<compile_context>
chip_gen: v7x
topology: tpu7x:2x2x1
jax: 0.10.0
libtpu: 0.0.40
codegen_flags: <defaults>
</compile_context>

<pallas_src>
import functools
import numpy as np
import jax
import jax.numpy as jnp
from jax.experimental import pallas as pl
from jax.experimental.pallas import tpu as pltpu

EPS = 1e-7
FEAT = 30                          # output width of linear_3 / LAF feature dim


# ----------------------------------------------------------------------------
# Fused kernel: element MLP + LAF aggregation + set MLP
# ----------------------------------------------------------------------------
def _fused_kernel(emb_ref, oh_ref, rx_ref, r1_ref, outer_ref, scale_ref,
                  w1_ref, b1_ref, w2_ref, b2_ref, w3_ref, b3_ref,
                  w4_ref, b4_ref, w5_ref, b5_ref, w6_ref, b6_ref,
                  out_ref, agg_acc, *, uf_pad):
    i = pl.program_id(0)

    @pl.when(i == 0)
    def _init():
        agg_acc[...] = jnp.zeros_like(agg_acc)

    # ---- per-element MLP on this tile (bf16 MXU path, f32 accumulation) -----
    h = jnp.dot(emb_ref[...], w1_ref[...], preferred_element_type=jnp.float32)
    h = jnp.tanh(h + b1_ref[...])
    h = jnp.dot(h.astype(jnp.bfloat16), w2_ref[...],
                preferred_element_type=jnp.float32)
    h = jnp.tanh(h + b2_ref[...])
    h = jnp.dot(h.astype(jnp.bfloat16), w3_ref[...],
                preferred_element_type=jnp.float32)
    x = jax.nn.sigmoid(h + b3_ref[...])                       # (tile_n, feat) f32

    # ---- LAF inner powers via lane-aligned selection matmuls (f32) ----------
    x = jnp.clip(x, EPS, 1.0 - EPS)
    lx = jnp.log(x)                                            # hoisted once
    l1 = jnp.log(1.0 - x)                                      # hoisted once
    powed = jnp.exp(
        jnp.dot(lx, rx_ref[...], preferred_element_type=jnp.float32)
        + jnp.dot(l1, r1_ref[...], preferred_element_type=jnp.float32)
    )                                                          # (tile_n, 4*UFpad)

    # ---- segment scatter-add as ONE lane-dense matmul, accumulated ----------
    # one-hot arrives bf16 (halved DMA); upcast so the accumulation stays f32.
    agg_acc[...] += jnp.dot(oh_ref[...].astype(jnp.float32), powed,
                            preferred_element_type=jnp.float32)  # (Spad, 4*UFpad)

    # ---- finalize on the last N-tile -----------------------------------------
    @pl.when(i == pl.num_programs(0) - 1)
    def _finalize():
        c = uf_pad                                             # lane-aligned chunk
        agg = jnp.maximum(agg_acc[...], EPS)
        # padded lanes: outer == 0 and scale == 0  ->  term == 0 (finite).
        term = jnp.exp(outer_ref[...] * jnp.log(agg)) * scale_ref[...]
        num = term[:, 0 * c:1 * c] + term[:, 1 * c:2 * c]
        den = term[:, 2 * c:3 * c] + term[:, 3 * c:4 * c]
        # eps-guard the denominator (sign-preserving; den == 0 -> +EPS), exact div.
        den = jnp.where(jnp.abs(den) < EPS, jnp.where(den < 0.0, -EPS, EPS), den)
        z = num / den                                          # (Spad, UFpad) f32
        z = jnp.tanh(jnp.dot(z, w4_ref[...], preferred_element_type=jnp.float32)
                     + b4_ref[...])
        z = jnp.tanh(jnp.dot(z, w5_ref[...], preferred_element_type=jnp.float32)
                     + b5_ref[...])
        out_ref[...] = (jnp.dot(z, w6_ref[...], preferred_element_type=jnp.float32)
                        + b6_ref[...])


def fused_laf_model(emb, onehot, rx, r1, outer_vec, scale_vec,
                    w1t, b1, w2t, b2, w3t, b3, w4t, b4, w5t, b5, w6t, b6,
                    *, tile_n, uf_pad):
    n_pad, d_in = emb.shape
    s_pad = onehot.shape[0]
    feat = w3t.shape[1]
    width = 4 * uf_pad
    d1, d2 = w1t.shape[1], w2t.shape[1]
    d4, d5, d6 = w4t.shape[1], w5t.shape[1], w6t.shape[1]
    assert n_pad % tile_n == 0

    kernel = functools.partial(_fused_kernel, uf_pad=uf_pad)

    def build(single_buffer_weights):
        # Grid-invariant inputs never change block index -> single-buffer them
        # so the second pipeline buffer isn't dead VMEM.
        inv = ({"pipeline_mode": pl.Buffered(1)} if single_buffer_weights else {})

        def const(shape):
            return pl.BlockSpec(shape, lambda i: (0, 0), **inv)

        in_specs = [
            pl.BlockSpec((tile_n, d_in), lambda i: (i, 0)),    # emb tile (bf16)
            pl.BlockSpec((s_pad, tile_n), lambda i: (0, i)),   # one-hot tile (bf16)
            const((feat, width)),                              # Rx (inner exps, x slots)
            const((feat, width)),                              # R1 (inner exps, 1-x slots)
            const((1, width)),                                 # outer exponents
            const((1, width)),                                 # multipliers
            const((d_in, d1)), const((1, d1)),                 # w1 (bf16), b1
            const((d1, d2)), const((1, d2)),                   # w2 (bf16), b2
            const((d2, feat)), const((1, feat)),               # w3 (bf16), b3
            const((uf_pad, d4)), const((1, d4)),               # w4 (permuted+padded)
            const((d4, d5)), const((1, d5)),                   # w5
            const((d5, d6)), const((1, d6)),                   # w6
        ]
        return pl.pallas_call(
            kernel,
            out_shape=jax.ShapeDtypeStruct((s_pad, d6), jnp.float32),
            grid_spec=pltpu.PrefetchScalarGridSpec(
                num_scalar_prefetch=0,
                grid=(n_pad // tile_n,),
                in_specs=in_specs,
                out_specs=pl.BlockSpec((s_pad, d6), lambda i: (0, 0)),
                scratch_shapes=[pltpu.VMEM((s_pad, width), jnp.float32)],  # LAF acc
            ),
            # N axis carries the LAF accumulator -> must be "arbitrary".
            compiler_params=pltpu.CompilerParams(
                dimension_semantics=("arbitrary",),
                vmem_limit_bytes=48 * 1024 * 1024,
            ),
        )

    args = (emb, onehot, rx, r1, outer_vec, scale_vec,
            w1t, b1, w2t, b2, w3t, b3, w4t, b4, w5t, b5, w6t, b6)
    try:
        return build(True)(*args)
    except Exception:
        # Compatibility fallback for jax versions where pipeline_mode on
        # pallas_call in_specs is unsupported (identical semantics, just
        # double-buffers the grid-invariant weights).
        return build(False)(*args)


# ----------------------------------------------------------------------------
# Parameter construction (deterministic, mimics the torch module's __init__)
# ----------------------------------------------------------------------------
def linear_params(key, fan_in, fan_out):
    kw, kb = jax.random.split(key)
    bound = 1.0 / np.sqrt(fan_in)
    w = jax.random.uniform(kw, (fan_out, fan_in), jnp.float32, -bound, bound)
    b = jax.random.uniform(kb, (fan_out,), jnp.float32, -bound, bound)
    return w, b


def make_params(key, vocab, units_arg):
    units = max(3 * (units_arg // 3), 3)
    ks = jax.random.split(key, 10)
    # Frozen embedding table: stored in bf16 to keep the gather + L1 matmul on
    # the bf16 path and halve the HBM stream.
    emb = jax.random.uniform(ks[0], (vocab, 784), jnp.float32).astype(jnp.bfloat16)
    w1, b1 = linear_params(ks[1], 784, 300)
    w2, b2 = linear_params(ks[2], 300, 100)
    w3, b3 = linear_params(ks[3], 100, FEAT)
    laf_w1 = jax.random.uniform(ks[4], (8, units), jnp.float32)        # np.random.uniform
    laf_w2 = 0.01 * jax.random.normal(ks[5], (4, units), jnp.float32)  # np.random.normal(0,0.01)
    laf_w = jnp.concatenate([laf_w1, laf_w2], axis=0)                  # (12, units)
    w4, b4 = linear_params(ks[6], FEAT * units, 1000)
    w5, b5 = linear_params(ks[7], 1000, 100)
    w6, b6 = linear_params(ks[8], 100, 1)
    return dict(units=units, embeddings=emb, laf_w=laf_w,
                w1=w1, b1=b1, w2=w2, b2=b2, w3=w3, b3=b3,
                w4=w4, b4=b4, w5=w5, b5=b5, w6=w6, b6=b6)


def _laf_host_tables(laf_w, units, feat, uf_pad):
    """Build lane-aligned selection / exponent / multiplier tables.

    Column layout: col(j, u, f) = j*uf_pad + u*feat + f,  j in {0..3} slots
    (bases x, 1-x, x, 1-x).  Columns >= units*feat inside each chunk are padding
    (zero in Rx/R1/outer/scale -> padded terms are exactly zero & finite).
    """
    w = np.asarray(laf_w, dtype=np.float32)
    inner, outer, scale = w[0:4], w[4:8], w[8:12]              # each (4, units)
    width = 4 * uf_pad
    rx = np.zeros((feat, width), np.float32)
    r1 = np.zeros((feat, width), np.float32)
    outer_vec = np.zeros((1, width), np.float32)
    scale_vec = np.zeros((1, width), np.float32)
    f_idx = np.arange(feat)
    for j in range(4):
        sel = rx if j in (0, 2) else r1                        # x slots vs (1-x) slots
        for u in range(units):
            cols = j * uf_pad + u * feat + f_idx
            sel[f_idx, cols] = inner[j, u]
            outer_vec[0, cols] = outer[j, u]
            scale_vec[0, cols] = scale[j, u]
    return (jnp.asarray(rx), jnp.asarray(r1),
            jnp.asarray(outer_vec), jnp.asarray(scale_vec))


def model_forward(params, x_idx, set_idx, num_sets):
    units = params["units"]
    uf = units * FEAT
    uf_pad = int(np.ceil(uf / 128)) * 128                      # lane-aligned chunk

    # --- glue: embedding gather (bf16 table -> bf16 rows, halves the round trip)
    emb = jnp.take(params["embeddings"], x_idx, axis=0)        # (N, 784) bf16
    n = emb.shape[0]

    # one N-tile when N is small; cap at 512 rows per tile for real batches
    # (multiple of 256 so the MXU M-dim stays full on v6e/v7x).
    tile_n = min(512, int(np.ceil(n / 8)) * 8)
    n_pad = int(np.ceil(n / tile_n)) * tile_n
    pad = n_pad - n
    if pad:
        emb = jnp.pad(emb, ((0, pad), (0, 0)))
        set_idx_p = jnp.pad(set_idx, (0, pad), constant_values=-1)   # pad -> no set
    else:
        set_idx_p = set_idx

    # --- glue: segment one-hot (bf16; padded rows/cols are zero -> no contribution)
    s_pad = max(8, int(np.ceil(num_sets / 8)) * 8)
    onehot = (set_idx_p[None, :] == jnp.arange(s_pad)[:, None]).astype(jnp.bfloat16)

    # --- glue: LAF selection matrices + outer/scale vectors (lane-aligned layout)
    rx, r1, outer_vec, scale_vec = _laf_host_tables(params["laf_w"], units, FEAT, uf_pad)

    # --- glue: reorder linear_4 input columns from torch's (f*U + u) flatten to
    #     the kernel's unit-major (u*30 + f) layout; zero rows in the lane padding.
    perm = np.array([f * units + u for u in range(units) for f in range(FEAT)])
    w4t = np.asarray(params["w4"], dtype=np.float32).T[perm, :]        # (uf, 1000)
    w4t_pad = np.zeros((uf_pad, w4t.shape[1]), np.float32)
    w4t_pad[:uf] = w4t
    w4t_pad = jnp.asarray(w4t_pad)

    # --- fused kernel ----------------------------------------------------------
    out = fused_laf_model(
        emb, onehot, rx, r1, outer_vec, scale_vec,
        params["w1"].T.astype(jnp.bfloat16), params["b1"][None, :],
        params["w2"].T.astype(jnp.bfloat16), params["b2"][None, :],
        params["w3"].T.astype(jnp.bfloat16), params["b3"][None, :],
        w4t_pad, params["b4"][None, :],
        params["w5"].T, params["b5"][None, :],
        params["w6"].T, params["b6"][None, :],
        tile_n=tile_n, uf_pad=uf_pad,
    )                                                                  # (Spad, 1)
    return out[:num_sets]


if __name__ == "__main__":
    VOCAB, N_ELEMS, N_SETS, UNITS_ARG = 20, 16, 4, 3

    key = jax.random.PRNGKey(0)
    kp, kx, ki = jax.random.split(key, 3)
    params = make_params(kp, VOCAB, UNITS_ARG)

    x_idx = jax.random.randint(kx, (N_ELEMS,), 0, VOCAB, dtype=jnp.int32)     # element ids
    set_idx = jax.random.randint(ki, (N_ELEMS,), 0, N_SETS, dtype=jnp.int32)  # set assignment

    out = model_forward(params, x_idx, set_idx, num_sets=N_SETS)
    out = jax.block_until_ready(out)

    assert out.shape == (N_SETS, 1), out.shape
    assert out.dtype == jnp.float32
    assert bool(jnp.all(jnp.isfinite(out)))
    print("KERNEL_OK")
</pallas_src>

<mosaic_0001>
module attributes {stable_mosaic.version = 11 : i64} {
  func.func @_fused_kernel(%arg0: i32, %arg1: memref<16x784xbf16, #tpu.memory_space<vmem>>, %arg2: memref<8x16xbf16, #tpu.memory_space<vmem>>, %arg3: memref<30x512xf32, #tpu.memory_space<vmem>>, %arg4: memref<30x512xf32, #tpu.memory_space<vmem>>, %arg5: memref<1x512xf32, #tpu.memory_space<vmem>>, %arg6: memref<1x512xf32, #tpu.memory_space<vmem>>, %arg7: memref<784x300xbf16, #tpu.memory_space<vmem>>, %arg8: memref<1x300xf32, #tpu.memory_space<vmem>>, %arg9: memref<300x100xbf16, #tpu.memory_space<vmem>>, %arg10: memref<1x100xf32, #tpu.memory_space<vmem>>, %arg11: memref<100x30xbf16, #tpu.memory_space<vmem>>, %arg12: memref<1x30xf32, #tpu.memory_space<vmem>>, %arg13: memref<128x1000xf32, #tpu.memory_space<vmem>>, %arg14: memref<1x1000xf32, #tpu.memory_space<vmem>>, %arg15: memref<1000x100xf32, #tpu.memory_space<vmem>>, %arg16: memref<1x100xf32, #tpu.memory_space<vmem>>, %arg17: memref<100x1xf32, #tpu.memory_space<vmem>>, %arg18: memref<1x1xf32, #tpu.memory_space<vmem>>, %arg19: memref<8x1xf32, #tpu.memory_space<vmem>>, %arg20: memref<8x512xf32, #tpu.memory_space<vmem>>) attributes {dimension_semantics = [#tpu.dimension_semantics<arbitrary>], iteration_bounds = array<i64: 1>, scalar_prefetch = 0 : i64, scratch_operands = 1 : i64, tpu.core_type = #tpu.core_type<tc>, window_params = [{transform_indices = @transform_0, window_bounds = array<i64: 16, 784>}, {transform_indices = @transform_1, window_bounds = array<i64: 8, 16>}, {pipeline_mode = #tpu.pipeline_mode<synchronous>, transform_indices = @transform_2, window_bounds = array<i64: 30, 512>}, {pipeline_mode = #tpu.pipeline_mode<synchronous>, transform_indices = @transform_3, window_bounds = array<i64: 30, 512>}, {pipeline_mode = #tpu.pipeline_mode<synchronous>, transform_indices = @transform_4, window_bounds = array<i64: 1, 512>}, {pipeline_mode = #tpu.pipeline_mode<synchronous>, transform_indices = @transform_5, window_bounds = array<i64: 1, 512>}, {pipeline_mode = #tpu.pipeline_mode<synchronous>, transform_indices = @transform_6, window_bounds = array<i64: 784, 300>}, {pipeline_mode = #tpu.pipeline_mode<synchronous>, transform_indices = @transform_7, window_bounds = array<i64: 1, 300>}, {pipeline_mode = #tpu.pipeline_mode<synchronous>, transform_indices = @transform_8, window_bounds = array<i64: 300, 100>}, {pipeline_mode = #tpu.pipeline_mode<synchronous>, transform_indices = @transform_9, window_bounds = array<i64: 1, 100>}, {pipeline_mode = #tpu.pipeline_mode<synchronous>, transform_indices = @transform_10, window_bounds = array<i64: 100, 30>}, {pipeline_mode = #tpu.pipeline_mode<synchronous>, transform_indices = @transform_11, window_bounds = array<i64: 1, 30>}, {pipeline_mode = #tpu.pipeline_mode<synchronous>, transform_indices = @transform_12, window_bounds = array<i64: 128, 1000>}, {pipeline_mode = #tpu.pipeline_mode<synchronous>, transform_indices = @transform_13, window_bounds = array<i64: 1, 1000>}, {pipeline_mode = #tpu.pipeline_mode<synchronous>, transform_indices = @transform_14, window_bounds = array<i64: 1000, 100>}, {pipeline_mode = #tpu.pipeline_mode<synchronous>, transform_indices = @transform_15, window_bounds = array<i64: 1, 100>}, {pipeline_mode = #tpu.pipeline_mode<synchronous>, transform_indices = @transform_16, window_bounds = array<i64: 100, 1>}, {pipeline_mode = #tpu.pipeline_mode<synchronous>, transform_indices = @transform_17, window_bounds = array<i64: 1, 1>}, {pipeline_mode = #tpu.pipeline_mode<synchronous>, transform_indices = @transform_18, window_bounds = array<i64: 8, 1>}]} {
    %c0_i32 = arith.constant 0 : i32
    %0 = arith.cmpi eq, %arg0, %c0_i32 : i32
    %1 = arith.extui %0 : i1 to i32
    %c0_i32_0 = arith.constant 0 : i32
    %2 = arith.cmpi ne, %1, %c0_i32_0 : i32
    scf.if %2 {
      %cst_35 = arith.constant 0.000000e+00 : f32
      %51 = vector.broadcast %cst_35 : f32 to vector<8x512xf32>
      %c0_36 = arith.constant 0 : index
      %c0_37 = arith.constant 0 : index
      %52 = vector.load %arg20[%c0_36, %c0_37] : memref<8x512xf32, #tpu.memory_space<vmem>>, vector<8x512xf32>
      tpu.vector_store %arg20[%c0_36, %c0_37], %51 {strides = array<i32>} : memref<8x512xf32, #tpu.memory_space<vmem>>, vector<8x512xf32>,
    } else {
    }
    %c0 = arith.constant 0 : index
    %c0_1 = arith.constant 0 : index
    %3 = vector.load %arg1[%c0, %c0_1] : memref<16x784xbf16, #tpu.memory_space<vmem>>, vector<16x784xbf16>
    %c0_2 = arith.constant 0 : index
    %c0_3 = arith.constant 0 : index
    %4 = vector.load %arg7[%c0_2, %c0_3] : memref<784x300xbf16, #tpu.memory_space<vmem>>, vector<784x300xbf16>
    %cst = arith.constant dense<0.000000e+00> : vector<16x300xf32>
    %5 = tpu.matmul %3, %4, %cst {dimension_numbers = #tpu.dot_dimension_numbers<[1], [0], [0], [1], [0, 0, 1, 1], [], []>} : vector<16x784xbf16>, vector<784x300xbf16>, vector<16x300xf32> -> vector<16x300xf32>
    %c0_4 = arith.constant 0 : index
    %c0_5 = arith.constant 0 : index
    %6 = vector.load %arg8[%c0_4, %c0_5] : memref<1x300xf32, #tpu.memory_space<vmem>>, vector<1x300xf32>
    %7 = vector.broadcast %6 : vector<1x300xf32> to vector<16x300xf32>
    %8 = arith.addf %5, %7 : vector<16x300xf32>
    %9 = math.tanh %8 : vector<16x300xf32>
    %10 = arith.truncf %9 : vector<16x300xf32> to vector<16x300xbf16>
    %c0_6 = arith.constant 0 : index
    %c0_7 = arith.constant 0 : index
    %11 = vector.load %arg9[%c0_6, %c0_7] : memref<300x100xbf16, #tpu.memory_space<vmem>>, vector<300x100xbf16>
    %cst_8 = arith.constant dense<0.000000e+00> : vector<16x100xf32>
    %12 = tpu.matmul %10, %11, %cst_8 {dimension_numbers = #tpu.dot_dimension_numbers<[1], [0], [0], [1], [0, 0, 1, 1], [], []>} : vector<16x300xbf16>, vector<300x100xbf16>, vector<16x100xf32> -> vector<16x100xf32>
    %c0_9 = arith.constant 0 : index
    %c0_10 = arith.constant 0 : index
    %13 = vector.load %arg10[%c0_9, %c0_10] : memref<1x100xf32, #tpu.memory_space<vmem>>, vector<1x100xf32>
    %14 = vector.broadcast %13 : vector<1x100xf32> to vector<16x100xf32>
    %15 = arith.addf %12, %14 : vector<16x100xf32>
    %16 = math.tanh %15 : vector<16x100xf32>
    %17 = arith.truncf %16 : vector<16x100xf32> to vector<16x100xbf16>
    %c0_11 = arith.constant 0 : index
    %c0_12 = arith.constant 0 : index
    %18 = vector.load %arg11[%c0_11, %c0_12] : memref<100x30xbf16, #tpu.memory_space<vmem>>, vector<100x30xbf16>
    %cst_13 = arith.constant dense<0.000000e+00> : vector<16x30xf32>
    %19 = tpu.matmul %17, %18, %cst_13 {dimension_numbers = #tpu.dot_dimension_numbers<[1], [0], [0], [1], [0, 0, 1, 1], [], []>} : vector<16x100xbf16>, vector<100x30xbf16>, vector<16x30xf32> -> vector<16x30xf32>
    %c0_14 = arith.constant 0 : index
    %c0_15 = arith.constant 0 : index
    %20 = vector.load %arg12[%c0_14, %c0_15] : memref<1x30xf32, #tpu.memory_space<vmem>>, vector<1x30xf32>
    %21 = vector.broadcast %20 : vector<1x30xf32> to vector<16x30xf32>
    %22 = arith.addf %19, %21 : vector<16x30xf32>
    %23 = arith.negf %22 : vector<16x30xf32>
    %24 = math.exp %23 : vector<16x30xf32>
    %cst_16 = arith.constant 1.000000e+00 : f32
    %25 = vector.broadcast %cst_16 : f32 to vector<16x30xf32>
    %26 = arith.addf %25, %24 : vector<16x30xf32>
    %27 = arith.divf %25, %26 : vector<16x30xf32>
    %cst_17 = arith.constant 1.000000e-07 : f32
    %cst_18 = arith.constant 0.99999988 : f32
    %28 = vector.broadcast %cst_17 : f32 to vector<16x30xf32>
    %29 = arith.maximumf %28, %27 : vector<16x30xf32>
    %30 = vector.broadcast %cst_18 : f32 to vector<16x30xf32>
    %31 = arith.minimumf %30, %29 : vector<16x30xf32>
    %32 = math.log %31 : vector<16x30xf32>
    %cst_19 = arith.constant 1.000000e+00 : f32
    %33 = vector.broadcast %cst_19 : f32 to vector<16x30xf32>
    %34 = arith.subf %33, %31 : vector<16x30xf32>
    %35 = math.log %34 : vector<16x30xf32>
    %c0_20 = arith.constant 0 : index
    %c0_21 = arith.constant 0 : index
    %36 = vector.load %arg3[%c0_20, %c0_21] : memref<30x512xf32, #tpu.memory_space<vmem>>, vector<30x512xf32>
    %cst_22 = arith.constant dense<0.000000e+00> : vector<16x512xf32>
    %37 = tpu.matmul %32, %36, %cst_22 {dimension_numbers = #tpu.dot_dimension_numbers<[1], [0], [0], [1], [0, 0, 1, 1], [], []>} : vector<16x30xf32>, vector<30x512xf32>, vector<16x512xf32> -> vector<16x512xf32>
    %c0_23 = arith.constant 0 : index
    %c0_24 = arith.constant 0 : index
    %38 = vector.load %arg4[%c0_23, %c0_24] : memref<30x512xf32, #tpu.memory_space<vmem>>, vector<30x512xf32>
    %cst_25 = arith.constant dense<0.000000e+00> : vector<16x512xf32>
    %39 = tpu.matmul %35, %38, %cst_25 {dimension_numbers = #tpu.dot_dimension_numbers<[1], [0], [0], [1], [0, 0, 1, 1], [], []>} : vector<16x30xf32>, vector<30x512xf32>, vector<16x512xf32> -> vector<16x512xf32>
    %40 = arith.addf %37, %39 : vector<16x512xf32>
    %41 = math.exp %40 : vector<16x512xf32>
    %c0_26 = arith.constant 0 : index
    %c0_27 = arith.constant 0 : index
    %42 = vector.load %arg20[%c0_26, %c0_27] : memref<8x512xf32, #tpu.memory_space<vmem>>, vector<8x512xf32>
    %c0_28 = arith.constant 0 : index
    %c0_29 = arith.constant 0 : index
    %43 = vector.load %arg2[%c0_28, %c0_29] : memref<8x16xbf16, #tpu.memory_space<vmem>>, vector<8x16xbf16>
    %44 = arith.extf %43 : vector<8x16xbf16> to vector<8x16xf32>
    %cst_30 = arith.constant dense<0.000000e+00> : vector<8x512xf32>
    %45 = tpu.matmul %44, %41, %cst_30 {dimension_numbers = #tpu.dot_dimension_numbers<[1], [0], [0], [1], [0, 0, 1, 1], [], []>} : vector<8x16xf32>, vector<16x512xf32>, vector<8x512xf32> -> vector<8x512xf32>
    %46 = arith.addf %42, %45 : vector<8x512xf32>
    %c0_31 = arith.constant 0 : index
    %c0_32 = arith.constant 0 : index
    %47 = vector.load %arg20[%c0_31, %c0_32] : memref<8x512xf32, #tpu.memory_space<vmem>>, vector<8x512xf32>
    tpu.vector_store %arg20[%c0_31, %c0_32], %46 {strides = array<i32>} : memref<8x512xf32, #tpu.memory_space<vmem>>, vector<8x512xf32>,
    %c0_i32_33 = arith.constant 0 : i32
    %48 = arith.cmpi eq, %arg0, %c0_i32_33 : i32
    %49 = arith.extui %48 : i1 to i32
    %c0_i32_34 = arith.constant 0 : i32
    %50 = arith.cmpi ne, %49, %c0_i32_34 : i32
    scf.if %50 {
      %c0_35 = arith.constant 0 : index
      %c0_36 = arith.constant 0 : index
      %51 = vector.load %arg20[%c0_35, %c0_36] : memref<8x512xf32, #tpu.memory_space<vmem>>, vector<8x512xf32>
      %cst_37 = arith.constant 1.000000e-07 : f32
      %52 = vector.broadcast %cst_37 : f32 to vector<8x512xf32>
      %53 = arith.maximumf %51, %52 : vector<8x512xf32>
      %c0_38 = arith.constant 0 : index
      %c0_39 = arith.constant 0 : index
      %54 = vector.load %arg5[%c0_38, %c0_39] : memref<1x512xf32, #tpu.memory_space<vmem>>, vector<1x512xf32>
      %55 = math.log %53 : vector<8x512xf32>
      %56 = vector.broadcast %54 : vector<1x512xf32> to vector<8x512xf32>
      %57 = arith.mulf %56, %55 : vector<8x512xf32>
      %58 = math.exp %57 : vector<8x512xf32>
      %c0_40 = arith.constant 0 : index
      %c0_41 = arith.constant 0 : index
      %59 = vector.load %arg6[%c0_40, %c0_41] : memref<1x512xf32, #tpu.memory_space<vmem>>, vector<1x512xf32>
      %60 = vector.broadcast %59 : vector<1x512xf32> to vector<8x512xf32>
      %61 = arith.mulf %58, %60 : vector<8x512xf32>
      %62 = vector.extract_strided_slice %61 {offsets = [0, 0], sizes = [8, 128], strides = [1, 1]} : vector<8x512xf32> to vector<8x128xf32>
      %63 = vector.extract_strided_slice %61 {offsets = [0, 128], sizes = [8, 128], strides = [1, 1]} : vector<8x512xf32> to vector<8x128xf32>
      %64 = arith.addf %62, %63 : vector<8x128xf32>
      %65 = vector.extract_strided_slice %61 {offsets = [0, 256], sizes = [8, 128], strides = [1, 1]} : vector<8x512xf32> to vector<8x128xf32>
      %66 = vector.extract_strided_slice %61 {offsets = [0, 384], sizes = [8, 128], strides = [1, 1]} : vector<8x512xf32> to vector<8x128xf32>
      %67 = arith.addf %65, %66 : vector<8x128xf32>
      %68 = math.absf %67 : vector<8x128xf32>
      %cst_42 = arith.constant 1.000000e-07 : f32
      %69 = vector.broadcast %cst_42 : f32 to vector<8x128xf32>
      %70 = arith.cmpf olt, %68, %69 : vector<8x128xf32>
      %cst_43 = arith.constant 0.000000e+00 : f32
      %71 = vector.broadcast %cst_43 : f32 to vector<8x128xf32>
      %72 = arith.cmpf olt, %67, %71 : vector<8x128xf32>
      %cst_44 = arith.constant -1.000000e-07 : f32
      %cst_45 = arith.constant 1.000000e-07 : f32
      %73 = vector.broadcast %cst_44 : f32 to vector<8x128xf32>
      %74 = vector.broadcast %cst_45 : f32 to vector<8x128xf32>
      %75 = arith.select %72, %73, %74 : vector<8x128xi1>, vector<8x128xf32>
      %76 = arith.select %70, %75, %67 : vector<8x128xi1>, vector<8x128xf32>
      %77 = arith.divf %64, %76 : vector<8x128xf32>
      %c0_46 = arith.constant 0 : index
      %c0_47 = arith.constant 0 : index
      %78 = vector.load %arg13[%c0_46, %c0_47] : memref<128x1000xf32, #tpu.memory_space<vmem>>, vector<128x1000xf32>
      %cst_48 = arith.constant dense<0.000000e+00> : vector<8x1000xf32>
      %79 = tpu.matmul %77, %78, %cst_48 {dimension_numbers = #tpu.dot_dimension_numbers<[1], [0], [0], [1], [0, 0, 1, 1], [], []>} : vector<8x128xf32>, vector<128x1000xf32>, vector<8x1000xf32> -> vector<8x1000xf32>
      %c0_49 = arith.constant 0 : index
      %c0_50 = arith.constant 0 : index
      %80 = vector.load %arg14[%c0_49, %c0_50] : memref<1x1000xf32, #tpu.memory_space<vmem>>, vector<1x1000xf32>
      %81 = vector.broadcast %80 : vector<1x1000xf32> to vector<8x1000xf32>
      %82 = arith.addf %79, %81 : vector<8x1000xf32>
      %83 = math.tanh %82 : vector<8x1000xf32>
      %c0_51 = arith.constant 0 : index
      %c0_52 = arith.constant 0 : index
      %84 = vector.load %arg15[%c0_51, %c0_52] : memref<1000x100xf32, #tpu.memory_space<vmem>>, vector<1000x100xf32>
      %cst_53 = arith.constant dense<0.000000e+00> : vector<8x100xf32>
      %85 = tpu.matmul %83, %84, %cst_53 {dimension_numbers = #tpu.dot_dimension_numbers<[1], [0], [0], [1], [0, 0, 1, 1], [], []>} : vector<8x1000xf32>, vector<1000x100xf32>, vector<8x100xf32> -> vector<8x100xf32>
      %c0_54 = arith.constant 0 : index
      %c0_55 = arith.constant 0 : index
      %86 = vector.load %arg16[%c0_54, %c0_55] : memref<1x100xf32, #tpu.memory_space<vmem>>, vector<1x100xf32>
      %87 = vector.broadcast %86 : vector<1x100xf32> to vector<8x100xf32>
      %88 = arith.addf %85, %87 : vector<8x100xf32>
      %89 = math.tanh %88 : vector<8x100xf32>
      %c0_56 = arith.constant 0 : index
      %c0_57 = arith.constant 0 : index
      %90 = vector.load %arg17[%c0_56, %c0_57] : memref<100x1xf32, #tpu.memory_space<vmem>>, vector<100x1xf32>
      %cst_58 = arith.constant dense<0.000000e+00> : vector<8x1xf32>
      %91 = tpu.matmul %89, %90, %cst_58 {dimension_numbers = #tpu.dot_dimension_numbers<[1], [0], [0], [1], [0, 0, 1, 1], [], []>} : vector<8x100xf32>, vector<100x1xf32>, vector<8x1xf32> -> vector<8x1xf32>
      %c0_59 = arith.constant 0 : index
      %c0_60 = arith.constant 0 : index
      %92 = vector.load %arg18[%c0_59, %c0_60] : memref<1x1xf32, #tpu.memory_space<vmem>>, vector<1x1xf32>
      %93 = vector.broadcast %92 : vector<1x1xf32> to vector<8x1xf32>
      %94 = arith.addf %91, %93 : vector<8x1xf32>
      %c0_61 = arith.constant 0 : index
      %c0_62 = arith.constant 0 : index
      %95 = vector.load %arg19[%c0_61, %c0_62] : memref<8x1xf32, #tpu.memory_space<vmem>>, vector<8x1xf32>
      tpu.vector_store %arg19[%c0_61, %c0_62], %94 {strides = array<i32>} : memref<8x1xf32, #tpu.memory_space<vmem>>, vector<8x1xf32>,
    } else {
    }
    return
  }
  func.func @transform_0(%arg0: i32) -> (i32, i32) {
    %c0_i32 = arith.constant 0 : i32
    %c0_i32_0 = arith.constant 0 : i32
    return %arg0, %c0_i32 : i32, i32
  }
  func.func @transform_1(%arg0: i32) -> (i32, i32) {
    %c0_i32 = arith.constant 0 : i32
    %c0_i32_0 = arith.constant 0 : i32
    return %c0_i32, %arg0 : i32, i32
  }
  func.func @transform_2(%arg0: i32) -> (i32, i32) {
    %c0_i32 = arith.constant 0 : i32
    %c0_i32_0 = arith.constant 0 : i32
    %c0_i32_1 = arith.constant 0 : i32
    return %c0_i32, %c0_i32_0 : i32, i32
  }
  func.func @transform_3(%arg0: i32) -> (i32, i32) {
    %c0_i32 = arith.constant 0 : i32
    %c0_i32_0 = arith.constant 0 : i32
    %c0_i32_1 = arith.constant 0 : i32
    return %c0_i32, %c0_i32_0 : i32, i32
  }
  func.func @transform_4(%arg0: i32) -> (i32, i32) {
    %c0_i32 = arith.constant 0 : i32
    %c0_i32_0 = arith.constant 0 : i32
    %c0_i32_1 = arith.constant 0 : i32
    return %c0_i32, %c0_i32_0 : i32, i32
  }
  func.func @transform_5(%arg0: i32) -> (i32, i32) {
    %c0_i32 = arith.constant 0 : i32
    %c0_i32_0 = arith.constant 0 : i32
    %c0_i32_1 = arith.constant 0 : i32
    return %c0_i32, %c0_i32_0 : i32, i32
  }
  func.func @transform_6(%arg0: i32) -> (i32, i32) {
    %c0_i32 = arith.constant 0 : i32
    %c0_i32_0 = arith.constant 0 : i32
    %c0_i32_1 = arith.constant 0 : i32
    return %c0_i32, %c0_i32_0 : i32, i32
  }
  func.func @transform_7(%arg0: i32) -> (i32, i32) {
    %c0_i32 = arith.constant 0 : i32
    %c0_i32_0 = arith.constant 0 : i32
    %c0_i32_1 = arith.constant 0 : i32
    return %c0_i32, %c0_i32_0 : i32, i32
  }
  func.func @transform_8(%arg0: i32) -> (i32, i32) {
    %c0_i32 = arith.constant 0 : i32
    %c0_i32_0 = arith.constant 0 : i32
    %c0_i32_1 = arith.constant 0 : i32
    return %c0_i32, %c0_i32_0 : i32, i32
  }
  func.func @transform_9(%arg0: i32) -> (i32, i32) {
    %c0_i32 = arith.constant 0 : i32
    %c0_i32_0 = arith.constant 0 : i32
    %c0_i32_1 = arith.constant 0 : i32
    return %c0_i32, %c0_i32_0 : i32, i32
  }
  func.func @transform_10(%arg0: i32) -> (i32, i32) {
    %c0_i32 = arith.constant 0 : i32
    %c0_i32_0 = arith.constant 0 : i32
    %c0_i32_1 = arith.constant 0 : i32
    return %c0_i32, %c0_i32_0 : i32, i32
  }
  func.func @transform_11(%arg0: i32) -> (i32, i32) {
    %c0_i32 = arith.constant 0 : i32
    %c0_i32_0 = arith.constant 0 : i32
    %c0_i32_1 = arith.constant 0 : i32
    return %c0_i32, %c0_i32_0 : i32, i32
  }
  func.func @transform_12(%arg0: i32) -> (i32, i32) {
    %c0_i32 = arith.constant 0 : i32
    %c0_i32_0 = arith.constant 0 : i32
    %c0_i32_1 = arith.constant 0 : i32
    return %c0_i32, %c0_i32_0 : i32, i32
  }
  func.func @transform_13(%arg0: i32) -> (i32, i32) {
    %c0_i32 = arith.constant 0 : i32
    %c0_i32_0 = arith.constant 0 : i32
    %c0_i32_1 = arith.constant 0 : i32
    return %c0_i32, %c0_i32_0 : i32, i32
  }
  func.func @transform_14(%arg0: i32) -> (i32, i32) {
    %c0_i32 = arith.constant 0 : i32
    %c0_i32_0 = arith.constant 0 : i32
    %c0_i32_1 = arith.constant 0 : i32
    return %c0_i32, %c0_i32_0 : i32, i32
  }
  func.func @transform_15(%arg0: i32) -> (i32, i32) {
    %c0_i32 = arith.constant 0 : i32
    %c0_i32_0 = arith.constant 0 : i32
    %c0_i32_1 = arith.constant 0 : i32
    return %c0_i32, %c0_i32_0 : i32, i32
  }
  func.func @transform_16(%arg0: i32) -> (i32, i32) {
    %c0_i32 = arith.constant 0 : i32
    %c0_i32_0 = arith.constant 0 : i32
    %c0_i32_1 = arith.constant 0 : i32
    return %c0_i32, %c0_i32_0 : i32, i32
  }
  func.func @transform_17(%arg0: i32) -> (i32, i32) {
    %c0_i32 = arith.constant 0 : i32
    %c0_i32_0 = arith.constant 0 : i32
    %c0_i32_1 = arith.constant 0 : i32
    return %c0_i32, %c0_i32_0 : i32, i32
  }
  func.func @transform_18(%arg0: i32) -> (i32, i32) {
    %c0_i32 = arith.constant 0 : i32
    %c0_i32_0 = arith.constant 0 : i32
    %c0_i32_1 = arith.constant 0 : i32
    return %c0_i32, %c0_i32_0 : i32, i32
  }
}

module attributes {stable_mosaic.version = 11 : i64} {
  func.func @_fused_kernel(%arg0: i32, %arg1: memref<16x784xbf16, #tpu.memory_space<vmem>>, %arg2: memref<8x16xbf16, #tpu.memory_space<vmem>>, %arg3: memref<30x512xf32, #tpu.memory_space<vmem>>, %arg4: memref<30x512xf32, #tpu.memory_space<vmem>>, %arg5: memref<1x512xf32, #tpu.memory_space<vmem>>, %arg6: memref<1x512xf32, #tpu.memory_space<vmem>>, %arg7: memref<784x300xbf16, #tpu.memory_space<vmem>>, %arg8: memref<1x300xf32, #tpu.memory_space<vmem>>, %arg9: memref<300x100xbf16, #tpu.memory_space<vmem>>, %arg10: memref<1x100xf32, #tpu.memory_space<vmem>>, %arg11: memref<100x30xbf16, #tpu.memory_space<vmem>>, %arg12: memref<1x30xf32, #tpu.memory_space<vmem>>, %arg13: memref<128x1000xf32, #tpu.memory_space<vmem>>, %arg14: memref<1x1000xf32, #tpu.memory_space<vmem>>, %arg15: memref<1000x100xf32, #tpu.memory_space<vmem>>, %arg16: memref<1x100xf32, #tpu.memory_space<vmem>>, %arg17: memref<100x1xf32, #tpu.memory_space<vmem>>, %arg18: memref<1x1xf32, #tpu.memory_space<vmem>>, %arg19: memref<8x1xf32, #tpu.memory_space<vmem>>, %arg20: memref<8x512xf32, #tpu.memory_space<vmem>>) attributes {dimension_semantics = [#tpu.dimension_semantics<arbitrary>], iteration_bounds = array<i64: 1>, scalar_prefetch = 0 : i64, scratch_operands = 1 : i64, tpu.core_type = #tpu.core_type<tc>, window_params = [{transform_indices = @transform_0, window_bounds = array<i64: 16, 784>}, {transform_indices = @transform_1, window_bounds = array<i64: 8, 16>}, {pipeline_mode = #tpu.pipeline_mode<synchronous>, transform_indices = @transform_2, window_bounds = array<i64: 30, 512>}, {pipeline_mode = #tpu.pipeline_mode<synchronous>, transform_indices = @transform_3, window_bounds = array<i64: 30, 512>}, {pipeline_mode = #tpu.pipeline_mode<synchronous>, transform_indices = @transform_4, window_bounds = array<i64: 1, 512>}, {pipeline_mode = #tpu.pipeline_mode<synchronous>, transform_indices = @transform_5, window_bounds = array<i64: 1, 512>}, {pipeline_mode = #tpu.pipeline_mode<synchronous>, transform_indices = @transform_6, window_bounds = array<i64: 784, 300>}, {pipeline_mode = #tpu.pipeline_mode<synchronous>, transform_indices = @transform_7, window_bounds = array<i64: 1, 300>}, {pipeline_mode = #tpu.pipeline_mode<synchronous>, transform_indices = @transform_8, window_bounds = array<i64: 300, 100>}, {pipeline_mode = #tpu.pipeline_mode<synchronous>, transform_indices = @transform_9, window_bounds = array<i64: 1, 100>}, {pipeline_mode = #tpu.pipeline_mode<synchronous>, transform_indices = @transform_10, window_bounds = array<i64: 100, 30>}, {pipeline_mode = #tpu.pipeline_mode<synchronous>, transform_indices = @transform_11, window_bounds = array<i64: 1, 30>}, {pipeline_mode = #tpu.pipeline_mode<synchronous>, transform_indices = @transform_12, window_bounds = array<i64: 128, 1000>}, {pipeline_mode = #tpu.pipeline_mode<synchronous>, transform_indices = @transform_13, window_bounds = array<i64: 1, 1000>}, {pipeline_mode = #tpu.pipeline_mode<synchronous>, transform_indices = @transform_14, window_bounds = array<i64: 1000, 100>}, {pipeline_mode = #tpu.pipeline_mode<synchronous>, transform_indices = @transform_15, window_bounds = array<i64: 1, 100>}, {pipeline_mode = #tpu.pipeline_mode<synchronous>, transform_indices = @transform_16, window_bounds = array<i64: 100, 1>}, {pipeline_mode = #tpu.pipeline_mode<synchronous>, transform_indices = @transform_17, window_bounds = array<i64: 1, 1>}, {pipeline_mode = #tpu.pipeline_mode<synchronous>, transform_indices = @transform_18, window_bounds = array<i64: 8, 1>}]} {
    %c0_i32 = arith.constant 0 : i32
    %0 = arith.cmpi eq, %arg0, %c0_i32 : i32
    %1 = arith.extui %0 : i1 to i32
    %c0_i32_0 = arith.constant 0 : i32
    %2 = arith.cmpi ne, %1, %c0_i32_0 : i32
    scf.if %2 {
      %cst_35 = arith.constant 0.000000e+00 : f32
      %51 = vector.broadcast %cst_35 : f32 to vector<8x512xf32>
      %c0_36 = arith.constant 0 : index
      %c0_37 = arith.constant 0 : index
      %52 = vector.load %arg20[%c0_36, %c0_37] : memref<8x512xf32, #tpu.memory_space<vmem>>, vector<8x512xf32>
      tpu.vector_store %arg20[%c0_36, %c0_37], %51 {strides = array<i32>} : memref<8x512xf32, #tpu.memory_space<vmem>>, vector<8x512xf32>,
    } else {
    }
    %c0 = arith.constant 0 : index
    %c0_1 = arith.constant 0 : index
    %3 = vector.load %arg1[%c0, %c0_1] : memref<16x784xbf16, #tpu.memory_space<vmem>>, vector<16x784xbf16>
    %c0_2 = arith.constant 0 : index
    %c0_3 = arith.constant 0 : index
    %4 = vector.load %arg7[%c0_2, %c0_3] : memref<784x300xbf16, #tpu.memory_space<vmem>>, vector<784x300xbf16>
    %cst = arith.constant dense<0.000000e+00> : vector<16x300xf32>
    %5 = tpu.matmul %3, %4, %cst {dimension_numbers = #tpu.dot_dimension_numbers<[1], [0], [0], [1], [0, 0, 1, 1], [], []>} : vector<16x784xbf16>, vector<784x300xbf16>, vector<16x300xf32> -> vector<16x300xf32>
    %c0_4 = arith.constant 0 : index
    %c0_5 = arith.constant 0 : index
    %6 = vector.load %arg8[%c0_4, %c0_5] : memref<1x300xf32, #tpu.memory_space<vmem>>, vector<1x300xf32>
    %7 = vector.broadcast %6 : vector<1x300xf32> to vector<16x300xf32>
    %8 = arith.addf %5, %7 : vector<16x300xf32>
    %9 = math.tanh %8 : vector<16x300xf32>
    %10 = arith.truncf %9 : vector<16x300xf32> to vector<16x300xbf16>
    %c0_6 = arith.constant 0 : index
    %c0_7 = arith.constant 0 : index
    %11 = vector.load %arg9[%c0_6, %c0_7] : memref<300x100xbf16, #tpu.memory_space<vmem>>, vector<300x100xbf16>
    %cst_8 = arith.constant dense<0.000000e+00> : vector<16x100xf32>
    %12 = tpu.matmul %10, %11, %cst_8 {dimension_numbers = #tpu.dot_dimension_numbers<[1], [0], [0], [1], [0, 0, 1, 1], [], []>} : vector<16x300xbf16>, vector<300x100xbf16>, vector<16x100xf32> -> vector<16x100xf32>
    %c0_9 = arith.constant 0 : index
    %c0_10 = arith.constant 0 : index
    %13 = vector.load %arg10[%c0_9, %c0_10] : memref<1x100xf32, #tpu.memory_space<vmem>>, vector<1x100xf32>
    %14 = vector.broadcast %13 : vector<1x100xf32> to vector<16x100xf32>
    %15 = arith.addf %12, %14 : vector<16x100xf32>
    %16 = math.tanh %15 : vector<16x100xf32>
    %17 = arith.truncf %16 : vector<16x100xf32> to vector<16x100xbf16>
    %c0_11 = arith.constant 0 : index
    %c0_12 = arith.constant 0 : index
    %18 = vector.load %arg11[%c0_11, %c0_12] : memref<100x30xbf16, #tpu.memory_space<vmem>>, vector<100x30xbf16>
    %cst_13 = arith.constant dense<0.000000e+00> : vector<16x30xf32>
    %19 = tpu.matmul %17, %18, %cst_13 {dimension_numbers = #tpu.dot_dimension_numbers<[1], [0], [0], [1], [0, 0, 1, 1], [], []>} : vector<16x100xbf16>, vector<100x30xbf16>, vector<16x30xf32> -> vector<16x30xf32>
    %c0_14 = arith.constant 0 : index
    %c0_15 = arith.constant 0 : index
    %20 = vector.load %arg12[%c0_14, %c0_15] : memref<1x30xf32, #tpu.memory_space<vmem>>, vector<1x30xf32>
    %21 = vector.broadcast %20 : vector<1x30xf32> to vector<16x30xf32>
    %22 = arith.addf %19, %21 : vector<16x30xf32>
    %23 = arith.negf %22 : vector<16x30xf32>
    %24 = math.exp %23 : vector<16x30xf32>
    %cst_16 = arith.constant 1.000000e+00 : f32
    %25 = vector.broadcast %cst_16 : f32 to vector<16x30xf32>
    %26 = arith.addf %25, %24 : vector<16x30xf32>
    %27 = arith.divf %25, %26 : vector<16x30xf32>
    %cst_17 = arith.constant 1.000000e-07 : f32
    %cst_18 = arith.constant 0.99999988 : f32
    %28 = vector.broadcast %cst_17 : f32 to vector<16x30xf32>
    %29 = arith.maximumf %28, %27 : vector<16x30xf32>
    %30 = vector.broadcast %cst_18 : f32 to vector<16x30xf32>
    %31 = arith.minimumf %30, %29 : vector<16x30xf32>
    %32 = math.log %31 : vector<16x30xf32>
    %cst_19 = arith.constant 1.000000e+00 : f32
    %33 = vector.broadcast %cst_19 : f32 to vector<16x30xf32>
    %34 = arith.subf %33, %31 : vector<16x30xf32>
    %35 = math.log %34 : vector<16x30xf32>
    %c0_20 = arith.constant 0 : index
    %c0_21 = arith.constant 0 : index
    %36 = vector.load %arg3[%c0_20, %c0_21] : memref<30x512xf32, #tpu.memory_space<vmem>>, vector<30x512xf32>
    %cst_22 = arith.constant dense<0.000000e+00> : vector<16x512xf32>
    %37 = tpu.matmul %32, %36, %cst_22 {dimension_numbers = #tpu.dot_dimension_numbers<[1], [0], [0], [1], [0, 0, 1, 1], [], []>} : vector<16x30xf32>, vector<30x512xf32>, vector<16x512xf32> -> vector<16x512xf32>
    %c0_23 = arith.constant 0 : index
    %c0_24 = arith.constant 0 : index
    %38 = vector.load %arg4[%c0_23, %c0_24] : memref<30x512xf32, #tpu.memory_space<vmem>>, vector<30x512xf32>
    %cst_25 = arith.constant dense<0.000000e+00> : vector<16x512xf32>
    %39 = tpu.matmul %35, %38, %cst_25 {dimension_numbers = #tpu.dot_dimension_numbers<[1], [0], [0], [1], [0, 0, 1, 1], [], []>} : vector<16x30xf32>, vector<30x512xf32>, vector<16x512xf32> -> vector<16x512xf32>
    %40 = arith.addf %37, %39 : vector<16x512xf32>
    %41 = math.exp %40 : vector<16x512xf32>
    %c0_26 = arith.constant 0 : index
    %c0_27 = arith.constant 0 : index
    %42 = vector.load %arg20[%c0_26, %c0_27] : memref<8x512xf32, #tpu.memory_space<vmem>>, vector<8x512xf32>
    %c0_28 = arith.constant 0 : index
    %c0_29 = arith.constant 0 : index
    %43 = vector.load %arg2[%c0_28, %c0_29] : memref<8x16xbf16, #tpu.memory_space<vmem>>, vector<8x16xbf16>
    %44 = arith.extf %43 : vector<8x16xbf16> to vector<8x16xf32>
    %cst_30 = arith.constant dense<0.000000e+00> : vector<8x512xf32>
    %45 = tpu.matmul %44, %41, %cst_30 {dimension_numbers = #tpu.dot_dimension_numbers<[1], [0], [0], [1], [0, 0, 1, 1], [], []>} : vector<8x16xf32>, vector<16x512xf32>, vector<8x512xf32> -> vector<8x512xf32>
    %46 = arith.addf %42, %45 : vector<8x512xf32>
    %c0_31 = arith.constant 0 : index
    %c0_32 = arith.constant 0 : index
    %47 = vector.load %arg20[%c0_31, %c0_32] : memref<8x512xf32, #tpu.memory_space<vmem>>, vector<8x512xf32>
    tpu.vector_store %arg20[%c0_31, %c0_32], %46 {strides = array<i32>} : memref<8x512xf32, #tpu.memory_space<vmem>>, vector<8x512xf32>,
    %c0_i32_33 = arith.constant 0 : i32
    %48 = arith.cmpi eq, %arg0, %c0_i32_33 : i32
    %49 = arith.extui %48 : i1 to i32
    %c0_i32_34 = arith.constant 0 : i32
    %50 = arith.cmpi ne, %49, %c0_i32_34 : i32
    scf.if %50 {
      %c0_35 = arith.constant 0 : index
      %c0_36 = arith.constant 0 : index
      %51 = vector.load %arg20[%c0_35, %c0_36] : memref<8x512xf32, #tpu.memory_space<vmem>>, vector<8x512xf32>
      %cst_37 = arith.constant 1.000000e-07 : f32
      %52 = vector.broadcast %cst_37 : f32 to vector<8x512xf32>
      %53 = arith.maximumf %51, %52 : vector<8x512xf32>
      %c0_38 = arith.constant 0 : index
      %c0_39 = arith.constant 0 : index
      %54 = vector.load %arg5[%c0_38, %c0_39] : memref<1x512xf32, #tpu.memory_space<vmem>>, vector<1x512xf32>
      %55 = math.log %53 : vector<8x512xf32>
      %56 = vector.broadcast %54 : vector<1x512xf32> to vector<8x512xf32>
      %57 = arith.mulf %56, %55 : vector<8x512xf32>
      %58 = math.exp %57 : vector<8x512xf32>
      %c0_40 = arith.constant 0 : index
      %c0_41 = arith.constant 0 : index
      %59 = vector.load %arg6[%c0_40, %c0_41] : memref<1x512xf32, #tpu.memory_space<vmem>>, vector<1x512xf32>
      %60 = vector.broadcast %59 : vector<1x512xf32> to vector<8x512xf32>
      %61 = arith.mulf %58, %60 : vector<8x512xf32>
      %62 = vector.extract_strided_slice %61 {offsets = [0, 0], sizes = [8, 128], strides = [1, 1]} : vector<8x512xf32> to vector<8x128xf32>
      %63 = vector.extract_strided_slice %61 {offsets = [0, 128], sizes = [8, 128], strides = [1, 1]} : vector<8x512xf32> to vector<8x128xf32>
      %64 = arith.addf %62, %63 : vector<8x128xf32>
      %65 = vector.extract_strided_slice %61 {offsets = [0, 256], sizes = [8, 128], strides = [1, 1]} : vector<8x512xf32> to vector<8x128xf32>
      %66 = vector.extract_strided_slice %61 {offsets = [0, 384], sizes = [8, 128], strides = [1, 1]} : vector<8x512xf32> to vector<8x128xf32>
      %67 = arith.addf %65, %66 : vector<8x128xf32>
      %68 = math.absf %67 : vector<8x128xf32>
      %cst_42 = arith.constant 1.000000e-07 : f32
      %69 = vector.broadcast %cst_42 : f32 to vector<8x128xf32>
      %70 = arith.cmpf olt, %68, %69 : vector<8x128xf32>
      %cst_43 = arith.constant 0.000000e+00 : f32
      %71 = vector.broadcast %cst_43 : f32 to vector<8x128xf32>
      %72 = arith.cmpf olt, %67, %71 : vector<8x128xf32>
      %cst_44 = arith.constant -1.000000e-07 : f32
      %cst_45 = arith.constant 1.000000e-07 : f32
      %73 = vector.broadcast %cst_44 : f32 to vector<8x128xf32>
      %74 = vector.broadcast %cst_45 : f32 to vector<8x128xf32>
      %75 = arith.select %72, %73, %74 : vector<8x128xi1>, vector<8x128xf32>
      %76 = arith.select %70, %75, %67 : vector<8x128xi1>, vector<8x128xf32>
      %77 = arith.divf %64, %76 : vector<8x128xf32>
      %c0_46 = arith.constant 0 : index
      %c0_47 = arith.constant 0 : index
      %78 = vector.load %arg13[%c0_46, %c0_47] : memref<128x1000xf32, #tpu.memory_space<vmem>>, vector<128x1000xf32>
      %cst_48 = arith.constant dense<0.000000e+00> : vector<8x1000xf32>
      %79 = tpu.matmul %77, %78, %cst_48 {dimension_numbers = #tpu.dot_dimension_numbers<[1], [0], [0], [1], [0, 0, 1, 1], [], []>} : vector<8x128xf32>, vector<128x1000xf32>, vector<8x1000xf32> -> vector<8x1000xf32>
      %c0_49 = arith.constant 0 : index
      %c0_50 = arith.constant 0 : index
      %80 = vector.load %arg14[%c0_49, %c0_50] : memref<1x1000xf32, #tpu.memory_space<vmem>>, vector<1x1000xf32>
      %81 = vector.broadcast %80 : vector<1x1000xf32> to vector<8x1000xf32>
      %82 = arith.addf %79, %81 : vector<8x1000xf32>
      %83 = math.tanh %82 : vector<8x1000xf32>
      %c0_51 = arith.constant 0 : index
      %c0_52 = arith.constant 0 : index
      %84 = vector.load %arg15[%c0_51, %c0_52] : memref<1000x100xf32, #tpu.memory_space<vmem>>, vector<1000x100xf32>
      %cst_53 = arith.constant dense<0.000000e+00> : vector<8x100xf32>
      %85 = tpu.matmul %83, %84, %cst_53 {dimension_numbers = #tpu.dot_dimension_numbers<[1], [0], [0], [1], [0, 0, 1, 1], [], []>} : vector<8x1000xf32>, vector<1000x100xf32>, vector<8x100xf32> -> vector<8x100xf32>
      %c0_54 = arith.constant 0 : index
      %c0_55 = arith.constant 0 : index
      %86 = vector.load %arg16[%c0_54, %c0_55] : memref<1x100xf32, #tpu.memory_space<vmem>>, vector<1x100xf32>
      %87 = vector.broadcast %86 : vector<1x100xf32> to vector<8x100xf32>
      %88 = arith.addf %85, %87 : vector<8x100xf32>
      %89 = math.tanh %88 : vector<8x100xf32>
      %c0_56 = arith.constant 0 : index
      %c0_57 = arith.constant 0 : index
      %90 = vector.load %arg17[%c0_56, %c0_57] : memref<100x1xf32, #tpu.memory_space<vmem>>, vector<100x1xf32>
      %cst_58 = arith.constant dense<0.000000e+00> : vector<8x1xf32>
      %91 = tpu.matmul %89, %90, %cst_58 {dimension_numbers = #tpu.dot_dimension_numbers<[1], [0], [0], [1], [0, 0, 1, 1], [], []>} : vector<8x100xf32>, vector<100x1xf32>, vector<8x1xf32> -> vector<8x1xf32>
      %c0_59 = arith.constant 0 : index
      %c0_60 = arith.constant 0 : index
      %92 = vector.load %arg18[%c0_59, %c0_60] : memref<1x1xf32, #tpu.memory_space<vmem>>, vector<1x1xf32>
      %93 = vector.broadcast %92 : vector<1x1xf32> to vector<8x1xf32>
      %94 = arith.addf %91, %93 : vector<8x1xf32>
      %c0_61 = arith.constant 0 : index
      %c0_62 = arith.constant 0 : index
      %95 = vector.load %arg19[%c0_61, %c0_62] : memref<8x1xf32, #tpu.memory_space<vmem>>, vector<8x1xf32>
      tpu.vector_store %arg19[%c0_61, %c0_62], %94 {strides = array<i32>} : memref<8x1xf32, #tpu.memory_space<vmem>>, vector<8x1xf32>,
    } else {
    }
    return
  }
  func.func @transform_0(%arg0: i32) -> (i32, i32) {
    %c0_i32 = arith.constant 0 : i32
    %c0_i32_0 = arith.constant 0 : i32
    return %arg0, %c0_i32 : i32, i32
  }
  func.func @transform_1(%arg0: i32) -> (i32, i32) {
    %c0_i32 = arith.constant 0 : i32
    %c0_i32_0 = arith.constant 0 : i32
    return %c0_i32, %arg0 : i32, i32
  }
  func.func @transform_2(%arg0: i32) -> (i32, i32) {
    %c0_i32 = arith.constant 0 : i32
    %c0_i32_0 = arith.constant 0 : i32
    %c0_i32_1 = arith.constant 0 : i32
    return %c0_i32, %c0_i32_0 : i32, i32
  }
  func.func @transform_3(%arg0: i32) -> (i32, i32) {
    %c0_i32 = arith.constant 0 : i32
    %c0_i32_0 = arith.constant 0 : i32
    %c0_i32_1 = arith.constant 0 : i32
    return %c0_i32, %c0_i32_0 : i32, i32
  }
  func.func @transform_4(%arg0: i32) -> (i32, i32) {
    %c0_i32 = arith.constant 0 : i32
    %c0_i32_0 = arith.constant 0 : i32
    %c0_i32_1 = arith.constant 0 : i32
    return %c0_i32, %c0_i32_0 : i32, i32
  }
  func.func @transform_5(%arg0: i32) -> (i32, i32) {
    %c0_i32 = arith.constant 0 : i32
    %c0_i32_0 = arith.constant 0 : i32
    %c0_i32_1 = arith.constant 0 : i32
    return %c0_i32, %c0_i32_0 : i32, i32
  }
  func.func @transform_6(%arg0: i32) -> (i32, i32) {
    %c0_i32 = arith.constant 0 : i32
    %c0_i32_0 = arith.constant 0 : i32
    %c0_i32_1 = arith.constant 0 : i32
    return %c0_i32, %c0_i32_0 : i32, i32
  }
  func.func @transform_7(%arg0: i32) -> (i32, i32) {
    %c0_i32 = arith.constant 0 : i32
    %c0_i32_0 = arith.constant 0 : i32
    %c0_i32_1 = arith.constant 0 : i32
    return %c0_i32, %c0_i32_0 : i32, i32
  }
  func.func @transform_8(%arg0: i32) -> (i32, i32) {
    %c0_i32 = arith.constant 0 : i32
    %c0_i32_0 = arith.constant 0 : i32
    %c0_i32_1 = arith.constant 0 : i32
    return %c0_i32, %c0_i32_0 : i32, i32
  }
  func.func @transform_9(%arg0: i32) -> (i32, i32) {
    %c0_i32 = arith.constant 0 : i32
    %c0_i32_0 = arith.constant 0 : i32
    %c0_i32_1 = arith.constant 0 : i32
    return %c0_i32, %c0_i32_0 : i32, i32
  }
  func.func @transform_10(%arg0: i32) -> (i32, i32) {
    %c0_i32 = arith.constant 0 : i32
    %c0_i32_0 = arith.constant 0 : i32
    %c0_i32_1 = arith.constant 0 : i32
    return %c0_i32, %c0_i32_0 : i32, i32
  }
  func.func @transform_11(%arg0: i32) -> (i32, i32) {
    %c0_i32 = arith.constant 0 : i32
    %c0_i32_0 = arith.constant 0 : i32
    %c0_i32_1 = arith.constant 0 : i32
    return %c0_i32, %c0_i32_0 : i32, i32
  }
  func.func @transform_12(%arg0: i32) -> (i32, i32) {
    %c0_i32 = arith.constant 0 : i32
    %c0_i32_0 = arith.constant 0 : i32
    %c0_i32_1 = arith.constant 0 : i32
    return %c0_i32, %c0_i32_0 : i32, i32
  }
  func.func @transform_13(%arg0: i32) -> (i32, i32) {
    %c0_i32 = arith.constant 0 : i32
    %c0_i32_0 = arith.constant 0 : i32
    %c0_i32_1 = arith.constant 0 : i32
    return %c0_i32, %c0_i32_0 : i32, i32
  }
  func.func @transform_14(%arg0: i32) -> (i32, i32) {
    %c0_i32 = arith.constant 0 : i32
    %c0_i32_0 = arith.constant 0 : i32
    %c0_i32_1 = arith.constant 0 : i32
    return %c0_i32, %c0_i32_0 : i32, i32
  }
  func.func @transform_15(%arg0: i32) -> (i32, i32) {
    %c0_i32 = arith.constant 0 : i32
    %c0_i32_0 = arith.constant 0 : i32
    %c0_i32_1 = arith.constant 0 : i32
    return %c0_i32, %c0_i32_0 : i32, i32
  }
  func.func @transform_16(%arg0: i32) -> (i32, i32) {
    %c0_i32 = arith.constant 0 : i32
    %c0_i32_0 = arith.constant 0 : i32
    %c0_i32_1 = arith.constant 0 : i32
    return %c0_i32, %c0_i32_0 : i32, i32
  }
  func.func @transform_17(%arg0: i32) -> (i32, i32) {
    %c0_i32 = arith.constant 0 : i32
    %c0_i32_0 = arith.constant 0 : i32
    %c0_i32_1 = arith.constant 0 : i32
    return %c0_i32, %c0_i32_0 : i32, i32
  }
  func.func @transform_18(%arg0: i32) -> (i32, i32) {
    %c0_i32 = arith.constant 0 : i32
    %c0_i32_0 = arith.constant 0 : i32
    %c0_i32_1 = arith.constant 0 : i32
    return %c0_i32, %c0_i32_0 : i32, i32
  }
}

</mosaic_0001>

<llo_original>
// kernel: tpu_custom_call.1
$region0: #{tpu_custom_call.1}
  #allocation0 [shape = 'u32[]', space=smem, size = 0x4, offset = 0x4, fixed_abs, tag = 'smem constant byte address 0x4 - core index']
  #allocation1 [shape = 'u32[144,128]{1,0:T(1,128)}', space=vmem, size = 0x12000, scoped, tag = 'internal scratch']
  #allocation2 [shape = 'f32[8,512]{1,0:T(8,128)}', space=vmem, size = 0x4000, scoped, tag = 'scratch operand']
  #allocation3 [shape = 'f32[1,1]{1,0:T(1,128)S(1)}', space=vmem, size = 0x200, scoped, tag = 'scoped memory for tpu_custom_call.1']
  %s0 = inlined_call_operand.vmem [shape: bf16[16,784], index: 0, kind: input, shape index: {}]
  %s1 = inlined_call_operand.vmem [shape: bf16[8,16], index: 1, kind: input, shape index: {}]
  %s2 = inlined_call_operand.vmem [shape: f32[30,512], index: 2, kind: input, shape index: {}]
  %s3 = inlined_call_operand.vmem [shape: f32[30,512], index: 3, kind: input, shape index: {}]
  %s4 = inlined_call_operand.vmem [shape: f32[1,512], index: 4, kind: input, shape index: {}]
  %s5 = inlined_call_operand.vmem [shape: f32[1,512], index: 5, kind: input, shape index: {}]
  %s6 = inlined_call_operand.vmem [shape: bf16[784,300], index: 6, kind: input, shape index: {}]
  %s7 = inlined_call_operand.vmem [shape: f32[1,300], index: 7, kind: input, shape index: {}]
  %s8 = inlined_call_operand.vmem [shape: bf16[300,100], index: 8, kind: input, shape index: {}]
  %s9 = inlined_call_operand.vmem [shape: f32[1,100], index: 9, kind: input, shape index: {}]
  %s10 = inlined_call_operand.vmem [shape: bf16[100,30], index: 10, kind: input, shape index: {}]
  %s11 = inlined_call_operand.vmem [shape: f32[1,30], index: 11, kind: input, shape index: {}]
  %s12 = inlined_call_operand.vmem [shape: f32[128,1000], index: 12, kind: input, shape index: {}]
  %s13 = inlined_call_operand.vmem [shape: f32[1,1000], index: 13, kind: input, shape index: {}]
  %s14 = inlined_call_operand.vmem [shape: f32[1000,100], index: 14, kind: input, shape index: {}]
  %s15 = inlined_call_operand.vmem [shape: f32[1,100], index: 15, kind: input, shape index: {}]
  %s16 = inlined_call_operand.vmem [shape: f32[100,1], index: 16, kind: input, shape index: {}]
  %s17 = inlined_call_operand.<no memory space> [shape: f32[1,1], index: 17, kind: input, shape index: {}]
  %s18 = inlined_call_operand.vmem [shape: f32[8,1], index: 18, kind: output, shape index: {}]
  %s19 = sld [smem:[#allocation0]]
  $region90: #{tpu_custom_call.1} parent=0
    _
  %s21 = ssub.s32 1, %s19
  %s22 = scalar_select 0, %s21, %s19
  %v23 = vstv %s17
  %24 = vst [vmem:[#allocation3] sm:$0x1] %v23
  // Predicated region
  $region2: #{tpu_custom_call.1} parent=0 // pred_check
    _
  $region3: #{tpu_custom_call.1} parent=0 // pred_check_branch
    %26 = sbr.rel (0) target = $region5
  $region4: #{tpu_custom_call.1} parent=0 // pred_region
    _
  $region5: #{tpu_custom_call.1} parent=0 // pred_fallthru
    _
  // Predicated region
  $region6: #{tpu_custom_call.1} parent=0 // pred_check
    _
  $region7: #{tpu_custom_call.1} parent=0 // pred_check_branch
    %28 = sbr.rel (0) target = $region9
  $region8: #{tpu_custom_call.1} parent=0 // pred_region
    _
  $region9: #{tpu_custom_call.1} parent=0 // pred_fallthru
    _
  // Predicated region
  $region10: #{tpu_custom_call.1} parent=0 // pred_check
    _
  $region11: #{tpu_custom_call.1} parent=0 // pred_check_branch
    %30 = sbr.rel (0) target = $region13
  $region12: #{tpu_custom_call.1} parent=0 // pred_region
    _
  $region13: #{tpu_custom_call.1} parent=0 // pred_fallthru
    _
  // Predicated region
  $region14: #{tpu_custom_call.1} parent=0 // pred_check
    _
  $region15: #{tpu_custom_call.1} parent=0 // pred_check_branch
    %32 = sbr.rel (0) target = $region17
  $region16: #{tpu_custom_call.1} parent=0 // pred_region
    _
  $region17: #{tpu_custom_call.1} parent=0 // pred_fallthru
    _
  // Predicated region
  $region18: #{tpu_custom_call.1} parent=0 // pred_check
    _
  $region19: #{tpu_custom_call.1} parent=0 // pred_check_branch
    %34 = sbr.rel (0) target = $region21
  $region20: #{tpu_custom_call.1} parent=0 // pred_region
    _
  $region21: #{tpu_custom_call.1} parent=0 // pred_fallthru
    _
  // Predicated region
  $region22: #{tpu_custom_call.1} parent=0 // pred_check
    _
  $region23: #{tpu_custom_call.1} parent=0 // pred_check_branch
    %36 = sbr.rel (0) target = $region25
  $region24: #{tpu_custom_call.1} parent=0 // pred_region
    _
  $region25: #{tpu_custom_call.1} parent=0 // pred_fallthru
    _
  // Predicated region
  $region26: #{tpu_custom_call.1} parent=0 // pred_check
    _
  $region27: #{tpu_custom_call.1} parent=0 // pred_check_branch
    %38 = sbr.rel (0) target = $region29
  $region28: #{tpu_custom_call.1} parent=0 // pred_region
    _
  $region29: #{tpu_custom_call.1} parent=0 // pred_fallthru
    _
  // Predicated region
  $region30: #{tpu_custom_call.1} parent=0 // pred_check
    _
  $region31: #{tpu_custom_call.1} parent=0 // pred_check_branch
    %40 = sbr.rel (0) target = $region33
  $region32: #{tpu_custom_call.1} parent=0 // pred_region
    _
  $region33: #{tpu_custom_call.1} parent=0 // pred_fallthru
    _
  // Predicated region
  $region34: #{tpu_custom_call.1} parent=0 // pred_check
    _
  $region35: #{tpu_custom_call.1} parent=0 // pred_check_branch
    %42 = sbr.rel (0) target = $region37
  $region36: #{tpu_custom_call.1} parent=0 // pred_region
    _
  $region37: #{tpu_custom_call.1} parent=0 // pred_fallthru
    _
  // Predicated region
  $region38: #{tpu_custom_call.1} parent=0 // pred_check
    _
  $region39: #{tpu_custom_call.1} parent=0 // pred_check_branch
    %44 = sbr.rel (0) target = $region41
  $region40: #{tpu_custom_call.1} parent=0 // pred_region
    _
  $region41: #{tpu_custom_call.1} parent=0 // pred_fallthru
    _
  // Predicated region
  $region42: #{tpu_custom_call.1} parent=0 // pred_check
    _
  $region43: #{tpu_custom_call.1} parent=0 // pred_check_branch
    %46 = sbr.rel (0) target = $region45
  $region44: #{tpu_custom_call.1} parent=0 // pred_region
    _
  $region45: #{tpu_custom_call.1} parent=0 // pred_fallthru
    _
  // Predicated region
  $region46: #{tpu_custom_call.1} parent=0 // pred_check
    _
  $region47: #{tpu_custom_call.1} parent=0 // pred_check_branch
    %48 = sbr.rel (0) target = $region49
  $region48: #{tpu_custom_call.1} parent=0 // pred_region
    _
  $region49: #{tpu_custom_call.1} parent=0 // pred_fallthru
    _
  // Predicated region
  $region50: #{tpu_custom_call.1} parent=0 // pred_check
    _
  $region51: #{tpu_custom_call.1} parent=0 // pred_check_branch
    %50 = sbr.rel (0) target = $region53
  $region52: #{tpu_custom_call.1} parent=0 // pred_region
    _
  $region53: #{tpu_custom_call.1} parent=0 // pred_fallthru
    _
  // Predicated region
  $region54: #{tpu_custom_call.1} parent=0 // pred_check
    _
  $region55: #{tpu_custom_call.1} parent=0 // pred_check_branch
    %52 = sbr.rel (0) target = $region57
  $region56: #{tpu_custom_call.1} parent=0 // pred_region
    _
  $region57: #{tpu_custom_call.1} parent=0 // pred_fallthru
    _
  // Predicated region
  $region58: #{tpu_custom_call.1} parent=0 // pred_check
    _
  $region59: #{tpu_custom_call.1} parent=0 // pred_check_branch
    %54 = sbr.rel (0) target = $region61
  $region60: #{tpu_custom_call.1} parent=0 // pred_region
    _
  $region61: #{tpu_custom_call.1} parent=0 // pred_fallthru
    _
  // Predicated region
  $region62: #{tpu_custom_call.1} parent=0 // pred_check
    _
  $region63: #{tpu_custom_call.1} parent=0 // pred_check_branch
    %56 = sbr.rel (0) target = $region65
  $region64: #{tpu_custom_call.1} parent=0 // pred_region
    _
  $region65: #{tpu_custom_call.1} parent=0 // pred_fallthru
    _
  // Predicated region
  $region66: #{tpu_custom_call.1} parent=0 // pred_check
    _
  $region67: #{tpu_custom_call.1} parent=0 // pred_check_branch
    %58 = sbr.rel (0) target = $region69
  $region68: #{tpu_custom_call.1} parent=0 // pred_region
    _
  $region69: #{tpu_custom_call.1} parent=0 // pred_fallthru
    _
  // Predicated region
  $region70: #{tpu_custom_call.1} parent=0 // pred_check
    _
  $region71: #{tpu_custom_call.1} parent=0 // pred_check_branch
    %60 = sbr.rel (0) target = $region73
  $region72: #{tpu_custom_call.1} parent=0 // pred_region
    _
  $region73: #{tpu_custom_call.1} parent=0 // pred_fallthru
    _
  %p62 = scmp.eq.s32.totalorder 0, 0
  // Predicated region
  $region74: #{tpu_custom_call.1} parent=0 // pred_check
    %p63 = pneg %p62
  $region75: #{tpu_custom_call.1} parent=0 // pred_check_branch
    %65 = sbr.rel (%p63) target = $region77
  $region76: #{tpu_custom_call.1} parent=0 // pred_region
    %66 = vst [vmem:[#allocation2] sm:$0xff] 0.0
    %67 = vst [vmem:[#allocation2 + $0x8] sm:$0xff] 0.0
    %68 = vst [vmem:[#allocation2 + $0x10] sm:$0xff] 0.0
    %69 = vst [vmem:[#allocation2 + $0x18] sm:$0xff] 0.0
  $region77: #{tpu_custom_call.1} parent=0 // pred_fallthru
    _
  %v70 = vld [vmem:[%s0] sm:$0xff]
  %v71 = vld [vmem:[%s0 + $0x8] sm:$0xff]
  %v72 = vld [vmem:[%s0 + $0x10] sm:$0xff]
  %v73 = vld [vmem:[%s0 + $0x18] sm:$0xf]
  %v74 = vld [vmem:[%s0 + $0x1c] sm:$0xff]
  %v75 = vld [vmem:[%s0 + $0x24] sm:$0xff]
  %v76 = vld [vmem:[%s0 + $0x2c] sm:$0xff]
  %v77 = vld [vmem:[%s0 + $0x34] sm:$0xf]
  %v78 = vld [vmem:[%s6] sm:$0xff]
  %v79 = vld [vmem:[%s6 + $0x8] sm:$0xf]
  %v80 = vld [vmem:[%s6 + $0xc] sm:$0xff]
  %v81 = vld [vmem:[%s6 + $0x14] sm:$0xf]
  %v82 = vld [vmem:[%s6 + $0x18] sm:$0xff]
  %v83 = vld [vmem:[%s6 + $0x20] sm:$0xf]
  %v84 = vld [vmem:[%s6 + $0x24] sm:$0xff]
  %v85 = vld [vmem:[%s6 + $0x2c] sm:$0xf]
  %v86 = vld [vmem:[%s6 + $0x30] sm:$0xff]
  %v87 = vld [vmem:[%s6 + $0x38] sm:$0xf]
  %v88 = vld [vmem:[%s6 + $0x3c] sm:$0xff]
  %v89 = vld [vmem:[%s6 + $0x44] sm:$0xf]
  %v90 = vld [vmem:[%s6 + $0x48] sm:$0xff]
  %v91 = vld [vmem:[%s6 + $0x50] sm:$0xf]
  %v92 = vld [vmem:[%s6 + $0x54] sm:$0xff]
  %v93 = vld [vmem:[%s6 + $0x5c] sm:$0xf]
  %v94 = vld [vmem:[%s6 + $0x60] sm:$0xff]
  %v95 = vld [vmem:[%s6 + $0x68] sm:$0xf]
  %v96 = vld [vmem:[%s6 + $0x6c] sm:$0xff]
  %v97 = vld [vmem:[%s6 + $0x74] sm:$0xf]
  %v98 = vld [vmem:[%s6 + $0x78] sm:$0xff]
  %v99 = vld [vmem:[%s6 + $0x80] sm:$0xf]
  %v100 = vld [vmem:[%s6 + $0x84] sm:$0xff]
  %v101 = vld [vmem:[%s6 + $0x8c] sm:$0xf]
  %v102 = vld [vmem:[%s6 + $0x90] sm:$0xff]
  %v103 = vld [vmem:[%s6 + $0x98] sm:$0xf]
  %v104 = vld [vmem:[%s6 + $0x9c] sm:$0xff]
  %v105 = vld [vmem:[%s6 + $0xa4] sm:$0xf]
  %v106 = vld [vmem:[%s6 + $0xa8] sm:$0xff]
  %v107 = vld [vmem:[%s6 + $0xb0] sm:$0xf]
  %v108 = vld [vmem:[%s6 + $0xb4] sm:$0xff]
  %v109 = vld [vmem:[%s6 + $0xbc] sm:$0xf]
  %v110 = vld [vmem:[%s6 + $0xc0] sm:$0xff]
  %v111 = vld [vmem:[%s6 + $0xc8] sm:$0xf]
  %v112 = vld [vmem:[%s6 + $0xcc] sm:$0xff]
  %v113 = vld [vmem:[%s6 + $0xd4] sm:$0xf]
  %v114 = vld [vmem:[%s6 + $0xd8] sm:$0xff]
  %v115 = vld [vmem:[%s6 + $0xe0] sm:$0xf]
  %v116 = vld [vmem:[%s6 + $0xe4] sm:$0xff]
  %v117 = vld [vmem:[%s6 + $0xec] sm:$0xf]
  %v118 = vld [vmem:[%s6 + $0xf0] sm:$0xff]
  %v119 = vld [vmem:[%s6 + $0xf8] sm:$0xf]
  %v120 = vld [vmem:[%s6 + $0xfc] sm:$0xff]
  %v121 = vld [vmem:[%s6 + $0x104] sm:$0xf]
  %v122 = vld [vmem:[%s6 + $0x108] sm:$0xff]
  %v123 = vld [vmem:[%s6 + $0x110] sm:$0xf]
  %v124 = vld [vmem:[%s6 + $0x114] sm:$0xff]
  %v125 = vld [vmem:[%s6 + $0x11c] sm:$0xf]
  %v126 = vld [vmem:[%s6 + $0x120] sm:$0xff]
  %v127 = vld [vmem:[%s6 + $0x128] sm:$0xf]
  %v128 = vld [vmem:[%s6 + $0x12c] sm:$0xff]
  %v129 = vld [vmem:[%s6 + $0x134] sm:$0xf]
  %v130 = vld [vmem:[%s6 + $0x138] sm:$0xff]
  %v131 = vld [vmem:[%s6 + $0x140] sm:$0xf]
  %v132 = vld [vmem:[%s6 + $0x144] sm:$0xff]
  %v133 = vld [vmem:[%s6 + $0x14c] sm:$0xf]
  %v134 = vld [vmem:[%s6 + $0x150] sm:$0xff]
  %v135 = vld [vmem:[%s6 + $0x158] sm:$0xf]
  %v136 = vld [vmem:[%s6 + $0x15c] sm:$0xff]
  %v137 = vld [vmem:[%s6 + $0x164] sm:$0xf]
  %v138 = vld [vmem:[%s6 + $0x168] sm:$0xff]
  %v139 = vld [vmem:[%s6 + $0x170] sm:$0xf]
  %v140 = vld [vmem:[%s6 + $0x174] sm:$0xff]
  %v141 = vld [vmem:[%s6 + $0x17c] sm:$0xf]
  %v142 = vld [vmem:[%s6 + $0x180] sm:$0xff]
  %v143 = vld [vmem:[%s6 + $0x188] sm:$0xf]
  %v144 = vld [vmem:[%s6 + $0x18c] sm:$0xff]
  %v145 = vld [vmem:[%s6 + $0x194] sm:$0xf]
  %v146 = vld [vmem:[%s6 + $0x198] sm:$0xff]
  %v147 = vld [vmem:[%s6 + $0x1a0] sm:$0xf]
  %v148 = vld [vmem:[%s6 + $0x1a4] sm:$0xff]
  %v149 = vld [vmem:[%s6 + $0x1ac] sm:$0xf]
  %v150 = vld [vmem:[%s6 + $0x1b0] sm:$0xff]
  %v151 = vld [vmem:[%s6 + $0x1b8] sm:$0xf]
  %v152 = vld [vmem:[%s6 + $0x1bc] sm:$0xff]
  %v153 = vld [vmem:[%s6 + $0x1c4] sm:$0xf]
  %v154 = vld [vmem:[%s6 + $0x1c8] sm:$0xff]
  %v155 = vld [vmem:[%s6 + $0x1d0] sm:$0xf]
  %v156 = vld [vmem:[%s6 + $0x1d4] sm:$0xff]
  %v157 = vld [vmem:[%s6 + $0x1dc] sm:$0xf]
  %v158 = vld [vmem:[%s6 + $0x1e0] sm:$0xff]
  %v159 = vld [vmem:[%s6 + $0x1e8] sm:$0xf]
  %v160 = vld [vmem:[%s6 + $0x1ec] sm:$0xff]
  %v161 = vld [vmem:[%s6 + $0x1f4] sm:$0xf]
  %v162 = vld [vmem:[%s6 + $0x1f8] sm:$0xff]
  %v163 = vld [vmem:[%s6 + $0x200] sm:$0xf]
  %v164 = vld [vmem:[%s6 + $0x204] sm:$0xff]
  %v165 = vld [vmem:[%s6 + $0x20c] sm:$0xf]
  %v166 = vld [vmem:[%s6 + $0x210] sm:$0xff]
  %v167 = vld [vmem:[%s6 + $0x218] sm:$0xf]
  %v168 = vld [vmem:[%s6 + $0x21c] sm:$0xff]
  %v169 = vld [vmem:[%s6 + $0x224] sm:$0xf]
  %v170 = vld [vmem:[%s6 + $0x228] sm:$0xff]
  %v171 = vld [vmem:[%s6 + $0x230] sm:$0xf]
  %v172 = vld [vmem:[%s6 + $0x234] sm:$0xff]
  %v173 = vld [vmem:[%s6 + $0x23c] sm:$0xf]
  %v174 = vld [vmem:[%s6 + $0x240] sm:$0xff]
  %v175 = vld [vmem:[%s6 + $0x248] sm:$0xf]
  %v176 = vld [vmem:[%s6 + $0x24c] sm:$0xff]
  %v177 = vld [vmem:[%s6 + $0x254] sm:$0xf]
  %v178 = vld [vmem:[%s6 + $0x258] sm:$0xff]
  %v179 = vld [vmem:[%s6 + $0x260] sm:$0xf]
  %v180 = vld [vmem:[%s6 + $0x264] sm:$0xff]
  %v181 = vld [vmem:[%s6 + $0x26c] sm:$0xf]
  %v182 = vld [vmem:[%s6 + $0x270] sm:$0xff]
  %v183 = vld [vmem:[%s6 + $0x278] sm:$0xf]
  %v184 = vld [vmem:[%s6 + $0x27c] sm:$0xff]
  %v185 = vld [vmem:[%s6 + $0x284] sm:$0xf]
  %v186 = vld [vmem:[%s6 + $0x288] sm:$0xff]
  %v187 = vld [vmem:[%s6 + $0x290] sm:$0xf]
  %v188 = vld [vmem:[%s6 + $0x294] sm:$0xff]
  %v189 = vld [vmem:[%s6 + $0x29c] sm:$0xf]
  %v190 = vld [vmem:[%s6 + $0x2a0] sm:$0xff]
  %v191 = vld [vmem:[%s6 + $0x2a8] sm:$0xf]
  %v192 = vld [vmem:[%s6 + $0x2ac] sm:$0xff]
  %v193 = vld [vmem:[%s6 + $0x2b4] sm:$0xf]
  %v194 = vld [vmem:[%s6 + $0x2b8] sm:$0xff]
  %v195 = vld [vmem:[%s6 + $0x2c0] sm:$0xf]
  %v196 = vld [vmem:[%s6 + $0x2c4] sm:$0xff]
  %v197 = vld [vmem:[%s6 + $0x2cc] sm:$0xf]
  %v198 = vld [vmem:[%s6 + $0x2d0] sm:$0xff]
  %v199 = vld [vmem:[%s6 + $0x2d8] sm:$0xf]
  %v200 = vld [vmem:[%s6 + $0x2dc] sm:$0xff]
  %v201 = vld [vmem:[%s6 + $0x2e4] sm:$0xf]
  %v202 = vld [vmem:[%s6 + $0x2e8] sm:$0xff]
  %v203 = vld [vmem:[%s6 + $0x2f0] sm:$0xf]
  %v204 = vld [vmem:[%s6 + $0x2f4] sm:$0xff]
  %v205 = vld [vmem:[%s6 + $0x2fc] sm:$0xf]
  %v206 = vld [vmem:[%s6 + $0x300] sm:$0xff]
  %v207 = vld [vmem:[%s6 + $0x308] sm:$0xf]
  %v208 = vld [vmem:[%s6 + $0x30c] sm:$0xff]
  %v209 = vld [vmem:[%s6 + $0x314] sm:$0xf]
  %v210 = vld [vmem:[%s6 + $0x318] sm:$0xff]
  %v211 = vld [vmem:[%s6 + $0x320] sm:$0xf]
  %v212 = vld [vmem:[%s6 + $0x324] sm:$0xff]
  %v213 = vld [vmem:[%s6 + $0x32c] sm:$0xf]
  %v214 = vld [vmem:[%s6 + $0x330] sm:$0xff]
  %v215 = vld [vmem:[%s6 + $0x338] sm:$0xf]
  %v216 = vld [vmem:[%s6 + $0x33c] sm:$0xff]
  %v217 = vld [vmem:[%s6 + $0x344] sm:$0xf]
  %v218 = vld [vmem:[%s6 + $0x348] sm:$0xff]
  %v219 = vld [vmem:[%s6 + $0x350] sm:$0xf]
  %v220 = vld [vmem:[%s6 + $0x354] sm:$0xff]
  %v221 = vld [vmem:[%s6 + $0x35c] sm:$0xf]
  %v222 = vld [vmem:[%s6 + $0x360] sm:$0xff]
  %v223 = vld [vmem:[%s6 + $0x368] sm:$0xf]
  %v224 = vld [vmem:[%s6 + $0x36c] sm:$0xff]
  %v225 = vld [vmem:[%s6 + $0x374] sm:$0xf]
  %v226 = vld [vmem:[%s6 + $0x378] sm:$0xff]
  %v227 = vld [vmem:[%s6 + $0x380] sm:$0xf]
  %v228 = vld [vmem:[%s6 + $0x384] sm:$0xff]
  %v229 = vld [vmem:[%s6 + $0x38c] sm:$0xf]
  %v230 = vld [vmem:[%s6 + $0x390] sm:$0xff]
  %v231 = vld [vmem:[%s6 + $0x398] sm:$0xf]
  %v232 = vld [vmem:[%s6 + $0x39c] sm:$0xff]
  %v233 = vld [vmem:[%s6 + $0x3a4] sm:$0xf]
  %v234 = vld [vmem:[%s6 + $0x3a8] sm:$0xff]
  %v235 = vld [vmem:[%s6 + $0x3b0] sm:$0xf]
  %v236 = vld [vmem:[%s6 + $0x3b4] sm:$0xff]
  %v237 = vld [vmem:[%s6 + $0x3bc] sm:$0xf]
  %v238 = vld [vmem:[%s6 + $0x3c0] sm:$0xff]
  %v239 = vld [vmem:[%s6 + $0x3c8] sm:$0xf]
  %v240 = vld [vmem:[%s6 + $0x3cc] sm:$0xff]
  %v241 = vld [vmem:[%s6 + $0x3d4] sm:$0xf]
  %v242 = vld [vmem:[%s6 + $0x3d8] sm:$0xff]
  %v243 = vld [vmem:[%s6 + $0x3e0] sm:$0xf]
  %v244 = vld [vmem:[%s6 + $0x3e4] sm:$0xff]
  %v245 = vld [vmem:[%s6 + $0x3ec] sm:$0xf]
  %v246 = vld [vmem:[%s6 + $0x3f0] sm:$0xff]
  %v247 = vld [vmem:[%s6 + $0x3f8] sm:$0xf]
  %v248 = vld [vmem:[%s6 + $0x3fc] sm:$0xff]
  %v249 = vld [vmem:[%s6 + $0x404] sm:$0xf]
  %v250 = vld [vmem:[%s6 + $0x408] sm:$0xff]
  %v251 = vld [vmem:[%s6 + $0x410] sm:$0xf]
  %v252 = vld [vmem:[%s6 + $0x414] sm:$0xff]
  %v253 = vld [vmem:[%s6 + $0x41c] sm:$0xf]
  %v254 = vld [vmem:[%s6 + $0x420] sm:$0xff]
  %v255 = vld [vmem:[%s6 + $0x428] sm:$0xf]
  %v256 = vld [vmem:[%s6 + $0x42c] sm:$0xff]
  %v257 = vld [vmem:[%s6 + $0x434] sm:$0xf]
  %v258 = vld [vmem:[%s6 + $0x438] sm:$0xff]
  %v259 = vld [vmem:[%s6 + $0x440] sm:$0xf]
  %v260 = vld [vmem:[%s6 + $0x444] sm:$0xff]
  %v261 = vld [vmem:[%s6 + $0x44c] sm:$0xf]
  %v262 = vld [vmem:[%s6 + $0x450] sm:$0xff]
  %v263 = vld [vmem:[%s6 + $0x458] sm:$0xf]
  %v264 = vld [vmem:[%s6 + $0x45c] sm:$0xff]
  %v265 = vld [vmem:[%s6 + $0x464] sm:$0xf]
  %v266 = vld [vmem:[%s6 + $0x468] sm:$0xff]
  %v267 = vld [vmem:[%s6 + $0x470] sm:$0xf]
  %v268 = vld [vmem:[%s6 + $0x474] sm:$0xff]
  %v269 = vld [vmem:[%s6 + $0x47c] sm:$0xf]
  %v270 = vld [vmem:[%s6 + $0x480] sm:$0xff]
  %v271 = vld [vmem:[%s6 + $0x488] sm:$0xf]
  %v272 = vld [vmem:[%s6 + $0x48c] sm:$0xff]
  %v273 = vld [vmem:[%s6 + $0x494] sm:$0xf]
  %v274 = vld [vmem:[%s7] sm:$0x7]
  %v276 = vlaneseq
  %v277 = vshrl.u32 %v276, 7
  %v278 = vsub.s32 0, %v277
  %v279 = vrot.slane %v274, %v278
  %v280 = vlaneseq
  %v281 = vshrl.u32 %v280, 7
  %v282 = vsub.s32 1, %v281
  %v283 = vrot.slane %v274, %v282
  %v284 = vlaneseq
  %v285 = vshrl.u32 %v284, 7
  %v286 = vsub.s32 2, %v285
  %v287 = vrot.slane %v274, %v286
  %v299 = vunpack.c.l.b16 %v70
  %v300 = vunpack.c.h.b16 %v70
  %v301 = vunpack.c.l.b16 %v71
  %v302 = vunpack.c.h.b16 %v71
  %v303 = vunpack.c.l.b16 %v72
  %v304 = vunpack.c.h.b16 %v72
  %v305 = vunpack.c.l.b16 %v73
  %v306 = vunpack.c.l.b16 %v74
  %v307 = vunpack.c.h.b16 %v74
  %v308 = vunpack.c.l.b16 %v75
  %v309 = vunpack.c.h.b16 %v75
  %v310 = vunpack.c.l.b16 %v76
  %v311 = vunpack.c.h.b16 %v76
  %v312 = vunpack.c.l.b16 %v77
  %v313 = vpack.c.b16 %v306, %v299
  %v314 = vpack.c.b16 %v307, %v300
  %v315 = vpack.c.b16 %v308, %v301
  %v316 = vpack.c.b16 %v309, %v302
  %v317 = vpack.c.b16 %v310, %v303
  %v318 = vpack.c.b16 %v311, %v304
  %v319 = vpack.c.b16 %v312, %v305
  %v522 = vunpack.c.l.b16 %v78
  %v523 = vunpack.c.h.b16 %v78
  %v524 = vunpack.c.l.b16 %v79
  %v525 = vunpack.c.l.b16 %v80
  %v526 = vunpack.c.h.b16 %v80
  %v527 = vunpack.c.l.b16 %v81
  %v528 = vunpack.c.l.b16 %v82
  %v529 = vunpack.c.h.b16 %v82
  %v530 = vunpack.c.l.b16 %v83
  %v531 = vunpack.c.l.b16 %v84
  %v532 = vunpack.c.h.b16 %v84
  %v533 = vunpack.c.l.b16 %v85
  %v534 = vunpack.c.l.b16 %v86
  %v535 = vunpack.c.h.b16 %v86
  %v536 = vunpack.c.l.b16 %v87
  %v537 = vunpack.c.l.b16 %v88
  %v538 = vunpack.c.h.b16 %v88
  %v539 = vunpack.c.l.b16 %v89
  %v540 = vunpack.c.l.b16 %v90
  %v541 = vunpack.c.h.b16 %v90
  %v542 = vunpack.c.l.b16 %v91
  %v543 = vunpack.c.l.b16 %v92
  %v544 = vunpack.c.h.b16 %v92
  %v545 = vunpack.c.l.b16 %v93
  %v546 = vunpack.c.l.b16 %v94
  %v547 = vunpack.c.h.b16 %v94
  %v548 = vunpack.c.l.b16 %v95
  %v549 = vunpack.c.l.b16 %v96
  %v550 = vunpack.c.h.b16 %v96
  %v551 = vunpack.c.l.b16 %v97
  %v552 = vunpack.c.l.b16 %v98
  %v553 = vunpack.c.h.b16 %v98
  %v554 = vunpack.c.l.b16 %v99
  %v555 = vunpack.c.l.b16 %v100
  %v556 = vunpack.c.h.b16 %v100
  %v557 = vunpack.c.l.b16 %v101
  %v558 = vunpack.c.l.b16 %v102
  %v559 = vunpack.c.h.b16 %v102
  %v560 = vunpack.c.l.b16 %v103
  %v561 = vunpack.c.l.b16 %v104
  %v562 = vunpack.c.h.b16 %v104
  %v563 = vunpack.c.l.b16 %v105
  %v564 = vunpack.c.l.b16 %v106
  %v565 = vunpack.c.h.b16 %v106
  %v566 = vunpack.c.l.b16 %v107
  %v567 = vunpack.c.l.b16 %v108
  %v568 = vunpack.c.h.b16 %v108
  %v569 = vunpack.c.l.b16 %v109
  %v570 = vunpack.c.l.b16 %v110
  %v571 = vunpack.c.h.b16 %v110
  %v572 = vunpack.c.l.b16 %v111
  %v573 = vunpack.c.l.b16 %v112
  %v574 = vunpack.c.h.b16 %v112
  %v575 = vunpack.c.l.b16 %v113
  %v576 = vunpack.c.l.b16 %v114
  %v577 = vunpack.c.h.b16 %v114
  %v578 = vunpack.c.l.b16 %v115
  %v579 = vunpack.c.l.b16 %v116
  %v580 = vunpack.c.h.b16 %v116
  %v581 = vunpack.c.l.b16 %v117
  %v582 = vunpack.c.l.b16 %v118
  %v583 = vunpack.c.h.b16 %v118
  %v584 = vunpack.c.l.b16 %v119
  %v585 = vunpack.c.l.b16 %v120
  %v586 = vunpack.c.h.b16 %v120
  %v587 = vunpack.c.l.b16 %v121
  %v588 = vunpack.c.l.b16 %v122
  %v589 = vunpack.c.h.b16 %v122
  %v590 = vunpack.c.l.b16 %v123
  %v591 = vunpack.c.l.b16 %v124
  %v592 = vunpack.c.h.b16 %v124
  %v593 = vunpack.c.l.b16 %v125
  %v594 = vunpack.c.l.b16 %v126
  %v595 = vunpack.c.h.b16 %v126
  %v596 = vunpack.c.l.b16 %v127
  %v597 = vunpack.c.l.b16 %v128
  %v598 = vunpack.c.h.b16 %v128
  %v599 = vunpack.c.l.b16 %v129
  %v600 = vunpack.c.l.b16 %v130
  %v601 = vunpack.c.h.b16 %v130
  %v602 = vunpack.c.l.b16 %v131
  %v603 = vunpack.c.l.b16 %v132
  %v604 = vunpack.c.h.b16 %v132
  %v605 = vunpack.c.l.b16 %v133
  %v606 = vunpack.c.l.b16 %v134
  %v607 = vunpack.c.h.b16 %v134
  %v608 = vunpack.c.l.b16 %v135
  %v609 = vunpack.c.l.b16 %v136
  %v610 = vunpack.c.h.b16 %v136
  %v611 = vunpack.c.l.b16 %v137
  %v612 = vunpack.c.l.b16 %v138
  %v613 = vunpack.c.h.b16 %v138
  %v614 = vunpack.c.l.b16 %v139
  %v615 = vunpack.c.l.b16 %v140
  %v616 = vunpack.c.h.b16 %v140
  %v617 = vunpack.c.l.b16 %v141
  %v618 = vunpack.c.l.b16 %v142
  %v619 = vunpack.c.h.b16 %v142
  %v620 = vunpack.c.l.b16 %v143
  %v621 = vunpack.c.l.b16 %v144
  %v622 = vunpack.c.h.b16 %v144
  %v623 = vunpack.c.l.b16 %v145
  %v624 = vunpack.c.l.b16 %v146
  %v625 = vunpack.c.h.b16 %v146
  %v626 = vunpack.c.l.b16 %v147
  %v627 = vunpack.c.l.b16 %v148
  %v628 = vunpack.c.h.b16 %v148
  %v629 = vunpack.c.l.b16 %v149
  %v630 = vunpack.c.l.b16 %v150
  %v631 = vunpack.c.h.b16 %v150
  %v632 = vunpack.c.l.b16 %v151
  %v633 = vunpack.c.l.b16 %v152
  %v634 = vunpack.c.h.b16 %v152
  %v635 = vunpack.c.l.b16 %v153
  %v636 = vunpack.c.l.b16 %v154
  %v637 = vunpack.c.h.b16 %v154
  %v638 = vunpack.c.l.b16 %v155
  %v639 = vunpack.c.l.b16 %v156
  %v640 = vunpack.c.h.b16 %v156
  %v641 = vunpack.c.l.b16 %v157
  %v642 = vunpack.c.l.b16 %v158
  %v643 = vunpack.c.h.b16 %v158
  %v644 = vunpack.c.l.b16 %v159
  %v645 = vunpack.c.l.b16 %v160
  %v646 = vunpack.c.h.b16 %v160
  %v647 = vunpack.c.l.b16 %v161
  %v648 = vunpack.c.l.b16 %v162
  %v649 = vunpack.c.h.b16 %v162
  %v650 = vunpack.c.l.b16 %v163
  %v651 = vunpack.c.l.b16 %v164
  %v652 = vunpack.c.h.b16 %v164
  %v653 = vunpack.c.l.b16 %v165
  %v654 = vunpack.c.l.b16 %v166
  %v655 = vunpack.c.h.b16 %v166
  %v656 = vunpack.c.l.b16 %v167
  %v657 = vunpack.c.l.b16 %v168
  %v658 = vunpack.c.h.b16 %v168
  %v659 = vunpack.c.l.b16 %v169
  %v660 = vunpack.c.l.b16 %v170
  %v661 = vunpack.c.h.b16 %v170
  %v662 = vunpack.c.l.b16 %v171
  %v663 = vunpack.c.l.b16 %v172
  %v664 = vunpack.c.h.b16 %v172
  %v665 = vunpack.c.l.b16 %v173
  %v666 = vunpack.c.l.b16 %v174
  %v667 = vunpack.c.h.b16 %v174
  %v668 = vunpack.c.l.b16 %v175
  %v669 = vunpack.c.l.b16 %v176
  %v670 = vunpack.c.h.b16 %v176
  %v671 = vunpack.c.l.b16 %v177
  %v672 = vunpack.c.l.b16 %v178
  %v673 = vunpack.c.h.b16 %v178
  %v674 = vunpack.c.l.b16 %v179
  %v675 = vunpack.c.l.b16 %v180
  %v676 = vunpack.c.h.b16 %v180
  %v677 = vunpack.c.l.b16 %v181
  %v678 = vunpack.c.l.b16 %v182
  %v679 = vunpack.c.h.b16 %v182
  %v680 = vunpack.c.l.b16 %v183
  %v681 = vunpack.c.l.b16 %v184
  %v682 = vunpack.c.h.b16 %v184
  %v683 = vunpack.c.l.b16 %v185
  %v684 = vunpack.c.l.b16 %v186
  %v685 = vunpack.c.h.b16 %v186
  %v686 = vunpack.c.l.b16 %v187
  %v687 = vunpack.c.l.b16 %v188
  %v688 = vunpack.c.h.b16 %v188
  %v689 = vunpack.c.l.b16 %v189
  %v690 = vunpack.c.l.b16 %v190
  %v691 = vunpack.c.h.b16 %v190
  %v692 = vunpack.c.l.b16 %v191
  %v693 = vunpack.c.l.b16 %v192
  %v694 = vunpack.c.h.b16 %v192
  %v695 = vunpack.c.l.b16 %v193
  %v696 = vunpack.c.l.b16 %v194
  %v697 = vunpack.c.h.b16 %v194
  %v698 = vunpack.c.l.b16 %v195
  %v699 = vunpack.c.l.b16 %v196
  %v700 = vunpack.c.h.b16 %v196
  %v701 = vunpack.c.l.b16 %v197
  %v702 = vunpack.c.l.b16 %v198
  %v703 = vunpack.c.h.b16 %v198
  %v704 = vunpack.c.l.b16 %v199
  %v705 = vunpack.c.l.b16 %v200
  %v706 = vunpack.c.h.b16 %v200
  %v707 = vunpack.c.l.b16 %v201
  %v708 = vunpack.c.l.b16 %v202
  %v709 = vunpack.c.h.b16 %v202
  %v710 = vunpack.c.l.b16 %v203
  %v711 = vunpack.c.l.b16 %v204
  %v712 = vunpack.c.h.b16 %v204
  %v713 = vunpack.c.l.b16 %v205
  %v714 = vunpack.c.l.b16 %v206
  %v715 = vunpack.c.h.b16 %v206
  %v716 = vunpack.c.l.b16 %v207
  %v717 = vunpack.c.l.b16 %v208
  %v718 = vunpack.c.h.b16 %v208
  %v719 = vunpack.c.l.b16 %v209
  %v720 = vunpack.c.l.b16 %v210
  %v721 = vunpack.c.h.b16 %v210
  %v722 = vunpack.c.l.b16 %v211
  %v723 = vunpack.c.l.b16 %v212
  %v724 = vunpack.c.h.b16 %v212
  %v725 = vunpack.c.l.b16 %v213
  %v726 = vunpack.c.l.b16 %v214
  %v727 = vunpack.c.h.b16 %v214
  %v728 = vunpack.c.l.b16 %v215
  %v729 = vunpack.c.l.b16 %v216
  %v730 = vunpack.c.h.b16 %v216
  %v731 = vunpack.c.l.b16 %v217
  %v732 = vunpack.c.l.b16 %v218
  %v733 = vunpack.c.h.b16 %v218
  %v734 = vunpack.c.l.b16 %v219
  %v735 = vunpack.c.l.b16 %v220
  %v736 = vunpack.c.h.b16 %v220
  %v737 = vunpack.c.l.b16 %v221
  %v738 = vunpack.c.l.b16 %v222
  %v739 = vunpack.c.h.b16 %v222
  %v740 = vunpack.c.l.b16 %v223
  %v741 = vunpack.c.l.b16 %v224
  %v742 = vunpack.c.h.b16 %v224
  %v743 = vunpack.c.l.b16 %v225
  %v744 = vunpack.c.l.b16 %v226
  %v745 = vunpack.c.h.b16 %v226
  %v746 = vunpack.c.l.b16 %v227
  %v747 = vunpack.c.l.b16 %v228
  %v748 = vunpack.c.h.b16 %v228
  %v749 = vunpack.c.l.b16 %v229
  %v750 = vunpack.c.l.b16 %v230
  %v751 = vunpack.c.h.b16 %v230
  %v752 = vunpack.c.l.b16 %v231
  %v753 = vunpack.c.l.b16 %v232
  %v754 = vunpack.c.h.b16 %v232
  %v755 = vunpack.c.l.b16 %v233
  %v756 = vunpack.c.l.b16 %v234
  %v757 = vunpack.c.h.b16 %v234
  %v758 = vunpack.c.l.b16 %v235
  %v759 = vunpack.c.l.b16 %v236
  %v760 = vunpack.c.h.b16 %v236
  %v761 = vunpack.c.l.b16 %v237
  %v762 = vunpack.c.l.b16 %v238
  %v763 = vunpack.c.h.b16 %v238
  %v764 = vunpack.c.l.b16 %v239
  %v765 = vunpack.c.l.b16 %v240
  %v766 = vunpack.c.h.b16 %v240
  %v767 = vunpack.c.l.b16 %v241
  %v768 = vunpack.c.l.b16 %v242
  %v769 = vunpack.c.h.b16 %v242
  %v770 = vunpack.c.l.b16 %v243
  %v771 = vunpack.c.l.b16 %v244
  %v772 = vunpack.c.h.b16 %v244
  %v773 = vunpack.c.l.b16 %v245
  %v774 = vunpack.c.l.b16 %v246
  %v775 = vunpack.c.h.b16 %v246
  %v776 = vunpack.c.l.b16 %v247
  %v777 = vunpack.c.l.b16 %v248
  %v778 = vunpack.c.h.b16 %v248
  %v779 = vunpack.c.l.b16 %v249
  %v780 = vunpack.c.l.b16 %v250
  %v781 = vunpack.c.h.b16 %v250
  %v782 = vunpack.c.l.b16 %v251
  %v783 = vunpack.c.l.b16 %v252
  %v784 = vunpack.c.h.b16 %v252
  %v785 = vunpack.c.l.b16 %v253
  %v786 = vunpack.c.l.b16 %v254
  %v787 = vunpack.c.h.b16 %v254
  %v788 = vunpack.c.l.b16 %v255
  %v789 = vunpack.c.l.b16 %v256
  %v790 = vunpack.c.h.b16 %v256
  %v791 = vunpack.c.l.b16 %v257
  %v792 = vunpack.c.l.b16 %v258
  %v793 = vunpack.c.h.b16 %v258
  %v794 = vunpack.c.l.b16 %v259
  %v795 = vunpack.c.l.b16 %v260
  %v796 = vunpack.c.h.b16 %v260
  %v797 = vunpack.c.l.b16 %v261
  %v798 = vunpack.c.l.b16 %v262
  %v799 = vunpack.c.h.b16 %v262
  %v800 = vunpack.c.l.b16 %v263
  %v801 = vunpack.c.l.b16 %v264
  %v802 = vunpack.c.h.b16 %v264
  %v803 = vunpack.c.l.b16 %v265
  %v804 = vunpack.c.l.b16 %v266
  %v805 = vunpack.c.h.b16 %v266
  %v806 = vunpack.c.l.b16 %v267
  %v807 = vunpack.c.l.b16 %v268
  %v808 = vunpack.c.h.b16 %v268
  %v809 = vunpack.c.l.b16 %v269
  %v810 = vunpack.c.l.b16 %v270
  %v811 = vunpack.c.h.b16 %v270
  %v812 = vunpack.c.l.b16 %v271
  %v813 = vunpack.c.l.b16 %v272
  %v814 = vunpack.c.h.b16 %v272
  %v815 = vunpack.c.l.b16 %v273
  %v816 = vpack.c.b16 %v525, %v522
  %v817 = vpack.c.b16 %v526, %v523
  %v818 = vpack.c.b16 %v527, %v524
  %v819 = vpack.c.b16 %v531, %v528
  %v820 = vpack.c.b16 %v532, %v529
  %v821 = vpack.c.b16 %v533, %v530
  %v822 = vpack.c.b16 %v537, %v534
  %v823 = vpack.c.b16 %v538, %v535
  %v824 = vpack.c.b16 %v539, %v536
  %v825 = vpack.c.b16 %v543, %v540
  %v826 = vpack.c.b16 %v544, %v541
  %v827 = vpack.c.b16 %v545, %v542
  %v828 = vpack.c.b16 %v549, %v546
  %v829 = vpack.c.b16 %v550, %v547
  %v830 = vpack.c.b16 %v551, %v548
  %v831 = vpack.c.b16 %v555, %v552
  %v832 = vpack.c.b16 %v556, %v553
  %v833 = vpack.c.b16 %v557, %v554
  %v834 = vpack.c.b16 %v561, %v558
  %v835 = vpack.c.b16 %v562, %v559
  %v836 = vpack.c.b16 %v563, %v560
  %v837 = vpack.c.b16 %v567, %v564
  %v838 = vpack.c.b16 %v568, %v565
  %v839 = vpack.c.b16 %v569, %v566
  %v840 = vpack.c.b16 %v573, %v570
  %v841 = vpack.c.b16 %v574, %v571
  %v842 = vpack.c.b16 %v575, %v572
  %v843 = vpack.c.b16 %v579, %v576
  %v844 = vpack.c.b16 %v580, %v577
  %v845 = vpack.c.b16 %v581, %v578
  %v846 = vpack.c.b16 %v585, %v582
  %v847 = vpack.c.b16 %v586, %v583
  %v848 = vpack.c.b16 %v587, %v584
  %v849 = vpack.c.b16 %v591, %v588
  %v850 = vpack.c.b16 %v592, %v589
  %v851 = vpack.c.b16 %v593, %v590
  %v852 = vpack.c.b16 %v597, %v594
  %v853 = vpack.c.b16 %v598, %v595
  %v854 = vpack.c.b16 %v599, %v596
  %v855 = vpack.c.b16 %v603, %v600
  %v856 = vpack.c.b16 %v604, %v601
  %v857 = vpack.c.b16 %v605, %v602
  %v858 = vpack.c.b16 %v609, %v606
  %v859 = vpack.c.b16 %v610, %v607
  %v860 = vpack.c.b16 %v611, %v608
  %v861 = vpack.c.b16 %v615, %v612
  %v862 = vpack.c.b16 %v616, %v613
  %v863 = vpack.c.b16 %v617, %v614
  %v864 = vpack.c.b16 %v621, %v618
  %v865 = vpack.c.b16 %v622, %v619
  %v866 = vpack.c.b16 %v623, %v620
  %v867 = vpack.c.b16 %v627, %v624
  %v868 = vpack.c.b16 %v628, %v625
  %v869 = vpack.c.b16 %v629, %v626
  %v870 = vpack.c.b16 %v633, %v630
  %v871 = vpack.c.b16 %v634, %v631
  %v872 = vpack.c.b16 %v635, %v632
  %v873 = vpack.c.b16 %v639, %v636
  %v874 = vpack.c.b16 %v640, %v637
  %v875 = vpack.c.b16 %v641, %v638
  %v876 = vpack.c.b16 %v645, %v642
  %v877 = vpack.c.b16 %v646, %v643
  %v878 = vpack.c.b16 %v647, %v644
  %v879 = vpack.c.b16 %v651, %v648
  %v880 = vpack.c.b16 %v652, %v649
  %v881 = vpack.c.b16 %v653, %v650
  %v882 = vpack.c.b16 %v657, %v654
  %v883 = vpack.c.b16 %v658, %v655
  %v884 = vpack.c.b16 %v659, %v656
  %v885 = vpack.c.b16 %v663, %v660
  %v886 = vpack.c.b16 %v664, %v661
  %v887 = vpack.c.b16 %v665, %v662
  %v888 = vpack.c.b16 %v669, %v666
  %v889 = vpack.c.b16 %v670, %v667
  %v890 = vpack.c.b16 %v671, %v668
  %v891 = vpack.c.b16 %v675, %v672
  %v892 = vpack.c.b16 %v676, %v673
  %v893 = vpack.c.b16 %v677, %v674
  %v894 = vpack.c.b16 %v681, %v678
  %v895 = vpack.c.b16 %v682, %v679
  %v896 = vpack.c.b16 %v683, %v680
  %v897 = vpack.c.b16 %v687, %v684
  %v898 = vpack.c.b16 %v688, %v685
  %v899 = vpack.c.b16 %v689, %v686
  %v900 = vpack.c.b16 %v693, %v690
  %v901 = vpack.c.b16 %v694, %v691
  %v902 = vpack.c.b16 %v695, %v692
  %v903 = vpack.c.b16 %v699, %v696
  %v904 = vpack.c.b16 %v700, %v697
  %v905 = vpack.c.b16 %v701, %v698
  %v906 = vpack.c.b16 %v705, %v702
  %v907 = vpack.c.b16 %v706, %v703
  %v908 = vpack.c.b16 %v707, %v704
  %v909 = vpack.c.b16 %v711, %v708
  %v910 = vpack.c.b16 %v712, %v709
  %v911 = vpack.c.b16 %v713, %v710
  %v912 = vpack.c.b16 %v717, %v714
  %v913 = vpack.c.b16 %v718, %v715
  %v914 = vpack.c.b16 %v719, %v716
  %v915 = vpack.c.b16 %v723, %v720
  %v916 = vpack.c.b16 %v724, %v721
  %v917 = vpack.c.b16 %v725, %v722
  %v918 = vpack.c.b16 %v729, %v726
  %v919 = vpack.c.b16 %v730, %v727
  %v920 = vpack.c.b16 %v731, %v728
  %v921 = vpack.c.b16 %v735, %v732
  %v922 = vpack.c.b16 %v736, %v733
  %v923 = vpack.c.b16 %v737, %v734
  %v924 = vpack.c.b16 %v741, %v738
  %v925 = vpack.c.b16 %v742, %v739
  %v926 = vpack.c.b16 %v743, %v740
  %v927 = vpack.c.b16 %v747, %v744
  %v928 = vpack.c.b16 %v748, %v745
  %v929 = vpack.c.b16 %v749, %v746
  %v930 = vpack.c.b16 %v753, %v750
  %v931 = vpack.c.b16 %v754, %v751
  %v932 = vpack.c.b16 %v755, %v752
  %v933 = vpack.c.b16 %v759, %v756
  %v934 = vpack.c.b16 %v760, %v757
  %v935 = vpack.c.b16 %v761, %v758
  %v936 = vpack.c.b16 %v765, %v762
  %v937 = vpack.c.b16 %v766, %v763
  %v938 = vpack.c.b16 %v767, %v764
  %v939 = vpack.c.b16 %v771, %v768
  %v940 = vpack.c.b16 %v772, %v769
  %v941 = vpack.c.b16 %v773, %v770
  %v942 = vpack.c.b16 %v777, %v774
  %v943 = vpack.c.b16 %v778, %v775
  %v944 = vpack.c.b16 %v779, %v776
  %v945 = vpack.c.b16 %v783, %v780
  %v946 = vpack.c.b16 %v784, %v781
  %v947 = vpack.c.b16 %v785, %v782
  %v948 = vpack.c.b16 %v789, %v786
  %v949 = vpack.c.b16 %v790, %v787
  %v950 = vpack.c.b16 %v791, %v788
  %v951 = vpack.c.b16 %v795, %v792
  %v952 = vpack.c.b16 %v796, %v793
  %v953 = vpack.c.b16 %v797, %v794
  %v954 = vpack.c.b16 %v801, %v798
  %v955 = vpack.c.b16 %v802, %v799
  %v956 = vpack.c.b16 %v803, %v800
  %v957 = vpack.c.b16 %v807, %v804
  %v958 = vpack.c.b16 %v808, %v805
  %v959 = vpack.c.b16 %v809, %v806
  %v960 = vpack.c.b16 %v813, %v810
  %v961 = vpack.c.b16 %v814, %v811
  %v962 = vpack.c.b16 %v815, %v812
  %vm1110 = vcmask 130048
  %v1112 = vsel %vm1110, %v319, 0
  %1114 = vmatprep.subr.bf16.mxu0 %v817
  %1115 = vmatpush1.bf16.msra.mxu0 %v816
  %1116 = vmatprep.subr.bf16.mxu0 %v820
  %1117 = vmatpush1.bf16.msra.mxu0 %v819
  %1118 = vmatprep.subr.bf16.mxu0 %v823
  %1119 = vmatpush1.bf16.msra.mxu0 %v822
  %1120 = vmatprep.subr.bf16.mxu0 %v826
  %1121 = vmatpush1.bf16.msra.mxu0 %v825
  %1122 = vmatprep.subr.bf16.mxu0 %v829
  %1123 = vmatpush1.bf16.msra.mxu0 %v828
  %1124 = vmatprep.subr.bf16.mxu0 %v832
  %1125 = vmatpush1.bf16.msra.mxu0 %v831
  %1126 = vmatprep.subr.bf16.mxu0 %v835
  %1127 = vmatpush1.bf16.msra.mxu0 %v834
  %1128 = vmatprep.subr.bf16.mxu0 %v838
  %1129 = vmatpush1.bf16.msra.mxu0 %v837
  %1130 = vmatprep.subr.bf16.mxu0 %v841
  %1131 = vmatpush1.bf16.msra.mxu0 %v840
  %1132 = vmatprep.subr.bf16.mxu0 %v844
  %1133 = vmatpush1.bf16.msra.mxu0 %v843
  %1134 = vmatprep.subr.bf16.mxu0 %v847
  %1135 = vmatpush1.bf16.msra.mxu0 %v846
  %1136 = vmatprep.subr.bf16.mxu0 %v850
  %1137 = vmatpush1.bf16.msra.mxu0 %v849
  %1138 = vmatprep.subr.bf16.mxu0 %v853
  %1139 = vmatpush1.bf16.msra.mxu0 %v852
  %1140 = vmatprep.subr.bf16.mxu0 %v856
  %1141 = vmatpush1.bf16.msra.mxu0 %v855
  %1142 = vmatprep.subr.bf16.mxu0 %v859
  %1143 = vmatpush1.bf16.msra.mxu0 %v858
  %1144 = vmatprep.subr.bf16.mxu0 %v862
  %1145 = vmatpush1.bf16.msra.mxu0 %v861
  %1146 = vmatprep.mubr.bf16.mxu0 %v314
  %1147 = vmatmul.mubr.bf16.gmra.mrb[0].mxu0 %v313
  %v1148 = vpop.f32.mrb[0].mxu0
  %v1149 = vadd.f32 %v279, %v1148
  %v1150 = vpop.f32.mrb[0].mxu0
  %v1151 = vadd.f32 %v283, %v1150
  %v1152 = vpop.f32.mrb[0].mxu0
  %v1153 = vadd.f32 %v279, %v1152
  %v1154 = vpop.f32.mrb[0].mxu0
  %v1155 = vadd.f32 %v283, %v1154
  %1156 = vdwg.mxu0
  %1157 = vmatprep.subr.bf16.mxu0 %v865
  %1158 = vmatpush1.bf16.msra.mxu0 %v864
  %1159 = vmatprep.subr.bf16.mxu0 %v868
  %1160 = vmatpush1.bf16.msra.mxu0 %v867
  %1161 = vmatprep.subr.bf16.mxu0 %v871
  %1162 = vmatpush1.bf16.msra.mxu0 %v870
  %1163 = vmatprep.subr.bf16.mxu0 %v874
  %1164 = vmatpush1.bf16.msra.mxu0 %v873
  %1165 = vmatprep.subr.bf16.mxu0 %v877
  %1166 = vmatpush1.bf16.msra.mxu0 %v876
  %1167 = vmatprep.subr.bf16.mxu0 %v880
  %1168 = vmatpush1.bf16.msra.mxu0 %v879
  %1169 = vmatprep.subr.bf16.mxu0 %v883
  %1170 = vmatpush1.bf16.msra.mxu0 %v882
  %1171 = vmatprep.subr.bf16.mxu0 %v886
  %1172 = vmatpush1.bf16.msra.mxu0 %v885
  %1173 = vmatprep.subr.bf16.mxu0 %v889
  %1174 = vmatpush1.bf16.msra.mxu0 %v888
  %1175 = vmatprep.subr.bf16.mxu0 %v892
  %1176 = vmatpush1.bf16.msra.mxu0 %v891
  %1177 = vmatprep.subr.bf16.mxu0 %v895
  %1178 = vmatpush1.bf16.msra.mxu0 %v894
  %1179 = vmatprep.subr.bf16.mxu0 %v898
  %1180 = vmatpush1.bf16.msra.mxu0 %v897
  %1181 = vmatprep.subr.bf16.mxu0 %v901
  %1182 = vmatpush1.bf16.msra.mxu0 %v900
  %1183 = vmatprep.subr.bf16.mxu0 %v904
  %1184 = vmatpush1.bf16.msra.mxu0 %v903
  %1185 = vmatprep.subr.bf16.mxu0 %v907
  %1186 = vmatpush1.bf16.msra.mxu0 %v906
  %1187 = vmatprep.subr.bf16.mxu0 %v910
  %1188 = vmatpush1.bf16.msra.mxu0 %v909
  %1189 = vmatprep.mubr.bf16.mxu0 %v316
  %1190 = vmatmul.mubr.bf16.gmra.mrb[0].mxu0 %v315
  %v1191 = vpop.f32.mrb[0].mxu0
  %v1192 = vadd.f32 %v1149, %v1191
  %v1193 = vpop.f32.mrb[0].mxu0
  %v1194 = vadd.f32 %v1151, %v1193
  %v1195 = vpop.f32.mrb[0].mxu0
  %v1196 = vadd.f32 %v1153, %v1195
  %v1197 = vpop.f32.mrb[0].mxu0
  %v1198 = vadd.f32 %v1155, %v1197
  %1199 = vdwg.mxu0
  %1200 = vmatprep.subr.bf16.mxu0 %v913
  %1201 = vmatpush1.bf16.msra.mxu0 %v912
  %1202 = vmatprep.subr.bf16.mxu0 %v916
  %1203 = vmatpush1.bf16.msra.mxu0 %v915
  %1204 = vmatprep.subr.bf16.mxu0 %v919
  %1205 = vmatpush1.bf16.msra.mxu0 %v918
  %1206 = vmatprep.subr.bf16.mxu0 %v922
  %1207 = vmatpush1.bf16.msra.mxu0 %v921
  %1208 = vmatprep.subr.bf16.mxu0 %v925
  %1209 = vmatpush1.bf16.msra.mxu0 %v924
  %1210 = vmatprep.subr.bf16.mxu0 %v928
  %1211 = vmatpush1.bf16.msra.mxu0 %v927
  %1212 = vmatprep.subr.bf16.mxu0 %v931
  %1213 = vmatpush1.bf16.msra.mxu0 %v930
  %1214 = vmatprep.subr.bf16.mxu0 %v934
  %1215 = vmatpush1.bf16.msra.mxu0 %v933
  %1216 = vmatprep.subr.bf16.mxu0 %v937
  %1217 = vmatpush1.bf16.msra.mxu0 %v936
  %1218 = vmatprep.subr.bf16.mxu0 %v940
  %1219 = vmatpush1.bf16.msra.mxu0 %v939
  %1220 = vmatprep.subr.bf16.mxu0 %v943
  %1221 = vmatpush1.bf16.msra.mxu0 %v942
  %1222 = vmatprep.subr.bf16.mxu0 %v946
  %1223 = vmatpush1.bf16.msra.mxu0 %v945
  %1224 = vmatprep.subr.bf16.mxu0 %v949
  %1225 = vmatpush1.bf16.msra.mxu0 %v948
  %1226 = vmatprep.subr.bf16.mxu0 %v952
  %1227 = vmatpush1.bf16.msra.mxu0 %v951
  %1228 = vmatprep.subr.bf16.mxu0 %v955
  %1229 = vmatpush1.bf16.msra.mxu0 %v954
  %1230 = vmatprep.subr.bf16.mxu0 %v958
  %1231 = vmatpush1.bf16.msra.mxu0 %v957
  %1232 = vmatprep.mubr.bf16.mxu0 %v318
  %1233 = vmatmul.mubr.bf16.gmra.mrb[0].mxu0 %v317
  %v1234 = vpop.f32.mrb[0].mxu0
  %v1235 = vadd.f32 %v1192, %v1234
  %v1236 = vpop.f32.mrb[0].mxu0
  %v1237 = vadd.f32 %v1194, %v1236
  %v1238 = vpop.f32.mrb[0].mxu0
  %v1239 = vadd.f32 %v1196, %v1238
  %v1240 = vpop.f32.mrb[0].mxu0
  %v1241 = vadd.f32 %v1198, %v1240
  %1242 = vdwg.mxu0
  %1243 = vmatprep.subr.bf16.mxu0 %v961
  %1244 = vmatpush1.bf16.msra.mxu0 %v960
  %1245 = vmatprep.subr.bf16.mxu0 0
  %1246 = vmatpush1.bf16.msra.mxu0 0
  %1247 = vmatprep.subr.bf16.mxu0 0
  %1248 = vmatpush1.bf16.msra.mxu0 0
  %1249 = vmatprep.subr.bf16.mxu0 0
  %1250 = vmatpush1.bf16.msra.mxu0 0
  %1251 = vmatprep.subr.bf16.mxu0 0
  %1252 = vmatpush1.bf16.msra.mxu0 0
  %1253 = vmatprep.subr.bf16.mxu0 0
  %1254 = vmatpush1.bf16.msra.mxu0 0
  %1255 = vmatprep.subr.bf16.mxu0 0
  %1256 = vmatpush1.bf16.msra.mxu0 0
  %1257 = vmatprep.subr.bf16.mxu0 0
  %1258 = vmatpush1.bf16.msra.mxu0 0
  %1259 = vmatprep.subr.bf16.mxu0 0
  %1260 = vmatpush1.bf16.msra.mxu0 0
  %1261 = vmatprep.subr.bf16.mxu0 0
  %1262 = vmatpush1.bf16.msra.mxu0 0
  %1263 = vmatprep.subr.bf16.mxu0 0
  %1264 = vmatpush1.bf16.msra.mxu0 0
  %1265 = vmatprep.subr.bf16.mxu0 0
  %1266 = vmatpush1.bf16.msra.mxu0 0
  %1267 = vmatprep.subr.bf16.mxu0 0
  %1268 = vmatpush1.bf16.msra.mxu0 0
  %1269 = vmatprep.subr.bf16.mxu0 0
  %1270 = vmatpush1.bf16.msra.mxu0 0
  %1271 = vmatprep.subr.bf16.mxu0 0
  %1272 = vmatpush1.bf16.msra.mxu0 0
  %1273 = vmatprep.subr.bf16.mxu0 0
  %1274 = vmatpush1.bf16.msra.mxu0 0
  %1275 = vmatprep.mubr.bf16.mxu0 0
  %1276 = vmatmul.mubr.bf16.gmra.mrb[0].mxu0 %v1112
  %v1277 = vpop.f32.mrb[0].mxu0
  %v1278 = vadd.f32 %v1235, %v1277
  %v1279 = vpop.f32.mrb[0].mxu0
  %v1280 = vadd.f32 %v1237, %v1279
  %v1281 = vpop.f32.mrb[0].mxu0
  %v1282 = vadd.f32 %v1239, %v1281
  %v1283 = vpop.f32.mrb[0].mxu0
  %v1284 = vadd.f32 %v1241, %v1283
  %1285 = vdwg.mxu0
  %1286 = vmatprep.subr.bf16.mxu0 0
  %1287 = vmatpush1.bf16.msra.mxu0 %v818
  %1288 = vmatprep.subr.bf16.mxu0 0
  %1289 = vmatpush1.bf16.msra.mxu0 %v821
  %1290 = vmatprep.subr.bf16.mxu0 0
  %1291 = vmatpush1.bf16.msra.mxu0 %v824
  %1292 = vmatprep.subr.bf16.mxu0 0
  %1293 = vmatpush1.bf16.msra.mxu0 %v827
  %1294 = vmatprep.subr.bf16.mxu0 0
  %1295 = vmatpush1.bf16.msra.mxu0 %v830
  %1296 = vmatprep.subr.bf16.mxu0 0
  %1297 = vmatpush1.bf16.msra.mxu0 %v833
  %1298 = vmatprep.subr.bf16.mxu0 0
  %1299 = vmatpush1.bf16.msra.mxu0 %v836
  %1300 = vmatprep.subr.bf16.mxu0 0
  %1301 = vmatpush1.bf16.msra.mxu0 %v839
  %1302 = vmatprep.subr.bf16.mxu0 0
  %1303 = vmatpush1.bf16.msra.mxu0 %v842
  %1304 = vmatprep.subr.bf16.mxu0 0
  %1305 = vmatpush1.bf16.msra.mxu0 %v845
  %1306 = vmatprep.subr.bf16.mxu0 0
  %1307 = vmatpush1.bf16.msra.mxu0 %v848
  %1308 = vmatprep.subr.bf16.mxu0 0
  %1309 = vmatpush1.bf16.msra.mxu0 %v851
  %1310 = vmatprep.subr.bf16.mxu0 0
  %1311 = vmatpush1.bf16.msra.mxu0 %v854
  %1312 = vmatprep.subr.bf16.mxu0 0
  %1313 = vmatpush1.bf16.msra.mxu0 %v857
  %1314 = vmatprep.subr.bf16.mxu0 0
  %1315 = vmatpush1.bf16.msra.mxu0 %v860
  %1316 = vmatprep.subr.bf16.mxu0 0
  %1317 = vmatpush1.bf16.msra.mxu0 %v863
  %1318 = vmatprep.mubr.bf16.mxu0 %v314
  %1319 = vmatmul.mubr.bf16.gmra.mrb[0].mxu0 %v313
  %v1320 = vpop.f32.mrb[0].mxu0
  %v1321 = vadd.f32 %v287, %v1320
  %v1322 = vpop.f32.mrb[0].mxu0
  %v1323 = vpop.f32.mrb[0].mxu0
  %v1324 = vadd.f32 %v287, %v1323
  %v1325 = vpop.f32.mrb[0].mxu0
  %1326 = vdwg.mxu0
  %1327 = vmatprep.subr.bf16.mxu0 0
  %1328 = vmatpush1.bf16.msra.mxu0 %v866
  %1329 = vmatprep.subr.bf16.mxu0 0
  %1330 = vmatpush1.bf16.msra.mxu0 %v869
  %1331 = vmatprep.subr.bf16.mxu0 0
  %1332 = vmatpush1.bf16.msra.mxu0 %v872
  %1333 = vmatprep.subr.bf16.mxu0 0
  %1334 = vmatpush1.bf16.msra.mxu0 %v875
  %1335 = vmatprep.subr.bf16.mxu0 0
  %1336 = vmatpush1.bf16.msra.mxu0 %v878
  %1337 = vmatprep.subr.bf16.mxu0 0
  %1338 = vmatpush1.bf16.msra.mxu0 %v881
  %1339 = vmatprep.subr.bf16.mxu0 0
  %1340 = vmatpush1.bf16.msra.mxu0 %v884
  %1341 = vmatprep.subr.bf16.mxu0 0
  %1342 = vmatpush1.bf16.msra.mxu0 %v887
  %1343 = vmatprep.subr.bf16.mxu0 0
  %1344 = vmatpush1.bf16.msra.mxu0 %v890
  %1345 = vmatprep.subr.bf16.mxu0 0
  %1346 = vmatpush1.bf16.msra.mxu0 %v893
  %1347 = vmatprep.subr.bf16.mxu0 0
  %1348 = vmatpush1.bf16.msra.mxu0 %v896
  %1349 = vmatprep.subr.bf16.mxu0 0
  %1350 = vmatpush1.bf16.msra.mxu0 %v899
  %1351 = vmatprep.subr.bf16.mxu0 0
  %1352 = vmatpush1.bf16.msra.mxu0 %v902
  %1353 = vmatprep.subr.bf16.mxu0 0
  %1354 = vmatpush1.bf16.msra.mxu0 %v905
  %1355 = vmatprep.subr.bf16.mxu0 0
  %1356 = vmatpush1.bf16.msra.mxu0 %v908
  %1357 = vmatprep.subr.bf16.mxu0 0
  %1358 = vmatpush1.bf16.msra.mxu0 %v911
  %1359 = vmatprep.mubr.bf16.mxu0 %v316
  %1360 = vmatmul.mubr.bf16.gmra.mrb[0].mxu0 %v315
  %v1361 = vpop.f32.mrb[0].mxu0
  %v1362 = vadd.f32 %v1321, %v1361
  %v1363 = vpop.f32.mrb[0].mxu0
  %v1364 = vpop.f32.mrb[0].mxu0
  %v1365 = vadd.f32 %v1324, %v1364
  %v1366 = vpop.f32.mrb[0].mxu0
  %1367 = vdwg.mxu0
  %1368 = vmatprep.subr.bf16.mxu0 0
  %1369 = vmatpush1.bf16.msra.mxu0 %v914
  %1370 = vmatprep.subr.bf16.mxu0 0
  %1371 = vmatpush1.bf16.msra.mxu0 %v917
  %1372 = vmatprep.subr.bf16.mxu0 0
  %1373 = vmatpush1.bf16.msra.mxu0 %v920
  %1374 = vmatprep.subr.bf16.mxu0 0
  %1375 = vmatpush1.bf16.msra.mxu0 %v923
  %1376 = vmatprep.subr.bf16.mxu0 0
  %1377 = vmatpush1.bf16.msra.mxu0 %v926
  %1378 = vmatprep.subr.bf16.mxu0 0
  %1379 = vmatpush1.bf16.msra.mxu0 %v929
  %1380 = vmatprep.subr.bf16.mxu0 0
  %1381 = vmatpush1.bf16.msra.mxu0 %v932
  %1382 = vmatprep.subr.bf16.mxu0 0
  %1383 = vmatpush1.bf16.msra.mxu0 %v935
  %1384 = vmatprep.subr.bf16.mxu0 0
  %1385 = vmatpush1.bf16.msra.mxu0 %v938
  %1386 = vmatprep.subr.bf16.mxu0 0
  %1387 = vmatpush1.bf16.msra.mxu0 %v941
  %1388 = vmatprep.subr.bf16.mxu0 0
  %1389 = vmatpush1.bf16.msra.mxu0 %v944
  %1390 = vmatprep.subr.bf16.mxu0 0
  %1391 = vmatpush1.bf16.msra.mxu0 %v947
  %1392 = vmatprep.subr.bf16.mxu0 0
  %1393 = vmatpush1.bf16.msra.mxu0 %v950
  %1394 = vmatprep.subr.bf16.mxu0 0
  %1395 = vmatpush1.bf16.msra.mxu0 %v953
  %1396 = vmatprep.subr.bf16.mxu0 0
  %1397 = vmatpush1.bf16.msra.mxu0 %v956
  %1398 = vmatprep.subr.bf16.mxu0 0
  %1399 = vmatpush1.bf16.msra.mxu0 %v959
  %1400 = vmatprep.mubr.bf16.mxu0 %v318
  %1401 = vmatmul.mubr.bf16.gmra.mrb[0].mxu0 %v317
  %v1402 = vpop.f32.mrb[0].mxu0
  %v1403 = vadd.f32 %v1362, %v1402
  %v1404 = vpop.f32.mrb[0].mxu0
  %v1405 = vpop.f32.mrb[0].mxu0
  %v1406 = vadd.f32 %v1365, %v1405
  %v1407 = vpop.f32.mrb[0].mxu0
  %1408 = vdwg.mxu0
  %1409 = vmatprep.subr.bf16.mxu0 0
  %1410 = vmatpush1.bf16.msra.mxu0 %v962
  %1411 = vmatprep.subr.bf16.mxu0 0
  %1412 = vmatpush1.bf16.msra.mxu0 0
  %1413 = vmatprep.subr.bf16.mxu0 0
  %1414 = vmatpush1.bf16.msra.mxu0 0
  %1415 = vmatprep.subr.bf16.mxu0 0
  %1416 = vmatpush1.bf16.msra.mxu0 0
  %1417 = vmatprep.subr.bf16.mxu0 0
  %1418 = vmatpush1.bf16.msra.mxu0 0
  %1419 = vmatprep.subr.bf16.mxu0 0
  %1420 = vmatpush1.bf16.msra.mxu0 0
  %1421 = vmatprep.subr.bf16.mxu0 0
  %1422 = vmatpush1.bf16.msra.mxu0 0
  %1423 = vmatprep.subr.bf16.mxu0 0
  %1424 = vmatpush1.bf16.msra.mxu0 0
  %1425 = vmatprep.subr.bf16.mxu0 0
  %1426 = vmatpush1.bf16.msra.mxu0 0
  %1427 = vmatprep.subr.bf16.mxu0 0
  %1428 = vmatpush1.bf16.msra.mxu0 0
  %1429 = vmatprep.subr.bf16.mxu0 0
  %1430 = vmatpush1.bf16.msra.mxu0 0
  %1431 = vmatprep.subr.bf16.mxu0 0
  %1432 = vmatpush1.bf16.msra.mxu0 0
  %1433 = vmatprep.subr.bf16.mxu0 0
  %1434 = vmatpush1.bf16.msra.mxu0 0
  %1435 = vmatprep.subr.bf16.mxu0 0
  %1436 = vmatpush1.bf16.msra.mxu0 0
  %1437 = vmatprep.subr.bf16.mxu0 0
  %1438 = vmatpush1.bf16.msra.mxu0 0
  %1439 = vmatprep.subr.bf16.mxu0 0
  %1440 = vmatpush1.bf16.msra.mxu0 0
  %1441 = vmatprep.mubr.bf16.mxu0 0
  %1442 = vmatmul.mubr.bf16.gmra.mrb[0].mxu0 %v1112
  %v1443 = vpop.f32.mrb[0].mxu0
  %v1444 = vadd.f32 %v1403, %v1443
  %v1445 = vpop.f32.mrb[0].mxu0
  %v1446 = vpop.f32.mrb[0].mxu0
  %v1447 = vadd.f32 %v1406, %v1446
  %v1448 = vpop.f32.mrb[0].mxu0
  %1449 = vdwg.mxu0
  %v1450 = vtanh.pop %v1278
  %v1451 = vtanh.pop %v1280
  %v1452 = vtanh.pop %v1444
  %v1453 = vtanh.pop %v1282
  %v1454 = vtanh.pop %v1284
  %v1455 = vtanh.pop %v1447
  %v1456 = vpack.c.bf16 %v1453, %v1450
  %v1457 = vpack.c.bf16 %v1454, %v1451
  %v1458 = vpack.c.bf16 %v1455, %v1452
  %v1459 = vld [vmem:[%s8] sm:$0xf]
  %v1460 = vld [vmem:[%s8 + $0x4] sm:$0xf]
  %v1461 = vld [vmem:[%s8 + $0x8] sm:$0xf]
  %v1462 = vld [vmem:[%s8 + $0xc] sm:$0xf]
  %v1463 = vld [vmem:[%s8 + $0x10] sm:$0xf]
  %v1464 = vld [vmem:[%s8 + $0x14] sm:$0xf]
  %v1465 = vld [vmem:[%s8 + $0x18] sm:$0xf]
  %v1466 = vld [vmem:[%s8 + $0x1c] sm:$0xf]
  %v1467 = vld [vmem:[%s8 + $0x20] sm:$0xf]
  %v1468 = vld [vmem:[%s8 + $0x24] sm:$0xf]
  %v1469 = vld [vmem:[%s8 + $0x28] sm:$0xf]
  %v1470 = vld [vmem:[%s8 + $0x2c] sm:$0xf]
  %v1471 = vld [vmem:[%s8 + $0x30] sm:$0xf]
  %v1472 = vld [vmem:[%s8 + $0x34] sm:$0xf]
  %v1473 = vld [vmem:[%s8 + $0x38] sm:$0xf]
  %v1474 = vld [vmem:[%s8 + $0x3c] sm:$0xf]
  %v1475 = vld [vmem:[%s8 + $0x40] sm:$0xf]
  %v1476 = vld [vmem:[%s8 + $0x44] sm:$0xf]
  %v1477 = vld [vmem:[%s8 + $0x48] sm:$0xf]
  %v1478 = vld [vmem:[%s8 + $0x4c] sm:$0xf]
  %v1479 = vld [vmem:[%s8 + $0x50] sm:$0xf]
  %v1480 = vld [vmem:[%s8 + $0x54] sm:$0xf]
  %v1481 = vld [vmem:[%s8 + $0x58] sm:$0xf]
  %v1482 = vld [vmem:[%s8 + $0x5c] sm:$0xf]
  %v1483 = vld [vmem:[%s8 + $0x60] sm:$0xf]
  %v1484 = vld [vmem:[%s8 + $0x64] sm:$0xf]
  %v1485 = vld [vmem:[%s8 + $0x68] sm:$0xf]
  %v1486 = vld [vmem:[%s8 + $0x6c] sm:$0xf]
  %v1487 = vld [vmem:[%s8 + $0x70] sm:$0xf]
  %v1488 = vld [vmem:[%s8 + $0x74] sm:$0xf]
  %v1489 = vld [vmem:[%s8 + $0x78] sm:$0xf]
  %v1490 = vld [vmem:[%s8 + $0x7c] sm:$0xf]
  %v1491 = vld [vmem:[%s8 + $0x80] sm:$0xf]
  %v1492 = vld [vmem:[%s8 + $0x84] sm:$0xf]
  %v1493 = vld [vmem:[%s8 + $0x88] sm:$0xf]
  %v1494 = vld [vmem:[%s8 + $0x8c] sm:$0xf]
  %v1495 = vld [vmem:[%s8 + $0x90] sm:$0xf]
  %v1496 = vld [vmem:[%s8 + $0x94] sm:$0x3]
  %v1497 = vld [vmem:[%s9] sm:$0x1]
  %v1499 = vlaneseq
  %v1500 = vshrl.u32 %v1499, 7
  %v1501 = vsub.s32 0, %v1500
  %v1502 = vrot.slane %v1497, %v1501
  %v1542 = vunpack.c.l.b16 %v1459
  %v1543 = vunpack.c.l.b16 %v1460
  %v1544 = vunpack.c.l.b16 %v1461
  %v1545 = vunpack.c.l.b16 %v1462
  %v1546 = vunpack.c.l.b16 %v1463
  %v1547 = vunpack.c.l.b16 %v1464
  %v1548 = vunpack.c.l.b16 %v1465
  %v1549 = vunpack.c.l.b16 %v1466
  %v1550 = vunpack.c.l.b16 %v1467
  %v1551 = vunpack.c.l.b16 %v1468
  %v1552 = vunpack.c.l.b16 %v1469
  %v1553 = vunpack.c.l.b16 %v1470
  %v1554 = vunpack.c.l.b16 %v1471
  %v1555 = vunpack.c.l.b16 %v1472
  %v1556 = vunpack.c.l.b16 %v1473
  %v1557 = vunpack.c.l.b16 %v1474
  %v1558 = vunpack.c.l.b16 %v1475
  %v1559 = vunpack.c.l.b16 %v1476
  %v1560 = vunpack.c.l.b16 %v1477
  %v1561 = vunpack.c.l.b16 %v1478
  %v1562 = vunpack.c.l.b16 %v1479
  %v1563 = vunpack.c.l.b16 %v1480
  %v1564 = vunpack.c.l.b16 %v1481
  %v1565 = vunpack.c.l.b16 %v1482
  %v1566 = vunpack.c.l.b16 %v1483
  %v1567 = vunpack.c.l.b16 %v1484
  %v1568 = vunpack.c.l.b16 %v1485
  %v1569 = vunpack.c.l.b16 %v1486
  %v1570 = vunpack.c.l.b16 %v1487
  %v1571 = vunpack.c.l.b16 %v1488
  %v1572 = vunpack.c.l.b16 %v1489
  %v1573 = vunpack.c.l.b16 %v1490
  %v1574 = vunpack.c.l.b16 %v1491
  %v1575 = vunpack.c.l.b16 %v1492
  %v1576 = vunpack.c.l.b16 %v1493
  %v1577 = vunpack.c.l.b16 %v1494
  %v1578 = vunpack.c.l.b16 %v1495
  %v1579 = vunpack.c.l.b16 %v1496
  %v1580 = vpack.c.b16 %v1543, %v1542
  %v1581 = vpack.c.b16 %v1545, %v1544
  %v1582 = vpack.c.b16 %v1547, %v1546
  %v1583 = vpack.c.b16 %v1549, %v1548
  %v1584 = vpack.c.b16 %v1551, %v1550
  %v1585 = vpack.c.b16 %v1553, %v1552
  %v1586 = vpack.c.b16 %v1555, %v1554
  %v1587 = vpack.c.b16 %v1557, %v1556
  %v1588 = vpack.c.b16 %v1559, %v1558
  %v1589 = vpack.c.b16 %v1561, %v1560
  %v1590 = vpack.c.b16 %v1563, %v1562
  %v1591 = vpack.c.b16 %v1565, %v1564
  %v1592 = vpack.c.b16 %v1567, %v1566
  %v1593 = vpack.c.b16 %v1569, %v1568
  %v1594 = vpack.c.b16 %v1571, %v1570
  %v1595 = vpack.c.b16 %v1573, %v1572
  %v1596 = vpack.c.b16 %v1575, %v1574
  %v1597 = vpack.c.b16 %v1577, %v1576
  %v1598 = vpack.c.b16 %v1579, %v1578
  %vm1617 = vcmask 359424
  %v1619 = vsel %vm1617, %v1458, 0
  %vm1621 = vcmask 1045504
  %v1623 = vsel %vm1621, %v1598, 0
  %1625 = vmatprep.subr.bf16.mxu0 0
  %1626 = vmatpush1.bf16.msra.mxu0 %v1580
  %1627 = vmatprep.subr.bf16.mxu0 0
  %1628 = vmatpush1.bf16.msra.mxu0 %v1581
  %1629 = vmatprep.subr.bf16.mxu0 0
  %1630 = vmatpush1.bf16.msra.mxu0 %v1582
  %1631 = vmatprep.subr.bf16.mxu0 0
  %1632 = vmatpush1.bf16.msra.mxu0 %v1583
  %1633 = vmatprep.subr.bf16.mxu0 0
  %1634 = vmatpush1.bf16.msra.mxu0 %v1584
  %1635 = vmatprep.subr.bf16.mxu0 0
  %1636 = vmatpush1.bf16.msra.mxu0 %v1585
  %1637 = vmatprep.subr.bf16.mxu0 0
  %1638 = vmatpush1.bf16.msra.mxu0 %v1586
  %1639 = vmatprep.subr.bf16.mxu0 0
  %1640 = vmatpush1.bf16.msra.mxu0 %v1587
  %1641 = vmatprep.subr.bf16.mxu0 0
  %1642 = vmatpush1.bf16.msra.mxu0 %v1588
  %1643 = vmatprep.subr.bf16.mxu0 0
  %1644 = vmatpush1.bf16.msra.mxu0 %v1589
  %1645 = vmatprep.subr.bf16.mxu0 0
  %1646 = vmatpush1.bf16.msra.mxu0 %v1590
  %1647 = vmatprep.subr.bf16.mxu0 0
  %1648 = vmatpush1.bf16.msra.mxu0 %v1591
  %1649 = vmatprep.subr.bf16.mxu0 0
  %1650 = vmatpush1.bf16.msra.mxu0 %v1592
  %1651 = vmatprep.subr.bf16.mxu0 0
  %1652 = vmatpush1.bf16.msra.mxu0 %v1593
  %1653 = vmatprep.subr.bf16.mxu0 0
  %1654 = vmatpush1.bf16.msra.mxu0 %v1594
  %1655 = vmatprep.subr.bf16.mxu0 0
  %1656 = vmatpush1.bf16.msra.mxu0 %v1595
  %1657 = vmatprep.mubr.bf16.mxu0 %v1457
  %1658 = vmatmul.mubr.bf16.gmra.mrb[0].mxu0 %v1456
  %v1659 = vpop.f32.mrb[0].mxu0
  %v1660 = vadd.f32 %v1502, %v1659
  %v1661 = vpop.f32.mrb[0].mxu0
  %v1662 = vpop.f32.mrb[0].mxu0
  %v1663 = vadd.f32 %v1502, %v1662
  %v1664 = vpop.f32.mrb[0].mxu0
  %1665 = vdwg.mxu0
  %1666 = vmatprep.subr.bf16.mxu0 0
  %1667 = vmatpush1.bf16.msra.mxu0 %v1596
  %1668 = vmatprep.subr.bf16.mxu0 0
  %1669 = vmatpush1.bf16.msra.mxu0 %v1597
  %1670 = vmatprep.subr.bf16.mxu0 0
  %1671 = vmatpush1.bf16.msra.mxu0 %v1623
  %1672 = vmatprep.subr.bf16.mxu0 0
  %1673 = vmatpush1.bf16.msra.mxu0 0
  %1674 = vmatprep.subr.bf16.mxu0 0
  %1675 = vmatpush1.bf16.msra.mxu0 0
  %1676 = vmatprep.subr.bf16.mxu0 0
  %1677 = vmatpush1.bf16.msra.mxu0 0
  %1678 = vmatprep.subr.bf16.mxu0 0
  %1679 = vmatpush1.bf16.msra.mxu0 0
  %1680 = vmatprep.subr.bf16.mxu0 0
  %1681 = vmatpush1.bf16.msra.mxu0 0
  %1682 = vmatprep.subr.bf16.mxu0 0
  %1683 = vmatpush1.bf16.msra.mxu0 0
  %1684 = vmatprep.subr.bf16.mxu0 0
  %1685 = vmatpush1.bf16.msra.mxu0 0
  %1686 = vmatprep.subr.bf16.mxu0 0
  %1687 = vmatpush1.bf16.msra.mxu0 0
  %1688 = vmatprep.subr.bf16.mxu0 0
  %1689 = vmatpush1.bf16.msra.mxu0 0
  %1690 = vmatprep.subr.bf16.mxu0 0
  %1691 = vmatpush1.bf16.msra.mxu0 0
  %1692 = vmatprep.subr.bf16.mxu0 0
  %1693 = vmatpush1.bf16.msra.mxu0 0
  %1694 = vmatprep.subr.bf16.mxu0 0
  %1695 = vmatpush1.bf16.msra.mxu0 0
  %1696 = vmatprep.subr.bf16.mxu0 0
  %1697 = vmatpush1.bf16.msra.mxu0 0
  %1698 = vmatprep.mubr.bf16.mxu0 0
  %1699 = vmatmul.mubr.bf16.gmra.mrb[0].mxu0 %v1619
  %v1700 = vpop.f32.mrb[0].mxu0
  %v1701 = vadd.f32 %v1660, %v1700
  %v1702 = vpop.f32.mrb[0].mxu0
  %v1703 = vpop.f32.mrb[0].mxu0
  %v1704 = vadd.f32 %v1663, %v1703
  %v1705 = vpop.f32.mrb[0].mxu0
  %1706 = vdwg.mxu0
  %v1707 = vtanh.pop %v1701
  %v1708 = vtanh.pop %v1704
  %v1709 = vpack.c.bf16 %v1708, %v1707
  %v1710 = vld [vmem:[%s10] sm:$0xf]
  %v1711 = vld [vmem:[%s10 + $0x4] sm:$0xf]
  %v1712 = vld [vmem:[%s10 + $0x8] sm:$0xf]
  %v1713 = vld [vmem:[%s10 + $0xc] sm:$0xf]
  %v1714 = vld [vmem:[%s10 + $0x10] sm:$0xf]
  %v1715 = vld [vmem:[%s10 + $0x14] sm:$0xf]
  %v1716 = vld [vmem:[%s10 + $0x18] sm:$0xf]
  %v1717 = vld [vmem:[%s10 + $0x1c] sm:$0xf]
  %v1718 = vld [vmem:[%s10 + $0x20] sm:$0xf]
  %v1719 = vld [vmem:[%s10 + $0x24] sm:$0xf]
  %v1720 = vld [vmem:[%s10 + $0x28] sm:$0xf]
  %v1721 = vld [vmem:[%s10 + $0x2c] sm:$0xf]
  %v1722 = vld [vmem:[%s10 + $0x30] sm:$0x3]
  %v1723 = vld [vmem:[%s11] sm:$0x1]
  %v1725 = vlaneseq
  %v1726 = vshrl.u32 %v1725, 7
  %v1727 = vsub.s32 0, %v1726
  %v1728 = vrot.slane %v1723, %v1727
  %v1743 = vunpack.c.l.b16 %v1710
  %v1744 = vunpack.c.l.b16 %v1711
  %v1745 = vunpack.c.l.b16 %v1712
  %v1746 = vunpack.c.l.b16 %v1713
  %v1747 = vunpack.c.l.b16 %v1714
  %v1748 = vunpack.c.l.b16 %v1715
  %v1749 = vunpack.c.l.b16 %v1716
  %v1750 = vunpack.c.l.b16 %v1717
  %v1751 = vunpack.c.l.b16 %v1718
  %v1752 = vunpack.c.l.b16 %v1719
  %v1753 = vunpack.c.l.b16 %v1720
  %v1754 = vunpack.c.l.b16 %v1721
  %v1755 = vunpack.c.l.b16 %v1722
  %v1756 = vpack.c.b16 %v1744, %v1743
  %v1757 = vpack.c.b16 %v1746, %v1745
  %v1758 = vpack.c.b16 %v1748, %v1747
  %v1759 = vpack.c.b16 %v1750, %v1749
  %v1760 = vpack.c.b16 %v1752, %v1751
  %v1761 = vpack.c.b16 %v1754, %v1753
  %v1762 = vpack.c.b16 %v1755, %v1755
  %vm1769 = vcmask 818176
  %v1771 = vsel %vm1769, %v1709, 0
  %vm1773 = vcmask 1041408
  %v1775 = vsel %vm1773, %v1762, 0
  %1777 = vmatprep.subr.bf16.mxu0 0
  %1778 = vmatpush1.bf16.msra.mxu0 %v1756
  %1779 = vmatprep.subr.bf16.mxu0 0
  %1780 = vmatpush1.bf16.msra.mxu0 %v1757
  %1781 = vmatprep.subr.bf16.mxu0 0
  %1782 = vmatpush1.bf16.msra.mxu0 %v1758
  %1783 = vmatprep.subr.bf16.mxu0 0
  %1784 = vmatpush1.bf16.msra.mxu0 %v1759
  %1785 = vmatprep.subr.bf16.mxu0 0
  %1786 = vmatpush1.bf16.msra.mxu0 %v1760
  %1787 = vmatprep.subr.bf16.mxu0 0
  %1788 = vmatpush1.bf16.msra.mxu0 %v1761
  %1789 = vmatprep.subr.bf16.mxu0 0
  %1790 = vmatpush1.bf16.msra.mxu0 %v1775
  %1791 = vmatprep.subr.bf16.mxu0 0
  %1792 = vmatpush1.bf16.msra.mxu0 0
  %1793 = vmatprep.subr.bf16.mxu0 0
  %1794 = vmatpush1.bf16.msra.mxu0 0
  %1795 = vmatprep.subr.bf16.mxu0 0
  %1796 = vmatpush1.bf16.msra.mxu0 0
  %1797 = vmatprep.subr.bf16.mxu0 0
  %1798 = vmatpush1.bf16.msra.mxu0 0
  %1799 = vmatprep.subr.bf16.mxu0 0
  %1800 = vmatpush1.bf16.msra.mxu0 0
  %1801 = vmatprep.subr.bf16.mxu0 0
  %1802 = vmatpush1.bf16.msra.mxu0 0
  %1803 = vmatprep.subr.bf16.mxu0 0
  %1804 = vmatpush1.bf16.msra.mxu0 0
  %1805 = vmatprep.subr.bf16.mxu0 0
  %1806 = vmatpush1.bf16.msra.mxu0 0
  %1807 = vmatprep.subr.bf16.mxu0 0
  %1808 = vmatpush1.bf16.msra.mxu0 0
  %1809 = vmatprep.mubr.bf16.mxu0 0
  %1810 = vmatmul.mubr.bf16.gmra.mrb[0].mxu0 %v1771
  %v1811 = vpop.f32.mrb[0].mxu0
  %v1812 = vadd.f32 %v1728, %v1811
  %v1813 = vpop.f32.mrb[0].mxu0
  %v1814 = vpop.f32.mrb[0].mxu0
  %v1815 = vadd.f32 %v1728, %v1814
  %v1816 = vpop.f32.mrb[0].mxu0
  %1817 = vdwg.mxu0
  %v1818 = vxor.u32 %v1812, 2147483648
  %v1819 = vxor.u32 %v1815, 2147483648
  %v1820 = vmul.f32 %v1818, 1.442695
  %v1821 = vpow.pop %v1820
  %v1822 = vmul.f32 %v1819, 1.442695
  %v1823 = vpow.pop %v1822
  %v1824 = vadd.f32 %v1821, 1.0
  %v1825 = vadd.f32 %v1823, 1.0
  %v1826 = vrcp.pop %v1824
  %v1827 = vmul.f32 1.0, %v1826
  %v1828 = vrcp.pop %v1825
  %v1829 = vmul.f32 1.0, %v1828
  %v1830 = vmax.f32 %v1827, 1e-07
  %v1831 = vmax.f32 %v1829, 1e-07
  %v1832 = vmin.f32 %v1830, 0.9999999
  %v1833 = vmin.f32 %v1831, 0.9999999
  %v1834 = vlog2.pop %v1832
  %v1835 = vmul.f32 %v1834, 0.6931472
  %v1836 = vlog2.pop %v1833
  %v1837 = vmul.f32 %v1836, 0.6931472
  %v1838 = vsub.f32 1.0, %v1832
  %v1839 = vsub.f32 1.0, %v1833
  %v1840 = vlog2.pop %v1838
  %v1841 = vmul.f32 %v1840, 0.6931472
  %v1842 = vlog2.pop %v1839
  %v1843 = vmul.f32 %v1842, 0.6931472
  %v1844 = vld [vmem:[%s2] sm:$0xff]
  %v1845 = vld [vmem:[%s2 + $0x8] sm:$0xff]
  %v1846 = vld [vmem:[%s2 + $0x10] sm:$0xff]
  %v1847 = vld [vmem:[%s2 + $0x18] sm:$0xff]
  %v1848 = vld [vmem:[%s2 + $0x20] sm:$0xff]
  %v1849 = vld [vmem:[%s2 + $0x28] sm:$0xff]
  %v1850 = vld [vmem:[%s2 + $0x30] sm:$0xff]
  %v1851 = vld [vmem:[%s2 + $0x38] sm:$0xff]
  %v1852 = vld [vmem:[%s2 + $0x40] sm:$0xff]
  %v1853 = vld [vmem:[%s2 + $0x48] sm:$0xff]
  %v1854 = vld [vmem:[%s2 + $0x50] sm:$0xff]
  %v1855 = vld [vmem:[%s2 + $0x58] sm:$0xff]
  %v1856 = vld [vmem:[%s2 + $0x60] sm:$0x3f]
  %v1857 = vld [vmem:[%s2 + $0x68] sm:$0x3f]
  %v1858 = vld [vmem:[%s2 + $0x70] sm:$0x3f]
  %v1859 = vld [vmem:[%s2 + $0x78] sm:$0x3f]
  %v1860 = vld [vmem:[%s3] sm:$0xff]
  %v1861 = vld [vmem:[%s3 + $0x8] sm:$0xff]
  %v1862 = vld [vmem:[%s3 + $0x10] sm:$0xff]
  %v1863 = vld [vmem:[%s3 + $0x18] sm:$0xff]
  %v1864 = vld [vmem:[%s3 + $0x20] sm:$0xff]
  %v1865 = vld [vmem:[%s3 + $0x28] sm:$0xff]
  %v1866 = vld [vmem:[%s3 + $0x30] sm:$0xff]
  %v1867 = vld [vmem:[%s3 + $0x38] sm:$0xff]
  %v1868 = vld [vmem:[%s3 + $0x40] sm:$0xff]
  %v1869 = vld [vmem:[%s3 + $0x48] sm:$0xff]
  %v1870 = vld [vmem:[%s3 + $0x50] sm:$0xff]
  %v1871 = vld [vmem:[%s3 + $0x58] sm:$0xff]
  %v1872 = vld [vmem:[%s3 + $0x60] sm:$0x3f]
  %v1873 = vld [vmem:[%s3 + $0x68] sm:$0x3f]
  %v1874 = vld [vmem:[%s3 + $0x70] sm:$0x3f]
  %v1875 = vld [vmem:[%s3 + $0x78] sm:$0x3f]
  %vm1876 = vcmask 244736
  %v1878 = vsel %vm1876, %v1841, 0
  %v1881 = vsel %vm1876, %v1843, 0
  %v1884 = vsel %vm1621, %v1872, 0
  %v1887 = vsel %vm1621, %v1873, 0
  %v1890 = vsel %vm1621, %v1874, 0
  %v1893 = vsel %vm1621, %v1875, 0
  %1895 = vmatprep.subr.mxu0 %v1861
  %1896 = vmatpush1.msra.mxu0 %v1860
  %1897 = vmatprep.subr.mxu0 %v1865
  %1898 = vmatpush1.msra.mxu0 %v1864
  %1899 = vmatprep.subr.mxu0 %v1869
  %1900 = vmatpush1.msra.mxu0 %v1868
  %1901 = vmatprep.subr.mxu0 %v1887
  %1902 = vmatpush1.msra.mxu0 %v1884
  %1903 = vmatprep.subr.mxu0 0.0
  %1904 = vmatpush1.msra.mxu0 0.0
  %1905 = vmatprep.subr.mxu0 0.0
  %1906 = vmatpush1.msra.mxu0 0.0
  %1907 = vmatprep.subr.mxu0 0.0
  %1908 = vmatpush1.msra.mxu0 0.0
  %1909 = vmatprep.subr.mxu0 0.0
  %1910 = vmatpush1.msra.mxu0 0.0
  %1911 = vmatprep.subr.mxu0 0.0
  %1912 = vmatpush1.msra.mxu0 0.0
  %1913 = vmatprep.subr.mxu0 0.0
  %1914 = vmatpush1.msra.mxu0 0.0
  %1915 = vmatprep.subr.mxu0 0.0
  %1916 = vmatpush1.msra.mxu0 0.0
  %1917 = vmatprep.subr.mxu0 0.0
  %1918 = vmatpush1.msra.mxu0 0.0
  %1919 = vmatprep.subr.mxu0 0.0
  %1920 = vmatpush1.msra.mxu0 0.0
  %1921 = vmatprep.subr.mxu0 0.0
  %1922 = vmatpush1.msra.mxu0 0.0
  %1923 = vmatprep.subr.mxu0 0.0
  %1924 = vmatpush1.msra.mxu0 0.0
  %1925 = vmatprep.subr.mxu0 0.0
  %1926 = vmatpush1.msra.mxu0 0.0
  %1927 = vmatprep.subr.mxu0 0.0
  %1928 = vmatpush1.msra.mxu0 0.0
  %1929 = vmatprep.subr.mxu0 0.0
  %1930 = vmatpush1.msra.mxu0 0.0
  %1931 = vmatprep.subr.mxu0 0.0
  %1932 = vmatpush1.msra.mxu0 0.0
  %1933 = vmatprep.subr.mxu0 0.0
  %1934 = vmatpush1.msra.mxu0 0.0
  %1935 = vmatprep.subr.mxu0 0.0
  %1936 = vmatpush1.msra.mxu0 0.0
  %1937 = vmatprep.subr.mxu0 0.0
  %1938 = vmatpush1.msra.mxu0 0.0
  %1939 = vmatprep.subr.mxu0 0.0
  %1940 = vmatpush1.msra.mxu0 0.0
  %1941 = vmatprep.subr.mxu0 0.0
  %1942 = vmatpush1.msra.mxu0 0.0
  %1943 = vmatprep.subr.mxu0 0.0
  %1944 = vmatpush1.msra.mxu0 0.0
  %1945 = vmatprep.subr.mxu0 0.0
  %1946 = vmatpush1.msra.mxu0 0.0
  %1947 = vmatprep.subr.mxu0 0.0
  %1948 = vmatpush1.msra.mxu0 0.0
  %1949 = vmatprep.subr.mxu0 0.0
  %1950 = vmatpush1.msra.mxu0 0.0
  %1951 = vmatprep.subr.mxu0 0.0
  %1952 = vmatpush1.msra.mxu0 0.0
  %1953 = vmatprep.subr.mxu0 0.0
  %1954 = vmatpush1.msra.mxu0 0.0
  %1955 = vmatprep.subr.mxu0 0.0
  %1956 = vmatpush1.msra.mxu0 0.0
  %1957 = vmatprep.subr.mxu0 0.0
  %1958 = vmatpush1.msra.mxu0 0.0
  %1959 = vmatprep.mubr.f32.mxu0 0.0
  %1960 = vmatmul.mubr.f32.gmra.mrb[0].mxu0 %v1878
  %v1961 = vpop.f32.mrb[0].mxu0
  %v1962 = vadd.f32 0.0, %v1961
  %v1963 = vpop.f32.mrb[0].mxu0
  %v1964 = vadd.f32 0.0, %v1963
  %1965 = vmatprep.mubr.f32.mxu0 0.0
  %1966 = vmatmul.mubr.f32.gmra.mrb[0].mxu0 %v1881
  %v1967 = vpop.f32.mrb[0].mxu0
  %v1968 = vadd.f32 0.0, %v1967
  %v1969 = vpop.f32.mrb[0].mxu0
  %v1970 = vadd.f32 0.0, %v1969
  %1971 = vdwg.mxu0
  %1972 = vmatprep.subr.mxu0 %v1863
  %1973 = vmatpush1.msra.mxu0 %v1862
  %1974 = vmatprep.subr.mxu0 %v1867
  %1975 = vmatpush1.msra.mxu0 %v1866
  %1976 = vmatprep.subr.mxu0 %v1871
  %1977 = vmatpush1.msra.mxu0 %v1870
  %1978 = vmatprep.subr.mxu0 %v1893
  %1979 = vmatpush1.msra.mxu0 %v1890
  %1980 = vmatprep.subr.mxu0 0.0
  %1981 = vmatpush1.msra.mxu0 0.0
  %1982 = vmatprep.subr.mxu0 0.0
  %1983 = vmatpush1.msra.mxu0 0.0
  %1984 = vmatprep.subr.mxu0 0.0
  %1985 = vmatpush1.msra.mxu0 0.0
  %1986 = vmatprep.subr.mxu0 0.0
  %1987 = vmatpush1.msra.mxu0 0.0
  %1988 = vmatprep.subr.mxu0 0.0
  %1989 = vmatpush1.msra.mxu0 0.0
  %1990 = vmatprep.subr.mxu0 0.0
  %1991 = vmatpush1.msra.mxu0 0.0
  %1992 = vmatprep.subr.mxu0 0.0
  %1993 = vmatpush1.msra.mxu0 0.0
  %1994 = vmatprep.subr.mxu0 0.0
  %1995 = vmatpush1.msra.mxu0 0.0
  %1996 = vmatprep.subr.mxu0 0.0
  %1997 = vmatpush1.msra.mxu0 0.0
  %1998 = vmatprep.subr.mxu0 0.0
  %1999 = vmatpush1.msra.mxu0 0.0
  %2000 = vmatprep.subr.mxu0 0.0
  %2001 = vmatpush1.msra.mxu0 0.0
  %2002 = vmatprep.subr.mxu0 0.0
  %2003 = vmatpush1.msra.mxu0 0.0
  %2004 = vmatprep.subr.mxu0 0.0
  %2005 = vmatpush1.msra.mxu0 0.0
  %2006 = vmatprep.subr.mxu0 0.0
  %2007 = vmatpush1.msra.mxu0 0.0
  %2008 = vmatprep.subr.mxu0 0.0
  %2009 = vmatpush1.msra.mxu0 0.0
  %2010 = vmatprep.subr.mxu0 0.0
  %2011 = vmatpush1.msra.mxu0 0.0
  %2012 = vmatprep.subr.mxu0 0.0
  %2013 = vmatpush1.msra.mxu0 0.0
  %2014 = vmatprep.subr.mxu0 0.0
  %2015 = vmatpush1.msra.mxu0 0.0
  %2016 = vmatprep.subr.mxu0 0.0
  %2017 = vmatpush1.msra.mxu0 0.0
  %2018 = vmatprep.subr.mxu0 0.0
  %2019 = vmatpush1.msra.mxu0 0.0
  %2020 = vmatprep.subr.mxu0 0.0
  %2021 = vmatpush1.msra.mxu0 0.0
  %2022 = vmatprep.subr.mxu0 0.0
  %2023 = vmatpush1.msra.mxu0 0.0
  %2024 = vmatprep.subr.mxu0 0.0
  %2025 = vmatpush1.msra.mxu0 0.0
  %2026 = vmatprep.subr.mxu0 0.0
  %2027 = vmatpush1.msra.mxu0 0.0
  %2028 = vmatprep.subr.mxu0 0.0
  %2029 = vmatpush1.msra.mxu0 0.0
  %2030 = vmatprep.subr.mxu0 0.0
  %2031 = vmatpush1.msra.mxu0 0.0
  %2032 = vmatprep.subr.mxu0 0.0
  %2033 = vmatpush1.msra.mxu0 0.0
  %2034 = vmatprep.subr.mxu0 0.0
  %2035 = vmatpush1.msra.mxu0 0.0
  %2036 = vmatprep.mubr.f32.mxu0 0.0
  %2037 = vmatmul.mubr.f32.gmra.mrb[0].mxu0 %v1878
  %v2038 = vpop.f32.mrb[0].mxu0
  %v2039 = vadd.f32 0.0, %v2038
  %v2040 = vpop.f32.mrb[0].mxu0
  %v2041 = vadd.f32 0.0, %v2040
  %2042 = vmatprep.mubr.f32.mxu0 0.0
  %2043 = vmatmul.mubr.f32.gmra.mrb[0].mxu0 %v1881
  %v2044 = vpop.f32.mrb[0].mxu0
  %v2045 = vadd.f32 0.0, %v2044
  %v2046 = vpop.f32.mrb[0].mxu0
  %v2047 = vadd.f32 0.0, %v2046
  %2048 = vdwg.mxu0
  %v2050 = vsel %vm1876, %v1835, 0
  %v2053 = vsel %vm1876, %v1837, 0
  %v2056 = vsel %vm1621, %v1856, 0
  %v2059 = vsel %vm1621, %v1857, 0
  %v2062 = vsel %vm1621, %v1858, 0
  %v2065 = vsel %vm1621, %v1859, 0
  %2067 = vmatprep.subr.mxu0 %v1845
  %2068 = vmatpush1.msra.mxu0 %v1844
  %2069 = vmatprep.subr.mxu0 %v1849
  %2070 = vmatpush1.msra.mxu0 %v1848
  %2071 = vmatprep.subr.mxu0 %v1853
  %2072 = vmatpush1.msra.mxu0 %v1852
  %2073 = vmatprep.subr.mxu0 %v2059
  %2074 = vmatpush1.msra.mxu0 %v2056
  %2075 = vmatprep.subr.mxu0 0.0
  %2076 = vmatpush1.msra.mxu0 0.0
  %2077 = vmatprep.subr.mxu0 0.0
  %2078 = vmatpush1.msra.mxu0 0.0
  %2079 = vmatprep.subr.mxu0 0.0
  %2080 = vmatpush1.msra.mxu0 0.0
  %2081 = vmatprep.subr.mxu0 0.0
  %2082 = vmatpush1.msra.mxu0 0.0
  %2083 = vmatprep.subr.mxu0 0.0
  %2084 = vmatpush1.msra.mxu0 0.0
  %2085 = vmatprep.subr.mxu0 0.0
  %2086 = vmatpush1.msra.mxu0 0.0
  %2087 = vmatprep.subr.mxu0 0.0
  %2088 = vmatpush1.msra.mxu0 0.0
  %2089 = vmatprep.subr.mxu0 0.0
  %2090 = vmatpush1.msra.mxu0 0.0
  %2091 = vmatprep.subr.mxu0 0.0
  %2092 = vmatpush1.msra.mxu0 0.0
  %2093 = vmatprep.subr.mxu0 0.0
  %2094 = vmatpush1.msra.mxu0 0.0
  %2095 = vmatprep.subr.mxu0 0.0
  %2096 = vmatpush1.msra.mxu0 0.0
  %2097 = vmatprep.subr.mxu0 0.0
  %2098 = vmatpush1.msra.mxu0 0.0
  %2099 = vmatprep.subr.mxu0 0.0
  %2100 = vmatpush1.msra.mxu0 0.0
  %2101 = vmatprep.subr.mxu0 0.0
  %2102 = vmatpush1.msra.mxu0 0.0
  %2103 = vmatprep.subr.mxu0 0.0
  %2104 = vmatpush1.msra.mxu0 0.0
  %2105 = vmatprep.subr.mxu0 0.0
  %2106 = vmatpush1.msra.mxu0 0.0
  %2107 = vmatprep.subr.mxu0 0.0
  %2108 = vmatpush1.msra.mxu0 0.0
  %2109 = vmatprep.subr.mxu0 0.0
  %2110 = vmatpush1.msra.mxu0 0.0
  %2111 = vmatprep.subr.mxu0 0.0
  %2112 = vmatpush1.msra.mxu0 0.0
  %2113 = vmatprep.subr.mxu0 0.0
  %2114 = vmatpush1.msra.mxu0 0.0
  %2115 = vmatprep.subr.mxu0 0.0
  %2116 = vmatpush1.msra.mxu0 0.0
  %2117 = vmatprep.subr.mxu0 0.0
  %2118 = vmatpush1.msra.mxu0 0.0
  %2119 = vmatprep.subr.mxu0 0.0
  %2120 = vmatpush1.msra.mxu0 0.0
  %2121 = vmatprep.subr.mxu0 0.0
  %2122 = vmatpush1.msra.mxu0 0.0
  %2123 = vmatprep.subr.mxu0 0.0
  %2124 = vmatpush1.msra.mxu0 0.0
  %2125 = vmatprep.subr.mxu0 0.0
  %2126 = vmatpush1.msra.mxu0 0.0
  %2127 = vmatprep.subr.mxu0 0.0
  %2128 = vmatpush1.msra.mxu0 0.0
  %2129 = vmatprep.subr.mxu0 0.0
  %2130 = vmatpush1.msra.mxu0 0.0
  %2131 = vmatprep.mubr.f32.mxu0 0.0
  %2132 = vmatmul.mubr.f32.gmra.mrb[0].mxu0 %v2050
  %v2133 = vpop.f32.mrb[0].mxu0
  %v2134 = vadd.f32 %v1962, %v2133
  %v2135 = vpop.f32.mrb[0].mxu0
  %v2136 = vadd.f32 %v1964, %v2135
  %2137 = vmatprep.mubr.f32.mxu0 0.0
  %2138 = vmatmul.mubr.f32.gmra.mrb[0].mxu0 %v2053
  %v2139 = vpop.f32.mrb[0].mxu0
  %v2140 = vadd.f32 %v1968, %v2139
  %v2141 = vpop.f32.mrb[0].mxu0
  %v2142 = vadd.f32 %v1970, %v2141
  %2143 = vdwg.mxu0
  %2144 = vmatprep.subr.mxu0 %v1847
  %2145 = vmatpush1.msra.mxu0 %v1846
  %2146 = vmatprep.subr.mxu0 %v1851
  %2147 = vmatpush1.msra.mxu0 %v1850
  %2148 = vmatprep.subr.mxu0 %v1855
  %2149 = vmatpush1.msra.mxu0 %v1854
  %2150 = vmatprep.subr.mxu0 %v2065
  %2151 = vmatpush1.msra.mxu0 %v2062
  %2152 = vmatprep.subr.mxu0 0.0
  %2153 = vmatpush1.msra.mxu0 0.0
  %2154 = vmatprep.subr.mxu0 0.0
  %2155 = vmatpush1.msra.mxu0 0.0
  %2156 = vmatprep.subr.mxu0 0.0
  %2157 = vmatpush1.msra.mxu0 0.0
  %2158 = vmatprep.subr.mxu0 0.0
  %2159 = vmatpush1.msra.mxu0 0.0
  %2160 = vmatprep.subr.mxu0 0.0
  %2161 = vmatpush1.msra.mxu0 0.0
  %2162 = vmatprep.subr.mxu0 0.0
  %2163 = vmatpush1.msra.mxu0 0.0
  %2164 = vmatprep.subr.mxu0 0.0
  %2165 = vmatpush1.msra.mxu0 0.0
  %2166 = vmatprep.subr.mxu0 0.0
  %2167 = vmatpush1.msra.mxu0 0.0
  %2168 = vmatprep.subr.mxu0 0.0
  %2169 = vmatpush1.msra.mxu0 0.0
  %2170 = vmatprep.subr.mxu0 0.0
  %2171 = vmatpush1.msra.mxu0 0.0
  %2172 = vmatprep.subr.mxu0 0.0
  %2173 = vmatpush1.msra.mxu0 0.0
  %2174 = vmatprep.subr.mxu0 0.0
  %2175 = vmatpush1.msra.mxu0 0.0
  %2176 = vmatprep.subr.mxu0 0.0
  %2177 = vmatpush1.msra.mxu0 0.0
  %2178 = vmatprep.subr.mxu0 0.0
  %2179 = vmatpush1.msra.mxu0 0.0
  %2180 = vmatprep.subr.mxu0 0.0
  %2181 = vmatpush1.msra.mxu0 0.0
  %2182 = vmatprep.subr.mxu0 0.0
  %2183 = vmatpush1.msra.mxu0 0.0
  %2184 = vmatprep.subr.mxu0 0.0
  %2185 = vmatpush1.msra.mxu0 0.0
  %2186 = vmatprep.subr.mxu0 0.0
  %2187 = vmatpush1.msra.mxu0 0.0
  %2188 = vmatprep.subr.mxu0 0.0
  %2189 = vmatpush1.msra.mxu0 0.0
  %2190 = vmatprep.subr.mxu0 0.0
  %2191 = vmatpush1.msra.mxu0 0.0
  %2192 = vmatprep.subr.mxu0 0.0
  %2193 = vmatpush1.msra.mxu0 0.0
  %2194 = vmatprep.subr.mxu0 0.0
  %2195 = vmatpush1.msra.mxu0 0.0
  %2196 = vmatprep.subr.mxu0 0.0
  %2197 = vmatpush1.msra.mxu0 0.0
  %2198 = vmatprep.subr.mxu0 0.0
  %2199 = vmatpush1.msra.mxu0 0.0
  %2200 = vmatprep.subr.mxu0 0.0
  %2201 = vmatpush1.msra.mxu0 0.0
  %2202 = vmatprep.subr.mxu0 0.0
  %2203 = vmatpush1.msra.mxu0 0.0
  %2204 = vmatprep.subr.mxu0 0.0
  %2205 = vmatpush1.msra.mxu0 0.0
  %2206 = vmatprep.subr.mxu0 0.0
  %2207 = vmatpush1.msra.mxu0 0.0
  %2208 = vmatprep.mubr.f32.mxu0 0.0
  %2209 = vmatmul.mubr.f32.gmra.mrb[0].mxu0 %v2050
  %v2210 = vpop.f32.mrb[0].mxu0
  %v2211 = vadd.f32 %v2039, %v2210
  %v2212 = vpop.f32.mrb[0].mxu0
  %v2213 = vadd.f32 %v2041, %v2212
  %2214 = vmatprep.mubr.f32.mxu0 0.0
  %2215 = vmatmul.mubr.f32.gmra.mrb[0].mxu0 %v2053
  %v2216 = vpop.f32.mrb[0].mxu0
  %v2217 = vadd.f32 %v2045, %v2216
  %v2218 = vpop.f32.mrb[0].mxu0
  %v2219 = vadd.f32 %v2047, %v2218
  %2220 = vdwg.mxu0
  %v2221 = vmul.f32 %v2134, 1.442695
  %v2222 = vpow.pop %v2221
  %v2223 = vmul.f32 %v2136, 1.442695
  %v2224 = vpow.pop %v2223
  %v2225 = vmul.f32 %v2211, 1.442695
  %v2226 = vpow.pop %v2225
  %v2227 = vmul.f32 %v2213, 1.442695
  %v2228 = vpow.pop %v2227
  %v2229 = vmul.f32 %v2140, 1.442695
  %v2230 = vpow.pop %v2229
  %v2231 = vmul.f32 %v2142, 1.442695
  %v2232 = vpow.pop %v2231
  %v2233 = vmul.f32 %v2217, 1.442695
  %v2234 = vpow.pop %v2233
  %v2235 = vmul.f32 %v2219, 1.442695
  %v2236 = vpow.pop %v2235
  %v2237 = vld [vmem:[#allocation2] sm:$0xff]
  %v2238 = vld [vmem:[#allocation2 + $0x8] sm:$0xff]
  %v2239 = vld [vmem:[#allocation2 + $0x10] sm:$0xff]
  %v2240 = vld [vmem:[#allocation2 + $0x18] sm:$0xff]
  %v2241 = vld [vmem:[%s1] sm:$0xf]
  %v2242 = vunpack.c.l.bf16 %v2241
  %v2244 = vsel %vm1110, %v2242, 0
  %2246 = vmatprep.subr.mxu0 %v2224
  %2247 = vmatpush1.msra.mxu0 %v2222
  %2248 = vmatprep.subr.mxu0 %v2232
  %2249 = vmatpush1.msra.mxu0 %v2230
  %2250 = vmatprep.subr.mxu0 0.0
  %2251 = vmatpush1.msra.mxu0 0.0
  %2252 = vmatprep.subr.mxu0 0.0
  %2253 = vmatpush1.msra.mxu0 0.0
  %2254 = vmatprep.subr.mxu0 0.0
  %2255 = vmatpush1.msra.mxu0 0.0
  %2256 = vmatprep.subr.mxu0 0.0
  %2257 = vmatpush1.msra.mxu0 0.0
  %2258 = vmatprep.subr.mxu0 0.0
  %2259 = vmatpush1.msra.mxu0 0.0
  %2260 = vmatprep.subr.mxu0 0.0
  %2261 = vmatpush1.msra.mxu0 0.0
  %2262 = vmatprep.subr.mxu0 0.0
  %2263 = vmatpush1.msra.mxu0 0.0
  %2264 = vmatprep.subr.mxu0 0.0
  %2265 = vmatpush1.msra.mxu0 0.0
  %2266 = vmatprep.subr.mxu0 0.0
  %2267 = vmatpush1.msra.mxu0 0.0
  %2268 = vmatprep.subr.mxu0 0.0
  %2269 = vmatpush1.msra.mxu0 0.0
  %2270 = vmatprep.subr.mxu0 0.0
  %2271 = vmatpush1.msra.mxu0 0.0
  %2272 = vmatprep.subr.mxu0 0.0
  %2273 = vmatpush1.msra.mxu0 0.0
  %2274 = vmatprep.subr.mxu0 0.0
  %2275 = vmatpush1.msra.mxu0 0.0
  %2276 = vmatprep.subr.mxu0 0.0
  %2277 = vmatpush1.msra.mxu0 0.0
  %2278 = vmatprep.subr.mxu0 0.0
  %2279 = vmatpush1.msra.mxu0 0.0
  %2280 = vmatprep.subr.mxu0 0.0
  %2281 = vmatpush1.msra.mxu0 0.0
  %2282 = vmatprep.subr.mxu0 0.0
  %2283 = vmatpush1.msra.mxu0 0.0
  %2284 = vmatprep.subr.mxu0 0.0
  %2285 = vmatpush1.msra.mxu0 0.0
  %2286 = vmatprep.subr.mxu0 0.0
  %2287 = vmatpush1.msra.mxu0 0.0
  %2288 = vmatprep.subr.mxu0 0.0
  %2289 = vmatpush1.msra.mxu0 0.0
  %2290 = vmatprep.subr.mxu0 0.0
  %2291 = vmatpush1.msra.mxu0 0.0
  %2292 = vmatprep.subr.mxu0 0.0
  %2293 = vmatpush1.msra.mxu0 0.0
  %2294 = vmatprep.subr.mxu0 0.0
  %2295 = vmatpush1.msra.mxu0 0.0
  %2296 = vmatprep.subr.mxu0 0.0
  %2297 = vmatpush1.msra.mxu0 0.0
  %2298 = vmatprep.subr.mxu0 0.0
  %2299 = vmatpush1.msra.mxu0 0.0
  %2300 = vmatprep.subr.mxu0 0.0
  %2301 = vmatpush1.msra.mxu0 0.0
  %2302 = vmatprep.subr.mxu0 0.0
  %2303 = vmatpush1.msra.mxu0 0.0
  %2304 = vmatprep.subr.mxu0 0.0
  %2305 = vmatpush1.msra.mxu0 0.0
  %2306 = vmatprep.subr.mxu0 0.0
  %2307 = vmatpush1.msra.mxu0 0.0
  %2308 = vmatprep.subr.mxu0 0.0
  %2309 = vmatpush1.msra.mxu0 0.0
  %2310 = vmatprep.mubr.f32.mxu0 0.0
  %2311 = vmatmul.mubr.f32.gmra.mrb[0].mxu0 %v2244
  %v2312 = vpop.f32.mrb[0].mxu0
  %v2313 = vadd.f32 0.0, %v2312
  %v2314 = vpop.f32.mrb[0].mxu0
  %v2315 = vadd.f32 0.0, %v2314
  %2316 = vdwg.mxu0
  %2317 = vmatprep.subr.mxu0 %v2228
  %2318 = vmatpush1.msra.mxu0 %v2226
  %2319 = vmatprep.subr.mxu0 %v2236
  %2320 = vmatpush1.msra.mxu0 %v2234
  %2321 = vmatprep.subr.mxu0 0.0
  %2322 = vmatpush1.msra.mxu0 0.0
  %2323 = vmatprep.subr.mxu0 0.0
  %2324 = vmatpush1.msra.mxu0 0.0
  %2325 = vmatprep.subr.mxu0 0.0
  %2326 = vmatpush1.msra.mxu0 0.0
  %2327 = vmatprep.subr.mxu0 0.0
  %2328 = vmatpush1.msra.mxu0 0.0
  %2329 = vmatprep.subr.mxu0 0.0
  %2330 = vmatpush1.msra.mxu0 0.0
  %2331 = vmatprep.subr.mxu0 0.0
  %2332 = vmatpush1.msra.mxu0 0.0
  %2333 = vmatprep.subr.mxu0 0.0
  %2334 = vmatpush1.msra.mxu0 0.0
  %2335 = vmatprep.subr.mxu0 0.0
  %2336 = vmatpush1.msra.mxu0 0.0
  %2337 = vmatprep.subr.mxu0 0.0
  %2338 = vmatpush1.msra.mxu0 0.0
  %2339 = vmatprep.subr.mxu0 0.0
  %2340 = vmatpush1.msra.mxu0 0.0
  %2341 = vmatprep.subr.mxu0 0.0
  %2342 = vmatpush1.msra.mxu0 0.0
  %2343 = vmatprep.subr.mxu0 0.0
  %2344 = vmatpush1.msra.mxu0 0.0
  %2345 = vmatprep.subr.mxu0 0.0
  %2346 = vmatpush1.msra.mxu0 0.0
  %2347 = vmatprep.subr.mxu0 0.0
  %2348 = vmatpush1.msra.mxu0 0.0
  %2349 = vmatprep.subr.mxu0 0.0
  %2350 = vmatpush1.msra.mxu0 0.0
  %2351 = vmatprep.subr.mxu0 0.0
  %2352 = vmatpush1.msra.mxu0 0.0
  %2353 = vmatprep.subr.mxu0 0.0
  %2354 = vmatpush1.msra.mxu0 0.0
  %2355 = vmatprep.subr.mxu0 0.0
  %2356 = vmatpush1.msra.mxu0 0.0
  %2357 = vmatprep.subr.mxu0 0.0
  %2358 = vmatpush1.msra.mxu0 0.0
  %2359 = vmatprep.subr.mxu0 0.0
  %2360 = vmatpush1.msra.mxu0 0.0
  %2361 = vmatprep.subr.mxu0 0.0
  %2362 = vmatpush1.msra.mxu0 0.0
  %2363 = vmatprep.subr.mxu0 0.0
  %2364 = vmatpush1.msra.mxu0 0.0
  %2365 = vmatprep.subr.mxu0 0.0
  %2366 = vmatpush1.msra.mxu0 0.0
  %2367 = vmatprep.subr.mxu0 0.0
  %2368 = vmatpush1.msra.mxu0 0.0
  %2369 = vmatprep.subr.mxu0 0.0
  %2370 = vmatpush1.msra.mxu0 0.0
  %2371 = vmatprep.subr.mxu0 0.0
  %2372 = vmatpush1.msra.mxu0 0.0
  %2373 = vmatprep.subr.mxu0 0.0
  %2374 = vmatpush1.msra.mxu0 0.0
  %2375 = vmatprep.subr.mxu0 0.0
  %2376 = vmatpush1.msra.mxu0 0.0
  %2377 = vmatprep.subr.mxu0 0.0
  %2378 = vmatpush1.msra.mxu0 0.0
  %2379 = vmatprep.subr.mxu0 0.0
  %2380 = vmatpush1.msra.mxu0 0.0
  %2381 = vmatprep.mubr.f32.mxu0 0.0
  %2382 = vmatmul.mubr.f32.gmra.mrb[0].mxu0 %v2244
  %v2383 = vpop.f32.mrb[0].mxu0
  %v2384 = vadd.f32 0.0, %v2383
  %v2385 = vpop.f32.mrb[0].mxu0
  %v2386 = vadd.f32 0.0, %v2385
  %2387 = vdwg.mxu0
  %v2388 = vadd.f32 %v2237, %v2313
  %v2389 = vadd.f32 %v2238, %v2315
  %v2390 = vadd.f32 %v2239, %v2384
  %v2391 = vadd.f32 %v2240, %v2386
  %2392 = vst [vmem:[#allocation2] sm:$0xff] %v2388
  %2393 = vst [vmem:[#allocation2 + $0x8] sm:$0xff] %v2389
  %2394 = vst [vmem:[#allocation2 + $0x10] sm:$0xff] %v2390
  %2395 = vst [vmem:[#allocation2 + $0x18] sm:$0xff] %v2391
  // Predicated region
  $region78: #{tpu_custom_call.1} parent=0 // pred_check
    %p2396 = pneg %p62
  $region79: #{tpu_custom_call.1} parent=0 // pred_check_branch
    %2398 = sbr.rel (%p2396) target = $region81
  $region80: #{tpu_custom_call.1} parent=0 // pred_region
    %v2399 = vld [vmem:[#allocation2] sm:$0xff]
    %v2400 = vld [vmem:[#allocation2 + $0x8] sm:$0xff]
    %v2401 = vld [vmem:[#allocation2 + $0x10] sm:$0xff]
    %v2402 = vld [vmem:[#allocation2 + $0x18] sm:$0xff]
    %v2403 = vmax.f32 %v2399, 1e-07
    %v2404 = vmax.f32 %v2400, 1e-07
    %v2405 = vmax.f32 %v2401, 1e-07
    %v2406 = vmax.f32 %v2402, 1e-07
    %v2407 = vld [vmem:[%s4] sm:$0xf]
    %v2408 = vlog2.pop %v2403
    %v2409 = vmul.f32 %v2408, 0.6931472
    %v2410 = vlog2.pop %v2404
    %v2411 = vmul.f32 %v2410, 0.6931472
    %v2412 = vlog2.pop %v2405
    %v2413 = vmul.f32 %v2412, 0.6931472
    %v2414 = vlog2.pop %v2406
    %v2415 = vmul.f32 %v2414, 0.6931472
    %v2417 = vlaneseq
    %v2418 = vshrl.u32 %v2417, 7
    %v2419 = vsub.s32 0, %v2418
    %v2420 = vrot.slane %v2407, %v2419
    %v2421 = vlaneseq
    %v2422 = vshrl.u32 %v2421, 7
    %v2423 = vsub.s32 1, %v2422
    %v2424 = vrot.slane %v2407, %v2423
    %v2425 = vlaneseq
    %v2426 = vshrl.u32 %v2425, 7
    %v2427 = vsub.s32 2, %v2426
    %v2428 = vrot.slane %v2407, %v2427
    %v2429 = vlaneseq
    %v2430 = vshrl.u32 %v2429, 7
    %v2431 = vsub.s32 3, %v2430
    %v2432 = vrot.slane %v2407, %v2431
    %v2437 = vmul.f32 %v2420, %v2409
    %v2438 = vmul.f32 %v2424, %v2411
    %v2439 = vmul.f32 %v2428, %v2413
    %v2440 = vmul.f32 %v2432, %v2415
    %v2441 = vmul.f32 %v2437, 1.442695
    %v2442 = vpow.pop %v2441
    %v2443 = vmul.f32 %v2438, 1.442695
    %v2444 = vpow.pop %v2443
    %v2445 = vmul.f32 %v2439, 1.442695
    %v2446 = vpow.pop %v2445
    %v2447 = vmul.f32 %v2440, 1.442695
    %v2448 = vpow.pop %v2447
    %v2449 = vld [vmem:[%s5] sm:$0xf]
    %v2451 = vlaneseq
    %v2452 = vshrl.u32 %v2451, 7
    %v2453 = vsub.s32 0, %v2452
    %v2454 = vrot.slane %v2449, %v2453
    %v2455 = vlaneseq
    %v2456 = vshrl.u32 %v2455, 7
    %v2457 = vsub.s32 1, %v2456
    %v2458 = vrot.slane %v2449, %v2457
    %v2459 = vlaneseq
    %v2460 = vshrl.u32 %v2459, 7
    %v2461 = vsub.s32 2, %v2460
    %v2462 = vrot.slane %v2449, %v2461
    %v2463 = vlaneseq
    %v2464 = vshrl.u32 %v2463, 7
    %v2465 = vsub.s32 3, %v2464
    %v2466 = vrot.slane %v2449, %v2465
    %v2471 = vmul.f32 %v2442, %v2454
    %v2472 = vmul.f32 %v2444, %v2458
    %v2473 = vmul.f32 %v2446, %v2462
    %v2474 = vmul.f32 %v2448, %v2466
    %v2475 = vadd.f32 %v2471, %v2472
    %v2476 = vadd.f32 %v2473, %v2474
    %v2477 = vand.u32 2147483647, %v2476
    %vm2478 = vcmp.lt.f32.partialorder %v2477, 1e-07
    %vm2479 = vcmp.lt.f32.partialorder %v2476, 0.0
    %v2480 = vsel %vm2479, -1e-07, 1e-07
    %v2481 = vsel %vm2478, %v2480, %v2476
    %v2482 = vrcp.pop %v2481
    %v2483 = vmul.f32 %v2475, %v2482
    %v2484 = vld [vmem:[%s12] sm:$0xff]
    %v2485 = vld [vmem:[%s12 + $0x8] sm:$0xff]
    %v2486 = vld [vmem:[%s12 + $0x10] sm:$0xff]
    %v2487 = vld [vmem:[%s12 + $0x18] sm:$0xff]
    %v2488 = vld [vmem:[%s12 + $0x20] sm:$0xff]
    %v2489 = vld [vmem:[%s12 + $0x28] sm:$0xff]
    %v2490 = vld [vmem:[%s12 + $0x30] sm:$0xff]
    %v2491 = vld [vmem:[%s12 + $0x38] sm:$0xff]
    %v2492 = vld [vmem:[%s12 + $0x40] sm:$0xff]
    %v2493 = vld [vmem:[%s12 + $0x48] sm:$0xff]
    %v2494 = vld [vmem:[%s12 + $0x50] sm:$0xff]
    %v2495 = vld [vmem:[%s12 + $0x58] sm:$0xff]
    %v2496 = vld [vmem:[%s12 + $0x60] sm:$0xff]
    %v2497 = vld [vmem:[%s12 + $0x68] sm:$0xff]
    %v2498 = vld [vmem:[%s12 + $0x70] sm:$0xff]
    %v2499 = vld [vmem:[%s12 + $0x78] sm:$0xff]
    %v2500 = vld [vmem:[%s12 + $0x80] sm:$0xff]
    %v2501 = vld [vmem:[%s12 + $0x88] sm:$0xff]
    %v2502 = vld [vmem:[%s12 + $0x90] sm:$0xff]
    %v2503 = vld [vmem:[%s12 + $0x98] sm:$0xff]
    %v2504 = vld [vmem:[%s12 + $0xa0] sm:$0xff]
    %v2505 = vld [vmem:[%s12 + $0xa8] sm:$0xff]
    %v2506 = vld [vmem:[%s12 + $0xb0] sm:$0xff]
    %v2507 = vld [vmem:[%s12 + $0xb8] sm:$0xff]
    %v2508 = vld [vmem:[%s12 + $0xc0] sm:$0xff]
    %v2509 = vld [vmem:[%s12 + $0xc8] sm:$0xff]
    %v2510 = vld [vmem:[%s12 + $0xd0] sm:$0xff]
    %v2511 = vld [vmem:[%s12 + $0xd8] sm:$0xff]
    %v2512 = vld [vmem:[%s12 + $0xe0] sm:$0xff]
    %v2513 = vld [vmem:[%s12 + $0xe8] sm:$0xff]
    %v2514 = vld [vmem:[%s12 + $0xf0] sm:$0xff]
    %v2515 = vld [vmem:[%s12 + $0xf8] sm:$0xff]
    %v2516 = vld [vmem:[%s12 + $0x100] sm:$0xff]
    %v2517 = vld [vmem:[%s12 + $0x108] sm:$0xff]
    %v2518 = vld [vmem:[%s12 + $0x110] sm:$0xff]
    %v2519 = vld [vmem:[%s12 + $0x118] sm:$0xff]
    %v2520 = vld [vmem:[%s12 + $0x120] sm:$0xff]
    %v2521 = vld [vmem:[%s12 + $0x128] sm:$0xff]
    %v2522 = vld [vmem:[%s12 + $0x130] sm:$0xff]
    %v2523 = vld [vmem:[%s12 + $0x138] sm:$0xff]
    %v2524 = vld [vmem:[%s12 + $0x140] sm:$0xff]
    %v2525 = vld [vmem:[%s12 + $0x148] sm:$0xff]
    %v2526 = vld [vmem:[%s12 + $0x150] sm:$0xff]
    %v2527 = vld [vmem:[%s12 + $0x158] sm:$0xff]
    %v2528 = vld [vmem:[%s12 + $0x160] sm:$0xff]
    %v2529 = vld [vmem:[%s12 + $0x168] sm:$0xff]
    %v2530 = vld [vmem:[%s12 + $0x170] sm:$0xff]
    %v2531 = vld [vmem:[%s12 + $0x178] sm:$0xff]
    %v2532 = vld [vmem:[%s12 + $0x180] sm:$0xff]
    %v2533 = vld [vmem:[%s12 + $0x188] sm:$0xff]
    %v2534 = vld [vmem:[%s12 + $0x190] sm:$0xff]
    %v2535 = vld [vmem:[%s12 + $0x198] sm:$0xff]
    %v2536 = vld [vmem:[%s12 + $0x1a0] sm:$0xff]
    %v2537 = vld [vmem:[%s12 + $0x1a8] sm:$0xff]
    %v2538 = vld [vmem:[%s12 + $0x1b0] sm:$0xff]
    %v2539 = vld [vmem:[%s12 + $0x1b8] sm:$0xff]
    %v2540 = vld [vmem:[%s12 + $0x1c0] sm:$0xff]
    %v2541 = vld [vmem:[%s12 + $0x1c8] sm:$0xff]
    %v2542 = vld [vmem:[%s12 + $0x1d0] sm:$0xff]
    %v2543 = vld [vmem:[%s12 + $0x1d8] sm:$0xff]
    %v2544 = vld [vmem:[%s12 + $0x1e0] sm:$0xff]
    %v2545 = vld [vmem:[%s12 + $0x1e8] sm:$0xff]
    %v2546 = vld [vmem:[%s12 + $0x1f0] sm:$0xff]
    %v2547 = vld [vmem:[%s12 + $0x1f8] sm:$0xff]
    %v2548 = vld [vmem:[%s12 + $0x200] sm:$0xff]
    %v2549 = vld [vmem:[%s12 + $0x208] sm:$0xff]
    %v2550 = vld [vmem:[%s12 + $0x210] sm:$0xff]
    %v2551 = vld [vmem:[%s12 + $0x218] sm:$0xff]
    %v2552 = vld [vmem:[%s12 + $0x220] sm:$0xff]
    %v2553 = vld [vmem:[%s12 + $0x228] sm:$0xff]
    %v2554 = vld [vmem:[%s12 + $0x230] sm:$0xff]
    %v2555 = vld [vmem:[%s12 + $0x238] sm:$0xff]
    %v2556 = vld [vmem:[%s12 + $0x240] sm:$0xff]
    %v2557 = vld [vmem:[%s12 + $0x248] sm:$0xff]
    %v2558 = vld [vmem:[%s12 + $0x250] sm:$0xff]
    %v2559 = vld [vmem:[%s12 + $0x258] sm:$0xff]
    %v2560 = vld [vmem:[%s12 + $0x260] sm:$0xff]
    %v2561 = vld [vmem:[%s12 + $0x268] sm:$0xff]
    %v2562 = vld [vmem:[%s12 + $0x270] sm:$0xff]
    %v2563 = vld [vmem:[%s12 + $0x278] sm:$0xff]
    %v2564 = vld [vmem:[%s12 + $0x280] sm:$0xff]
    %v2565 = vld [vmem:[%s12 + $0x288] sm:$0xff]
    %v2566 = vld [vmem:[%s12 + $0x290] sm:$0xff]
    %v2567 = vld [vmem:[%s12 + $0x298] sm:$0xff]
    %v2568 = vld [vmem:[%s12 + $0x2a0] sm:$0xff]
    %v2569 = vld [vmem:[%s12 + $0x2a8] sm:$0xff]
    %v2570 = vld [vmem:[%s12 + $0x2b0] sm:$0xff]
    %v2571 = vld [vmem:[%s12 + $0x2b8] sm:$0xff]
    %v2572 = vld [vmem:[%s12 + $0x2c0] sm:$0xff]
    %v2573 = vld [vmem:[%s12 + $0x2c8] sm:$0xff]
    %v2574 = vld [vmem:[%s12 + $0x2d0] sm:$0xff]
    %v2575 = vld [vmem:[%s12 + $0x2d8] sm:$0xff]
    %v2576 = vld [vmem:[%s12 + $0x2e0] sm:$0xff]
    %v2577 = vld [vmem:[%s12 + $0x2e8] sm:$0xff]
    %v2578 = vld [vmem:[%s12 + $0x2f0] sm:$0xff]
    %v2579 = vld [vmem:[%s12 + $0x2f8] sm:$0xff]
    %v2580 = vld [vmem:[%s12 + $0x300] sm:$0xff]
    %v2581 = vld [vmem:[%s12 + $0x308] sm:$0xff]
    %v2582 = vld [vmem:[%s12 + $0x310] sm:$0xff]
    %v2583 = vld [vmem:[%s12 + $0x318] sm:$0xff]
    %v2584 = vld [vmem:[%s12 + $0x320] sm:$0xff]
    %v2585 = vld [vmem:[%s12 + $0x328] sm:$0xff]
    %v2586 = vld [vmem:[%s12 + $0x330] sm:$0xff]
    %v2587 = vld [vmem:[%s12 + $0x338] sm:$0xff]
    %v2588 = vld [vmem:[%s12 + $0x340] sm:$0xff]
    %v2589 = vld [vmem:[%s12 + $0x348] sm:$0xff]
    %v2590 = vld [vmem:[%s12 + $0x350] sm:$0xff]
    %v2591 = vld [vmem:[%s12 + $0x358] sm:$0xff]
    %v2592 = vld [vmem:[%s12 + $0x360] sm:$0xff]
    %v2593 = vld [vmem:[%s12 + $0x368] sm:$0xff]
    %v2594 = vld [vmem:[%s12 + $0x370] sm:$0xff]
    %v2595 = vld [vmem:[%s12 + $0x378] sm:$0xff]
    %v2596 = vld [vmem:[%s12 + $0x380] sm:$0xff]
    %v2597 = vld [vmem:[%s12 + $0x388] sm:$0xff]
    %v2598 = vld [vmem:[%s12 + $0x390] sm:$0xff]
    %v2599 = vld [vmem:[%s12 + $0x398] sm:$0xff]
    %v2600 = vld [vmem:[%s12 + $0x3a0] sm:$0xff]
    %v2601 = vld [vmem:[%s12 + $0x3a8] sm:$0xff]
    %v2602 = vld [vmem:[%s12 + $0x3b0] sm:$0xff]
    %v2603 = vld [vmem:[%s12 + $0x3b8] sm:$0xff]
    %v2604 = vld [vmem:[%s12 + $0x3c0] sm:$0xff]
    %v2605 = vld [vmem:[%s12 + $0x3c8] sm:$0xff]
    %v2606 = vld [vmem:[%s12 + $0x3d0] sm:$0xff]
    %v2607 = vld [vmem:[%s12 + $0x3d8] sm:$0xff]
    %v2608 = vld [vmem:[%s12 + $0x3e0] sm:$0xff]
    %v2609 = vld [vmem:[%s12 + $0x3e8] sm:$0xff]
    %v2610 = vld [vmem:[%s12 + $0x3f0] sm:$0xff]
    %v2611 = vld [vmem:[%s12 + $0x3f8] sm:$0xff]
    %v2612 = vld [vmem:[%s13] sm:$0xff]
    %v2614 = vlaneseq
    %v2615 = vshrl.u32 %v2614, 7
    %v2616 = vsub.s32 0, %v2615
    %v2617 = vrot.slane %v2612, %v2616
    %v2618 = vlaneseq
    %v2619 = vshrl.u32 %v2618, 7
    %v2620 = vsub.s32 1, %v2619
    %v2621 = vrot.slane %v2612, %v2620
    %v2622 = vlaneseq
    %v2623 = vshrl.u32 %v2622, 7
    %v2624 = vsub.s32 2, %v2623
    %v2625 = vrot.slane %v2612, %v2624
    %v2626 = vlaneseq
    %v2627 = vshrl.u32 %v2626, 7
    %v2628 = vsub.s32 3, %v2627
    %v2629 = vrot.slane %v2612, %v2628
    %v2630 = vlaneseq
    %v2631 = vshrl.u32 %v2630, 7
    %v2632 = vsub.s32 4, %v2631
    %v2633 = vrot.slane %v2612, %v2632
    %v2634 = vlaneseq
    %v2635 = vshrl.u32 %v2634, 7
    %v2636 = vsub.s32 5, %v2635
    %v2637 = vrot.slane %v2612, %v2636
    %v2638 = vlaneseq
    %v2639 = vshrl.u32 %v2638, 7
    %v2640 = vsub.s32 6, %v2639
    %v2641 = vrot.slane %v2612, %v2640
    %v2642 = vlaneseq
    %v2643 = vshrl.u32 %v2642, 7
    %v2644 = vsub.s32 7, %v2643
    %v2645 = vrot.slane %v2612, %v2644
    %2654 = vmatprep.subr.mxu0 %v2485
    %2655 = vmatpush1.msra.mxu0 %v2484
    %2656 = vmatprep.subr.mxu0 %v2493
    %2657 = vmatpush1.msra.mxu0 %v2492
    %2658 = vmatprep.subr.mxu0 %v2501
    %2659 = vmatpush1.msra.mxu0 %v2500
    %2660 = vmatprep.subr.mxu0 %v2509
    %2661 = vmatpush1.msra.mxu0 %v2508
    %2662 = vmatprep.subr.mxu0 %v2517
    %2663 = vmatpush1.msra.mxu0 %v2516
    %2664 = vmatprep.subr.mxu0 %v2525
    %2665 = vmatpush1.msra.mxu0 %v2524
    %2666 = vmatprep.subr.mxu0 %v2533
    %2667 = vmatpush1.msra.mxu0 %v2532
    %2668 = vmatprep.subr.mxu0 %v2541
    %2669 = vmatpush1.msra.mxu0 %v2540
    %2670 = vmatprep.subr.mxu0 %v2549
    %2671 = vmatpush1.msra.mxu0 %v2548
    %2672 = vmatprep.subr.mxu0 %v2557
    %2673 = vmatpush1.msra.mxu0 %v2556
    %2674 = vmatprep.subr.mxu0 %v2565
    %2675 = vmatpush1.msra.mxu0 %v2564
    %2676 = vmatprep.subr.mxu0 %v2573
    %2677 = vmatpush1.msra.mxu0 %v2572
    %2678 = vmatprep.subr.mxu0 %v2581
    %2679 = vmatpush1.msra.mxu0 %v2580
    %2680 = vmatprep.subr.mxu0 %v2589
    %2681 = vmatpush1.msra.mxu0 %v2588
    %2682 = vmatprep.subr.mxu0 %v2597
    %2683 = vmatpush1.msra.mxu0 %v2596
    %2684 = vmatprep.subr.mxu0 %v2605
    %2685 = vmatpush1.msra.mxu0 %v2604
    %2686 = vmatprep.subr.mxu0 0.0
    %2687 = vmatpush1.msra.mxu0 0.0
    %2688 = vmatprep.subr.mxu0 0.0
    %2689 = vmatpush1.msra.mxu0 0.0
    %2690 = vmatprep.subr.mxu0 0.0
    %2691 = vmatpush1.msra.mxu0 0.0
    %2692 = vmatprep.subr.mxu0 0.0
    %2693 = vmatpush1.msra.mxu0 0.0
    %2694 = vmatprep.subr.mxu0 0.0
    %2695 = vmatpush1.msra.mxu0 0.0
    %2696 = vmatprep.subr.mxu0 0.0
    %2697 = vmatpush1.msra.mxu0 0.0
    %2698 = vmatprep.subr.mxu0 0.0
    %2699 = vmatpush1.msra.mxu0 0.0
    %2700 = vmatprep.subr.mxu0 0.0
    %2701 = vmatpush1.msra.mxu0 0.0
    %2702 = vmatprep.subr.mxu0 0.0
    %2703 = vmatpush1.msra.mxu0 0.0
    %2704 = vmatprep.subr.mxu0 0.0
    %2705 = vmatpush1.msra.mxu0 0.0
    %2706 = vmatprep.subr.mxu0 0.0
    %2707 = vmatpush1.msra.mxu0 0.0
    %2708 = vmatprep.subr.mxu0 0.0
    %2709 = vmatpush1.msra.mxu0 0.0
    %2710 = vmatprep.subr.mxu0 0.0
    %2711 = vmatpush1.msra.mxu0 0.0
    %2712 = vmatprep.subr.mxu0 0.0
    %2713 = vmatpush1.msra.mxu0 0.0
    %2714 = vmatprep.subr.mxu0 0.0
    %2715 = vmatpush1.msra.mxu0 0.0
    %2716 = vmatprep.subr.mxu0 0.0
    %2717 = vmatpush1.msra.mxu0 0.0
    %2718 = vmatprep.mubr.f32.mxu0 0.0
    %2719 = vmatmul.mubr.f32.gmra.mrb[0].mxu0 %v2483
    %v2720 = vpop.f32.mrb[0].mxu0
    %v2721 = vadd.f32 %v2617, %v2720
    %v2722 = vpop.f32.mrb[0].mxu0
    %v2723 = vadd.f32 %v2621, %v2722
    %2724 = vdwg.mxu0
    %2725 = vmatprep.subr.mxu0 %v2487
    %2726 = vmatpush1.msra.mxu0 %v2486
    %2727 = vmatprep.subr.mxu0 %v2495
    %2728 = vmatpush1.msra.mxu0 %v2494
    %2729 = vmatprep.subr.mxu0 %v2503
    %2730 = vmatpush1.msra.mxu0 %v2502
    %2731 = vmatprep.subr.mxu0 %v2511
    %2732 = vmatpush1.msra.mxu0 %v2510
    %2733 = vmatprep.subr.mxu0 %v2519
    %2734 = vmatpush1.msra.mxu0 %v2518
    %2735 = vmatprep.subr.mxu0 %v2527
    %2736 = vmatpush1.msra.mxu0 %v2526
    %2737 = vmatprep.subr.mxu0 %v2535
    %2738 = vmatpush1.msra.mxu0 %v2534
    %2739 = vmatprep.subr.mxu0 %v2543
    %2740 = vmatpush1.msra.mxu0 %v2542
    %2741 = vmatprep.subr.mxu0 %v2551
    %2742 = vmatpush1.msra.mxu0 %v2550
    %2743 = vmatprep.subr.mxu0 %v2559
    %2744 = vmatpush1.msra.mxu0 %v2558
    %2745 = vmatprep.subr.mxu0 %v2567
    %2746 = vmatpush1.msra.mxu0 %v2566
    %2747 = vmatprep.subr.mxu0 %v2575
    %2748 = vmatpush1.msra.mxu0 %v2574
    %2749 = vmatprep.subr.mxu0 %v2583
    %2750 = vmatpush1.msra.mxu0 %v2582
    %2751 = vmatprep.subr.mxu0 %v2591
    %2752 = vmatpush1.msra.mxu0 %v2590
    %2753 = vmatprep.subr.mxu0 %v2599
    %2754 = vmatpush1.msra.mxu0 %v2598
    %2755 = vmatprep.subr.mxu0 %v2607
    %2756 = vmatpush1.msra.mxu0 %v2606
    %2757 = vmatprep.subr.mxu0 0.0
    %2758 = vmatpush1.msra.mxu0 0.0
    %2759 = vmatprep.subr.mxu0 0.0
    %2760 = vmatpush1.msra.mxu0 0.0
    %2761 = vmatprep.subr.mxu0 0.0
    %2762 = vmatpush1.msra.mxu0 0.0
    %2763 = vmatprep.subr.mxu0 0.0
    %2764 = vmatpush1.msra.mxu0 0.0
    %2765 = vmatprep.subr.mxu0 0.0
    %2766 = vmatpush1.msra.mxu0 0.0
    %2767 = vmatprep.subr.mxu0 0.0
    %2768 = vmatpush1.msra.mxu0 0.0
    %2769 = vmatprep.subr.mxu0 0.0
    %2770 = vmatpush1.msra.mxu0 0.0
    %2771 = vmatprep.subr.mxu0 0.0
    %2772 = vmatpush1.msra.mxu0 0.0
    %2773 = vmatprep.subr.mxu0 0.0
    %2774 = vmatpush1.msra.mxu0 0.0
    %2775 = vmatprep.subr.mxu0 0.0
    %2776 = vmatpush1.msra.mxu0 0.0
    %2777 = vmatprep.subr.mxu0 0.0
    %2778 = vmatpush1.msra.mxu0 0.0
    %2779 = vmatprep.subr.mxu0 0.0
    %2780 = vmatpush1.msra.mxu0 0.0
    %2781 = vmatprep.subr.mxu0 0.0
    %2782 = vmatpush1.msra.mxu0 0.0
    %2783 = vmatprep.subr.mxu0 0.0
    %2784 = vmatpush1.msra.mxu0 0.0
    %2785 = vmatprep.subr.mxu0 0.0
    %2786 = vmatpush1.msra.mxu0 0.0
    %2787 = vmatprep.subr.mxu0 0.0
    %2788 = vmatpush1.msra.mxu0 0.0
    %2789 = vmatprep.mubr.f32.mxu0 0.0
    %2790 = vmatmul.mubr.f32.gmra.mrb[0].mxu0 %v2483
    %v2791 = vpop.f32.mrb[0].mxu0
    %v2792 = vadd.f32 %v2625, %v2791
    %v2793 = vpop.f32.mrb[0].mxu0
    %v2794 = vadd.f32 %v2629, %v2793
    %2795 = vdwg.mxu0
    %2796 = vmatprep.subr.mxu0 %v2489
    %2797 = vmatpush1.msra.mxu0 %v2488
    %2798 = vmatprep.subr.mxu0 %v2497
    %2799 = vmatpush1.msra.mxu0 %v2496
    %2800 = vmatprep.subr.mxu0 %v2505
    %2801 = vmatpush1.msra.mxu0 %v2504
    %2802 = vmatprep.subr.mxu0 %v2513
    %2803 = vmatpush1.msra.mxu0 %v2512
    %2804 = vmatprep.subr.mxu0 %v2521
    %2805 = vmatpush1.msra.mxu0 %v2520
    %2806 = vmatprep.subr.mxu0 %v2529
    %2807 = vmatpush1.msra.mxu0 %v2528
    %2808 = vmatprep.subr.mxu0 %v2537
    %2809 = vmatpush1.msra.mxu0 %v2536
    %2810 = vmatprep.subr.mxu0 %v2545
    %2811 = vmatpush1.msra.mxu0 %v2544
    %2812 = vmatprep.subr.mxu0 %v2553
    %2813 = vmatpush1.msra.mxu0 %v2552
    %2814 = vmatprep.subr.mxu0 %v2561
    %2815 = vmatpush1.msra.mxu0 %v2560
    %2816 = vmatprep.subr.mxu0 %v2569
    %2817 = vmatpush1.msra.mxu0 %v2568
    %2818 = vmatprep.subr.mxu0 %v2577
    %2819 = vmatpush1.msra.mxu0 %v2576
    %2820 = vmatprep.subr.mxu0 %v2585
    %2821 = vmatpush1.msra.mxu0 %v2584
    %2822 = vmatprep.subr.mxu0 %v2593
    %2823 = vmatpush1.msra.mxu0 %v2592
    %2824 = vmatprep.subr.mxu0 %v2601
    %2825 = vmatpush1.msra.mxu0 %v2600
    %2826 = vmatprep.subr.mxu0 %v2609
    %2827 = vmatpush1.msra.mxu0 %v2608
    %2828 = vmatprep.subr.mxu0 0.0
    %2829 = vmatpush1.msra.mxu0 0.0
    %2830 = vmatprep.subr.mxu0 0.0
    %2831 = vmatpush1.msra.mxu0 0.0
    %2832 = vmatprep.subr.mxu0 0.0
    %2833 = vmatpush1.msra.mxu0 0.0
    %2834 = vmatprep.subr.mxu0 0.0
    %2835 = vmatpush1.msra.mxu0 0.0
    %2836 = vmatprep.subr.mxu0 0.0
    %2837 = vmatpush1.msra.mxu0 0.0
    %2838 = vmatprep.subr.mxu0 0.0
    %2839 = vmatpush1.msra.mxu0 0.0
    %2840 = vmatprep.subr.mxu0 0.0
    %2841 = vmatpush1.msra.mxu0 0.0
    %2842 = vmatprep.subr.mxu0 0.0
    %2843 = vmatpush1.msra.mxu0 0.0
    %2844 = vmatprep.subr.mxu0 0.0
    %2845 = vmatpush1.msra.mxu0 0.0
    %2846 = vmatprep.subr.mxu0 0.0
    %2847 = vmatpush1.msra.mxu0 0.0
    %2848 = vmatprep.subr.mxu0 0.0
    %2849 = vmatpush1.msra.mxu0 0.0
    %2850 = vmatprep.subr.mxu0 0.0
    %2851 = vmatpush1.msra.mxu0 0.0
    %2852 = vmatprep.subr.mxu0 0.0
    %2853 = vmatpush1.msra.mxu0 0.0
    %2854 = vmatprep.subr.mxu0 0.0
    %2855 = vmatpush1.msra.mxu0 0.0
    %2856 = vmatprep.subr.mxu0 0.0
    %2857 = vmatpush1.msra.mxu0 0.0
    %2858 = vmatprep.subr.mxu0 0.0
    %2859 = vmatpush1.msra.mxu0 0.0
    %2860 = vmatprep.mubr.f32.mxu0 0.0
    %2861 = vmatmul.mubr.f32.gmra.mrb[0].mxu0 %v2483
    %v2862 = vpop.f32.mrb[0].mxu0
    %v2863 = vadd.f32 %v2633, %v2862
    %v2864 = vpop.f32.mrb[0].mxu0
    %v2865 = vadd.f32 %v2637, %v2864
    %2866 = vdwg.mxu0
    %2867 = vmatprep.subr.mxu0 %v2491
    %2868 = vmatpush1.msra.mxu0 %v2490
    %2869 = vmatprep.subr.mxu0 %v2499
    %2870 = vmatpush1.msra.mxu0 %v2498
    %2871 = vmatprep.subr.mxu0 %v2507
    %2872 = vmatpush1.msra.mxu0 %v2506
    %2873 = vmatprep.subr.mxu0 %v2515
    %2874 = vmatpush1.msra.mxu0 %v2514
    %2875 = vmatprep.subr.mxu0 %v2523
    %2876 = vmatpush1.msra.mxu0 %v2522
    %2877 = vmatprep.subr.mxu0 %v2531
    %2878 = vmatpush1.msra.mxu0 %v2530
    %2879 = vmatprep.subr.mxu0 %v2539
    %2880 = vmatpush1.msra.mxu0 %v2538
    %2881 = vmatprep.subr.mxu0 %v2547
    %2882 = vmatpush1.msra.mxu0 %v2546
    %2883 = vmatprep.subr.mxu0 %v2555
    %2884 = vmatpush1.msra.mxu0 %v2554
    %2885 = vmatprep.subr.mxu0 %v2563
    %2886 = vmatpush1.msra.mxu0 %v2562
    %2887 = vmatprep.subr.mxu0 %v2571
    %2888 = vmatpush1.msra.mxu0 %v2570
    %2889 = vmatprep.subr.mxu0 %v2579
    %2890 = vmatpush1.msra.mxu0 %v2578
    %2891 = vmatprep.subr.mxu0 %v2587
    %2892 = vmatpush1.msra.mxu0 %v2586
    %2893 = vmatprep.subr.mxu0 %v2595
    %2894 = vmatpush1.msra.mxu0 %v2594
    %2895 = vmatprep.subr.mxu0 %v2603
    %2896 = vmatpush1.msra.mxu0 %v2602
    %2897 = vmatprep.subr.mxu0 %v2611
    %2898 = vmatpush1.msra.mxu0 %v2610
    %2899 = vmatprep.subr.mxu0 0.0
    %2900 = vmatpush1.msra.mxu0 0.0
    %2901 = vmatprep.subr.mxu0 0.0
    %2902 = vmatpush1.msra.mxu0 0.0
    %2903 = vmatprep.subr.mxu0 0.0
    %2904 = vmatpush1.msra.mxu0 0.0
    %2905 = vmatprep.subr.mxu0 0.0
    %2906 = vmatpush1.msra.mxu0 0.0
    %2907 = vmatprep.subr.mxu0 0.0
    %2908 = vmatpush1.msra.mxu0 0.0
    %2909 = vmatprep.subr.mxu0 0.0
    %2910 = vmatpush1.msra.mxu0 0.0
    %2911 = vmatprep.subr.mxu0 0.0
    %2912 = vmatpush1.msra.mxu0 0.0
    %2913 = vmatprep.subr.mxu0 0.0
    %2914 = vmatpush1.msra.mxu0 0.0
    %2915 = vmatprep.subr.mxu0 0.0
    %2916 = vmatpush1.msra.mxu0 0.0
    %2917 = vmatprep.subr.mxu0 0.0
    %2918 = vmatpush1.msra.mxu0 0.0
    %2919 = vmatprep.subr.mxu0 0.0
    %2920 = vmatpush1.msra.mxu0 0.0
    %2921 = vmatprep.subr.mxu0 0.0
    %2922 = vmatpush1.msra.mxu0 0.0
    %2923 = vmatprep.subr.mxu0 0.0
    %2924 = vmatpush1.msra.mxu0 0.0
    %2925 = vmatprep.subr.mxu0 0.0
    %2926 = vmatpush1.msra.mxu0 0.0
    %2927 = vmatprep.subr.mxu0 0.0
    %2928 = vmatpush1.msra.mxu0 0.0
    %2929 = vmatprep.subr.mxu0 0.0
    %2930 = vmatpush1.msra.mxu0 0.0
    %2931 = vmatprep.mubr.f32.mxu0 0.0
    %2932 = vmatmul.mubr.f32.gmra.mrb[0].mxu0 %v2483
    %v2933 = vpop.f32.mrb[0].mxu0
    %v2934 = vadd.f32 %v2641, %v2933
    %v2935 = vpop.f32.mrb[0].mxu0
    %v2936 = vadd.f32 %v2645, %v2935
    %2937 = vdwg.mxu0
    %v2938 = vtanh.pop %v2721
    %v2939 = vtanh.pop %v2723
    %v2940 = vtanh.pop %v2792
    %v2941 = vtanh.pop %v2794
    %v2942 = vtanh.pop %v2863
    %v2943 = vtanh.pop %v2865
    %v2944 = vtanh.pop %v2934
    %v2945 = vtanh.pop %v2936
    %v2946 = vld [vmem:[%s14] sm:$0xff]
    %v2947 = vld [vmem:[%s14 + $0x8] sm:$0xff]
    %v2948 = vld [vmem:[%s14 + $0x10] sm:$0xff]
    %v2949 = vld [vmem:[%s14 + $0x18] sm:$0xff]
    %v2950 = vld [vmem:[%s14 + $0x20] sm:$0xff]
    %v2951 = vld [vmem:[%s14 + $0x28] sm:$0xff]
    %v2952 = vld [vmem:[%s14 + $0x30] sm:$0xff]
    %v2953 = vld [vmem:[%s14 + $0x38] sm:$0xff]
    %v2954 = vld [vmem:[%s14 + $0x40] sm:$0xff]
    %v2955 = vld [vmem:[%s14 + $0x48] sm:$0xff]
    %v2956 = vld [vmem:[%s14 + $0x50] sm:$0xff]
    %v2957 = vld [vmem:[%s14 + $0x58] sm:$0xff]
    %v2958 = vld [vmem:[%s14 + $0x60] sm:$0xff]
    %v2959 = vld [vmem:[%s14 + $0x68] sm:$0xff]
    %v2960 = vld [vmem:[%s14 + $0x70] sm:$0xff]
    %v2961 = vld [vmem:[%s14 + $0x78] sm:$0xff]
    %v2962 = vld [vmem:[%s14 + $0x80] sm:$0xff]
    %v2963 = vld [vmem:[%s14 + $0x88] sm:$0xff]
    %v2964 = vld [vmem:[%s14 + $0x90] sm:$0xff]
    %v2965 = vld [vmem:[%s14 + $0x98] sm:$0xff]
    %v2966 = vld [vmem:[%s14 + $0xa0] sm:$0xff]
    %v2967 = vld [vmem:[%s14 + $0xa8] sm:$0xff]
    %v2968 = vld [vmem:[%s14 + $0xb0] sm:$0xff]
    %v2969 = vld [vmem:[%s14 + $0xb8] sm:$0xff]
    %v2970 = vld [vmem:[%s14 + $0xc0] sm:$0xff]
    %v2971 = vld [vmem:[%s14 + $0xc8] sm:$0xff]
    %v2972 = vld [vmem:[%s14 + $0xd0] sm:$0xff]
    %v2973 = vld [vmem:[%s14 + $0xd8] sm:$0xff]
    %v2974 = vld [vmem:[%s14 + $0xe0] sm:$0xff]
    %v2975 = vld [vmem:[%s14 + $0xe8] sm:$0xff]
    %v2976 = vld [vmem:[%s14 + $0xf0] sm:$0xff]
    %v2977 = vld [vmem:[%s14 + $0xf8] sm:$0xff]
    %v2978 = vld [vmem:[%s14 + $0x100] sm:$0xff]
    %v2979 = vld [vmem:[%s14 + $0x108] sm:$0xff]
    %v2980 = vld [vmem:[%s14 + $0x110] sm:$0xff]
    %v2981 = vld [vmem:[%s14 + $0x118] sm:$0xff]
    %v2982 = vld [vmem:[%s14 + $0x120] sm:$0xff]
    %v2983 = vld [vmem:[%s14 + $0x128] sm:$0xff]
    %v2984 = vld [vmem:[%s14 + $0x130] sm:$0xff]
    %v2985 = vld [vmem:[%s14 + $0x138] sm:$0xff]
    %v2986 = vld [vmem:[%s14 + $0x140] sm:$0xff]
    %v2987 = vld [vmem:[%s14 + $0x148] sm:$0xff]
    %v2988 = vld [vmem:[%s14 + $0x150] sm:$0xff]
    %v2989 = vld [vmem:[%s14 + $0x158] sm:$0xff]
    %v2990 = vld [vmem:[%s14 + $0x160] sm:$0xff]
    %v2991 = vld [vmem:[%s14 + $0x168] sm:$0xff]
    %v2992 = vld [vmem:[%s14 + $0x170] sm:$0xff]
    %v2993 = vld [vmem:[%s14 + $0x178] sm:$0xff]
    %v2994 = vld [vmem:[%s14 + $0x180] sm:$0xff]
    %v2995 = vld [vmem:[%s14 + $0x188] sm:$0xff]
    %v2996 = vld [vmem:[%s14 + $0x190] sm:$0xff]
    %v2997 = vld [vmem:[%s14 + $0x198] sm:$0xff]
    %v2998 = vld [vmem:[%s14 + $0x1a0] sm:$0xff]
    %v2999 = vld [vmem:[%s14 + $0x1a8] sm:$0xff]
    %v3000 = vld [vmem:[%s14 + $0x1b0] sm:$0xff]
    %v3001 = vld [vmem:[%s14 + $0x1b8] sm:$0xff]
    %v3002 = vld [vmem:[%s14 + $0x1c0] sm:$0xff]
    %v3003 = vld [vmem:[%s14 + $0x1c8] sm:$0xff]
    %v3004 = vld [vmem:[%s14 + $0x1d0] sm:$0xff]
    %v3005 = vld [vmem:[%s14 + $0x1d8] sm:$0xff]
    %v3006 = vld [vmem:[%s14 + $0x1e0] sm:$0xff]
    %v3007 = vld [vmem:[%s14 + $0x1e8] sm:$0xff]
    %v3008 = vld [vmem:[%s14 + $0x1f0] sm:$0xff]
    %v3009 = vld [vmem:[%s14 + $0x1f8] sm:$0xff]
    %v3010 = vld [vmem:[%s14 + $0x200] sm:$0xff]
    %v3011 = vld [vmem:[%s14 + $0x208] sm:$0xff]
    %v3012 = vld [vmem:[%s14 + $0x210] sm:$0xff]
    %v3013 = vld [vmem:[%s14 + $0x218] sm:$0xff]
    %v3014 = vld [vmem:[%s14 + $0x220] sm:$0xff]
    %v3015 = vld [vmem:[%s14 + $0x228] sm:$0xff]
    %v3016 = vld [vmem:[%s14 + $0x230] sm:$0xff]
    %v3017 = vld [vmem:[%s14 + $0x238] sm:$0xff]
    %v3018 = vld [vmem:[%s14 + $0x240] sm:$0xff]
    %v3019 = vld [vmem:[%s14 + $0x248] sm:$0xff]
    %v3020 = vld [vmem:[%s14 + $0x250] sm:$0xff]
    %v3021 = vld [vmem:[%s14 + $0x258] sm:$0xff]
    %v3022 = vld [vmem:[%s14 + $0x260] sm:$0xff]
    %v3023 = vld [vmem:[%s14 + $0x268] sm:$0xff]
    %v3024 = vld [vmem:[%s14 + $0x270] sm:$0xff]
    %v3025 = vld [vmem:[%s14 + $0x278] sm:$0xff]
    %v3026 = vld [vmem:[%s14 + $0x280] sm:$0xff]
    %v3027 = vld [vmem:[%s14 + $0x288] sm:$0xff]
    %v3028 = vld [vmem:[%s14 + $0x290] sm:$0xff]
    %v3029 = vld [vmem:[%s14 + $0x298] sm:$0xff]
    %v3030 = vld [vmem:[%s14 + $0x2a0] sm:$0xff]
    %v3031 = vld [vmem:[%s14 + $0x2a8] sm:$0xff]
    %v3032 = vld [vmem:[%s14 + $0x2b0] sm:$0xff]
    %v3033 = vld [vmem:[%s14 + $0x2b8] sm:$0xff]
    %v3034 = vld [vmem:[%s14 + $0x2c0] sm:$0xff]
    %v3035 = vld [vmem:[%s14 + $0x2c8] sm:$0xff]
    %v3036 = vld [vmem:[%s14 + $0x2d0] sm:$0xff]
    %v3037 = vld [vmem:[%s14 + $0x2d8] sm:$0xff]
    %v3038 = vld [vmem:[%s14 + $0x2e0] sm:$0xff]
    %v3039 = vld [vmem:[%s14 + $0x2e8] sm:$0xff]
    %v3040 = vld [vmem:[%s14 + $0x2f0] sm:$0xff]
    %v3041 = vld [vmem:[%s14 + $0x2f8] sm:$0xff]
    %v3042 = vld [vmem:[%s14 + $0x300] sm:$0xff]
    %v3043 = vld [vmem:[%s14 + $0x308] sm:$0xff]
    %v3044 = vld [vmem:[%s14 + $0x310] sm:$0xff]
    %v3045 = vld [vmem:[%s14 + $0x318] sm:$0xff]
    %v3046 = vld [vmem:[%s14 + $0x320] sm:$0xff]
    %v3047 = vld [vmem:[%s14 + $0x328] sm:$0xff]
    %v3048 = vld [vmem:[%s14 + $0x330] sm:$0xff]
    %v3049 = vld [vmem:[%s14 + $0x338] sm:$0xff]
    %v3050 = vld [vmem:[%s14 + $0x340] sm:$0xff]
    %v3051 = vld [vmem:[%s14 + $0x348] sm:$0xff]
    %v3052 = vld [vmem:[%s14 + $0x350] sm:$0xff]
    %v3053 = vld [vmem:[%s14 + $0x358] sm:$0xff]
    %v3054 = vld [vmem:[%s14 + $0x360] sm:$0xff]
    %v3055 = vld [vmem:[%s14 + $0x368] sm:$0xff]
    %v3056 = vld [vmem:[%s14 + $0x370] sm:$0xff]
    %v3057 = vld [vmem:[%s14 + $0x378] sm:$0xff]
    %v3058 = vld [vmem:[%s14 + $0x380] sm:$0xff]
    %v3059 = vld [vmem:[%s14 + $0x388] sm:$0xff]
    %v3060 = vld [vmem:[%s14 + $0x390] sm:$0xff]
    %v3061 = vld [vmem:[%s14 + $0x398] sm:$0xff]
    %v3062 = vld [vmem:[%s14 + $0x3a0] sm:$0xff]
    %v3063 = vld [vmem:[%s14 + $0x3a8] sm:$0xff]
    %v3064 = vld [vmem:[%s14 + $0x3b0] sm:$0xff]
    %v3065 = vld [vmem:[%s14 + $0x3b8] sm:$0xff]
    %v3066 = vld [vmem:[%s14 + $0x3c0] sm:$0xff]
    %v3067 = vld [vmem:[%s14 + $0x3c8] sm:$0xff]
    %v3068 = vld [vmem:[%s14 + $0x3d0] sm:$0xff]
    %v3069 = vld [vmem:[%s14 + $0x3d8] sm:$0xff]
    %v3070 = vld [vmem:[%s14 + $0x3e0] sm:$0xff]
    %v3071 = vld [vmem:[%s15] sm:$0x1]
    %v3073 = vlaneseq
    %v3074 = vshrl.u32 %v3073, 7
    %v3075 = vsub.s32 0, %v3074
    %v3076 = vrot.slane %v3071, %v3075
    %vm3078 = vcmask 850944
    %v3080 = vsel %vm3078, %v2945, 0
    %3082 = vmatprep.subr.mxu0 0.0
    %3083 = vmatpush1.msra.mxu0 %v2946
    %3084 = vmatprep.subr.mxu0 0.0
    %3085 = vmatpush1.msra.mxu0 %v2947
    %3086 = vmatprep.subr.mxu0 0.0
    %3087 = vmatpush1.msra.mxu0 %v2948
    %3088 = vmatprep.subr.mxu0 0.0
    %3089 = vmatpush1.msra.mxu0 %v2949
    %3090 = vmatprep.subr.mxu0 0.0
    %3091 = vmatpush1.msra.mxu0 %v2950
    %3092 = vmatprep.subr.mxu0 0.0
    %3093 = vmatpush1.msra.mxu0 %v2951
    %3094 = vmatprep.subr.mxu0 0.0
    %3095 = vmatpush1.msra.mxu0 %v2952
    %3096 = vmatprep.subr.mxu0 0.0
    %3097 = vmatpush1.msra.mxu0 %v2953
    %3098 = vmatprep.subr.mxu0 0.0
    %3099 = vmatpush1.msra.mxu0 %v2954
    %3100 = vmatprep.subr.mxu0 0.0
    %3101 = vmatpush1.msra.mxu0 %v2955
    %3102 = vmatprep.subr.mxu0 0.0
    %3103 = vmatpush1.msra.mxu0 %v2956
    %3104 = vmatprep.subr.mxu0 0.0
    %3105 = vmatpush1.msra.mxu0 %v2957
    %3106 = vmatprep.subr.mxu0 0.0
    %3107 = vmatpush1.msra.mxu0 %v2958
    %3108 = vmatprep.subr.mxu0 0.0
    %3109 = vmatpush1.msra.mxu0 %v2959
    %3110 = vmatprep.subr.mxu0 0.0
    %3111 = vmatpush1.msra.mxu0 %v2960
    %3112 = vmatprep.subr.mxu0 0.0
    %3113 = vmatpush1.msra.mxu0 %v2961
    %3114 = vmatprep.subr.mxu0 0.0
    %3115 = vmatpush1.msra.mxu0 %v2962
    %3116 = vmatprep.subr.mxu0 0.0
    %3117 = vmatpush1.msra.mxu0 %v2963
    %3118 = vmatprep.subr.mxu0 0.0
    %3119 = vmatpush1.msra.mxu0 %v2964
    %3120 = vmatprep.subr.mxu0 0.0
    %3121 = vmatpush1.msra.mxu0 %v2965
    %3122 = vmatprep.subr.mxu0 0.0
    %3123 = vmatpush1.msra.mxu0 %v2966
    %3124 = vmatprep.subr.mxu0 0.0
    %3125 = vmatpush1.msra.mxu0 %v2967
    %3126 = vmatprep.subr.mxu0 0.0
    %3127 = vmatpush1.msra.mxu0 %v2968
    %3128 = vmatprep.subr.mxu0 0.0
    %3129 = vmatpush1.msra.mxu0 %v2969
    %3130 = vmatprep.subr.mxu0 0.0
    %3131 = vmatpush1.msra.mxu0 %v2970
    %3132 = vmatprep.subr.mxu0 0.0
    %3133 = vmatpush1.msra.mxu0 %v2971
    %3134 = vmatprep.subr.mxu0 0.0
    %3135 = vmatpush1.msra.mxu0 %v2972
    %3136 = vmatprep.subr.mxu0 0.0
    %3137 = vmatpush1.msra.mxu0 %v2973
    %3138 = vmatprep.subr.mxu0 0.0
    %3139 = vmatpush1.msra.mxu0 %v2974
    %3140 = vmatprep.subr.mxu0 0.0
    %3141 = vmatpush1.msra.mxu0 %v2975
    %3142 = vmatprep.subr.mxu0 0.0
    %3143 = vmatpush1.msra.mxu0 %v2976
    %3144 = vmatprep.subr.mxu0 0.0
    %3145 = vmatpush1.msra.mxu0 %v2977
    %3146 = vmatprep.mubr.f32.mxu0 %v2939
    %3147 = vmatmul.mubr.f32.gmra.mrb[0].mxu0 %v2938
    %v3148 = vpop.f32.mrb[0].mxu0
    %v3149 = vadd.f32 %v3076, %v3148
    %v3150 = vpop.f32.mrb[0].mxu0
    %3151 = vdwg.mxu0
    %3152 = vmatprep.subr.mxu0 0.0
    %3153 = vmatpush1.msra.mxu0 %v2978
    %3154 = vmatprep.subr.mxu0 0.0
    %3155 = vmatpush1.msra.mxu0 %v2979
    %3156 = vmatprep.subr.mxu0 0.0
    %3157 = vmatpush1.msra.mxu0 %v2980
    %3158 = vmatprep.subr.mxu0 0.0
    %3159 = vmatpush1.msra.mxu0 %v2981
    %3160 = vmatprep.subr.mxu0 0.0
    %3161 = vmatpush1.msra.mxu0 %v2982
    %3162 = vmatprep.subr.mxu0 0.0
    %3163 = vmatpush1.msra.mxu0 %v2983
    %3164 = vmatprep.subr.mxu0 0.0
    %3165 = vmatpush1.msra.mxu0 %v2984
    %3166 = vmatprep.subr.mxu0 0.0
    %3167 = vmatpush1.msra.mxu0 %v2985
    %3168 = vmatprep.subr.mxu0 0.0
    %3169 = vmatpush1.msra.mxu0 %v2986
    %3170 = vmatprep.subr.mxu0 0.0
    %3171 = vmatpush1.msra.mxu0 %v2987
    %3172 = vmatprep.subr.mxu0 0.0
    %3173 = vmatpush1.msra.mxu0 %v2988
    %3174 = vmatprep.subr.mxu0 0.0
    %3175 = vmatpush1.msra.mxu0 %v2989
    %3176 = vmatprep.subr.mxu0 0.0
    %3177 = vmatpush1.msra.mxu0 %v2990
    %3178 = vmatprep.subr.mxu0 0.0
    %3179 = vmatpush1.msra.mxu0 %v2991
    %3180 = vmatprep.subr.mxu0 0.0
    %3181 = vmatpush1.msra.mxu0 %v2992
    %3182 = vmatprep.subr.mxu0 0.0
    %3183 = vmatpush1.msra.mxu0 %v2993
    %3184 = vmatprep.subr.mxu0 0.0
    %3185 = vmatpush1.msra.mxu0 %v2994
    %3186 = vmatprep.subr.mxu0 0.0
    %3187 = vmatpush1.msra.mxu0 %v2995
    %3188 = vmatprep.subr.mxu0 0.0
    %3189 = vmatpush1.msra.mxu0 %v2996
    %3190 = vmatprep.subr.mxu0 0.0
    %3191 = vmatpush1.msra.mxu0 %v2997
    %3192 = vmatprep.subr.mxu0 0.0
    %3193 = vmatpush1.msra.mxu0 %v2998
    %3194 = vmatprep.subr.mxu0 0.0
    %3195 = vmatpush1.msra.mxu0 %v2999
    %3196 = vmatprep.subr.mxu0 0.0
    %3197 = vmatpush1.msra.mxu0 %v3000
    %3198 = vmatprep.subr.mxu0 0.0
    %3199 = vmatpush1.msra.mxu0 %v3001
    %3200 = vmatprep.subr.mxu0 0.0
    %3201 = vmatpush1.msra.mxu0 %v3002
    %3202 = vmatprep.subr.mxu0 0.0
    %3203 = vmatpush1.msra.mxu0 %v3003
    %3204 = vmatprep.subr.mxu0 0.0
    %3205 = vmatpush1.msra.mxu0 %v3004
    %3206 = vmatprep.subr.mxu0 0.0
    %3207 = vmatpush1.msra.mxu0 %v3005
    %3208 = vmatprep.subr.mxu0 0.0
    %3209 = vmatpush1.msra.mxu0 %v3006
    %3210 = vmatprep.subr.mxu0 0.0
    %3211 = vmatpush1.msra.mxu0 %v3007
    %3212 = vmatprep.subr.mxu0 0.0
    %3213 = vmatpush1.msra.mxu0 %v3008
    %3214 = vmatprep.subr.mxu0 0.0
    %3215 = vmatpush1.msra.mxu0 %v3009
    %3216 = vmatprep.mubr.f32.mxu0 %v2941
    %3217 = vmatmul.mubr.f32.gmra.mrb[0].mxu0 %v2940
    %v3218 = vpop.f32.mrb[0].mxu0
    %v3219 = vadd.f32 %v3149, %v3218
    %v3220 = vpop.f32.mrb[0].mxu0
    %3221 = vdwg.mxu0
    %3222 = vmatprep.subr.mxu0 0.0
    %3223 = vmatpush1.msra.mxu0 %v3010
    %3224 = vmatprep.subr.mxu0 0.0
    %3225 = vmatpush1.msra.mxu0 %v3011
    %3226 = vmatprep.subr.mxu0 0.0
    %3227 = vmatpush1.msra.mxu0 %v3012
    %3228 = vmatprep.subr.mxu0 0.0
    %3229 = vmatpush1.msra.mxu0 %v3013
    %3230 = vmatprep.subr.mxu0 0.0
    %3231 = vmatpush1.msra.mxu0 %v3014
    %3232 = vmatprep.subr.mxu0 0.0
    %3233 = vmatpush1.msra.mxu0 %v3015
    %3234 = vmatprep.subr.mxu0 0.0
    %3235 = vmatpush1.msra.mxu0 %v3016
    %3236 = vmatprep.subr.mxu0 0.0
    %3237 = vmatpush1.msra.mxu0 %v3017
    %3238 = vmatprep.subr.mxu0 0.0
    %3239 = vmatpush1.msra.mxu0 %v3018
    %3240 = vmatprep.subr.mxu0 0.0
    %3241 = vmatpush1.msra.mxu0 %v3019
    %3242 = vmatprep.subr.mxu0 0.0
    %3243 = vmatpush1.msra.mxu0 %v3020
    %3244 = vmatprep.subr.mxu0 0.0
    %3245 = vmatpush1.msra.mxu0 %v3021
    %3246 = vmatprep.subr.mxu0 0.0
    %3247 = vmatpush1.msra.mxu0 %v3022
    %3248 = vmatprep.subr.mxu0 0.0
    %3249 = vmatpush1.msra.mxu0 %v3023
    %3250 = vmatprep.subr.mxu0 0.0
    %3251 = vmatpush1.msra.mxu0 %v3024
    %3252 = vmatprep.subr.mxu0 0.0
    %3253 = vmatpush1.msra.mxu0 %v3025
    %3254 = vmatprep.subr.mxu0 0.0
    %3255 = vmatpush1.msra.mxu0 %v3026
    %3256 = vmatprep.subr.mxu0 0.0
    %3257 = vmatpush1.msra.mxu0 %v3027
    %3258 = vmatprep.subr.mxu0 0.0
    %3259 = vmatpush1.msra.mxu0 %v3028
    %3260 = vmatprep.subr.mxu0 0.0
    %3261 = vmatpush1.msra.mxu0 %v3029
    %3262 = vmatprep.subr.mxu0 0.0
    %3263 = vmatpush1.msra.mxu0 %v3030
    %3264 = vmatprep.subr.mxu0 0.0
    %3265 = vmatpush1.msra.mxu0 %v3031
    %3266 = vmatprep.subr.mxu0 0.0
    %3267 = vmatpush1.msra.mxu0 %v3032
    %3268 = vmatprep.subr.mxu0 0.0
    %3269 = vmatpush1.msra.mxu0 %v3033
    %3270 = vmatprep.subr.mxu0 0.0
    %3271 = vmatpush1.msra.mxu0 %v3034
    %3272 = vmatprep.subr.mxu0 0.0
    %3273 = vmatpush1.msra.mxu0 %v3035
    %3274 = vmatprep.subr.mxu0 0.0
    %3275 = vmatpush1.msra.mxu0 %v3036
    %3276 = vmatprep.subr.mxu0 0.0
    %3277 = vmatpush1.msra.mxu0 %v3037
    %3278 = vmatprep.subr.mxu0 0.0
    %3279 = vmatpush1.msra.mxu0 %v3038
    %3280 = vmatprep.subr.mxu0 0.0
    %3281 = vmatpush1.msra.mxu0 %v3039
    %3282 = vmatprep.subr.mxu0 0.0
    %3283 = vmatpush1.msra.mxu0 %v3040
    %3284 = vmatprep.subr.mxu0 0.0
    %3285 = vmatpush1.msra.mxu0 %v3041
    %3286 = vmatprep.mubr.f32.mxu0 %v2943
    %3287 = vmatmul.mubr.f32.gmra.mrb[0].mxu0 %v2942
    %v3288 = vpop.f32.mrb[0].mxu0
    %v3289 = vadd.f32 %v3219, %v3288
    %v3290 = vpop.f32.mrb[0].mxu0
    %3291 = vdwg.mxu0
    %3292 = vmatprep.subr.mxu0 0.0
    %3293 = vmatpush1.msra.mxu0 %v3042
    %3294 = vmatprep.subr.mxu0 0.0
    %3295 = vmatpush1.msra.mxu0 %v3043
    %3296 = vmatprep.subr.mxu0 0.0
    %3297 = vmatpush1.msra.mxu0 %v3044
    %3298 = vmatprep.subr.mxu0 0.0
    %3299 = vmatpush1.msra.mxu0 %v3045
    %3300 = vmatprep.subr.mxu0 0.0
    %3301 = vmatpush1.msra.mxu0 %v3046
    %3302 = vmatprep.subr.mxu0 0.0
    %3303 = vmatpush1.msra.mxu0 %v3047
    %3304 = vmatprep.subr.mxu0 0.0
    %3305 = vmatpush1.msra.mxu0 %v3048
    %3306 = vmatprep.subr.mxu0 0.0
    %3307 = vmatpush1.msra.mxu0 %v3049
    %3308 = vmatprep.subr.mxu0 0.0
    %3309 = vmatpush1.msra.mxu0 %v3050
    %3310 = vmatprep.subr.mxu0 0.0
    %3311 = vmatpush1.msra.mxu0 %v3051
    %3312 = vmatprep.subr.mxu0 0.0
    %3313 = vmatpush1.msra.mxu0 %v3052
    %3314 = vmatprep.subr.mxu0 0.0
    %3315 = vmatpush1.msra.mxu0 %v3053
    %3316 = vmatprep.subr.mxu0 0.0
    %3317 = vmatpush1.msra.mxu0 %v3054
    %3318 = vmatprep.subr.mxu0 0.0
    %3319 = vmatpush1.msra.mxu0 %v3055
    %3320 = vmatprep.subr.mxu0 0.0
    %3321 = vmatpush1.msra.mxu0 %v3056
    %3322 = vmatprep.subr.mxu0 0.0
    %3323 = vmatpush1.msra.mxu0 %v3057
    %3324 = vmatprep.subr.mxu0 0.0
    %3325 = vmatpush1.msra.mxu0 %v3058
    %3326 = vmatprep.subr.mxu0 0.0
    %3327 = vmatpush1.msra.mxu0 %v3059
    %3328 = vmatprep.subr.mxu0 0.0
    %3329 = vmatpush1.msra.mxu0 %v3060
    %3330 = vmatprep.subr.mxu0 0.0
    %3331 = vmatpush1.msra.mxu0 %v3061
    %3332 = vmatprep.subr.mxu0 0.0
    %3333 = vmatpush1.msra.mxu0 %v3062
    %3334 = vmatprep.subr.mxu0 0.0
    %3335 = vmatpush1.msra.mxu0 %v3063
    %3336 = vmatprep.subr.mxu0 0.0
    %3337 = vmatpush1.msra.mxu0 %v3064
    %3338 = vmatprep.subr.mxu0 0.0
    %3339 = vmatpush1.msra.mxu0 %v3065
    %3340 = vmatprep.subr.mxu0 0.0
    %3341 = vmatpush1.msra.mxu0 %v3066
    %3342 = vmatprep.subr.mxu0 0.0
    %3343 = vmatpush1.msra.mxu0 %v3067
    %3344 = vmatprep.subr.mxu0 0.0
    %3345 = vmatpush1.msra.mxu0 %v3068
    %3346 = vmatprep.subr.mxu0 0.0
    %3347 = vmatpush1.msra.mxu0 %v3069
    %3348 = vmatprep.subr.mxu0 0.0
    %3349 = vmatpush1.msra.mxu0 %v3070
    %3350 = vmatprep.subr.mxu0 0.0
    %3351 = vmatpush1.msra.mxu0 0.0
    %3352 = vmatprep.subr.mxu0 0.0
    %3353 = vmatpush1.msra.mxu0 0.0
    %3354 = vmatprep.subr.mxu0 0.0
    %3355 = vmatpush1.msra.mxu0 0.0
    %3356 = vmatprep.mubr.f32.mxu0 %v3080
    %3357 = vmatmul.mubr.f32.gmra.mrb[0].mxu0 %v2944
    %v3358 = vpop.f32.mrb[0].mxu0
    %v3359 = vadd.f32 %v3289, %v3358
    %v3360 = vpop.f32.mrb[0].mxu0
    %3361 = vdwg.mxu0
    %v3362 = vtanh.pop %v3359
    %v3363 = vld [vmem:[%s16] sm:$0xff]
    %v3364 = vld [vmem:[%s16 + $0x8] sm:$0xff]
    %v3365 = vld [vmem:[%s16 + $0x10] sm:$0xff]
    %v3366 = vld [vmem:[%s16 + $0x18] sm:$0xff]
    %v3367 = vld [vmem:[%s16 + $0x20] sm:$0xff]
    %v3368 = vld [vmem:[%s16 + $0x28] sm:$0xff]
    %v3369 = vld [vmem:[%s16 + $0x30] sm:$0xff]
    %v3370 = vld [vmem:[%s16 + $0x38] sm:$0xff]
    %v3371 = vld [vmem:[%s16 + $0x40] sm:$0xff]
    %v3372 = vld [vmem:[%s16 + $0x48] sm:$0xff]
    %v3373 = vld [vmem:[%s16 + $0x50] sm:$0xff]
    %v3374 = vld [vmem:[%s16 + $0x58] sm:$0xff]
    %v3375 = vld [vmem:[%s16 + $0x60] sm:$0xf]
    %v3376 = vld [vmem:[#allocation3] sm:$0x1]
    %v3378 = vlaneseq
    %v3379 = vshrl.u32 %v3378, 7
    %v3380 = vsub.s32 0, %v3379
    %v3381 = vrot.slane %v3376, %v3380
    %v3384 = vsel %vm1769, %v3362, 0
    %vm3386 = vcmask 1043456
    %v3388 = vsel %vm3386, %v3375, 0
    %3390 = vmatprep.subr.mxu0 0.0
    %3391 = vmatpush1.msra.mxu0 %v3363
    %3392 = vmatprep.subr.mxu0 0.0
    %3393 = vmatpush1.msra.mxu0 %v3364
    %3394 = vmatprep.subr.mxu0 0.0
    %3395 = vmatpush1.msra.mxu0 %v3365
    %3396 = vmatprep.subr.mxu0 0.0
    %3397 = vmatpush1.msra.mxu0 %v3366
    %3398 = vmatprep.subr.mxu0 0.0
    %3399 = vmatpush1.msra.mxu0 %v3367
    %3400 = vmatprep.subr.mxu0 0.0
    %3401 = vmatpush1.msra.mxu0 %v3368
    %3402 = vmatprep.subr.mxu0 0.0
    %3403 = vmatpush1.msra.mxu0 %v3369
    %3404 = vmatprep.subr.mxu0 0.0
    %3405 = vmatpush1.msra.mxu0 %v3370
    %3406 = vmatprep.subr.mxu0 0.0
    %3407 = vmatpush1.msra.mxu0 %v3371
    %3408 = vmatprep.subr.mxu0 0.0
    %3409 = vmatpush1.msra.mxu0 %v3372
    %3410 = vmatprep.subr.mxu0 0.0
    %3411 = vmatpush1.msra.mxu0 %v3373
    %3412 = vmatprep.subr.mxu0 0.0
    %3413 = vmatpush1.msra.mxu0 %v3374
    %3414 = vmatprep.subr.mxu0 0.0
    %3415 = vmatpush1.msra.mxu0 %v3388
    %3416 = vmatprep.subr.mxu0 0.0
    %3417 = vmatpush1.msra.mxu0 0.0
    %3418 = vmatprep.subr.mxu0 0.0
    %3419 = vmatpush1.msra.mxu0 0.0
    %3420 = vmatprep.subr.mxu0 0.0
    %3421 = vmatpush1.msra.mxu0 0.0
    %3422 = vmatprep.subr.mxu0 0.0
    %3423 = vmatpush1.msra.mxu0 0.0
    %3424 = vmatprep.subr.mxu0 0.0
    %3425 = vmatpush1.msra.mxu0 0.0
    %3426 = vmatprep.subr.mxu0 0.0
    %3427 = vmatpush1.msra.mxu0 0.0
    %3428 = vmatprep.subr.mxu0 0.0
    %3429 = vmatpush1.msra.mxu0 0.0
    %3430 = vmatprep.subr.mxu0 0.0
    %3431 = vmatpush1.msra.mxu0 0.0
    %3432 = vmatprep.subr.mxu0 0.0
    %3433 = vmatpush1.msra.mxu0 0.0
    %3434 = vmatprep.subr.mxu0 0.0
    %3435 = vmatpush1.msra.mxu0 0.0
    %3436 = vmatprep.subr.mxu0 0.0
    %3437 = vmatpush1.msra.mxu0 0.0
    %3438 = vmatprep.subr.mxu0 0.0
    %3439 = vmatpush1.msra.mxu0 0.0
    %3440 = vmatprep.subr.mxu0 0.0
    %3441 = vmatpush1.msra.mxu0 0.0
    %3442 = vmatprep.subr.mxu0 0.0
    %3443 = vmatpush1.msra.mxu0 0.0
    %3444 = vmatprep.subr.mxu0 0.0
    %3445 = vmatpush1.msra.mxu0 0.0
    %3446 = vmatprep.subr.mxu0 0.0
    %3447 = vmatpush1.msra.mxu0 0.0
    %3448 = vmatprep.subr.mxu0 0.0
    %3449 = vmatpush1.msra.mxu0 0.0
    %3450 = vmatprep.subr.mxu0 0.0
    %3451 = vmatpush1.msra.mxu0 0.0
    %3452 = vmatprep.subr.mxu0 0.0
    %3453 = vmatpush1.msra.mxu0 0.0
    %3454 = vmatprep.mubr.f32.mxu0 0.0
    %3455 = vmatmul.mubr.f32.gmra.mrb[0].mxu0 %v3384
    %v3456 = vpop.f32.mrb[0].mxu0
    %v3457 = vadd.f32 %v3381, %v3456
    %v3458 = vpop.f32.mrb[0].mxu0
    %3459 = vdwg.mxu0
    %vm3460 = vcmask 7168
    %3461 = vst.msk [vmem:[%s18] sm:$0xff] %vm3460, %v3457
  $region81: #{tpu_custom_call.1} parent=0 // pred_fallthru
    _
  // Predicated region
  $region82: #{tpu_custom_call.1} parent=0 // pred_check
    _
  $region83: #{tpu_custom_call.1} parent=0 // pred_check_branch
    %3463 = sbr.rel (0) target = $region85
  $region84: #{tpu_custom_call.1} parent=0 // pred_region
    _
  $region85: #{tpu_custom_call.1} parent=0 // pred_fallthru
    _
  // Predicated region
  $region86: #{tpu_custom_call.1} parent=0 // pred_check
    _
  $region87: #{tpu_custom_call.1} parent=0 // pred_check_branch
    %3465 = sbr.rel (0) target = $region89
  $region88: #{tpu_custom_call.1} parent=0 // pred_region
    _
  $region89: #{tpu_custom_call.1} parent=0 // pred_fallthru
    _

// kernel: tpu_custom_call.1
$region0: #{tpu_custom_call.1}
  #allocation0 [shape = 'u32[]', space=smem, size = 0x4, offset = 0x4, fixed_abs, tag = 'smem constant byte address 0x4 - core index']
  #allocation1 [shape = 'u32[144,128]{1,0:T(1,128)}', space=vmem, size = 0x12000, scoped, tag = 'internal scratch']
  #allocation2 [shape = 'f32[8,512]{1,0:T(8,128)}', space=vmem, size = 0x4000, scoped, tag = 'scratch operand']
  #allocation3 [shape = 'f32[1,1]{1,0:T(1,128)S(1)}', space=vmem, size = 0x200, scoped, tag = 'scoped memory for tpu_custom_call.1']
  %s0 = inlined_call_operand.vmem [shape: bf16[16,784], index: 0, kind: input, shape index: {}]
  %s1 = inlined_call_operand.vmem [shape: bf16[8,16], index: 1, kind: input, shape index: {}]
  %s2 = inlined_call_operand.vmem [shape: f32[30,512], index: 2, kind: input, shape index: {}]
  %s3 = inlined_call_operand.vmem [shape: f32[30,512], index: 3, kind: input, shape index: {}]
  %s4 = inlined_call_operand.vmem [shape: f32[1,512], index: 4, kind: input, shape index: {}]
  %s5 = inlined_call_operand.vmem [shape: f32[1,512], index: 5, kind: input, shape index: {}]
  %s6 = inlined_call_operand.vmem [shape: bf16[784,300], index: 6, kind: input, shape index: {}]
  %s7 = inlined_call_operand.vmem [shape: f32[1,300], index: 7, kind: input, shape index: {}]
  %s8 = inlined_call_operand.vmem [shape: bf16[300,100], index: 8, kind: input, shape index: {}]
  %s9 = inlined_call_operand.vmem [shape: f32[1,100], index: 9, kind: input, shape index: {}]
  %s10 = inlined_call_operand.vmem [shape: bf16[100,30], index: 10, kind: input, shape index: {}]
  %s11 = inlined_call_operand.vmem [shape: f32[1,30], index: 11, kind: input, shape index: {}]
  %s12 = inlined_call_operand.vmem [shape: f32[128,1000], index: 12, kind: input, shape index: {}]
  %s13 = inlined_call_operand.vmem [shape: f32[1,1000], index: 13, kind: input, shape index: {}]
  %s14 = inlined_call_operand.vmem [shape: f32[1000,100], index: 14, kind: input, shape index: {}]
  %s15 = inlined_call_operand.vmem [shape: f32[1,100], index: 15, kind: input, shape index: {}]
  %s16 = inlined_call_operand.vmem [shape: f32[100,1], index: 16, kind: input, shape index: {}]
  %s17 = inlined_call_operand.<no memory space> [shape: f32[1,1], index: 17, kind: input, shape index: {}]
  %s18 = inlined_call_operand.vmem [shape: f32[8,1], index: 18, kind: output, shape index: {}]
  %s19 = sld [smem:[#allocation0]]
  $region90: #{tpu_custom_call.1} parent=0
    _
  %s21 = ssub.s32 1, %s19
  %s22 = scalar_select 0, %s21, %s19
  %v23 = vstv %s17
  %24 = vst [vmem:[#allocation3] sm:$0x1] %v23
  // Predicated region
  $region2: #{tpu_custom_call.1} parent=0 // pred_check
    _
  $region3: #{tpu_custom_call.1} parent=0 // pred_check_branch
    %26 = sbr.rel (0) target = $region5
  $region4: #{tpu_custom_call.1} parent=0 // pred_region
    _
  $region5: #{tpu_custom_call.1} parent=0 // pred_fallthru
    _
  // Predicated region
  $region6: #{tpu_custom_call.1} parent=0 // pred_check
    _
  $region7: #{tpu_custom_call.1} parent=0 // pred_check_branch
    %28 = sbr.rel (0) target = $region9
  $region8: #{tpu_custom_call.1} parent=0 // pred_region
    _
  $region9: #{tpu_custom_call.1} parent=0 // pred_fallthru
    _
  // Predicated region
  $region10: #{tpu_custom_call.1} parent=0 // pred_check
    _
  $region11: #{tpu_custom_call.1} parent=0 // pred_check_branch
    %30 = sbr.rel (0) target = $region13
  $region12: #{tpu_custom_call.1} parent=0 // pred_region
    _
  $region13: #{tpu_custom_call.1} parent=0 // pred_fallthru
    _
  // Predicated region
  $region14: #{tpu_custom_call.1} parent=0 // pred_check
    _
  $region15: #{tpu_custom_call.1} parent=0 // pred_check_branch
    %32 = sbr.rel (0) target = $region17
  $region16: #{tpu_custom_call.1} parent=0 // pred_region
    _
  $region17: #{tpu_custom_call.1} parent=0 // pred_fallthru
    _
  // Predicated region
  $region18: #{tpu_custom_call.1} parent=0 // pred_check
    _
  $region19: #{tpu_custom_call.1} parent=0 // pred_check_branch
    %34 = sbr.rel (0) target = $region21
  $region20: #{tpu_custom_call.1} parent=0 // pred_region
    _
  $region21: #{tpu_custom_call.1} parent=0 // pred_fallthru
    _
  // Predicated region
  $region22: #{tpu_custom_call.1} parent=0 // pred_check
    _
  $region23: #{tpu_custom_call.1} parent=0 // pred_check_branch
    %36 = sbr.rel (0) target = $region25
  $region24: #{tpu_custom_call.1} parent=0 // pred_region
    _
  $region25: #{tpu_custom_call.1} parent=0 // pred_fallthru
    _
  // Predicated region
  $region26: #{tpu_custom_call.1} parent=0 // pred_check
    _
  $region27: #{tpu_custom_call.1} parent=0 // pred_check_branch
    %38 = sbr.rel (0) target = $region29
  $region28: #{tpu_custom_call.1} parent=0 // pred_region
    _
  $region29: #{tpu_custom_call.1} parent=0 // pred_fallthru
    _
  // Predicated region
  $region30: #{tpu_custom_call.1} parent=0 // pred_check
    _
  $region31: #{tpu_custom_call.1} parent=0 // pred_check_branch
    %40 = sbr.rel (0) target = $region33
  $region32: #{tpu_custom_call.1} parent=0 // pred_region
    _
  $region33: #{tpu_custom_call.1} parent=0 // pred_fallthru
    _
  // Predicated region
  $region34: #{tpu_custom_call.1} parent=0 // pred_check
    _
  $region35: #{tpu_custom_call.1} parent=0 // pred_check_branch
    %42 = sbr.rel (0) target = $region37
  $region36: #{tpu_custom_call.1} parent=0 // pred_region
    _
  $region37: #{tpu_custom_call.1} parent=0 // pred_fallthru
    _
  // Predicated region
  $region38: #{tpu_custom_call.1} parent=0 // pred_check
    _
  $region39: #{tpu_custom_call.1} parent=0 // pred_check_branch
    %44 = sbr.rel (0) target = $region41
  $region40: #{tpu_custom_call.1} parent=0 // pred_region
    _
  $region41: #{tpu_custom_call.1} parent=0 // pred_fallthru
    _
  // Predicated region
  $region42: #{tpu_custom_call.1} parent=0 // pred_check
    _
  $region43: #{tpu_custom_call.1} parent=0 // pred_check_branch
    %46 = sbr.rel (0) target = $region45
  $region44: #{tpu_custom_call.1} parent=0 // pred_region
    _
  $region45: #{tpu_custom_call.1} parent=0 // pred_fallthru
    _
  // Predicated region
  $region46: #{tpu_custom_call.1} parent=0 // pred_check
    _
  $region47: #{tpu_custom_call.1} parent=0 // pred_check_branch
    %48 = sbr.rel (0) target = $region49
  $region48: #{tpu_custom_call.1} parent=0 // pred_region
    _
  $region49: #{tpu_custom_call.1} parent=0 // pred_fallthru
    _
  // Predicated region
  $region50: #{tpu_custom_call.1} parent=0 // pred_check
    _
  $region51: #{tpu_custom_call.1} parent=0 // pred_check_branch
    %50 = sbr.rel (0) target = $region53
  $region52: #{tpu_custom_call.1} parent=0 // pred_region
    _
  $region53: #{tpu_custom_call.1} parent=0 // pred_fallthru
    _
  // Predicated region
  $region54: #{tpu_custom_call.1} parent=0 // pred_check
    _
  $region55: #{tpu_custom_call.1} parent=0 // pred_check_branch
    %52 = sbr.rel (0) target = $region57
  $region56: #{tpu_custom_call.1} parent=0 // pred_region
    _
  $region57: #{tpu_custom_call.1} parent=0 // pred_fallthru
    _
  // Predicated region
  $region58: #{tpu_custom_call.1} parent=0 // pred_check
    _
  $region59: #{tpu_custom_call.1} parent=0 // pred_check_branch
    %54 = sbr.rel (0) target = $region61
  $region60: #{tpu_custom_call.1} parent=0 // pred_region
    _
  $region61: #{tpu_custom_call.1} parent=0 // pred_fallthru
    _
  // Predicated region
  $region62: #{tpu_custom_call.1} parent=0 // pred_check
    _
  $region63: #{tpu_custom_call.1} parent=0 // pred_check_branch
    %56 = sbr.rel (0) target = $region65
  $region64: #{tpu_custom_call.1} parent=0 // pred_region
    _
  $region65: #{tpu_custom_call.1} parent=0 // pred_fallthru
    _
  // Predicated region
  $region66: #{tpu_custom_call.1} parent=0 // pred_check
    _
  $region67: #{tpu_custom_call.1} parent=0 // pred_check_branch
    %58 = sbr.rel (0) target = $region69
  $region68: #{tpu_custom_call.1} parent=0 // pred_region
    _
  $region69: #{tpu_custom_call.1} parent=0 // pred_fallthru
    _
  // Predicated region
  $region70: #{tpu_custom_call.1} parent=0 // pred_check
    _
  $region71: #{tpu_custom_call.1} parent=0 // pred_check_branch
    %60 = sbr.rel (0) target = $region73
  $region72: #{tpu_custom_call.1} parent=0 // pred_region
    _
  $region73: #{tpu_custom_call.1} parent=0 // pred_fallthru
    _
  %p62 = scmp.eq.s32.totalorder 0, 0
  // Predicated region
  $region74: #{tpu_custom_call.1} parent=0 // pred_check
    %p63 = pneg %p62
  $region75: #{tpu_custom_call.1} parent=0 // pred_check_branch
    %65 = sbr.rel (%p63) target = $region77
  $region76: #{tpu_custom_call.1} parent=0 // pred_region
    %66 = vst [vmem:[#allocation2] sm:$0xff] 0.0
    %67 = vst [vmem:[#allocation2 + $0x8] sm:$0xff] 0.0
    %68 = vst [vmem:[#allocation2 + $0x10] sm:$0xff] 0.0
    %69 = vst [vmem:[#allocation2 + $0x18] sm:$0xff] 0.0
  $region77: #{tpu_custom_call.1} parent=0 // pred_fallthru
    _
  %v70 = vld [vmem:[%s0] sm:$0xff]
  %v71 = vld [vmem:[%s0 + $0x8] sm:$0xff]
  %v72 = vld [vmem:[%s0 + $0x10] sm:$0xff]
  %v73 = vld [vmem:[%s0 + $0x18] sm:$0xf]
  %v74 = vld [vmem:[%s0 + $0x1c] sm:$0xff]
  %v75 = vld [vmem:[%s0 + $0x24] sm:$0xff]
  %v76 = vld [vmem:[%s0 + $0x2c] sm:$0xff]
  %v77 = vld [vmem:[%s0 + $0x34] sm:$0xf]
  %v78 = vld [vmem:[%s6] sm:$0xff]
  %v79 = vld [vmem:[%s6 + $0x8] sm:$0xf]
  %v80 = vld [vmem:[%s6 + $0xc] sm:$0xff]
  %v81 = vld [vmem:[%s6 + $0x14] sm:$0xf]
  %v82 = vld [vmem:[%s6 + $0x18] sm:$0xff]
  %v83 = vld [vmem:[%s6 + $0x20] sm:$0xf]
  %v84 = vld [vmem:[%s6 + $0x24] sm:$0xff]
  %v85 = vld [vmem:[%s6 + $0x2c] sm:$0xf]
  %v86 = vld [vmem:[%s6 + $0x30] sm:$0xff]
  %v87 = vld [vmem:[%s6 + $0x38] sm:$0xf]
  %v88 = vld [vmem:[%s6 + $0x3c] sm:$0xff]
  %v89 = vld [vmem:[%s6 + $0x44] sm:$0xf]
  %v90 = vld [vmem:[%s6 + $0x48] sm:$0xff]
  %v91 = vld [vmem:[%s6 + $0x50] sm:$0xf]
  %v92 = vld [vmem:[%s6 + $0x54] sm:$0xff]
  %v93 = vld [vmem:[%s6 + $0x5c] sm:$0xf]
  %v94 = vld [vmem:[%s6 + $0x60] sm:$0xff]
  %v95 = vld [vmem:[%s6 + $0x68] sm:$0xf]
  %v96 = vld [vmem:[%s6 + $0x6c] sm:$0xff]
  %v97 = vld [vmem:[%s6 + $0x74] sm:$0xf]
  %v98 = vld [vmem:[%s6 + $0x78] sm:$0xff]
  %v99 = vld [vmem:[%s6 + $0x80] sm:$0xf]
  %v100 = vld [vmem:[%s6 + $0x84] sm:$0xff]
  %v101 = vld [vmem:[%s6 + $0x8c] sm:$0xf]
  %v102 = vld [vmem:[%s6 + $0x90] sm:$0xff]
  %v103 = vld [vmem:[%s6 + $0x98] sm:$0xf]
  %v104 = vld [vmem:[%s6 + $0x9c] sm:$0xff]
  %v105 = vld [vmem:[%s6 + $0xa4] sm:$0xf]
  %v106 = vld [vmem:[%s6 + $0xa8] sm:$0xff]
  %v107 = vld [vmem:[%s6 + $0xb0] sm:$0xf]
  %v108 = vld [vmem:[%s6 + $0xb4] sm:$0xff]
  %v109 = vld [vmem:[%s6 + $0xbc] sm:$0xf]
  %v110 = vld [vmem:[%s6 + $0xc0] sm:$0xff]
  %v111 = vld [vmem:[%s6 + $0xc8] sm:$0xf]
  %v112 = vld [vmem:[%s6 + $0xcc] sm:$0xff]
  %v113 = vld [vmem:[%s6 + $0xd4] sm:$0xf]
  %v114 = vld [vmem:[%s6 + $0xd8] sm:$0xff]
  %v115 = vld [vmem:[%s6 + $0xe0] sm:$0xf]
  %v116 = vld [vmem:[%s6 + $0xe4] sm:$0xff]
  %v117 = vld [vmem:[%s6 + $0xec] sm:$0xf]
  %v118 = vld [vmem:[%s6 + $0xf0] sm:$0xff]
  %v119 = vld [vmem:[%s6 + $0xf8] sm:$0xf]
  %v120 = vld [vmem:[%s6 + $0xfc] sm:$0xff]
  %v121 = vld [vmem:[%s6 + $0x104] sm:$0xf]
  %v122 = vld [vmem:[%s6 + $0x108] sm:$0xff]
  %v123 = vld [vmem:[%s6 + $0x110] sm:$0xf]
  %v124 = vld [vmem:[%s6 + $0x114] sm:$0xff]
  %v125 = vld [vmem:[%s6 + $0x11c] sm:$0xf]
  %v126 = vld [vmem:[%s6 + $0x120] sm:$0xff]
  %v127 = vld [vmem:[%s6 + $0x128] sm:$0xf]
  %v128 = vld [vmem:[%s6 + $0x12c] sm:$0xff]
  %v129 = vld [vmem:[%s6 + $0x134] sm:$0xf]
  %v130 = vld [vmem:[%s6 + $0x138] sm:$0xff]
  %v131 = vld [vmem:[%s6 + $0x140] sm:$0xf]
  %v132 = vld [vmem:[%s6 + $0x144] sm:$0xff]
  %v133 = vld [vmem:[%s6 + $0x14c] sm:$0xf]
  %v134 = vld [vmem:[%s6 + $0x150] sm:$0xff]
  %v135 = vld [vmem:[%s6 + $0x158] sm:$0xf]
  %v136 = vld [vmem:[%s6 + $0x15c] sm:$0xff]
  %v137 = vld [vmem:[%s6 + $0x164] sm:$0xf]
  %v138 = vld [vmem:[%s6 + $0x168] sm:$0xff]
  %v139 = vld [vmem:[%s6 + $0x170] sm:$0xf]
  %v140 = vld [vmem:[%s6 + $0x174] sm:$0xff]
  %v141 = vld [vmem:[%s6 + $0x17c] sm:$0xf]
  %v142 = vld [vmem:[%s6 + $0x180] sm:$0xff]
  %v143 = vld [vmem:[%s6 + $0x188] sm:$0xf]
  %v144 = vld [vmem:[%s6 + $0x18c] sm:$0xff]
  %v145 = vld [vmem:[%s6 + $0x194] sm:$0xf]
  %v146 = vld [vmem:[%s6 + $0x198] sm:$0xff]
  %v147 = vld [vmem:[%s6 + $0x1a0] sm:$0xf]
  %v148 = vld [vmem:[%s6 + $0x1a4] sm:$0xff]
  %v149 = vld [vmem:[%s6 + $0x1ac] sm:$0xf]
  %v150 = vld [vmem:[%s6 + $0x1b0] sm:$0xff]
  %v151 = vld [vmem:[%s6 + $0x1b8] sm:$0xf]
  %v152 = vld [vmem:[%s6 + $0x1bc] sm:$0xff]
  %v153 = vld [vmem:[%s6 + $0x1c4] sm:$0xf]
  %v154 = vld [vmem:[%s6 + $0x1c8] sm:$0xff]
  %v155 = vld [vmem:[%s6 + $0x1d0] sm:$0xf]
  %v156 = vld [vmem:[%s6 + $0x1d4] sm:$0xff]
  %v157 = vld [vmem:[%s6 + $0x1dc] sm:$0xf]
  %v158 = vld [vmem:[%s6 + $0x1e0] sm:$0xff]
  %v159 = vld [vmem:[%s6 + $0x1e8] sm:$0xf]
  %v160 = vld [vmem:[%s6 + $0x1ec] sm:$0xff]
  %v161 = vld [vmem:[%s6 + $0x1f4] sm:$0xf]
  %v162 = vld [vmem:[%s6 + $0x1f8] sm:$0xff]
  %v163 = vld [vmem:[%s6 + $0x200] sm:$0xf]
  %v164 = vld [vmem:[%s6 + $0x204] sm:$0xff]
  %v165 = vld [vmem:[%s6 + $0x20c] sm:$0xf]
  %v166 = vld [vmem:[%s6 + $0x210] sm:$0xff]
  %v167 = vld [vmem:[%s6 + $0x218] sm:$0xf]
  %v168 = vld [vmem:[%s6 + $0x21c] sm:$0xff]
  %v169 = vld [vmem:[%s6 + $0x224] sm:$0xf]
  %v170 = vld [vmem:[%s6 + $0x228] sm:$0xff]
  %v171 = vld [vmem:[%s6 + $0x230] sm:$0xf]
  %v172 = vld [vmem:[%s6 + $0x234] sm:$0xff]
  %v173 = vld [vmem:[%s6 + $0x23c] sm:$0xf]
  %v174 = vld [vmem:[%s6 + $0x240] sm:$0xff]
  %v175 = vld [vmem:[%s6 + $0x248] sm:$0xf]
  %v176 = vld [vmem:[%s6 + $0x24c] sm:$0xff]
  %v177 = vld [vmem:[%s6 + $0x254] sm:$0xf]
  %v178 = vld [vmem:[%s6 + $0x258] sm:$0xff]
  %v179 = vld [vmem:[%s6 + $0x260] sm:$0xf]
  %v180 = vld [vmem:[%s6 + $0x264] sm:$0xff]
  %v181 = vld [vmem:[%s6 + $0x26c] sm:$0xf]
  %v182 = vld [vmem:[%s6 + $0x270] sm:$0xff]
  %v183 = vld [vmem:[%s6 + $0x278] sm:$0xf]
  %v184 = vld [vmem:[%s6 + $0x27c] sm:$0xff]
  %v185 = vld [vmem:[%s6 + $0x284] sm:$0xf]
  %v186 = vld [vmem:[%s6 + $0x288] sm:$0xff]
  %v187 = vld [vmem:[%s6 + $0x290] sm:$0xf]
  %v188 = vld [vmem:[%s6 + $0x294] sm:$0xff]
  %v189 = vld [vmem:[%s6 + $0x29c] sm:$0xf]
  %v190 = vld [vmem:[%s6 + $0x2a0] sm:$0xff]
  %v191 = vld [vmem:[%s6 + $0x2a8] sm:$0xf]
  %v192 = vld [vmem:[%s6 + $0x2ac] sm:$0xff]
  %v193 = vld [vmem:[%s6 + $0x2b4] sm:$0xf]
  %v194 = vld [vmem:[%s6 + $0x2b8] sm:$0xff]
  %v195 = vld [vmem:[%s6 + $0x2c0] sm:$0xf]
  %v196 = vld [vmem:[%s6 + $0x2c4] sm:$0xff]
  %v197 = vld [vmem:[%s6 + $0x2cc] sm:$0xf]
  %v198 = vld [vmem:[%s6 + $0x2d0] sm:$0xff]
  %v199 = vld [vmem:[%s6 + $0x2d8] sm:$0xf]
  %v200 = vld [vmem:[%s6 + $0x2dc] sm:$0xff]
  %v201 = vld [vmem:[%s6 + $0x2e4] sm:$0xf]
  %v202 = vld [vmem:[%s6 + $0x2e8] sm:$0xff]
  %v203 = vld [vmem:[%s6 + $0x2f0] sm:$0xf]
  %v204 = vld [vmem:[%s6 + $0x2f4] sm:$0xff]
  %v205 = vld [vmem:[%s6 + $0x2fc] sm:$0xf]
  %v206 = vld [vmem:[%s6 + $0x300] sm:$0xff]
  %v207 = vld [vmem:[%s6 + $0x308] sm:$0xf]
  %v208 = vld [vmem:[%s6 + $0x30c] sm:$0xff]
  %v209 = vld [vmem:[%s6 + $0x314] sm:$0xf]
  %v210 = vld [vmem:[%s6 + $0x318] sm:$0xff]
  %v211 = vld [vmem:[%s6 + $0x320] sm:$0xf]
  %v212 = vld [vmem:[%s6 + $0x324] sm:$0xff]
  %v213 = vld [vmem:[%s6 + $0x32c] sm:$0xf]
  %v214 = vld [vmem:[%s6 + $0x330] sm:$0xff]
  %v215 = vld [vmem:[%s6 + $0x338] sm:$0xf]
  %v216 = vld [vmem:[%s6 + $0x33c] sm:$0xff]
  %v217 = vld [vmem:[%s6 + $0x344] sm:$0xf]
  %v218 = vld [vmem:[%s6 + $0x348] sm:$0xff]
  %v219 = vld [vmem:[%s6 + $0x350] sm:$0xf]
  %v220 = vld [vmem:[%s6 + $0x354] sm:$0xff]
  %v221 = vld [vmem:[%s6 + $0x35c] sm:$0xf]
  %v222 = vld [vmem:[%s6 + $0x360] sm:$0xff]
  %v223 = vld [vmem:[%s6 + $0x368] sm:$0xf]
  %v224 = vld [vmem:[%s6 + $0x36c] sm:$0xff]
  %v225 = vld [vmem:[%s6 + $0x374] sm:$0xf]
  %v226 = vld [vmem:[%s6 + $0x378] sm:$0xff]
  %v227 = vld [vmem:[%s6 + $0x380] sm:$0xf]
  %v228 = vld [vmem:[%s6 + $0x384] sm:$0xff]
  %v229 = vld [vmem:[%s6 + $0x38c] sm:$0xf]
  %v230 = vld [vmem:[%s6 + $0x390] sm:$0xff]
  %v231 = vld [vmem:[%s6 + $0x398] sm:$0xf]
  %v232 = vld [vmem:[%s6 + $0x39c] sm:$0xff]
  %v233 = vld [vmem:[%s6 + $0x3a4] sm:$0xf]
  %v234 = vld [vmem:[%s6 + $0x3a8] sm:$0xff]
  %v235 = vld [vmem:[%s6 + $0x3b0] sm:$0xf]
  %v236 = vld [vmem:[%s6 + $0x3b4] sm:$0xff]
  %v237 = vld [vmem:[%s6 + $0x3bc] sm:$0xf]
  %v238 = vld [vmem:[%s6 + $0x3c0] sm:$0xff]
  %v239 = vld [vmem:[%s6 + $0x3c8] sm:$0xf]
  %v240 = vld [vmem:[%s6 + $0x3cc] sm:$0xff]
  %v241 = vld [vmem:[%s6 + $0x3d4] sm:$0xf]
  %v242 = vld [vmem:[%s6 + $0x3d8] sm:$0xff]
  %v243 = vld [vmem:[%s6 + $0x3e0] sm:$0xf]
  %v244 = vld [vmem:[%s6 + $0x3e4] sm:$0xff]
  %v245 = vld [vmem:[%s6 + $0x3ec] sm:$0xf]
  %v246 = vld [vmem:[%s6 + $0x3f0] sm:$0xff]
  %v247 = vld [vmem:[%s6 + $0x3f8] sm:$0xf]
  %v248 = vld [vmem:[%s6 + $0x3fc] sm:$0xff]
  %v249 = vld [vmem:[%s6 + $0x404] sm:$0xf]
  %v250 = vld [vmem:[%s6 + $0x408] sm:$0xff]
  %v251 = vld [vmem:[%s6 + $0x410] sm:$0xf]
  %v252 = vld [vmem:[%s6 + $0x414] sm:$0xff]
  %v253 = vld [vmem:[%s6 + $0x41c] sm:$0xf]
  %v254 = vld [vmem:[%s6 + $0x420] sm:$0xff]
  %v255 = vld [vmem:[%s6 + $0x428] sm:$0xf]
  %v256 = vld [vmem:[%s6 + $0x42c] sm:$0xff]
  %v257 = vld [vmem:[%s6 + $0x434] sm:$0xf]
  %v258 = vld [vmem:[%s6 + $0x438] sm:$0xff]
  %v259 = vld [vmem:[%s6 + $0x440] sm:$0xf]
  %v260 = vld [vmem:[%s6 + $0x444] sm:$0xff]
  %v261 = vld [vmem:[%s6 + $0x44c] sm:$0xf]
  %v262 = vld [vmem:[%s6 + $0x450] sm:$0xff]
  %v263 = vld [vmem:[%s6 + $0x458] sm:$0xf]
  %v264 = vld [vmem:[%s6 + $0x45c] sm:$0xff]
  %v265 = vld [vmem:[%s6 + $0x464] sm:$0xf]
  %v266 = vld [vmem:[%s6 + $0x468] sm:$0xff]
  %v267 = vld [vmem:[%s6 + $0x470] sm:$0xf]
  %v268 = vld [vmem:[%s6 + $0x474] sm:$0xff]
  %v269 = vld [vmem:[%s6 + $0x47c] sm:$0xf]
  %v270 = vld [vmem:[%s6 + $0x480] sm:$0xff]
  %v271 = vld [vmem:[%s6 + $0x488] sm:$0xf]
  %v272 = vld [vmem:[%s6 + $0x48c] sm:$0xff]
  %v273 = vld [vmem:[%s6 + $0x494] sm:$0xf]
  %v274 = vld [vmem:[%s7] sm:$0x7]
  %v276 = vlaneseq
  %v277 = vshrl.u32 %v276, 7
  %v278 = vsub.s32 0, %v277
  %v279 = vrot.slane %v274, %v278
  %v280 = vlaneseq
  %v281 = vshrl.u32 %v280, 7
  %v282 = vsub.s32 1, %v281
  %v283 = vrot.slane %v274, %v282
  %v284 = vlaneseq
  %v285 = vshrl.u32 %v284, 7
  %v286 = vsub.s32 2, %v285
  %v287 = vrot.slane %v274, %v286
  %v299 = vunpack.c.l.b16 %v70
  %v300 = vunpack.c.h.b16 %v70
  %v301 = vunpack.c.l.b16 %v71
  %v302 = vunpack.c.h.b16 %v71
  %v303 = vunpack.c.l.b16 %v72
  %v304 = vunpack.c.h.b16 %v72
  %v305 = vunpack.c.l.b16 %v73
  %v306 = vunpack.c.l.b16 %v74
  %v307 = vunpack.c.h.b16 %v74
  %v308 = vunpack.c.l.b16 %v75
  %v309 = vunpack.c.h.b16 %v75
  %v310 = vunpack.c.l.b16 %v76
  %v311 = vunpack.c.h.b16 %v76
  %v312 = vunpack.c.l.b16 %v77
  %v313 = vpack.c.b16 %v306, %v299
  %v314 = vpack.c.b16 %v307, %v300
  %v315 = vpack.c.b16 %v308, %v301
  %v316 = vpack.c.b16 %v309, %v302
  %v317 = vpack.c.b16 %v310, %v303
  %v318 = vpack.c.b16 %v311, %v304
  %v319 = vpack.c.b16 %v312, %v305
  %v522 = vunpack.c.l.b16 %v78
  %v523 = vunpack.c.h.b16 %v78
  %v524 = vunpack.c.l.b16 %v79
  %v525 = vunpack.c.l.b16 %v80
  %v526 = vunpack.c.h.b16 %v80
  %v527 = vunpack.c.l.b16 %v81
  %v528 = vunpack.c.l.b16 %v82
  %v529 = vunpack.c.h.b16 %v82
  %v530 = vunpack.c.l.b16 %v83
  %v531 = vunpack.c.l.b16 %v84
  %v532 = vunpack.c.h.b16 %v84
  %v533 = vunpack.c.l.b16 %v85
  %v534 = vunpack.c.l.b16 %v86
  %v535 = vunpack.c.h.b16 %v86
  %v536 = vunpack.c.l.b16 %v87
  %v537 = vunpack.c.l.b16 %v88
  %v538 = vunpack.c.h.b16 %v88
  %v539 = vunpack.c.l.b16 %v89
  %v540 = vunpack.c.l.b16 %v90
  %v541 = vunpack.c.h.b16 %v90
  %v542 = vunpack.c.l.b16 %v91
  %v543 = vunpack.c.l.b16 %v92
  %v544 = vunpack.c.h.b16 %v92
  %v545 = vunpack.c.l.b16 %v93
  %v546 = vunpack.c.l.b16 %v94
  %v547 = vunpack.c.h.b16 %v94
  %v548 = vunpack.c.l.b16 %v95
  %v549 = vunpack.c.l.b16 %v96
  %v550 = vunpack.c.h.b16 %v96
  %v551 = vunpack.c.l.b16 %v97
  %v552 = vunpack.c.l.b16 %v98
  %v553 = vunpack.c.h.b16 %v98
  %v554 = vunpack.c.l.b16 %v99
  %v555 = vunpack.c.l.b16 %v100
  %v556 = vunpack.c.h.b16 %v100
  %v557 = vunpack.c.l.b16 %v101
  %v558 = vunpack.c.l.b16 %v102
  %v559 = vunpack.c.h.b16 %v102
  %v560 = vunpack.c.l.b16 %v103
  %v561 = vunpack.c.l.b16 %v104
  %v562 = vunpack.c.h.b16 %v104
  %v563 = vunpack.c.l.b16 %v105
  %v564 = vunpack.c.l.b16 %v106
  %v565 = vunpack.c.h.b16 %v106
  %v566 = vunpack.c.l.b16 %v107
  %v567 = vunpack.c.l.b16 %v108
  %v568 = vunpack.c.h.b16 %v108
  %v569 = vunpack.c.l.b16 %v109
  %v570 = vunpack.c.l.b16 %v110
  %v571 = vunpack.c.h.b16 %v110
  %v572 = vunpack.c.l.b16 %v111
  %v573 = vunpack.c.l.b16 %v112
  %v574 = vunpack.c.h.b16 %v112
  %v575 = vunpack.c.l.b16 %v113
  %v576 = vunpack.c.l.b16 %v114
  %v577 = vunpack.c.h.b16 %v114
  %v578 = vunpack.c.l.b16 %v115
  %v579 = vunpack.c.l.b16 %v116
  %v580 = vunpack.c.h.b16 %v116
  %v581 = vunpack.c.l.b16 %v117
  %v582 = vunpack.c.l.b16 %v118
  %v583 = vunpack.c.h.b16 %v118
  %v584 = vunpack.c.l.b16 %v119
  %v585 = vunpack.c.l.b16 %v120
  %v586 = vunpack.c.h.b16 %v120
  %v587 = vunpack.c.l.b16 %v121
  %v588 = vunpack.c.l.b16 %v122
  %v589 = vunpack.c.h.b16 %v122
  %v590 = vunpack.c.l.b16 %v123
  %v591 = vunpack.c.l.b16 %v124
  %v592 = vunpack.c.h.b16 %v124
  %v593 = vunpack.c.l.b16 %v125
  %v594 = vunpack.c.l.b16 %v126
  %v595 = vunpack.c.h.b16 %v126
  %v596 = vunpack.c.l.b16 %v127
  %v597 = vunpack.c.l.b16 %v128
  %v598 = vunpack.c.h.b16 %v128
  %v599 = vunpack.c.l.b16 %v129
  %v600 = vunpack.c.l.b16 %v130
  %v601 = vunpack.c.h.b16 %v130
  %v602 = vunpack.c.l.b16 %v131
  %v603 = vunpack.c.l.b16 %v132
  %v604 = vunpack.c.h.b16 %v132
  %v605 = vunpack.c.l.b16 %v133
  %v606 = vunpack.c.l.b16 %v134
  %v607 = vunpack.c.h.b16 %v134
  %v608 = vunpack.c.l.b16 %v135
  %v609 = vunpack.c.l.b16 %v136
  %v610 = vunpack.c.h.b16 %v136
  %v611 = vunpack.c.l.b16 %v137
  %v612 = vunpack.c.l.b16 %v138
  %v613 = vunpack.c.h.b16 %v138
  %v614 = vunpack.c.l.b16 %v139
  %v615 = vunpack.c.l.b16 %v140
  %v616 = vunpack.c.h.b16 %v140
  %v617 = vunpack.c.l.b16 %v141
  %v618 = vunpack.c.l.b16 %v142
  %v619 = vunpack.c.h.b16 %v142
  %v620 = vunpack.c.l.b16 %v143
  %v621 = vunpack.c.l.b16 %v144
  %v622 = vunpack.c.h.b16 %v144
  %v623 = vunpack.c.l.b16 %v145
  %v624 = vunpack.c.l.b16 %v146
  %v625 = vunpack.c.h.b16 %v146
  %v626 = vunpack.c.l.b16 %v147
  %v627 = vunpack.c.l.b16 %v148
  %v628 = vunpack.c.h.b16 %v148
  %v629 = vunpack.c.l.b16 %v149
  %v630 = vunpack.c.l.b16 %v150
  %v631 = vunpack.c.h.b16 %v150
  %v632 = vunpack.c.l.b16 %v151
  %v633 = vunpack.c.l.b16 %v152
  %v634 = vunpack.c.h.b16 %v152
  %v635 = vunpack.c.l.b16 %v153
  %v636 = vunpack.c.l.b16 %v154
  %v637 = vunpack.c.h.b16 %v154
  %v638 = vunpack.c.l.b16 %v155
  %v639 = vunpack.c.l.b16 %v156
  %v640 = vunpack.c.h.b16 %v156
  %v641 = vunpack.c.l.b16 %v157
  %v642 = vunpack.c.l.b16 %v158
  %v643 = vunpack.c.h.b16 %v158
  %v644 = vunpack.c.l.b16 %v159
  %v645 = vunpack.c.l.b16 %v160
  %v646 = vunpack.c.h.b16 %v160
  %v647 = vunpack.c.l.b16 %v161
  %v648 = vunpack.c.l.b16 %v162
  %v649 = vunpack.c.h.b16 %v162
  %v650 = vunpack.c.l.b16 %v163
  %v651 = vunpack.c.l.b16 %v164
  %v652 = vunpack.c.h.b16 %v164
  %v653 = vunpack.c.l.b16 %v165
  %v654 = vunpack.c.l.b16 %v166
  %v655 = vunpack.c.h.b16 %v166
  %v656 = vunpack.c.l.b16 %v167
  %v657 = vunpack.c.l.b16 %v168
  %v658 = vunpack.c.h.b16 %v168
  %v659 = vunpack.c.l.b16 %v169
  %v660 = vunpack.c.l.b16 %v170
  %v661 = vunpack.c.h.b16 %v170
  %v662 = vunpack.c.l.b16 %v171
  %v663 = vunpack.c.l.b16 %v172
  %v664 = vunpack.c.h.b16 %v172
  %v665 = vunpack.c.l.b16 %v173
  %v666 = vunpack.c.l.b16 %v174
  %v667 = vunpack.c.h.b16 %v174
  %v668 = vunpack.c.l.b16 %v175
  %v669 = vunpack.c.l.b16 %v176
  %v670 = vunpack.c.h.b16 %v176
  %v671 = vunpack.c.l.b16 %v177
  %v672 = vunpack.c.l.b16 %v178
  %v673 = vunpack.c.h.b16 %v178
  %v674 = vunpack.c.l.b16 %v179
  %v675 = vunpack.c.l.b16 %v180
  %v676 = vunpack.c.h.b16 %v180
  %v677 = vunpack.c.l.b16 %v181
  %v678 = vunpack.c.l.b16 %v182
  %v679 = vunpack.c.h.b16 %v182
  %v680 = vunpack.c.l.b16 %v183
  %v681 = vunpack.c.l.b16 %v184
  %v682 = vunpack.c.h.b16 %v184
  %v683 = vunpack.c.l.b16 %v185
  %v684 = vunpack.c.l.b16 %v186
  %v685 = vunpack.c.h.b16 %v186
  %v686 = vunpack.c.l.b16 %v187
  %v687 = vunpack.c.l.b16 %v188
  %v688 = vunpack.c.h.b16 %v188
  %v689 = vunpack.c.l.b16 %v189
  %v690 = vunpack.c.l.b16 %v190
  %v691 = vunpack.c.h.b16 %v190
  %v692 = vunpack.c.l.b16 %v191
  %v693 = vunpack.c.l.b16 %v192
  %v694 = vunpack.c.h.b16 %v192
  %v695 = vunpack.c.l.b16 %v193
  %v696 = vunpack.c.l.b16 %v194
  %v697 = vunpack.c.h.b16 %v194
  %v698 = vunpack.c.l.b16 %v195
  %v699 = vunpack.c.l.b16 %v196
  %v700 = vunpack.c.h.b16 %v196
  %v701 = vunpack.c.l.b16 %v197
  %v702 = vunpack.c.l.b16 %v198
  %v703 = vunpack.c.h.b16 %v198
  %v704 = vunpack.c.l.b16 %v199
  %v705 = vunpack.c.l.b16 %v200
  %v706 = vunpack.c.h.b16 %v200
  %v707 = vunpack.c.l.b16 %v201
  %v708 = vunpack.c.l.b16 %v202
  %v709 = vunpack.c.h.b16 %v202
  %v710 = vunpack.c.l.b16 %v203
  %v711 = vunpack.c.l.b16 %v204
  %v712 = vunpack.c.h.b16 %v204
  %v713 = vunpack.c.l.b16 %v205
  %v714 = vunpack.c.l.b16 %v206
  %v715 = vunpack.c.h.b16 %v206
  %v716 = vunpack.c.l.b16 %v207
  %v717 = vunpack.c.l.b16 %v208
  %v718 = vunpack.c.h.b16 %v208
  %v719 = vunpack.c.l.b16 %v209
  %v720 = vunpack.c.l.b16 %v210
  %v721 = vunpack.c.h.b16 %v210
  %v722 = vunpack.c.l.b16 %v211
  %v723 = vunpack.c.l.b16 %v212
  %v724 = vunpack.c.h.b16 %v212
  %v725 = vunpack.c.l.b16 %v213
  %v726 = vunpack.c.l.b16 %v214
  %v727 = vunpack.c.h.b16 %v214
  %v728 = vunpack.c.l.b16 %v215
  %v729 = vunpack.c.l.b16 %v216
  %v730 = vunpack.c.h.b16 %v216
  %v731 = vunpack.c.l.b16 %v217
  %v732 = vunpack.c.l.b16 %v218
  %v733 = vunpack.c.h.b16 %v218
  %v734 = vunpack.c.l.b16 %v219
  %v735 = vunpack.c.l.b16 %v220
  %v736 = vunpack.c.h.b16 %v220
  %v737 = vunpack.c.l.b16 %v221
  %v738 = vunpack.c.l.b16 %v222
  %v739 = vunpack.c.h.b16 %v222
  %v740 = vunpack.c.l.b16 %v223
  %v741 = vunpack.c.l.b16 %v224
  %v742 = vunpack.c.h.b16 %v224
  %v743 = vunpack.c.l.b16 %v225
  %v744 = vunpack.c.l.b16 %v226
  %v745 = vunpack.c.h.b16 %v226
  %v746 = vunpack.c.l.b16 %v227
  %v747 = vunpack.c.l.b16 %v228
  %v748 = vunpack.c.h.b16 %v228
  %v749 = vunpack.c.l.b16 %v229
  %v750 = vunpack.c.l.b16 %v230
  %v751 = vunpack.c.h.b16 %v230
  %v752 = vunpack.c.l.b16 %v231
  %v753 = vunpack.c.l.b16 %v232
  %v754 = vunpack.c.h.b16 %v232
  %v755 = vunpack.c.l.b16 %v233
  %v756 = vunpack.c.l.b16 %v234
  %v757 = vunpack.c.h.b16 %v234
  %v758 = vunpack.c.l.b16 %v235
  %v759 = vunpack.c.l.b16 %v236
  %v760 = vunpack.c.h.b16 %v236
  %v761 = vunpack.c.l.b16 %v237
  %v762 = vunpack.c.l.b16 %v238
  %v763 = vunpack.c.h.b16 %v238
  %v764 = vunpack.c.l.b16 %v239
  %v765 = vunpack.c.l.b16 %v240
  %v766 = vunpack.c.h.b16 %v240
  %v767 = vunpack.c.l.b16 %v241
  %v768 = vunpack.c.l.b16 %v242
  %v769 = vunpack.c.h.b16 %v242
  %v770 = vunpack.c.l.b16 %v243
  %v771 = vunpack.c.l.b16 %v244
  %v772 = vunpack.c.h.b16 %v244
  %v773 = vunpack.c.l.b16 %v245
  %v774 = vunpack.c.l.b16 %v246
  %v775 = vunpack.c.h.b16 %v246
  %v776 = vunpack.c.l.b16 %v247
  %v777 = vunpack.c.l.b16 %v248
  %v778 = vunpack.c.h.b16 %v248
  %v779 = vunpack.c.l.b16 %v249
  %v780 = vunpack.c.l.b16 %v250
  %v781 = vunpack.c.h.b16 %v250
  %v782 = vunpack.c.l.b16 %v251
  %v783 = vunpack.c.l.b16 %v252
  %v784 = vunpack.c.h.b16 %v252
  %v785 = vunpack.c.l.b16 %v253
  %v786 = vunpack.c.l.b16 %v254
  %v787 = vunpack.c.h.b16 %v254
  %v788 = vunpack.c.l.b16 %v255
  %v789 = vunpack.c.l.b16 %v256
  %v790 = vunpack.c.h.b16 %v256
  %v791 = vunpack.c.l.b16 %v257
  %v792 = vunpack.c.l.b16 %v258
  %v793 = vunpack.c.h.b16 %v258
  %v794 = vunpack.c.l.b16 %v259
  %v795 = vunpack.c.l.b16 %v260
  %v796 = vunpack.c.h.b16 %v260
  %v797 = vunpack.c.l.b16 %v261
  %v798 = vunpack.c.l.b16 %v262
  %v799 = vunpack.c.h.b16 %v262
  %v800 = vunpack.c.l.b16 %v263
  %v801 = vunpack.c.l.b16 %v264
  %v802 = vunpack.c.h.b16 %v264
  %v803 = vunpack.c.l.b16 %v265
  %v804 = vunpack.c.l.b16 %v266
  %v805 = vunpack.c.h.b16 %v266
  %v806 = vunpack.c.l.b16 %v267
  %v807 = vunpack.c.l.b16 %v268
  %v808 = vunpack.c.h.b16 %v268
  %v809 = vunpack.c.l.b16 %v269
  %v810 = vunpack.c.l.b16 %v270
  %v811 = vunpack.c.h.b16 %v270
  %v812 = vunpack.c.l.b16 %v271
  %v813 = vunpack.c.l.b16 %v272
  %v814 = vunpack.c.h.b16 %v272
  %v815 = vunpack.c.l.b16 %v273
  %v816 = vpack.c.b16 %v525, %v522
  %v817 = vpack.c.b16 %v526, %v523
  %v818 = vpack.c.b16 %v527, %v524
  %v819 = vpack.c.b16 %v531, %v528
  %v820 = vpack.c.b16 %v532, %v529
  %v821 = vpack.c.b16 %v533, %v530
  %v822 = vpack.c.b16 %v537, %v534
  %v823 = vpack.c.b16 %v538, %v535
  %v824 = vpack.c.b16 %v539, %v536
  %v825 = vpack.c.b16 %v543, %v540
  %v826 = vpack.c.b16 %v544, %v541
  %v827 = vpack.c.b16 %v545, %v542
  %v828 = vpack.c.b16 %v549, %v546
  %v829 = vpack.c.b16 %v550, %v547
  %v830 = vpack.c.b16 %v551, %v548
  %v831 = vpack.c.b16 %v555, %v552
  %v832 = vpack.c.b16 %v556, %v553
  %v833 = vpack.c.b16 %v557, %v554
  %v834 = vpack.c.b16 %v561, %v558
  %v835 = vpack.c.b16 %v562, %v559
  %v836 = vpack.c.b16 %v563, %v560
  %v837 = vpack.c.b16 %v567, %v564
  %v838 = vpack.c.b16 %v568, %v565
  %v839 = vpack.c.b16 %v569, %v566
  %v840 = vpack.c.b16 %v573, %v570
  %v841 = vpack.c.b16 %v574, %v571
  %v842 = vpack.c.b16 %v575, %v572
  %v843 = vpack.c.b16 %v579, %v576
  %v844 = vpack.c.b16 %v580, %v577
  %v845 = vpack.c.b16 %v581, %v578
  %v846 = vpack.c.b16 %v585, %v582
  %v847 = vpack.c.b16 %v586, %v583
  %v848 = vpack.c.b16 %v587, %v584
  %v849 = vpack.c.b16 %v591, %v588
  %v850 = vpack.c.b16 %v592, %v589
  %v851 = vpack.c.b16 %v593, %v590
  %v852 = vpack.c.b16 %v597, %v594
  %v853 = vpack.c.b16 %v598, %v595
  %v854 = vpack.c.b16 %v599, %v596
  %v855 = vpack.c.b16 %v603, %v600
  %v856 = vpack.c.b16 %v604, %v601
  %v857 = vpack.c.b16 %v605, %v602
  %v858 = vpack.c.b16 %v609, %v606
  %v859 = vpack.c.b16 %v610, %v607
  %v860 = vpack.c.b16 %v611, %v608
  %v861 = vpack.c.b16 %v615, %v612
  %v862 = vpack.c.b16 %v616, %v613
  %v863 = vpack.c.b16 %v617, %v614
  %v864 = vpack.c.b16 %v621, %v618
  %v865 = vpack.c.b16 %v622, %v619
  %v866 = vpack.c.b16 %v623, %v620
  %v867 = vpack.c.b16 %v627, %v624
  %v868 = vpack.c.b16 %v628, %v625
  %v869 = vpack.c.b16 %v629, %v626
  %v870 = vpack.c.b16 %v633, %v630
  %v871 = vpack.c.b16 %v634, %v631
  %v872 = vpack.c.b16 %v635, %v632
  %v873 = vpack.c.b16 %v639, %v636
  %v874 = vpack.c.b16 %v640, %v637
  %v875 = vpack.c.b16 %v641, %v638
  %v876 = vpack.c.b16 %v645, %v642
  %v877 = vpack.c.b16 %v646, %v643
  %v878 = vpack.c.b16 %v647, %v644
  %v879 = vpack.c.b16 %v651, %v648
  %v880 = vpack.c.b16 %v652, %v649
  %v881 = vpack.c.b16 %v653, %v650
  %v882 = vpack.c.b16 %v657, %v654
  %v883 = vpack.c.b16 %v658, %v655
  %v884 = vpack.c.b16 %v659, %v656
  %v885 = vpack.c.b16 %v663, %v660
  %v886 = vpack.c.b16 %v664, %v661
  %v887 = vpack.c.b16 %v665, %v662
  %v888 = vpack.c.b16 %v669, %v666
  %v889 = vpack.c.b16 %v670, %v667
  %v890 = vpack.c.b16 %v671, %v668
  %v891 = vpack.c.b16 %v675, %v672
  %v892 = vpack.c.b16 %v676, %v673
  %v893 = vpack.c.b16 %v677, %v674
  %v894 = vpack.c.b16 %v681, %v678
  %v895 = vpack.c.b16 %v682, %v679
  %v896 = vpack.c.b16 %v683, %v680
  %v897 = vpack.c.b16 %v687, %v684
  %v898 = vpack.c.b16 %v688, %v685
  %v899 = vpack.c.b16 %v689, %v686
  %v900 = vpack.c.b16 %v693, %v690
  %v901 = vpack.c.b16 %v694, %v691
  %v902 = vpack.c.b16 %v695, %v692
  %v903 = vpack.c.b16 %v699, %v696
  %v904 = vpack.c.b16 %v700, %v697
  %v905 = vpack.c.b16 %v701, %v698
  %v906 = vpack.c.b16 %v705, %v702
  %v907 = vpack.c.b16 %v706, %v703
  %v908 = vpack.c.b16 %v707, %v704
  %v909 = vpack.c.b16 %v711, %v708
  %v910 = vpack.c.b16 %v712, %v709
  %v911 = vpack.c.b16 %v713, %v710
  %v912 = vpack.c.b16 %v717, %v714
  %v913 = vpack.c.b16 %v718, %v715
  %v914 = vpack.c.b16 %v719, %v716
  %v915 = vpack.c.b16 %v723, %v720
  %v916 = vpack.c.b16 %v724, %v721
  %v917 = vpack.c.b16 %v725, %v722
  %v918 = vpack.c.b16 %v729, %v726
  %v919 = vpack.c.b16 %v730, %v727
  %v920 = vpack.c.b16 %v731, %v728
  %v921 = vpack.c.b16 %v735, %v732
  %v922 = vpack.c.b16 %v736, %v733
  %v923 = vpack.c.b16 %v737, %v734
  %v924 = vpack.c.b16 %v741, %v738
  %v925 = vpack.c.b16 %v742, %v739
  %v926 = vpack.c.b16 %v743, %v740
  %v927 = vpack.c.b16 %v747, %v744
  %v928 = vpack.c.b16 %v748, %v745
  %v929 = vpack.c.b16 %v749, %v746
  %v930 = vpack.c.b16 %v753, %v750
  %v931 = vpack.c.b16 %v754, %v751
  %v932 = vpack.c.b16 %v755, %v752
  %v933 = vpack.c.b16 %v759, %v756
  %v934 = vpack.c.b16 %v760, %v757
  %v935 = vpack.c.b16 %v761, %v758
  %v936 = vpack.c.b16 %v765, %v762
  %v937 = vpack.c.b16 %v766, %v763
  %v938 = vpack.c.b16 %v767, %v764
  %v939 = vpack.c.b16 %v771, %v768
  %v940 = vpack.c.b16 %v772, %v769
  %v941 = vpack.c.b16 %v773, %v770
  %v942 = vpack.c.b16 %v777, %v774
  %v943 = vpack.c.b16 %v778, %v775
  %v944 = vpack.c.b16 %v779, %v776
  %v945 = vpack.c.b16 %v783, %v780
  %v946 = vpack.c.b16 %v784, %v781
  %v947 = vpack.c.b16 %v785, %v782
  %v948 = vpack.c.b16 %v789, %v786
  %v949 = vpack.c.b16 %v790, %v787
  %v950 = vpack.c.b16 %v791, %v788
  %v951 = vpack.c.b16 %v795, %v792
  %v952 = vpack.c.b16 %v796, %v793
  %v953 = vpack.c.b16 %v797, %v794
  %v954 = vpack.c.b16 %v801, %v798
  %v955 = vpack.c.b16 %v802, %v799
  %v956 = vpack.c.b16 %v803, %v800
  %v957 = vpack.c.b16 %v807, %v804
  %v958 = vpack.c.b16 %v808, %v805
  %v959 = vpack.c.b16 %v809, %v806
  %v960 = vpack.c.b16 %v813, %v810
  %v961 = vpack.c.b16 %v814, %v811
  %v962 = vpack.c.b16 %v815, %v812
  %vm1110 = vcmask 130048
  %v1112 = vsel %vm1110, %v319, 0
  %1114 = vmatprep.subr.bf16.mxu0 %v817
  %1115 = vmatpush1.bf16.msra.mxu0 %v816
  %1116 = vmatprep.subr.bf16.mxu0 %v820
  %1117 = vmatpush1.bf16.msra.mxu0 %v819
  %1118 = vmatprep.subr.bf16.mxu0 %v823
  %1119 = vmatpush1.bf16.msra.mxu0 %v822
  %1120 = vmatprep.subr.bf16.mxu0 %v826
  %1121 = vmatpush1.bf16.msra.mxu0 %v825
  %1122 = vmatprep.subr.bf16.mxu0 %v829
  %1123 = vmatpush1.bf16.msra.mxu0 %v828
  %1124 = vmatprep.subr.bf16.mxu0 %v832
  %1125 = vmatpush1.bf16.msra.mxu0 %v831
  %1126 = vmatprep.subr.bf16.mxu0 %v835
  %1127 = vmatpush1.bf16.msra.mxu0 %v834
  %1128 = vmatprep.subr.bf16.mxu0 %v838
  %1129 = vmatpush1.bf16.msra.mxu0 %v837
  %1130 = vmatprep.subr.bf16.mxu0 %v841
  %1131 = vmatpush1.bf16.msra.mxu0 %v840
  %1132 = vmatprep.subr.bf16.mxu0 %v844
  %1133 = vmatpush1.bf16.msra.mxu0 %v843
  %1134 = vmatprep.subr.bf16.mxu0 %v847
  %1135 = vmatpush1.bf16.msra.mxu0 %v846
  %1136 = vmatprep.subr.bf16.mxu0 %v850
  %1137 = vmatpush1.bf16.msra.mxu0 %v849
  %1138 = vmatprep.subr.bf16.mxu0 %v853
  %1139 = vmatpush1.bf16.msra.mxu0 %v852
  %1140 = vmatprep.subr.bf16.mxu0 %v856
  %1141 = vmatpush1.bf16.msra.mxu0 %v855
  %1142 = vmatprep.subr.bf16.mxu0 %v859
  %1143 = vmatpush1.bf16.msra.mxu0 %v858
  %1144 = vmatprep.subr.bf16.mxu0 %v862
  %1145 = vmatpush1.bf16.msra.mxu0 %v861
  %1146 = vmatprep.mubr.bf16.mxu0 %v314
  %1147 = vmatmul.mubr.bf16.gmra.mrb[0].mxu0 %v313
  %v1148 = vpop.f32.mrb[0].mxu0
  %v1149 = vadd.f32 %v279, %v1148
  %v1150 = vpop.f32.mrb[0].mxu0
  %v1151 = vadd.f32 %v283, %v1150
  %v1152 = vpop.f32.mrb[0].mxu0
  %v1153 = vadd.f32 %v279, %v1152
  %v1154 = vpop.f32.mrb[0].mxu0
  %v1155 = vadd.f32 %v283, %v1154
  %1156 = vdwg.mxu0
  %1157 = vmatprep.subr.bf16.mxu0 %v865
  %1158 = vmatpush1.bf16.msra.mxu0 %v864
  %1159 = vmatprep.subr.bf16.mxu0 %v868
  %1160 = vmatpush1.bf16.msra.mxu0 %v867
  %1161 = vmatprep.subr.bf16.mxu0 %v871
  %1162 = vmatpush1.bf16.msra.mxu0 %v870
  %1163 = vmatprep.subr.bf16.mxu0 %v874
  %1164 = vmatpush1.bf16.msra.mxu0 %v873
  %1165 = vmatprep.subr.bf16.mxu0 %v877
  %1166 = vmatpush1.bf16.msra.mxu0 %v876
  %1167 = vmatprep.subr.bf16.mxu0 %v880
  %1168 = vmatpush1.bf16.msra.mxu0 %v879
  %1169 = vmatprep.subr.bf16.mxu0 %v883
  %1170 = vmatpush1.bf16.msra.mxu0 %v882
  %1171 = vmatprep.subr.bf16.mxu0 %v886
  %1172 = vmatpush1.bf16.msra.mxu0 %v885
  %1173 = vmatprep.subr.bf16.mxu0 %v889
  %1174 = vmatpush1.bf16.msra.mxu0 %v888
  %1175 = vmatprep.subr.bf16.mxu0 %v892
  %1176 = vmatpush1.bf16.msra.mxu0 %v891
  %1177 = vmatprep.subr.bf16.mxu0 %v895
  %1178 = vmatpush1.bf16.msra.mxu0 %v894
  %1179 = vmatprep.subr.bf16.mxu0 %v898
  %1180 = vmatpush1.bf16.msra.mxu0 %v897
  %1181 = vmatprep.subr.bf16.mxu0 %v901
  %1182 = vmatpush1.bf16.msra.mxu0 %v900
  %1183 = vmatprep.subr.bf16.mxu0 %v904
  %1184 = vmatpush1.bf16.msra.mxu0 %v903
  %1185 = vmatprep.subr.bf16.mxu0 %v907
  %1186 = vmatpush1.bf16.msra.mxu0 %v906
  %1187 = vmatprep.subr.bf16.mxu0 %v910
  %1188 = vmatpush1.bf16.msra.mxu0 %v909
  %1189 = vmatprep.mubr.bf16.mxu0 %v316
  %1190 = vmatmul.mubr.bf16.gmra.mrb[0].mxu0 %v315
  %v1191 = vpop.f32.mrb[0].mxu0
  %v1192 = vadd.f32 %v1149, %v1191
  %v1193 = vpop.f32.mrb[0].mxu0
  %v1194 = vadd.f32 %v1151, %v1193
  %v1195 = vpop.f32.mrb[0].mxu0
  %v1196 = vadd.f32 %v1153, %v1195
  %v1197 = vpop.f32.mrb[0].mxu0
  %v1198 = vadd.f32 %v1155, %v1197
  %1199 = vdwg.mxu0
  %1200 = vmatprep.subr.bf16.mxu0 %v913
  %1201 = vmatpush1.bf16.msra.mxu0 %v912
  %1202 = vmatprep.subr.bf16.mxu0 %v916
  %1203 = vmatpush1.bf16.msra.mxu0 %v915
  %1204 = vmatprep.subr.bf16.mxu0 %v919
  %1205 = vmatpush1.bf16.msra.mxu0 %v918
  %1206 = vmatprep.subr.bf16.mxu0 %v922
  %1207 = vmatpush1.bf16.msra.mxu0 %v921
  %1208 = vmatprep.subr.bf16.mxu0 %v925
  %1209 = vmatpush1.bf16.msra.mxu0 %v924
  %1210 = vmatprep.subr.bf16.mxu0 %v928
  %1211 = vmatpush1.bf16.msra.mxu0 %v927
  %1212 = vmatprep.subr.bf16.mxu0 %v931
  %1213 = vmatpush1.bf16.msra.mxu0 %v930
  %1214 = vmatprep.subr.bf16.mxu0 %v934
  %1215 = vmatpush1.bf16.msra.mxu0 %v933
  %1216 = vmatprep.subr.bf16.mxu0 %v937
  %1217 = vmatpush1.bf16.msra.mxu0 %v936
  %1218 = vmatprep.subr.bf16.mxu0 %v940
  %1219 = vmatpush1.bf16.msra.mxu0 %v939
  %1220 = vmatprep.subr.bf16.mxu0 %v943
  %1221 = vmatpush1.bf16.msra.mxu0 %v942
  %1222 = vmatprep.subr.bf16.mxu0 %v946
  %1223 = vmatpush1.bf16.msra.mxu0 %v945
  %1224 = vmatprep.subr.bf16.mxu0 %v949
  %1225 = vmatpush1.bf16.msra.mxu0 %v948
  %1226 = vmatprep.subr.bf16.mxu0 %v952
  %1227 = vmatpush1.bf16.msra.mxu0 %v951
  %1228 = vmatprep.subr.bf16.mxu0 %v955
  %1229 = vmatpush1.bf16.msra.mxu0 %v954
  %1230 = vmatprep.subr.bf16.mxu0 %v958
  %1231 = vmatpush1.bf16.msra.mxu0 %v957
  %1232 = vmatprep.mubr.bf16.mxu0 %v318
  %1233 = vmatmul.mubr.bf16.gmra.mrb[0].mxu0 %v317
  %v1234 = vpop.f32.mrb[0].mxu0
  %v1235 = vadd.f32 %v1192, %v1234
  %v1236 = vpop.f32.mrb[0].mxu0
  %v1237 = vadd.f32 %v1194, %v1236
  %v1238 = vpop.f32.mrb[0].mxu0
  %v1239 = vadd.f32 %v1196, %v1238
  %v1240 = vpop.f32.mrb[0].mxu0
  %v1241 = vadd.f32 %v1198, %v1240
  %1242 = vdwg.mxu0
  %1243 = vmatprep.subr.bf16.mxu0 %v961
  %1244 = vmatpush1.bf16.msra.mxu0 %v960
  %1245 = vmatprep.subr.bf16.mxu0 0
  %1246 = vmatpush1.bf16.msra.mxu0 0
  %1247 = vmatprep.subr.bf16.mxu0 0
  %1248 = vmatpush1.bf16.msra.mxu0 0
  %1249 = vmatprep.subr.bf16.mxu0 0
  %1250 = vmatpush1.bf16.msra.mxu0 0
  %1251 = vmatprep.subr.bf16.mxu0 0
  %1252 = vmatpush1.bf16.msra.mxu0 0
  %1253 = vmatprep.subr.bf16.mxu0 0
  %1254 = vmatpush1.bf16.msra.mxu0 0
  %1255 = vmatprep.subr.bf16.mxu0 0
  %1256 = vmatpush1.bf16.msra.mxu0 0
  %1257 = vmatprep.subr.bf16.mxu0 0
  %1258 = vmatpush1.bf16.msra.mxu0 0
  %1259 = vmatprep.subr.bf16.mxu0 0
  %1260 = vmatpush1.bf16.msra.mxu0 0
  %1261 = vmatprep.subr.bf16.mxu0 0
  %1262 = vmatpush1.bf16.msra.mxu0 0
  %1263 = vmatprep.subr.bf16.mxu0 0
  %1264 = vmatpush1.bf16.msra.mxu0 0
  %1265 = vmatprep.subr.bf16.mxu0 0
  %1266 = vmatpush1.bf16.msra.mxu0 0
  %1267 = vmatprep.subr.bf16.mxu0 0
  %1268 = vmatpush1.bf16.msra.mxu0 0
  %1269 = vmatprep.subr.bf16.mxu0 0
  %1270 = vmatpush1.bf16.msra.mxu0 0
  %1271 = vmatprep.subr.bf16.mxu0 0
  %1272 = vmatpush1.bf16.msra.mxu0 0
  %1273 = vmatprep.subr.bf16.mxu0 0
  %1274 = vmatpush1.bf16.msra.mxu0 0
  %1275 = vmatprep.mubr.bf16.mxu0 0
  %1276 = vmatmul.mubr.bf16.gmra.mrb[0].mxu0 %v1112
  %v1277 = vpop.f32.mrb[0].mxu0
  %v1278 = vadd.f32 %v1235, %v1277
  %v1279 = vpop.f32.mrb[0].mxu0
  %v1280 = vadd.f32 %v1237, %v1279
  %v1281 = vpop.f32.mrb[0].mxu0
  %v1282 = vadd.f32 %v1239, %v1281
  %v1283 = vpop.f32.mrb[0].mxu0
  %v1284 = vadd.f32 %v1241, %v1283
  %1285 = vdwg.mxu0
  %1286 = vmatprep.subr.bf16.mxu0 0
  %1287 = vmatpush1.bf16.msra.mxu0 %v818
  %1288 = vmatprep.subr.bf16.mxu0 0
  %1289 = vmatpush1.bf16.msra.mxu0 %v821
  %1290 = vmatprep.subr.bf16.mxu0 0
  %1291 = vmatpush1.bf16.msra.mxu0 %v824
  %1292 = vmatprep.subr.bf16.mxu0 0
  %1293 = vmatpush1.bf16.msra.mxu0 %v827
  %1294 = vmatprep.subr.bf16.mxu0 0
  %1295 = vmatpush1.bf16.msra.mxu0 %v830
  %1296 = vmatprep.subr.bf16.mxu0 0
  %1297 = vmatpush1.bf16.msra.mxu0 %v833
  %1298 = vmatprep.subr.bf16.mxu0 0
  %1299 = vmatpush1.bf16.msra.mxu0 %v836
  %1300 = vmatprep.subr.bf16.mxu0 0
  %1301 = vmatpush1.bf16.msra.mxu0 %v839
  %1302 = vmatprep.subr.bf16.mxu0 0
  %1303 = vmatpush1.bf16.msra.mxu0 %v842
  %1304 = vmatprep.subr.bf16.mxu0 0
  %1305 = vmatpush1.bf16.msra.mxu0 %v845
  %1306 = vmatprep.subr.bf16.mxu0 0
  %1307 = vmatpush1.bf16.msra.mxu0 %v848
  %1308 = vmatprep.subr.bf16.mxu0 0
  %1309 = vmatpush1.bf16.msra.mxu0 %v851
  %1310 = vmatprep.subr.bf16.mxu0 0
  %1311 = vmatpush1.bf16.msra.mxu0 %v854
  %1312 = vmatprep.subr.bf16.mxu0 0
  %1313 = vmatpush1.bf16.msra.mxu0 %v857
  %1314 = vmatprep.subr.bf16.mxu0 0
  %1315 = vmatpush1.bf16.msra.mxu0 %v860
  %1316 = vmatprep.subr.bf16.mxu0 0
  %1317 = vmatpush1.bf16.msra.mxu0 %v863
  %1318 = vmatprep.mubr.bf16.mxu0 %v314
  %1319 = vmatmul.mubr.bf16.gmra.mrb[0].mxu0 %v313
  %v1320 = vpop.f32.mrb[0].mxu0
  %v1321 = vadd.f32 %v287, %v1320
  %v1322 = vpop.f32.mrb[0].mxu0
  %v1323 = vpop.f32.mrb[0].mxu0
  %v1324 = vadd.f32 %v287, %v1323
  %v1325 = vpop.f32.mrb[0].mxu0
  %1326 = vdwg.mxu0
  %1327 = vmatprep.subr.bf16.mxu0 0
  %1328 = vmatpush1.bf16.msra.mxu0 %v866
  %1329 = vmatprep.subr.bf16.mxu0 0
  %1330 = vmatpush1.bf16.msra.mxu0 %v869
  %1331 = vmatprep.subr.bf16.mxu0 0
  %1332 = vmatpush1.bf16.msra.mxu0 %v872
  %1333 = vmatprep.subr.bf16.mxu0 0
  %1334 = vmatpush1.bf16.msra.mxu0 %v875
  %1335 = vmatprep.subr.bf16.mxu0 0
  %1336 = vmatpush1.bf16.msra.mxu0 %v878
  %1337 = vmatprep.subr.bf16.mxu0 0
  %1338 = vmatpush1.bf16.msra.mxu0 %v881
  %1339 = vmatprep.subr.bf16.mxu0 0
  %1340 = vmatpush1.bf16.msra.mxu0 %v884
  %1341 = vmatprep.subr.bf16.mxu0 0
  %1342 = vmatpush1.bf16.msra.mxu0 %v887
  %1343 = vmatprep.subr.bf16.mxu0 0
  %1344 = vmatpush1.bf16.msra.mxu0 %v890
  %1345 = vmatprep.subr.bf16.mxu0 0
  %1346 = vmatpush1.bf16.msra.mxu0 %v893
  %1347 = vmatprep.subr.bf16.mxu0 0
  %1348 = vmatpush1.bf16.msra.mxu0 %v896
  %1349 = vmatprep.subr.bf16.mxu0 0
  %1350 = vmatpush1.bf16.msra.mxu0 %v899
  %1351 = vmatprep.subr.bf16.mxu0 0
  %1352 = vmatpush1.bf16.msra.mxu0 %v902
  %1353 = vmatprep.subr.bf16.mxu0 0
  %1354 = vmatpush1.bf16.msra.mxu0 %v905
  %1355 = vmatprep.subr.bf16.mxu0 0
  %1356 = vmatpush1.bf16.msra.mxu0 %v908
  %1357 = vmatprep.subr.bf16.mxu0 0
  %1358 = vmatpush1.bf16.msra.mxu0 %v911
  %1359 = vmatprep.mubr.bf16.mxu0 %v316
  %1360 = vmatmul.mubr.bf16.gmra.mrb[0].mxu0 %v315
  %v1361 = vpop.f32.mrb[0].mxu0
  %v1362 = vadd.f32 %v1321, %v1361
  %v1363 = vpop.f32.mrb[0].mxu0
  %v1364 = vpop.f32.mrb[0].mxu0
  %v1365 = vadd.f32 %v1324, %v1364
  %v1366 = vpop.f32.mrb[0].mxu0
  %1367 = vdwg.mxu0
  %1368 = vmatprep.subr.bf16.mxu0 0
  %1369 = vmatpush1.bf16.msra.mxu0 %v914
  %1370 = vmatprep.subr.bf16.mxu0 0
  %1371 = vmatpush1.bf16.msra.mxu0 %v917
  %1372 = vmatprep.subr.bf16.mxu0 0
  %1373 = vmatpush1.bf16.msra.mxu0 %v920
  %1374 = vmatprep.subr.bf16.mxu0 0
  %1375 = vmatpush1.bf16.msra.mxu0 %v923
  %1376 = vmatprep.subr.bf16.mxu0 0
  %1377 = vmatpush1.bf16.msra.mxu0 %v926
  %1378 = vmatprep.subr.bf16.mxu0 0
  %1379 = vmatpush1.bf16.msra.mxu0 %v929
  %1380 = vmatprep.subr.bf16.mxu0 0
  %1381 = vmatpush1.bf16.msra.mxu0 %v932
  %1382 = vmatprep.subr.bf16.mxu0 0
  %1383 = vmatpush1.bf16.msra.mxu0 %v935
  %1384 = vmatprep.subr.bf16.mxu0 0
  %1385 = vmatpush1.bf16.msra.mxu0 %v938
  %1386 = vmatprep.subr.bf16.mxu0 0
  %1387 = vmatpush1.bf16.msra.mxu0 %v941
  %1388 = vmatprep.subr.bf16.mxu0 0
  %1389 = vmatpush1.bf16.msra.mxu0 %v944
  %1390 = vmatprep.subr.bf16.mxu0 0
  %1391 = vmatpush1.bf16.msra.mxu0 %v947
  %1392 = vmatprep.subr.bf16.mxu0 0
  %1393 = vmatpush1.bf16.msra.mxu0 %v950
  %1394 = vmatprep.subr.bf16.mxu0 0
  %1395 = vmatpush1.bf16.msra.mxu0 %v953
  %1396 = vmatprep.subr.bf16.mxu0 0
  %1397 = vmatpush1.bf16.msra.mxu0 %v956
  %1398 = vmatprep.subr.bf16.mxu0 0
  %1399 = vmatpush1.bf16.msra.mxu0 %v959
  %1400 = vmatprep.mubr.bf16.mxu0 %v318
  %1401 = vmatmul.mubr.bf16.gmra.mrb[0].mxu0 %v317
  %v1402 = vpop.f32.mrb[0].mxu0
  %v1403 = vadd.f32 %v1362, %v1402
  %v1404 = vpop.f32.mrb[0].mxu0
  %v1405 = vpop.f32.mrb[0].mxu0
  %v1406 = vadd.f32 %v1365, %v1405
  %v1407 = vpop.f32.mrb[0].mxu0
  %1408 = vdwg.mxu0
  %1409 = vmatprep.subr.bf16.mxu0 0
  %1410 = vmatpush1.bf16.msra.mxu0 %v962
  %1411 = vmatprep.subr.bf16.mxu0 0
  %1412 = vmatpush1.bf16.msra.mxu0 0
  %1413 = vmatprep.subr.bf16.mxu0 0
  %1414 = vmatpush1.bf16.msra.mxu0 0
  %1415 = vmatprep.subr.bf16.mxu0 0
  %1416 = vmatpush1.bf16.msra.mxu0 0
  %1417 = vmatprep.subr.bf16.mxu0 0
  %1418 = vmatpush1.bf16.msra.mxu0 0
  %1419 = vmatprep.subr.bf16.mxu0 0
  %1420 = vmatpush1.bf16.msra.mxu0 0
  %1421 = vmatprep.subr.bf16.mxu0 0
  %1422 = vmatpush1.bf16.msra.mxu0 0
  %1423 = vmatprep.subr.bf16.mxu0 0
  %1424 = vmatpush1.bf16.msra.mxu0 0
  %1425 = vmatprep.subr.bf16.mxu0 0
  %1426 = vmatpush1.bf16.msra.mxu0 0
  %1427 = vmatprep.subr.bf16.mxu0 0
  %1428 = vmatpush1.bf16.msra.mxu0 0
  %1429 = vmatprep.subr.bf16.mxu0 0
  %1430 = vmatpush1.bf16.msra.mxu0 0
  %1431 = vmatprep.subr.bf16.mxu0 0
  %1432 = vmatpush1.bf16.msra.mxu0 0
  %1433 = vmatprep.subr.bf16.mxu0 0
  %1434 = vmatpush1.bf16.msra.mxu0 0
  %1435 = vmatprep.subr.bf16.mxu0 0
  %1436 = vmatpush1.bf16.msra.mxu0 0
  %1437 = vmatprep.subr.bf16.mxu0 0
  %1438 = vmatpush1.bf16.msra.mxu0 0
  %1439 = vmatprep.subr.bf16.mxu0 0
  %1440 = vmatpush1.bf16.msra.mxu0 0
  %1441 = vmatprep.mubr.bf16.mxu0 0
  %1442 = vmatmul.mubr.bf16.gmra.mrb[0].mxu0 %v1112
  %v1443 = vpop.f32.mrb[0].mxu0
  %v1444 = vadd.f32 %v1403, %v1443
  %v1445 = vpop.f32.mrb[0].mxu0
  %v1446 = vpop.f32.mrb[0].mxu0
  %v1447 = vadd.f32 %v1406, %v1446
  %v1448 = vpop.f32.mrb[0].mxu0
  %1449 = vdwg.mxu0
  %v1450 = vtanh.pop %v1278
  %v1451 = vtanh.pop %v1280
  %v1452 = vtanh.pop %v1444
  %v1453 = vtanh.pop %v1282
  %v1454 = vtanh.pop %v1284
  %v1455 = vtanh.pop %v1447
  %v1456 = vpack.c.bf16 %v1453, %v1450
  %v1457 = vpack.c.bf16 %v1454, %v1451
  %v1458 = vpack.c.bf16 %v1455, %v1452
  %v1459 = vld [vmem:[%s8] sm:$0xf]
  %v1460 = vld [vmem:[%s8 + $0x4] sm:$0xf]
  %v1461 = vld [vmem:[%s8 + $0x8] sm:$0xf]
  %v1462 = vld [vmem:[%s8 + $0xc] sm:$0xf]
  %v1463 = vld [vmem:[%s8 + $0x10] sm:$0xf]
  %v1464 = vld [vmem:[%s8 + $0x14] sm:$0xf]
  %v1465 = vld [vmem:[%s8 + $0x18] sm:$0xf]
  %v1466 = vld [vmem:[%s8 + $0x1c] sm:$0xf]
  %v1467 = vld [vmem:[%s8 + $0x20] sm:$0xf]
  %v1468 = vld [vmem:[%s8 + $0x24] sm:$0xf]
  %v1469 = vld [vmem:[%s8 + $0x28] sm:$0xf]
  %v1470 = vld [vmem:[%s8 + $0x2c] sm:$0xf]
  %v1471 = vld [vmem:[%s8 + $0x30] sm:$0xf]
  %v1472 = vld [vmem:[%s8 + $0x34] sm:$0xf]
  %v1473 = vld [vmem:[%s8 + $0x38] sm:$0xf]
  %v1474 = vld [vmem:[%s8 + $0x3c] sm:$0xf]
  %v1475 = vld [vmem:[%s8 + $0x40] sm:$0xf]
  %v1476 = vld [vmem:[%s8 + $0x44] sm:$0xf]
  %v1477 = vld [vmem:[%s8 + $0x48] sm:$0xf]
  %v1478 = vld [vmem:[%s8 + $0x4c] sm:$0xf]
  %v1479 = vld [vmem:[%s8 + $0x50] sm:$0xf]
  %v1480 = vld [vmem:[%s8 + $0x54] sm:$0xf]
  %v1481 = vld [vmem:[%s8 + $0x58] sm:$0xf]
  %v1482 = vld [vmem:[%s8 + $0x5c] sm:$0xf]
  %v1483 = vld [vmem:[%s8 + $0x60] sm:$0xf]
  %v1484 = vld [vmem:[%s8 + $0x64] sm:$0xf]
  %v1485 = vld [vmem:[%s8 + $0x68] sm:$0xf]
  %v1486 = vld [vmem:[%s8 + $0x6c] sm:$0xf]
  %v1487 = vld [vmem:[%s8 + $0x70] sm:$0xf]
  %v1488 = vld [vmem:[%s8 + $0x74] sm:$0xf]
  %v1489 = vld [vmem:[%s8 + $0x78] sm:$0xf]
  %v1490 = vld [vmem:[%s8 + $0x7c] sm:$0xf]
  %v1491 = vld [vmem:[%s8 + $0x80] sm:$0xf]
  %v1492 = vld [vmem:[%s8 + $0x84] sm:$0xf]
  %v1493 = vld [vmem:[%s8 + $0x88] sm:$0xf]
  %v1494 = vld [vmem:[%s8 + $0x8c] sm:$0xf]
  %v1495 = vld [vmem:[%s8 + $0x90] sm:$0xf]
  %v1496 = vld [vmem:[%s8 + $0x94] sm:$0x3]
  %v1497 = vld [vmem:[%s9] sm:$0x1]
  %v1499 = vlaneseq
  %v1500 = vshrl.u32 %v1499, 7
  %v1501 = vsub.s32 0, %v1500
  %v1502 = vrot.slane %v1497, %v1501
  %v1542 = vunpack.c.l.b16 %v1459
  %v1543 = vunpack.c.l.b16 %v1460
  %v1544 = vunpack.c.l.b16 %v1461
  %v1545 = vunpack.c.l.b16 %v1462
  %v1546 = vunpack.c.l.b16 %v1463
  %v1547 = vunpack.c.l.b16 %v1464
  %v1548 = vunpack.c.l.b16 %v1465
  %v1549 = vunpack.c.l.b16 %v1466
  %v1550 = vunpack.c.l.b16 %v1467
  %v1551 = vunpack.c.l.b16 %v1468
  %v1552 = vunpack.c.l.b16 %v1469
  %v1553 = vunpack.c.l.b16 %v1470
  %v1554 = vunpack.c.l.b16 %v1471
  %v1555 = vunpack.c.l.b16 %v1472
  %v1556 = vunpack.c.l.b16 %v1473
  %v1557 = vunpack.c.l.b16 %v1474
  %v1558 = vunpack.c.l.b16 %v1475
  %v1559 = vunpack.c.l.b16 %v1476
  %v1560 = vunpack.c.l.b16 %v1477
  %v1561 = vunpack.c.l.b16 %v1478
  %v1562 = vunpack.c.l.b16 %v1479
  %v1563 = vunpack.c.l.b16 %v1480
  %v1564 = vunpack.c.l.b16 %v1481
  %v1565 = vunpack.c.l.b16 %v1482
  %v1566 = vunpack.c.l.b16 %v1483
  %v1567 = vunpack.c.l.b16 %v1484
  %v1568 = vunpack.c.l.b16 %v1485
  %v1569 = vunpack.c.l.b16 %v1486
  %v1570 = vunpack.c.l.b16 %v1487
  %v1571 = vunpack.c.l.b16 %v1488
  %v1572 = vunpack.c.l.b16 %v1489
  %v1573 = vunpack.c.l.b16 %v1490
  %v1574 = vunpack.c.l.b16 %v1491
  %v1575 = vunpack.c.l.b16 %v1492
  %v1576 = vunpack.c.l.b16 %v1493
  %v1577 = vunpack.c.l.b16 %v1494
  %v1578 = vunpack.c.l.b16 %v1495
  %v1579 = vunpack.c.l.b16 %v1496
  %v1580 = vpack.c.b16 %v1543, %v1542
  %v1581 = vpack.c.b16 %v1545, %v1544
  %v1582 = vpack.c.b16 %v1547, %v1546
  %v1583 = vpack.c.b16 %v1549, %v1548
  %v1584 = vpack.c.b16 %v1551, %v1550
  %v1585 = vpack.c.b16 %v1553, %v1552
  %v1586 = vpack.c.b16 %v1555, %v1554
  %v1587 = vpack.c.b16 %v1557, %v1556
  %v1588 = vpack.c.b16 %v1559, %v1558
  %v1589 = vpack.c.b16 %v1561, %v1560
  %v1590 = vpack.c.b16 %v1563, %v1562
  %v1591 = vpack.c.b16 %v1565, %v1564
  %v1592 = vpack.c.b16 %v1567, %v1566
  %v1593 = vpack.c.b16 %v1569, %v1568
  %v1594 = vpack.c.b16 %v1571, %v1570
  %v1595 = vpack.c.b16 %v1573, %v1572
  %v1596 = vpack.c.b16 %v1575, %v1574
  %v1597 = vpack.c.b16 %v1577, %v1576
  %v1598 = vpack.c.b16 %v1579, %v1578
  %vm1617 = vcmask 359424
  %v1619 = vsel %vm1617, %v1458, 0
  %vm1621 = vcmask 1045504
  %v1623 = vsel %vm1621, %v1598, 0
  %1625 = vmatprep.subr.bf16.mxu0 0
  %1626 = vmatpush1.bf16.msra.mxu0 %v1580
  %1627 = vmatprep.subr.bf16.mxu0 0
  %1628 = vmatpush1.bf16.msra.mxu0 %v1581
  %1629 = vmatprep.subr.bf16.mxu0 0
  %1630 = vmatpush1.bf16.msra.mxu0 %v1582
  %1631 = vmatprep.subr.bf16.mxu0 0
  %1632 = vmatpush1.bf16.msra.mxu0 %v1583
  %1633 = vmatprep.subr.bf16.mxu0 0
  %1634 = vmatpush1.bf16.msra.mxu0 %v1584
  %1635 = vmatprep.subr.bf16.mxu0 0
  %1636 = vmatpush1.bf16.msra.mxu0 %v1585
  %1637 = vmatprep.subr.bf16.mxu0 0
  %1638 = vmatpush1.bf16.msra.mxu0 %v1586
  %1639 = vmatprep.subr.bf16.mxu0 0
  %1640 = vmatpush1.bf16.msra.mxu0 %v1587
  %1641 = vmatprep.subr.bf16.mxu0 0
  %1642 = vmatpush1.bf16.msra.mxu0 %v1588
  %1643 = vmatprep.subr.bf16.mxu0 0
  %1644 = vmatpush1.bf16.msra.mxu0 %v1589
  %1645 = vmatprep.subr.bf16.mxu0 0
  %1646 = vmatpush1.bf16.msra.mxu0 %v1590
  %1647 = vmatprep.subr.bf16.mxu0 0
  %1648 = vmatpush1.bf16.msra.mxu0 %v1591
  %1649 = vmatprep.subr.bf16.mxu0 0
  %1650 = vmatpush1.bf16.msra.mxu0 %v1592
  %1651 = vmatprep.subr.bf16.mxu0 0
  %1652 = vmatpush1.bf16.msra.mxu0 %v1593
  %1653 = vmatprep.subr.bf16.mxu0 0
  %1654 = vmatpush1.bf16.msra.mxu0 %v1594
  %1655 = vmatprep.subr.bf16.mxu0 0
  %1656 = vmatpush1.bf16.msra.mxu0 %v1595
  %1657 = vmatprep.mubr.bf16.mxu0 %v1457
  %1658 = vmatmul.mubr.bf16.gmra.mrb[0].mxu0 %v1456
  %v1659 = vpop.f32.mrb[0].mxu0
  %v1660 = vadd.f32 %v1502, %v1659
  %v1661 = vpop.f32.mrb[0].mxu0
  %v1662 = vpop.f32.mrb[0].mxu0
  %v1663 = vadd.f32 %v1502, %v1662
  %v1664 = vpop.f32.mrb[0].mxu0
  %1665 = vdwg.mxu0
  %1666 = vmatprep.subr.bf16.mxu0 0
  %1667 = vmatpush1.bf16.msra.mxu0 %v1596
  %1668 = vmatprep.subr.bf16.mxu0 0
  %1669 = vmatpush1.bf16.msra.mxu0 %v1597
  %1670 = vmatprep.subr.bf16.mxu0 0
  %1671 = vmatpush1.bf16.msra.mxu0 %v1623
  %1672 = vmatprep.subr.bf16.mxu0 0
  %1673 = vmatpush1.bf16.msra.mxu0 0
  %1674 = vmatprep.subr.bf16.mxu0 0
  %1675 = vmatpush1.bf16.msra.mxu0 0
  %1676 = vmatprep.subr.bf16.mxu0 0
  %1677 = vmatpush1.bf16.msra.mxu0 0
  %1678 = vmatprep.subr.bf16.mxu0 0
  %1679 = vmatpush1.bf16.msra.mxu0 0
  %1680 = vmatprep.subr.bf16.mxu0 0
  %1681 = vmatpush1.bf16.msra.mxu0 0
  %1682 = vmatprep.subr.bf16.mxu0 0
  %1683 = vmatpush1.bf16.msra.mxu0 0
  %1684 = vmatprep.subr.bf16.mxu0 0
  %1685 = vmatpush1.bf16.msra.mxu0 0
  %1686 = vmatprep.subr.bf16.mxu0 0
  %1687 = vmatpush1.bf16.msra.mxu0 0
  %1688 = vmatprep.subr.bf16.mxu0 0
  %1689 = vmatpush1.bf16.msra.mxu0 0
  %1690 = vmatprep.subr.bf16.mxu0 0
  %1691 = vmatpush1.bf16.msra.mxu0 0
  %1692 = vmatprep.subr.bf16.mxu0 0
  %1693 = vmatpush1.bf16.msra.mxu0 0
  %1694 = vmatprep.subr.bf16.mxu0 0
  %1695 = vmatpush1.bf16.msra.mxu0 0
  %1696 = vmatprep.subr.bf16.mxu0 0
  %1697 = vmatpush1.bf16.msra.mxu0 0
  %1698 = vmatprep.mubr.bf16.mxu0 0
  %1699 = vmatmul.mubr.bf16.gmra.mrb[0].mxu0 %v1619
  %v1700 = vpop.f32.mrb[0].mxu0
  %v1701 = vadd.f32 %v1660, %v1700
  %v1702 = vpop.f32.mrb[0].mxu0
  %v1703 = vpop.f32.mrb[0].mxu0
  %v1704 = vadd.f32 %v1663, %v1703
  %v1705 = vpop.f32.mrb[0].mxu0
  %1706 = vdwg.mxu0
  %v1707 = vtanh.pop %v1701
  %v1708 = vtanh.pop %v1704
  %v1709 = vpack.c.bf16 %v1708, %v1707
  %v1710 = vld [vmem:[%s10] sm:$0xf]
  %v1711 = vld [vmem:[%s10 + $0x4] sm:$0xf]
  %v1712 = vld [vmem:[%s10 + $0x8] sm:$0xf]
  %v1713 = vld [vmem:[%s10 + $0xc] sm:$0xf]
  %v1714 = vld [vmem:[%s10 + $0x10] sm:$0xf]
  %v1715 = vld [vmem:[%s10 + $0x14] sm:$0xf]
  %v1716 = vld [vmem:[%s10 + $0x18] sm:$0xf]
  %v1717 = vld [vmem:[%s10 + $0x1c] sm:$0xf]
  %v1718 = vld [vmem:[%s10 + $0x20] sm:$0xf]
  %v1719 = vld [vmem:[%s10 + $0x24] sm:$0xf]
  %v1720 = vld [vmem:[%s10 + $0x28] sm:$0xf]
  %v1721 = vld [vmem:[%s10 + $0x2c] sm:$0xf]
  %v1722 = vld [vmem:[%s10 + $0x30] sm:$0x3]
  %v1723 = vld [vmem:[%s11] sm:$0x1]
  %v1725 = vlaneseq
  %v1726 = vshrl.u32 %v1725, 7
  %v1727 = vsub.s32 0, %v1726
  %v1728 = vrot.slane %v1723, %v1727
  %v1743 = vunpack.c.l.b16 %v1710
  %v1744 = vunpack.c.l.b16 %v1711
  %v1745 = vunpack.c.l.b16 %v1712
  %v1746 = vunpack.c.l.b16 %v1713
  %v1747 = vunpack.c.l.b16 %v1714
  %v1748 = vunpack.c.l.b16 %v1715
  %v1749 = vunpack.c.l.b16 %v1716
  %v1750 = vunpack.c.l.b16 %v1717
  %v1751 = vunpack.c.l.b16 %v1718
  %v1752 = vunpack.c.l.b16 %v1719
  %v1753 = vunpack.c.l.b16 %v1720
  %v1754 = vunpack.c.l.b16 %v1721
  %v1755 = vunpack.c.l.b16 %v1722
  %v1756 = vpack.c.b16 %v1744, %v1743
  %v1757 = vpack.c.b16 %v1746, %v1745
  %v1758 = vpack.c.b16 %v1748, %v1747
  %v1759 = vpack.c.b16 %v1750, %v1749
  %v1760 = vpack.c.b16 %v1752, %v1751
  %v1761 = vpack.c.b16 %v1754, %v1753
  %v1762 = vpack.c.b16 %v1755, %v1755
  %vm1769 = vcmask 818176
  %v1771 = vsel %vm1769, %v1709, 0
  %vm1773 = vcmask 1041408
  %v1775 = vsel %vm1773, %v1762, 0
  %1777 = vmatprep.subr.bf16.mxu0 0
  %1778 = vmatpush1.bf16.msra.mxu0 %v1756
  %1779 = vmatprep.subr.bf16.mxu0 0
  %1780 = vmatpush1.bf16.msra.mxu0 %v1757
  %1781 = vmatprep.subr.bf16.mxu0 0
  %1782 = vmatpush1.bf16.msra.mxu0 %v1758
  %1783 = vmatprep.subr.bf16.mxu0 0
  %1784 = vmatpush1.bf16.msra.mxu0 %v1759
  %1785 = vmatprep.subr.bf16.mxu0 0
  %1786 = vmatpush1.bf16.msra.mxu0 %v1760
  %1787 = vmatprep.subr.bf16.mxu0 0
  %1788 = vmatpush1.bf16.msra.mxu0 %v1761
  %1789 = vmatprep.subr.bf16.mxu0 0
  %1790 = vmatpush1.bf16.msra.mxu0 %v1775
  %1791 = vmatprep.subr.bf16.mxu0 0
  %1792 = vmatpush1.bf16.msra.mxu0 0
  %1793 = vmatprep.subr.bf16.mxu0 0
  %1794 = vmatpush1.bf16.msra.mxu0 0
  %1795 = vmatprep.subr.bf16.mxu0 0
  %1796 = vmatpush1.bf16.msra.mxu0 0
  %1797 = vmatprep.subr.bf16.mxu0 0
  %1798 = vmatpush1.bf16.msra.mxu0 0
  %1799 = vmatprep.subr.bf16.mxu0 0
  %1800 = vmatpush1.bf16.msra.mxu0 0
  %1801 = vmatprep.subr.bf16.mxu0 0
  %1802 = vmatpush1.bf16.msra.mxu0 0
  %1803 = vmatprep.subr.bf16.mxu0 0
  %1804 = vmatpush1.bf16.msra.mxu0 0
  %1805 = vmatprep.subr.bf16.mxu0 0
  %1806 = vmatpush1.bf16.msra.mxu0 0
  %1807 = vmatprep.subr.bf16.mxu0 0
  %1808 = vmatpush1.bf16.msra.mxu0 0
  %1809 = vmatprep.mubr.bf16.mxu0 0
  %1810 = vmatmul.mubr.bf16.gmra.mrb[0].mxu0 %v1771
  %v1811 = vpop.f32.mrb[0].mxu0
  %v1812 = vadd.f32 %v1728, %v1811
  %v1813 = vpop.f32.mrb[0].mxu0
  %v1814 = vpop.f32.mrb[0].mxu0
  %v1815 = vadd.f32 %v1728, %v1814
  %v1816 = vpop.f32.mrb[0].mxu0
  %1817 = vdwg.mxu0
  %v1818 = vxor.u32 %v1812, 2147483648
  %v1819 = vxor.u32 %v1815, 2147483648
  %v1820 = vmul.f32 %v1818, 1.442695
  %v1821 = vpow.pop %v1820
  %v1822 = vmul.f32 %v1819, 1.442695
  %v1823 = vpow.pop %v1822
  %v1824 = vadd.f32 %v1821, 1.0
  %v1825 = vadd.f32 %v1823, 1.0
  %v1826 = vrcp.pop %v1824
  %v1827 = vmul.f32 1.0, %v1826
  %v1828 = vrcp.pop %v1825
  %v1829 = vmul.f32 1.0, %v1828
  %v1830 = vmax.f32 %v1827, 1e-07
  %v1831 = vmax.f32 %v1829, 1e-07
  %v1832 = vmin.f32 %v1830, 0.9999999
  %v1833 = vmin.f32 %v1831, 0.9999999
  %v1834 = vlog2.pop %v1832
  %v1835 = vmul.f32 %v1834, 0.6931472
  %v1836 = vlog2.pop %v1833
  %v1837 = vmul.f32 %v1836, 0.6931472
  %v1838 = vsub.f32 1.0, %v1832
  %v1839 = vsub.f32 1.0, %v1833
  %v1840 = vlog2.pop %v1838
  %v1841 = vmul.f32 %v1840, 0.6931472
  %v1842 = vlog2.pop %v1839
  %v1843 = vmul.f32 %v1842, 0.6931472
  %v1844 = vld [vmem:[%s2] sm:$0xff]
  %v1845 = vld [vmem:[%s2 + $0x8] sm:$0xff]
  %v1846 = vld [vmem:[%s2 + $0x10] sm:$0xff]
  %v1847 = vld [vmem:[%s2 + $0x18] sm:$0xff]
  %v1848 = vld [vmem:[%s2 + $0x20] sm:$0xff]
  %v1849 = vld [vmem:[%s2 + $0x28] sm:$0xff]
  %v1850 = vld [vmem:[%s2 + $0x30] sm:$0xff]
  %v1851 = vld [vmem:[%s2 + $0x38] sm:$0xff]
  %v1852 = vld [vmem:[%s2 + $0x40] sm:$0xff]
  %v1853 = vld [vmem:[%s2 + $0x48] sm:$0xff]
  %v1854 = vld [vmem:[%s2 + $0x50] sm:$0xff]
  %v1855 = vld [vmem:[%s2 + $0x58] sm:$0xff]
  %v1856 = vld [vmem:[%s2 + $0x60] sm:$0x3f]
  %v1857 = vld [vmem:[%s2 + $0x68] sm:$0x3f]
  %v1858 = vld [vmem:[%s2 + $0x70] sm:$0x3f]
  %v1859 = vld [vmem:[%s2 + $0x78] sm:$0x3f]
  %v1860 = vld [vmem:[%s3] sm:$0xff]
  %v1861 = vld [vmem:[%s3 + $0x8] sm:$0xff]
  %v1862 = vld [vmem:[%s3 + $0x10] sm:$0xff]
  %v1863 = vld [vmem:[%s3 + $0x18] sm:$0xff]
  %v1864 = vld [vmem:[%s3 + $0x20] sm:$0xff]
  %v1865 = vld [vmem:[%s3 + $0x28] sm:$0xff]
  %v1866 = vld [vmem:[%s3 + $0x30] sm:$0xff]
  %v1867 = vld [vmem:[%s3 + $0x38] sm:$0xff]
  %v1868 = vld [vmem:[%s3 + $0x40] sm:$0xff]
  %v1869 = vld [vmem:[%s3 + $0x48] sm:$0xff]
  %v1870 = vld [vmem:[%s3 + $0x50] sm:$0xff]
  %v1871 = vld [vmem:[%s3 + $0x58] sm:$0xff]
  %v1872 = vld [vmem:[%s3 + $0x60] sm:$0x3f]
  %v1873 = vld [vmem:[%s3 + $0x68] sm:$0x3f]
  %v1874 = vld [vmem:[%s3 + $0x70] sm:$0x3f]
  %v1875 = vld [vmem:[%s3 + $0x78] sm:$0x3f]
  %vm1876 = vcmask 244736
  %v1878 = vsel %vm1876, %v1841, 0
  %v1881 = vsel %vm1876, %v1843, 0
  %v1884 = vsel %vm1621, %v1872, 0
  %v1887 = vsel %vm1621, %v1873, 0
  %v1890 = vsel %vm1621, %v1874, 0
  %v1893 = vsel %vm1621, %v1875, 0
  %1895 = vmatprep.subr.mxu0 %v1861
  %1896 = vmatpush1.msra.mxu0 %v1860
  %1897 = vmatprep.subr.mxu0 %v1865
  %1898 = vmatpush1.msra.mxu0 %v1864
  %1899 = vmatprep.subr.mxu0 %v1869
  %1900 = vmatpush1.msra.mxu0 %v1868
  %1901 = vmatprep.subr.mxu0 %v1887
  %1902 = vmatpush1.msra.mxu0 %v1884
  %1903 = vmatprep.subr.mxu0 0.0
  %1904 = vmatpush1.msra.mxu0 0.0
  %1905 = vmatprep.subr.mxu0 0.0
  %1906 = vmatpush1.msra.mxu0 0.0
  %1907 = vmatprep.subr.mxu0 0.0
  %1908 = vmatpush1.msra.mxu0 0.0
  %1909 = vmatprep.subr.mxu0 0.0
  %1910 = vmatpush1.msra.mxu0 0.0
  %1911 = vmatprep.subr.mxu0 0.0
  %1912 = vmatpush1.msra.mxu0 0.0
  %1913 = vmatprep.subr.mxu0 0.0
  %1914 = vmatpush1.msra.mxu0 0.0
  %1915 = vmatprep.subr.mxu0 0.0
  %1916 = vmatpush1.msra.mxu0 0.0
  %1917 = vmatprep.subr.mxu0 0.0
  %1918 = vmatpush1.msra.mxu0 0.0
  %1919 = vmatprep.subr.mxu0 0.0
  %1920 = vmatpush1.msra.mxu0 0.0
  %1921 = vmatprep.subr.mxu0 0.0
  %1922 = vmatpush1.msra.mxu0 0.0
  %1923 = vmatprep.subr.mxu0 0.0
  %1924 = vmatpush1.msra.mxu0 0.0
  %1925 = vmatprep.subr.mxu0 0.0
  %1926 = vmatpush1.msra.mxu0 0.0
  %1927 = vmatprep.subr.mxu0 0.0
  %1928 = vmatpush1.msra.mxu0 0.0
  %1929 = vmatprep.subr.mxu0 0.0
  %1930 = vmatpush1.msra.mxu0 0.0
  %1931 = vmatprep.subr.mxu0 0.0
  %1932 = vmatpush1.msra.mxu0 0.0
  %1933 = vmatprep.subr.mxu0 0.0
  %1934 = vmatpush1.msra.mxu0 0.0
  %1935 = vmatprep.subr.mxu0 0.0
  %1936 = vmatpush1.msra.mxu0 0.0
  %1937 = vmatprep.subr.mxu0 0.0
  %1938 = vmatpush1.msra.mxu0 0.0
  %1939 = vmatprep.subr.mxu0 0.0
  %1940 = vmatpush1.msra.mxu0 0.0
  %1941 = vmatprep.subr.mxu0 0.0
  %1942 = vmatpush1.msra.mxu0 0.0
  %1943 = vmatprep.subr.mxu0 0.0
  %1944 = vmatpush1.msra.mxu0 0.0
  %1945 = vmatprep.subr.mxu0 0.0
  %1946 = vmatpush1.msra.mxu0 0.0
  %1947 = vmatprep.subr.mxu0 0.0
  %1948 = vmatpush1.msra.mxu0 0.0
  %1949 = vmatprep.subr.mxu0 0.0
  %1950 = vmatpush1.msra.mxu0 0.0
  %1951 = vmatprep.subr.mxu0 0.0
  %1952 = vmatpush1.msra.mxu0 0.0
  %1953 = vmatprep.subr.mxu0 0.0
  %1954 = vmatpush1.msra.mxu0 0.0
  %1955 = vmatprep.subr.mxu0 0.0
  %1956 = vmatpush1.msra.mxu0 0.0
  %1957 = vmatprep.subr.mxu0 0.0
  %1958 = vmatpush1.msra.mxu0 0.0
  %1959 = vmatprep.mubr.f32.mxu0 0.0
  %1960 = vmatmul.mubr.f32.gmra.mrb[0].mxu0 %v1878
  %v1961 = vpop.f32.mrb[0].mxu0
  %v1962 = vadd.f32 0.0, %v1961
  %v1963 = vpop.f32.mrb[0].mxu0
  %v1964 = vadd.f32 0.0, %v1963
  %1965 = vmatprep.mubr.f32.mxu0 0.0
  %1966 = vmatmul.mubr.f32.gmra.mrb[0].mxu0 %v1881
  %v1967 = vpop.f32.mrb[0].mxu0
  %v1968 = vadd.f32 0.0, %v1967
  %v1969 = vpop.f32.mrb[0].mxu0
  %v1970 = vadd.f32 0.0, %v1969
  %1971 = vdwg.mxu0
  %1972 = vmatprep.subr.mxu0 %v1863
  %1973 = vmatpush1.msra.mxu0 %v1862
  %1974 = vmatprep.subr.mxu0 %v1867
  %1975 = vmatpush1.msra.mxu0 %v1866
  %1976 = vmatprep.subr.mxu0 %v1871
  %1977 = vmatpush1.msra.mxu0 %v1870
  %1978 = vmatprep.subr.mxu0 %v1893
  %1979 = vmatpush1.msra.mxu0 %v1890
  %1980 = vmatprep.subr.mxu0 0.0
  %1981 = vmatpush1.msra.mxu0 0.0
  %1982 = vmatprep.subr.mxu0 0.0
  %1983 = vmatpush1.msra.mxu0 0.0
  %1984 = vmatprep.subr.mxu0 0.0
  %1985 = vmatpush1.msra.mxu0 0.0
  %1986 = vmatprep.subr.mxu0 0.0
  %1987 = vmatpush1.msra.mxu0 0.0
  %1988 = vmatprep.subr.mxu0 0.0
  %1989 = vmatpush1.msra.mxu0 0.0
  %1990 = vmatprep.subr.mxu0 0.0
  %1991 = vmatpush1.msra.mxu0 0.0
  %1992 = vmatprep.subr.mxu0 0.0
  %1993 = vmatpush1.msra.mxu0 0.0
  %1994 = vmatprep.subr.mxu0 0.0
  %1995 = vmatpush1.msra.mxu0 0.0
  %1996 = vmatprep.subr.mxu0 0.0
  %1997 = vmatpush1.msra.mxu0 0.0
  %1998 = vmatprep.subr.mxu0 0.0
  %1999 = vmatpush1.msra.mxu0 0.0
  %2000 = vmatprep.subr.mxu0 0.0
  %2001 = vmatpush1.msra.mxu0 0.0
  %2002 = vmatprep.subr.mxu0 0.0
  %2003 = vmatpush1.msra.mxu0 0.0
  %2004 = vmatprep.subr.mxu0 0.0
  %2005 = vmatpush1.msra.mxu0 0.0
  %2006 = vmatprep.subr.mxu0 0.0
  %2007 = vmatpush1.msra.mxu0 0.0
  %2008 = vmatprep.subr.mxu0 0.0
  %2009 = vmatpush1.msra.mxu0 0.0
  %2010 = vmatprep.subr.mxu0 0.0
  %2011 = vmatpush1.msra.mxu0 0.0
  %2012 = vmatprep.subr.mxu0 0.0
  %2013 = vmatpush1.msra.mxu0 0.0
  %2014 = vmatprep.subr.mxu0 0.0
  %2015 = vmatpush1.msra.mxu0 0.0
  %2016 = vmatprep.subr.mxu0 0.0
  %2017 = vmatpush1.msra.mxu0 0.0
  %2018 = vmatprep.subr.mxu0 0.0
  %2019 = vmatpush1.msra.mxu0 0.0
  %2020 = vmatprep.subr.mxu0 0.0
  %2021 = vmatpush1.msra.mxu0 0.0
  %2022 = vmatprep.subr.mxu0 0.0
  %2023 = vmatpush1.msra.mxu0 0.0
  %2024 = vmatprep.subr.mxu0 0.0
  %2025 = vmatpush1.msra.mxu0 0.0
  %2026 = vmatprep.subr.mxu0 0.0
  %2027 = vmatpush1.msra.mxu0 0.0
  %2028 = vmatprep.subr.mxu0 0.0
  %2029 = vmatpush1.msra.mxu0 0.0
  %2030 = vmatprep.subr.mxu0 0.0
  %2031 = vmatpush1.msra.mxu0 0.0
  %2032 = vmatprep.subr.mxu0 0.0
  %2033 = vmatpush1.msra.mxu0 0.0
  %2034 = vmatprep.subr.mxu0 0.0
  %2035 = vmatpush1.msra.mxu0 0.0
  %2036 = vmatprep.mubr.f32.mxu0 0.0
  %2037 = vmatmul.mubr.f32.gmra.mrb[0].mxu0 %v1878
  %v2038 = vpop.f32.mrb[0].mxu0
  %v2039 = vadd.f32 0.0, %v2038
  %v2040 = vpop.f32.mrb[0].mxu0
  %v2041 = vadd.f32 0.0, %v2040
  %2042 = vmatprep.mubr.f32.mxu0 0.0
  %2043 = vmatmul.mubr.f32.gmra.mrb[0].mxu0 %v1881
  %v2044 = vpop.f32.mrb[0].mxu0
  %v2045 = vadd.f32 0.0, %v2044
  %v2046 = vpop.f32.mrb[0].mxu0
  %v2047 = vadd.f32 0.0, %v2046
  %2048 = vdwg.mxu0
  %v2050 = vsel %vm1876, %v1835, 0
  %v2053 = vsel %vm1876, %v1837, 0
  %v2056 = vsel %vm1621, %v1856, 0
  %v2059 = vsel %vm1621, %v1857, 0
  %v2062 = vsel %vm1621, %v1858, 0
  %v2065 = vsel %vm1621, %v1859, 0
  %2067 = vmatprep.subr.mxu0 %v1845
  %2068 = vmatpush1.msra.mxu0 %v1844
  %2069 = vmatprep.subr.mxu0 %v1849
  %2070 = vmatpush1.msra.mxu0 %v1848
  %2071 = vmatprep.subr.mxu0 %v1853
  %2072 = vmatpush1.msra.mxu0 %v1852
  %2073 = vmatprep.subr.mxu0 %v2059
  %2074 = vmatpush1.msra.mxu0 %v2056
  %2075 = vmatprep.subr.mxu0 0.0
  %2076 = vmatpush1.msra.mxu0 0.0
  %2077 = vmatprep.subr.mxu0 0.0
  %2078 = vmatpush1.msra.mxu0 0.0
  %2079 = vmatprep.subr.mxu0 0.0
  %2080 = vmatpush1.msra.mxu0 0.0
  %2081 = vmatprep.subr.mxu0 0.0
  %2082 = vmatpush1.msra.mxu0 0.0
  %2083 = vmatprep.subr.mxu0 0.0
  %2084 = vmatpush1.msra.mxu0 0.0
  %2085 = vmatprep.subr.mxu0 0.0
  %2086 = vmatpush1.msra.mxu0 0.0
  %2087 = vmatprep.subr.mxu0 0.0
  %2088 = vmatpush1.msra.mxu0 0.0
  %2089 = vmatprep.subr.mxu0 0.0
  %2090 = vmatpush1.msra.mxu0 0.0
  %2091 = vmatprep.subr.mxu0 0.0
  %2092 = vmatpush1.msra.mxu0 0.0
  %2093 = vmatprep.subr.mxu0 0.0
  %2094 = vmatpush1.msra.mxu0 0.0
  %2095 = vmatprep.subr.mxu0 0.0
  %2096 = vmatpush1.msra.mxu0 0.0
  %2097 = vmatprep.subr.mxu0 0.0
  %2098 = vmatpush1.msra.mxu0 0.0
  %2099 = vmatprep.subr.mxu0 0.0
  %2100 = vmatpush1.msra.mxu0 0.0
  %2101 = vmatprep.subr.mxu0 0.0
  %2102 = vmatpush1.msra.mxu0 0.0
  %2103 = vmatprep.subr.mxu0 0.0
  %2104 = vmatpush1.msra.mxu0 0.0
  %2105 = vmatprep.subr.mxu0 0.0
  %2106 = vmatpush1.msra.mxu0 0.0
  %2107 = vmatprep.subr.mxu0 0.0
  %2108 = vmatpush1.msra.mxu0 0.0
  %2109 = vmatprep.subr.mxu0 0.0
  %2110 = vmatpush1.msra.mxu0 0.0
  %2111 = vmatprep.subr.mxu0 0.0
  %2112 = vmatpush1.msra.mxu0 0.0
  %2113 = vmatprep.subr.mxu0 0.0
  %2114 = vmatpush1.msra.mxu0 0.0
  %2115 = vmatprep.subr.mxu0 0.0
  %2116 = vmatpush1.msra.mxu0 0.0
  %2117 = vmatprep.subr.mxu0 0.0
  %2118 = vmatpush1.msra.mxu0 0.0
  %2119 = vmatprep.subr.mxu0 0.0
  %2120 = vmatpush1.msra.mxu0 0.0
  %2121 = vmatprep.subr.mxu0 0.0
  %2122 = vmatpush1.msra.mxu0 0.0
  %2123 = vmatprep.subr.mxu0 0.0
  %2124 = vmatpush1.msra.mxu0 0.0
  %2125 = vmatprep.subr.mxu0 0.0
  %2126 = vmatpush1.msra.mxu0 0.0
  %2127 = vmatprep.subr.mxu0 0.0
  %2128 = vmatpush1.msra.mxu0 0.0
  %2129 = vmatprep.subr.mxu0 0.0
  %2130 = vmatpush1.msra.mxu0 0.0
  %2131 = vmatprep.mubr.f32.mxu0 0.0
  %2132 = vmatmul.mubr.f32.gmra.mrb[0].mxu0 %v2050
  %v2133 = vpop.f32.mrb[0].mxu0
  %v2134 = vadd.f32 %v1962, %v2133
  %v2135 = vpop.f32.mrb[0].mxu0
  %v2136 = vadd.f32 %v1964, %v2135
  %2137 = vmatprep.mubr.f32.mxu0 0.0
  %2138 = vmatmul.mubr.f32.gmra.mrb[0].mxu0 %v2053
  %v2139 = vpop.f32.mrb[0].mxu0
  %v2140 = vadd.f32 %v1968, %v2139
  %v2141 = vpop.f32.mrb[0].mxu0
  %v2142 = vadd.f32 %v1970, %v2141
  %2143 = vdwg.mxu0
  %2144 = vmatprep.subr.mxu0 %v1847
  %2145 = vmatpush1.msra.mxu0 %v1846
  %2146 = vmatprep.subr.mxu0 %v1851
  %2147 = vmatpush1.msra.mxu0 %v1850
  %2148 = vmatprep.subr.mxu0 %v1855
  %2149 = vmatpush1.msra.mxu0 %v1854
  %2150 = vmatprep.subr.mxu0 %v2065
  %2151 = vmatpush1.msra.mxu0 %v2062
  %2152 = vmatprep.subr.mxu0 0.0
  %2153 = vmatpush1.msra.mxu0 0.0
  %2154 = vmatprep.subr.mxu0 0.0
  %2155 = vmatpush1.msra.mxu0 0.0
  %2156 = vmatprep.subr.mxu0 0.0
  %2157 = vmatpush1.msra.mxu0 0.0
  %2158 = vmatprep.subr.mxu0 0.0
  %2159 = vmatpush1.msra.mxu0 0.0
  %2160 = vmatprep.subr.mxu0 0.0
  %2161 = vmatpush1.msra.mxu0 0.0
  %2162 = vmatprep.subr.mxu0 0.0
  %2163 = vmatpush1.msra.mxu0 0.0
  %2164 = vmatprep.subr.mxu0 0.0
  %2165 = vmatpush1.msra.mxu0 0.0
  %2166 = vmatprep.subr.mxu0 0.0
  %2167 = vmatpush1.msra.mxu0 0.0
  %2168 = vmatprep.subr.mxu0 0.0
  %2169 = vmatpush1.msra.mxu0 0.0
  %2170 = vmatprep.subr.mxu0 0.0
  %2171 = vmatpush1.msra.mxu0 0.0
  %2172 = vmatprep.subr.mxu0 0.0
  %2173 = vmatpush1.msra.mxu0 0.0
  %2174 = vmatprep.subr.mxu0 0.0
  %2175 = vmatpush1.msra.mxu0 0.0
  %2176 = vmatprep.subr.mxu0 0.0
  %2177 = vmatpush1.msra.mxu0 0.0
  %2178 = vmatprep.subr.mxu0 0.0
  %2179 = vmatpush1.msra.mxu0 0.0
  %2180 = vmatprep.subr.mxu0 0.0
  %2181 = vmatpush1.msra.mxu0 0.0
  %2182 = vmatprep.subr.mxu0 0.0
  %2183 = vmatpush1.msra.mxu0 0.0
  %2184 = vmatprep.subr.mxu0 0.0
  %2185 = vmatpush1.msra.mxu0 0.0
  %2186 = vmatprep.subr.mxu0 0.0
  %2187 = vmatpush1.msra.mxu0 0.0
  %2188 = vmatprep.subr.mxu0 0.0
  %2189 = vmatpush1.msra.mxu0 0.0
  %2190 = vmatprep.subr.mxu0 0.0
  %2191 = vmatpush1.msra.mxu0 0.0
  %2192 = vmatprep.subr.mxu0 0.0
  %2193 = vmatpush1.msra.mxu0 0.0
  %2194 = vmatprep.subr.mxu0 0.0
  %2195 = vmatpush1.msra.mxu0 0.0
  %2196 = vmatprep.subr.mxu0 0.0
  %2197 = vmatpush1.msra.mxu0 0.0
  %2198 = vmatprep.subr.mxu0 0.0
  %2199 = vmatpush1.msra.mxu0 0.0
  %2200 = vmatprep.subr.mxu0 0.0
  %2201 = vmatpush1.msra.mxu0 0.0
  %2202 = vmatprep.subr.mxu0 0.0
  %2203 = vmatpush1.msra.mxu0 0.0
  %2204 = vmatprep.subr.mxu0 0.0
  %2205 = vmatpush1.msra.mxu0 0.0
  %2206 = vmatprep.subr.mxu0 0.0
  %2207 = vmatpush1.msra.mxu0 0.0
  %2208 = vmatprep.mubr.f32.mxu0 0.0
  %2209 = vmatmul.mubr.f32.gmra.mrb[0].mxu0 %v2050
  %v2210 = vpop.f32.mrb[0].mxu0
  %v2211 = vadd.f32 %v2039, %v2210
  %v2212 = vpop.f32.mrb[0].mxu0
  %v2213 = vadd.f32 %v2041, %v2212
  %2214 = vmatprep.mubr.f32.mxu0 0.0
  %2215 = vmatmul.mubr.f32.gmra.mrb[0].mxu0 %v2053
  %v2216 = vpop.f32.mrb[0].mxu0
  %v2217 = vadd.f32 %v2045, %v2216
  %v2218 = vpop.f32.mrb[0].mxu0
  %v2219 = vadd.f32 %v2047, %v2218
  %2220 = vdwg.mxu0
  %v2221 = vmul.f32 %v2134, 1.442695
  %v2222 = vpow.pop %v2221
  %v2223 = vmul.f32 %v2136, 1.442695
  %v2224 = vpow.pop %v2223
  %v2225 = vmul.f32 %v2211, 1.442695
  %v2226 = vpow.pop %v2225
  %v2227 = vmul.f32 %v2213, 1.442695
  %v2228 = vpow.pop %v2227
  %v2229 = vmul.f32 %v2140, 1.442695
  %v2230 = vpow.pop %v2229
  %v2231 = vmul.f32 %v2142, 1.442695
  %v2232 = vpow.pop %v2231
  %v2233 = vmul.f32 %v2217, 1.442695
  %v2234 = vpow.pop %v2233
  %v2235 = vmul.f32 %v2219, 1.442695
  %v2236 = vpow.pop %v2235
  %v2237 = vld [vmem:[#allocation2] sm:$0xff]
  %v2238 = vld [vmem:[#allocation2 + $0x8] sm:$0xff]
  %v2239 = vld [vmem:[#allocation2 + $0x10] sm:$0xff]
  %v2240 = vld [vmem:[#allocation2 + $0x18] sm:$0xff]
  %v2241 = vld [vmem:[%s1] sm:$0xf]
  %v2242 = vunpack.c.l.bf16 %v2241
  %v2244 = vsel %vm1110, %v2242, 0
  %2246 = vmatprep.subr.mxu0 %v2224
  %2247 = vmatpush1.msra.mxu0 %v2222
  %2248 = vmatprep.subr.mxu0 %v2232
  %2249 = vmatpush1.msra.mxu0 %v2230
  %2250 = vmatprep.subr.mxu0 0.0
  %2251 = vmatpush1.msra.mxu0 0.0
  %2252 = vmatprep.subr.mxu0 0.0
  %2253 = vmatpush1.msra.mxu0 0.0
  %2254 = vmatprep.subr.mxu0 0.0
  %2255 = vmatpush1.msra.mxu0 0.0
  %2256 = vmatprep.subr.mxu0 0.0
  %2257 = vmatpush1.msra.mxu0 0.0
  %2258 = vmatprep.subr.mxu0 0.0
  %2259 = vmatpush1.msra.mxu0 0.0
  %2260 = vmatprep.subr.mxu0 0.0
  %2261 = vmatpush1.msra.mxu0 0.0
  %2262 = vmatprep.subr.mxu0 0.0
  %2263 = vmatpush1.msra.mxu0 0.0
  %2264 = vmatprep.subr.mxu0 0.0
  %2265 = vmatpush1.msra.mxu0 0.0
  %2266 = vmatprep.subr.mxu0 0.0
  %2267 = vmatpush1.msra.mxu0 0.0
  %2268 = vmatprep.subr.mxu0 0.0
  %2269 = vmatpush1.msra.mxu0 0.0
  %2270 = vmatprep.subr.mxu0 0.0
  %2271 = vmatpush1.msra.mxu0 0.0
  %2272 = vmatprep.subr.mxu0 0.0
  %2273 = vmatpush1.msra.mxu0 0.0
  %2274 = vmatprep.subr.mxu0 0.0
  %2275 = vmatpush1.msra.mxu0 0.0
  %2276 = vmatprep.subr.mxu0 0.0
  %2277 = vmatpush1.msra.mxu0 0.0
  %2278 = vmatprep.subr.mxu0 0.0
  %2279 = vmatpush1.msra.mxu0 0.0
  %2280 = vmatprep.subr.mxu0 0.0
  %2281 = vmatpush1.msra.mxu0 0.0
  %2282 = vmatprep.subr.mxu0 0.0
  %2283 = vmatpush1.msra.mxu0 0.0
  %2284 = vmatprep.subr.mxu0 0.0
  %2285 = vmatpush1.msra.mxu0 0.0
  %2286 = vmatprep.subr.mxu0 0.0
  %2287 = vmatpush1.msra.mxu0 0.0
  %2288 = vmatprep.subr.mxu0 0.0
  %2289 = vmatpush1.msra.mxu0 0.0
  %2290 = vmatprep.subr.mxu0 0.0
  %2291 = vmatpush1.msra.mxu0 0.0
  %2292 = vmatprep.subr.mxu0 0.0
  %2293 = vmatpush1.msra.mxu0 0.0
  %2294 = vmatprep.subr.mxu0 0.0
  %2295 = vmatpush1.msra.mxu0 0.0
  %2296 = vmatprep.subr.mxu0 0.0
  %2297 = vmatpush1.msra.mxu0 0.0
  %2298 = vmatprep.subr.mxu0 0.0
  %2299 = vmatpush1.msra.mxu0 0.0
  %2300 = vmatprep.subr.mxu0 0.0
  %2301 = vmatpush1.msra.mxu0 0.0
  %2302 = vmatprep.subr.mxu0 0.0
  %2303 = vmatpush1.msra.mxu0 0.0
  %2304 = vmatprep.subr.mxu0 0.0
  %2305 = vmatpush1.msra.mxu0 0.0
  %2306 = vmatprep.subr.mxu0 0.0
  %2307 = vmatpush1.msra.mxu0 0.0
  %2308 = vmatprep.subr.mxu0 0.0
  %2309 = vmatpush1.msra.mxu0 0.0
  %2310 = vmatprep.mubr.f32.mxu0 0.0
  %2311 = vmatmul.mubr.f32.gmra.mrb[0].mxu0 %v2244
  %v2312 = vpop.f32.mrb[0].mxu0
  %v2313 = vadd.f32 0.0, %v2312
  %v2314 = vpop.f32.mrb[0].mxu0
  %v2315 = vadd.f32 0.0, %v2314
  %2316 = vdwg.mxu0
  %2317 = vmatprep.subr.mxu0 %v2228
  %2318 = vmatpush1.msra.mxu0 %v2226
  %2319 = vmatprep.subr.mxu0 %v2236
  %2320 = vmatpush1.msra.mxu0 %v2234
  %2321 = vmatprep.subr.mxu0 0.0
  %2322 = vmatpush1.msra.mxu0 0.0
  %2323 = vmatprep.subr.mxu0 0.0
  %2324 = vmatpush1.msra.mxu0 0.0
  %2325 = vmatprep.subr.mxu0 0.0
  %2326 = vmatpush1.msra.mxu0 0.0
  %2327 = vmatprep.subr.mxu0 0.0
  %2328 = vmatpush1.msra.mxu0 0.0
  %2329 = vmatprep.subr.mxu0 0.0
  %2330 = vmatpush1.msra.mxu0 0.0
  %2331 = vmatprep.subr.mxu0 0.0
  %2332 = vmatpush1.msra.mxu0 0.0
  %2333 = vmatprep.subr.mxu0 0.0
  %2334 = vmatpush1.msra.mxu0 0.0
  %2335 = vmatprep.subr.mxu0 0.0
  %2336 = vmatpush1.msra.mxu0 0.0
  %2337 = vmatprep.subr.mxu0 0.0
  %2338 = vmatpush1.msra.mxu0 0.0
  %2339 = vmatprep.subr.mxu0 0.0
  %2340 = vmatpush1.msra.mxu0 0.0
  %2341 = vmatprep.subr.mxu0 0.0
  %2342 = vmatpush1.msra.mxu0 0.0
  %2343 = vmatprep.subr.mxu0 0.0
  %2344 = vmatpush1.msra.mxu0 0.0
  %2345 = vmatprep.subr.mxu0 0.0
  %2346 = vmatpush1.msra.mxu0 0.0
  %2347 = vmatprep.subr.mxu0 0.0
  %2348 = vmatpush1.msra.mxu0 0.0
  %2349 = vmatprep.subr.mxu0 0.0
  %2350 = vmatpush1.msra.mxu0 0.0
  %2351 = vmatprep.subr.mxu0 0.0
  %2352 = vmatpush1.msra.mxu0 0.0
  %2353 = vmatprep.subr.mxu0 0.0
  %2354 = vmatpush1.msra.mxu0 0.0
  %2355 = vmatprep.subr.mxu0 0.0
  %2356 = vmatpush1.msra.mxu0 0.0
  %2357 = vmatprep.subr.mxu0 0.0
  %2358 = vmatpush1.msra.mxu0 0.0
  %2359 = vmatprep.subr.mxu0 0.0
  %2360 = vmatpush1.msra.mxu0 0.0
  %2361 = vmatprep.subr.mxu0 0.0
  %2362 = vmatpush1.msra.mxu0 0.0
  %2363 = vmatprep.subr.mxu0 0.0
  %2364 = vmatpush1.msra.mxu0 0.0
  %2365 = vmatprep.subr.mxu0 0.0
  %2366 = vmatpush1.msra.mxu0 0.0
  %2367 = vmatprep.subr.mxu0 0.0
  %2368 = vmatpush1.msra.mxu0 0.0
  %2369 = vmatprep.subr.mxu0 0.0
  %2370 = vmatpush1.msra.mxu0 0.0
  %2371 = vmatprep.subr.mxu0 0.0
  %2372 = vmatpush1.msra.mxu0 0.0
  %2373 = vmatprep.subr.mxu0 0.0
  %2374 = vmatpush1.msra.mxu0 0.0
  %2375 = vmatprep.subr.mxu0 0.0
  %2376 = vmatpush1.msra.mxu0 0.0
  %2377 = vmatprep.subr.mxu0 0.0
  %2378 = vmatpush1.msra.mxu0 0.0
  %2379 = vmatprep.subr.mxu0 0.0
  %2380 = vmatpush1.msra.mxu0 0.0
  %2381 = vmatprep.mubr.f32.mxu0 0.0
  %2382 = vmatmul.mubr.f32.gmra.mrb[0].mxu0 %v2244
  %v2383 = vpop.f32.mrb[0].mxu0
  %v2384 = vadd.f32 0.0, %v2383
  %v2385 = vpop.f32.mrb[0].mxu0
  %v2386 = vadd.f32 0.0, %v2385
  %2387 = vdwg.mxu0
  %v2388 = vadd.f32 %v2237, %v2313
  %v2389 = vadd.f32 %v2238, %v2315
  %v2390 = vadd.f32 %v2239, %v2384
  %v2391 = vadd.f32 %v2240, %v2386
  %2392 = vst [vmem:[#allocation2] sm:$0xff] %v2388
  %2393 = vst [vmem:[#allocation2 + $0x8] sm:$0xff] %v2389
  %2394 = vst [vmem:[#allocation2 + $0x10] sm:$0xff] %v2390
  %2395 = vst [vmem:[#allocation2 + $0x18] sm:$0xff] %v2391
  // Predicated region
  $region78: #{tpu_custom_call.1} parent=0 // pred_check
    %p2396 = pneg %p62
  $region79: #{tpu_custom_call.1} parent=0 // pred_check_branch
    %2398 = sbr.rel (%p2396) target = $region81
  $region80: #{tpu_custom_call.1} parent=0 // pred_region
    %v2399 = vld [vmem:[#allocation2] sm:$0xff]
    %v2400 = vld [vmem:[#allocation2 + $0x8] sm:$0xff]
    %v2401 = vld [vmem:[#allocation2 + $0x10] sm:$0xff]
    %v2402 = vld [vmem:[#allocation2 + $0x18] sm:$0xff]
    %v2403 = vmax.f32 %v2399, 1e-07
    %v2404 = vmax.f32 %v2400, 1e-07
    %v2405 = vmax.f32 %v2401, 1e-07
    %v2406 = vmax.f32 %v2402, 1e-07
    %v2407 = vld [vmem:[%s4] sm:$0xf]
    %v2408 = vlog2.pop %v2403
    %v2409 = vmul.f32 %v2408, 0.6931472
    %v2410 = vlog2.pop %v2404
    %v2411 = vmul.f32 %v2410, 0.6931472
    %v2412 = vlog2.pop %v2405
    %v2413 = vmul.f32 %v2412, 0.6931472
    %v2414 = vlog2.pop %v2406
    %v2415 = vmul.f32 %v2414, 0.6931472
    %v2417 = vlaneseq
    %v2418 = vshrl.u32 %v2417, 7
    %v2419 = vsub.s32 0, %v2418
    %v2420 = vrot.slane %v2407, %v2419
    %v2421 = vlaneseq
    %v2422 = vshrl.u32 %v2421, 7
    %v2423 = vsub.s32 1, %v2422
    %v2424 = vrot.slane %v2407, %v2423
    %v2425 = vlaneseq
    %v2426 = vshrl.u32 %v2425, 7
    %v2427 = vsub.s32 2, %v2426
    %v2428 = vrot.slane %v2407, %v2427
    %v2429 = vlaneseq
    %v2430 = vshrl.u32 %v2429, 7
    %v2431 = vsub.s32 3, %v2430
    %v2432 = vrot.slane %v2407, %v2431
    %v2437 = vmul.f32 %v2420, %v2409
    %v2438 = vmul.f32 %v2424, %v2411
    %v2439 = vmul.f32 %v2428, %v2413
    %v2440 = vmul.f32 %v2432, %v2415
    %v2441 = vmul.f32 %v2437, 1.442695
    %v2442 = vpow.pop %v2441
    %v2443 = vmul.f32 %v2438, 1.442695
    %v2444 = vpow.pop %v2443
    %v2445 = vmul.f32 %v2439, 1.442695
    %v2446 = vpow.pop %v2445
    %v2447 = vmul.f32 %v2440, 1.442695
    %v2448 = vpow.pop %v2447
    %v2449 = vld [vmem:[%s5] sm:$0xf]
    %v2451 = vlaneseq
    %v2452 = vshrl.u32 %v2451, 7
    %v2453 = vsub.s32 0, %v2452
    %v2454 = vrot.slane %v2449, %v2453
    %v2455 = vlaneseq
    %v2456 = vshrl.u32 %v2455, 7
    %v2457 = vsub.s32 1, %v2456
    %v2458 = vrot.slane %v2449, %v2457
    %v2459 = vlaneseq
    %v2460 = vshrl.u32 %v2459, 7
    %v2461 = vsub.s32 2, %v2460
    %v2462 = vrot.slane %v2449, %v2461
    %v2463 = vlaneseq
    %v2464 = vshrl.u32 %v2463, 7
    %v2465 = vsub.s32 3, %v2464
    %v2466 = vrot.slane %v2449, %v2465
    %v2471 = vmul.f32 %v2442, %v2454
    %v2472 = vmul.f32 %v2444, %v2458
    %v2473 = vmul.f32 %v2446, %v2462
    %v2474 = vmul.f32 %v2448, %v2466
    %v2475 = vadd.f32 %v2471, %v2472
    %v2476 = vadd.f32 %v2473, %v2474
    %v2477 = vand.u32 2147483647, %v2476
    %vm2478 = vcmp.lt.f32.partialorder %v2477, 1e-07
    %vm2479 = vcmp.lt.f32.partialorder %v2476, 0.0
    %v2480 = vsel %vm2479, -1e-07, 1e-07
    %v2481 = vsel %vm2478, %v2480, %v2476
    %v2482 = vrcp.pop %v2481
    %v2483 = vmul.f32 %v2475, %v2482
    %v2484 = vld [vmem:[%s12] sm:$0xff]
    %v2485 = vld [vmem:[%s12 + $0x8] sm:$0xff]
    %v2486 = vld [vmem:[%s12 + $0x10] sm:$0xff]
    %v2487 = vld [vmem:[%s12 + $0x18] sm:$0xff]
    %v2488 = vld [vmem:[%s12 + $0x20] sm:$0xff]
    %v2489 = vld [vmem:[%s12 + $0x28] sm:$0xff]
    %v2490 = vld [vmem:[%s12 + $0x30] sm:$0xff]
    %v2491 = vld [vmem:[%s12 + $0x38] sm:$0xff]
    %v2492 = vld [vmem:[%s12 + $0x40] sm:$0xff]
    %v2493 = vld [vmem:[%s12 + $0x48] sm:$0xff]
    %v2494 = vld [vmem:[%s12 + $0x50] sm:$0xff]
    %v2495 = vld [vmem:[%s12 + $0x58] sm:$0xff]
    %v2496 = vld [vmem:[%s12 + $0x60] sm:$0xff]
    %v2497 = vld [vmem:[%s12 + $0x68] sm:$0xff]
    %v2498 = vld [vmem:[%s12 + $0x70] sm:$0xff]
    %v2499 = vld [vmem:[%s12 + $0x78] sm:$0xff]
    %v2500 = vld [vmem:[%s12 + $0x80] sm:$0xff]
    %v2501 = vld [vmem:[%s12 + $0x88] sm:$0xff]
    %v2502 = vld [vmem:[%s12 + $0x90] sm:$0xff]
    %v2503 = vld [vmem:[%s12 + $0x98] sm:$0xff]
    %v2504 = vld [vmem:[%s12 + $0xa0] sm:$0xff]
    %v2505 = vld [vmem:[%s12 + $0xa8] sm:$0xff]
    %v2506 = vld [vmem:[%s12 + $0xb0] sm:$0xff]
    %v2507 = vld [vmem:[%s12 + $0xb8] sm:$0xff]
    %v2508 = vld [vmem:[%s12 + $0xc0] sm:$0xff]
    %v2509 = vld [vmem:[%s12 + $0xc8] sm:$0xff]
    %v2510 = vld [vmem:[%s12 + $0xd0] sm:$0xff]
    %v2511 = vld [vmem:[%s12 + $0xd8] sm:$0xff]
    %v2512 = vld [vmem:[%s12 + $0xe0] sm:$0xff]
    %v2513 = vld [vmem:[%s12 + $0xe8] sm:$0xff]
    %v2514 = vld [vmem:[%s12 + $0xf0] sm:$0xff]
    %v2515 = vld [vmem:[%s12 + $0xf8] sm:$0xff]
    %v2516 = vld [vmem:[%s12 + $0x100] sm:$0xff]
    %v2517 = vld [vmem:[%s12 + $0x108] sm:$0xff]
    %v2518 = vld [vmem:[%s12 + $0x110] sm:$0xff]
    %v2519 = vld [vmem:[%s12 + $0x118] sm:$0xff]
    %v2520 = vld [vmem:[%s12 + $0x120] sm:$0xff]
    %v2521 = vld [vmem:[%s12 + $0x128] sm:$0xff]
    %v2522 = vld [vmem:[%s12 + $0x130] sm:$0xff]
    %v2523 = vld [vmem:[%s12 + $0x138] sm:$0xff]
    %v2524 = vld [vmem:[%s12 + $0x140] sm:$0xff]
    %v2525 = vld [vmem:[%s12 + $0x148] sm:$0xff]
    %v2526 = vld [vmem:[%s12 + $0x150] sm:$0xff]
    %v2527 = vld [vmem:[%s12 + $0x158] sm:$0xff]
    %v2528 = vld [vmem:[%s12 + $0x160] sm:$0xff]
    %v2529 = vld [vmem:[%s12 + $0x168] sm:$0xff]
    %v2530 = vld [vmem:[%s12 + $0x170] sm:$0xff]
    %v2531 = vld [vmem:[%s12 + $0x178] sm:$0xff]
    %v2532 = vld [vmem:[%s12 + $0x180] sm:$0xff]
    %v2533 = vld [vmem:[%s12 + $0x188] sm:$0xff]
    %v2534 = vld [vmem:[%s12 + $0x190] sm:$0xff]
    %v2535 = vld [vmem:[%s12 + $0x198] sm:$0xff]
    %v2536 = vld [vmem:[%s12 + $0x1a0] sm:$0xff]
    %v2537 = vld [vmem:[%s12 + $0x1a8] sm:$0xff]
    %v2538 = vld [vmem:[%s12 + $0x1b0] sm:$0xff]
    %v2539 = vld [vmem:[%s12 + $0x1b8] sm:$0xff]
    %v2540 = vld [vmem:[%s12 + $0x1c0] sm:$0xff]
    %v2541 = vld [vmem:[%s12 + $0x1c8] sm:$0xff]
    %v2542 = vld [vmem:[%s12 + $0x1d0] sm:$0xff]
    %v2543 = vld [vmem:[%s12 + $0x1d8] sm:$0xff]
    %v2544 = vld [vmem:[%s12 + $0x1e0] sm:$0xff]
    %v2545 = vld [vmem:[%s12 + $0x1e8] sm:$0xff]
    %v2546 = vld [vmem:[%s12 + $0x1f0] sm:$0xff]
    %v2547 = vld [vmem:[%s12 + $0x1f8] sm:$0xff]
    %v2548 = vld [vmem:[%s12 + $0x200] sm:$0xff]
    %v2549 = vld [vmem:[%s12 + $0x208] sm:$0xff]
    %v2550 = vld [vmem:[%s12 + $0x210] sm:$0xff]
    %v2551 = vld [vmem:[%s12 + $0x218] sm:$0xff]
    %v2552 = vld [vmem:[%s12 + $0x220] sm:$0xff]
    %v2553 = vld [vmem:[%s12 + $0x228] sm:$0xff]
    %v2554 = vld [vmem:[%s12 + $0x230] sm:$0xff]
    %v2555 = vld [vmem:[%s12 + $0x238] sm:$0xff]
    %v2556 = vld [vmem:[%s12 + $0x240] sm:$0xff]
    %v2557 = vld [vmem:[%s12 + $0x248] sm:$0xff]
    %v2558 = vld [vmem:[%s12 + $0x250] sm:$0xff]
    %v2559 = vld [vmem:[%s12 + $0x258] sm:$0xff]
    %v2560 = vld [vmem:[%s12 + $0x260] sm:$0xff]
    %v2561 = vld [vmem:[%s12 + $0x268] sm:$0xff]
    %v2562 = vld [vmem:[%s12 + $0x270] sm:$0xff]
    %v2563 = vld [vmem:[%s12 + $0x278] sm:$0xff]
    %v2564 = vld [vmem:[%s12 + $0x280] sm:$0xff]
    %v2565 = vld [vmem:[%s12 + $0x288] sm:$0xff]
    %v2566 = vld [vmem:[%s12 + $0x290] sm:$0xff]
    %v2567 = vld [vmem:[%s12 + $0x298] sm:$0xff]
    %v2568 = vld [vmem:[%s12 + $0x2a0] sm:$0xff]
    %v2569 = vld [vmem:[%s12 + $0x2a8] sm:$0xff]
    %v2570 = vld [vmem:[%s12 + $0x2b0] sm:$0xff]
    %v2571 = vld [vmem:[%s12 + $0x2b8] sm:$0xff]
    %v2572 = vld [vmem:[%s12 + $0x2c0] sm:$0xff]
    %v2573 = vld [vmem:[%s12 + $0x2c8] sm:$0xff]
    %v2574 = vld [vmem:[%s12 + $0x2d0] sm:$0xff]
    %v2575 = vld [vmem:[%s12 + $0x2d8] sm:$0xff]
    %v2576 = vld [vmem:[%s12 + $0x2e0] sm:$0xff]
    %v2577 = vld [vmem:[%s12 + $0x2e8] sm:$0xff]
    %v2578 = vld [vmem:[%s12 + $0x2f0] sm:$0xff]
    %v2579 = vld [vmem:[%s12 + $0x2f8] sm:$0xff]
    %v2580 = vld [vmem:[%s12 + $0x300] sm:$0xff]
    %v2581 = vld [vmem:[%s12 + $0x308] sm:$0xff]
    %v2582 = vld [vmem:[%s12 + $0x310] sm:$0xff]
    %v2583 = vld [vmem:[%s12 + $0x318] sm:$0xff]
    %v2584 = vld [vmem:[%s12 + $0x320] sm:$0xff]
    %v2585 = vld [vmem:[%s12 + $0x328] sm:$0xff]
    %v2586 = vld [vmem:[%s12 + $0x330] sm:$0xff]
    %v2587 = vld [vmem:[%s12 + $0x338] sm:$0xff]
    %v2588 = vld [vmem:[%s12 + $0x340] sm:$0xff]
    %v2589 = vld [vmem:[%s12 + $0x348] sm:$0xff]
    %v2590 = vld [vmem:[%s12 + $0x350] sm:$0xff]
    %v2591 = vld [vmem:[%s12 + $0x358] sm:$0xff]
    %v2592 = vld [vmem:[%s12 + $0x360] sm:$0xff]
    %v2593 = vld [vmem:[%s12 + $0x368] sm:$0xff]
    %v2594 = vld [vmem:[%s12 + $0x370] sm:$0xff]
    %v2595 = vld [vmem:[%s12 + $0x378] sm:$0xff]
    %v2596 = vld [vmem:[%s12 + $0x380] sm:$0xff]
    %v2597 = vld [vmem:[%s12 + $0x388] sm:$0xff]
    %v2598 = vld [vmem:[%s12 + $0x390] sm:$0xff]
    %v2599 = vld [vmem:[%s12 + $0x398] sm:$0xff]
    %v2600 = vld [vmem:[%s12 + $0x3a0] sm:$0xff]
    %v2601 = vld [vmem:[%s12 + $0x3a8] sm:$0xff]
    %v2602 = vld [vmem:[%s12 + $0x3b0] sm:$0xff]
    %v2603 = vld [vmem:[%s12 + $0x3b8] sm:$0xff]
    %v2604 = vld [vmem:[%s12 + $0x3c0] sm:$0xff]
    %v2605 = vld [vmem:[%s12 + $0x3c8] sm:$0xff]
    %v2606 = vld [vmem:[%s12 + $0x3d0] sm:$0xff]
    %v2607 = vld [vmem:[%s12 + $0x3d8] sm:$0xff]
    %v2608 = vld [vmem:[%s12 + $0x3e0] sm:$0xff]
    %v2609 = vld [vmem:[%s12 + $0x3e8] sm:$0xff]
    %v2610 = vld [vmem:[%s12 + $0x3f0] sm:$0xff]
    %v2611 = vld [vmem:[%s12 + $0x3f8] sm:$0xff]
    %v2612 = vld [vmem:[%s13] sm:$0xff]
    %v2614 = vlaneseq
    %v2615 = vshrl.u32 %v2614, 7
    %v2616 = vsub.s32 0, %v2615
    %v2617 = vrot.slane %v2612, %v2616
    %v2618 = vlaneseq
    %v2619 = vshrl.u32 %v2618, 7
    %v2620 = vsub.s32 1, %v2619
    %v2621 = vrot.slane %v2612, %v2620
    %v2622 = vlaneseq
    %v2623 = vshrl.u32 %v2622, 7
    %v2624 = vsub.s32 2, %v2623
    %v2625 = vrot.slane %v2612, %v2624
    %v2626 = vlaneseq
    %v2627 = vshrl.u32 %v2626, 7
    %v2628 = vsub.s32 3, %v2627
    %v2629 = vrot.slane %v2612, %v2628
    %v2630 = vlaneseq
    %v2631 = vshrl.u32 %v2630, 7
    %v2632 = vsub.s32 4, %v2631
    %v2633 = vrot.slane %v2612, %v2632
    %v2634 = vlaneseq
    %v2635 = vshrl.u32 %v2634, 7
    %v2636 = vsub.s32 5, %v2635
    %v2637 = vrot.slane %v2612, %v2636
    %v2638 = vlaneseq
    %v2639 = vshrl.u32 %v2638, 7
    %v2640 = vsub.s32 6, %v2639
    %v2641 = vrot.slane %v2612, %v2640
    %v2642 = vlaneseq
    %v2643 = vshrl.u32 %v2642, 7
    %v2644 = vsub.s32 7, %v2643
    %v2645 = vrot.slane %v2612, %v2644
    %2654 = vmatprep.subr.mxu0 %v2485
    %2655 = vmatpush1.msra.mxu0 %v2484
    %2656 = vmatprep.subr.mxu0 %v2493
    %2657 = vmatpush1.msra.mxu0 %v2492
    %2658 = vmatprep.subr.mxu0 %v2501
    %2659 = vmatpush1.msra.mxu0 %v2500
    %2660 = vmatprep.subr.mxu0 %v2509
    %2661 = vmatpush1.msra.mxu0 %v2508
    %2662 = vmatprep.subr.mxu0 %v2517
    %2663 = vmatpush1.msra.mxu0 %v2516
    %2664 = vmatprep.subr.mxu0 %v2525
    %2665 = vmatpush1.msra.mxu0 %v2524
    %2666 = vmatprep.subr.mxu0 %v2533
    %2667 = vmatpush1.msra.mxu0 %v2532
    %2668 = vmatprep.subr.mxu0 %v2541
    %2669 = vmatpush1.msra.mxu0 %v2540
    %2670 = vmatprep.subr.mxu0 %v2549
    %2671 = vmatpush1.msra.mxu0 %v2548
    %2672 = vmatprep.subr.mxu0 %v2557
    %2673 = vmatpush1.msra.mxu0 %v2556
    %2674 = vmatprep.subr.mxu0 %v2565
    %2675 = vmatpush1.msra.mxu0 %v2564
    %2676 = vmatprep.subr.mxu0 %v2573
    %2677 = vmatpush1.msra.mxu0 %v2572
    %2678 = vmatprep.subr.mxu0 %v2581
    %2679 = vmatpush1.msra.mxu0 %v2580
    %2680 = vmatprep.subr.mxu0 %v2589
    %2681 = vmatpush1.msra.mxu0 %v2588
    %2682 = vmatprep.subr.mxu0 %v2597
    %2683 = vmatpush1.msra.mxu0 %v2596
    %2684 = vmatprep.subr.mxu0 %v2605
    %2685 = vmatpush1.msra.mxu0 %v2604
    %2686 = vmatprep.subr.mxu0 0.0
    %2687 = vmatpush1.msra.mxu0 0.0
    %2688 = vmatprep.subr.mxu0 0.0
    %2689 = vmatpush1.msra.mxu0 0.0
    %2690 = vmatprep.subr.mxu0 0.0
    %2691 = vmatpush1.msra.mxu0 0.0
    %2692 = vmatprep.subr.mxu0 0.0
    %2693 = vmatpush1.msra.mxu0 0.0
    %2694 = vmatprep.subr.mxu0 0.0
    %2695 = vmatpush1.msra.mxu0 0.0
    %2696 = vmatprep.subr.mxu0 0.0
    %2697 = vmatpush1.msra.mxu0 0.0
    %2698 = vmatprep.subr.mxu0 0.0
    %2699 = vmatpush1.msra.mxu0 0.0
    %2700 = vmatprep.subr.mxu0 0.0
    %2701 = vmatpush1.msra.mxu0 0.0
    %2702 = vmatprep.subr.mxu0 0.0
    %2703 = vmatpush1.msra.mxu0 0.0
    %2704 = vmatprep.subr.mxu0 0.0
    %2705 = vmatpush1.msra.mxu0 0.0
    %2706 = vmatprep.subr.mxu0 0.0
    %2707 = vmatpush1.msra.mxu0 0.0
    %2708 = vmatprep.subr.mxu0 0.0
    %2709 = vmatpush1.msra.mxu0 0.0
    %2710 = vmatprep.subr.mxu0 0.0
    %2711 = vmatpush1.msra.mxu0 0.0
    %2712 = vmatprep.subr.mxu0 0.0
    %2713 = vmatpush1.msra.mxu0 0.0
    %2714 = vmatprep.subr.mxu0 0.0
    %2715 = vmatpush1.msra.mxu0 0.0
    %2716 = vmatprep.subr.mxu0 0.0
    %2717 = vmatpush1.msra.mxu0 0.0
    %2718 = vmatprep.mubr.f32.mxu0 0.0
    %2719 = vmatmul.mubr.f32.gmra.mrb[0].mxu0 %v2483
    %v2720 = vpop.f32.mrb[0].mxu0
    %v2721 = vadd.f32 %v2617, %v2720
    %v2722 = vpop.f32.mrb[0].mxu0
    %v2723 = vadd.f32 %v2621, %v2722
    %2724 = vdwg.mxu0
    %2725 = vmatprep.subr.mxu0 %v2487
    %2726 = vmatpush1.msra.mxu0 %v2486
    %2727 = vmatprep.subr.mxu0 %v2495
    %2728 = vmatpush1.msra.mxu0 %v2494
    %2729 = vmatprep.subr.mxu0 %v2503
    %2730 = vmatpush1.msra.mxu0 %v2502
    %2731 = vmatprep.subr.mxu0 %v2511
    %2732 = vmatpush1.msra.mxu0 %v2510
    %2733 = vmatprep.subr.mxu0 %v2519
    %2734 = vmatpush1.msra.mxu0 %v2518
    %2735 = vmatprep.subr.mxu0 %v2527
    %2736 = vmatpush1.msra.mxu0 %v2526
    %2737 = vmatprep.subr.mxu0 %v2535
    %2738 = vmatpush1.msra.mxu0 %v2534
    %2739 = vmatprep.subr.mxu0 %v2543
    %2740 = vmatpush1.msra.mxu0 %v2542
    %2741 = vmatprep.subr.mxu0 %v2551
    %2742 = vmatpush1.msra.mxu0 %v2550
    %2743 = vmatprep.subr.mxu0 %v2559
    %2744 = vmatpush1.msra.mxu0 %v2558
    %2745 = vmatprep.subr.mxu0 %v2567
    %2746 = vmatpush1.msra.mxu0 %v2566
    %2747 = vmatprep.subr.mxu0 %v2575
    %2748 = vmatpush1.msra.mxu0 %v2574
    %2749 = vmatprep.subr.mxu0 %v2583
    %2750 = vmatpush1.msra.mxu0 %v2582
    %2751 = vmatprep.subr.mxu0 %v2591
    %2752 = vmatpush1.msra.mxu0 %v2590
    %2753 = vmatprep.subr.mxu0 %v2599
    %2754 = vmatpush1.msra.mxu0 %v2598
    %2755 = vmatprep.subr.mxu0 %v2607
    %2756 = vmatpush1.msra.mxu0 %v2606
    %2757 = vmatprep.subr.mxu0 0.0
    %2758 = vmatpush1.msra.mxu0 0.0
    %2759 = vmatprep.subr.mxu0 0.0
    %2760 = vmatpush1.msra.mxu0 0.0
    %2761 = vmatprep.subr.mxu0 0.0
    %2762 = vmatpush1.msra.mxu0 0.0
    %2763 = vmatprep.subr.mxu0 0.0
    %2764 = vmatpush1.msra.mxu0 0.0
    %2765 = vmatprep.subr.mxu0 0.0
    %2766 = vmatpush1.msra.mxu0 0.0
    %2767 = vmatprep.subr.mxu0 0.0
    %2768 = vmatpush1.msra.mxu0 0.0
    %2769 = vmatprep.subr.mxu0 0.0
    %2770 = vmatpush1.msra.mxu0 0.0
    %2771 = vmatprep.subr.mxu0 0.0
    %2772 = vmatpush1.msra.mxu0 0.0
    %2773 = vmatprep.subr.mxu0 0.0
    %2774 = vmatpush1.msra.mxu0 0.0
    %2775 = vmatprep.subr.mxu0 0.0
    %2776 = vmatpush1.msra.mxu0 0.0
    %2777 = vmatprep.subr.mxu0 0.0
    %2778 = vmatpush1.msra.mxu0 0.0
    %2779 = vmatprep.subr.mxu0 0.0
    %2780 = vmatpush1.msra.mxu0 0.0
    %2781 = vmatprep.subr.mxu0 0.0
    %2782 = vmatpush1.msra.mxu0 0.0
    %2783 = vmatprep.subr.mxu0 0.0
    %2784 = vmatpush1.msra.mxu0 0.0
    %2785 = vmatprep.subr.mxu0 0.0
    %2786 = vmatpush1.msra.mxu0 0.0
    %2787 = vmatprep.subr.mxu0 0.0
    %2788 = vmatpush1.msra.mxu0 0.0
    %2789 = vmatprep.mubr.f32.mxu0 0.0
    %2790 = vmatmul.mubr.f32.gmra.mrb[0].mxu0 %v2483
    %v2791 = vpop.f32.mrb[0].mxu0
    %v2792 = vadd.f32 %v2625, %v2791
    %v2793 = vpop.f32.mrb[0].mxu0
    %v2794 = vadd.f32 %v2629, %v2793
    %2795 = vdwg.mxu0
    %2796 = vmatprep.subr.mxu0 %v2489
    %2797 = vmatpush1.msra.mxu0 %v2488
    %2798 = vmatprep.subr.mxu0 %v2497
    %2799 = vmatpush1.msra.mxu0 %v2496
    %2800 = vmatprep.subr.mxu0 %v2505
    %2801 = vmatpush1.msra.mxu0 %v2504
    %2802 = vmatprep.subr.mxu0 %v2513
    %2803 = vmatpush1.msra.mxu0 %v2512
    %2804 = vmatprep.subr.mxu0 %v2521
    %2805 = vmatpush1.msra.mxu0 %v2520
    %2806 = vmatprep.subr.mxu0 %v2529
    %2807 = vmatpush1.msra.mxu0 %v2528
    %2808 = vmatprep.subr.mxu0 %v2537
    %2809 = vmatpush1.msra.mxu0 %v2536
    %2810 = vmatprep.subr.mxu0 %v2545
    %2811 = vmatpush1.msra.mxu0 %v2544
    %2812 = vmatprep.subr.mxu0 %v2553
    %2813 = vmatpush1.msra.mxu0 %v2552
    %2814 = vmatprep.subr.mxu0 %v2561
    %2815 = vmatpush1.msra.mxu0 %v2560
    %2816 = vmatprep.subr.mxu0 %v2569
    %2817 = vmatpush1.msra.mxu0 %v2568
    %2818 = vmatprep.subr.mxu0 %v2577
    %2819 = vmatpush1.msra.mxu0 %v2576
    %2820 = vmatprep.subr.mxu0 %v2585
    %2821 = vmatpush1.msra.mxu0 %v2584
    %2822 = vmatprep.subr.mxu0 %v2593
    %2823 = vmatpush1.msra.mxu0 %v2592
    %2824 = vmatprep.subr.mxu0 %v2601
    %2825 = vmatpush1.msra.mxu0 %v2600
    %2826 = vmatprep.subr.mxu0 %v2609
    %2827 = vmatpush1.msra.mxu0 %v2608
    %2828 = vmatprep.subr.mxu0 0.0
    %2829 = vmatpush1.msra.mxu0 0.0
    %2830 = vmatprep.subr.mxu0 0.0
    %2831 = vmatpush1.msra.mxu0 0.0
    %2832 = vmatprep.subr.mxu0 0.0
    %2833 = vmatpush1.msra.mxu0 0.0
    %2834 = vmatprep.subr.mxu0 0.0
    %2835 = vmatpush1.msra.mxu0 0.0
    %2836 = vmatprep.subr.mxu0 0.0
    %2837 = vmatpush1.msra.mxu0 0.0
    %2838 = vmatprep.subr.mxu0 0.0
    %2839 = vmatpush1.msra.mxu0 0.0
    %2840 = vmatprep.subr.mxu0 0.0
    %2841 = vmatpush1.msra.mxu0 0.0
    %2842 = vmatprep.subr.mxu0 0.0
    %2843 = vmatpush1.msra.mxu0 0.0
    %2844 = vmatprep.subr.mxu0 0.0
    %2845 = vmatpush1.msra.mxu0 0.0
    %2846 = vmatprep.subr.mxu0 0.0
    %2847 = vmatpush1.msra.mxu0 0.0
    %2848 = vmatprep.subr.mxu0 0.0
    %2849 = vmatpush1.msra.mxu0 0.0
    %2850 = vmatprep.subr.mxu0 0.0
    %2851 = vmatpush1.msra.mxu0 0.0
    %2852 = vmatprep.subr.mxu0 0.0
    %2853 = vmatpush1.msra.mxu0 0.0
    %2854 = vmatprep.subr.mxu0 0.0
    %2855 = vmatpush1.msra.mxu0 0.0
    %2856 = vmatprep.subr.mxu0 0.0
    %2857 = vmatpush1.msra.mxu0 0.0
    %2858 = vmatprep.subr.mxu0 0.0
    %2859 = vmatpush1.msra.mxu0 0.0
    %2860 = vmatprep.mubr.f32.mxu0 0.0
    %2861 = vmatmul.mubr.f32.gmra.mrb[0].mxu0 %v2483
    %v2862 = vpop.f32.mrb[0].mxu0
    %v2863 = vadd.f32 %v2633, %v2862
    %v2864 = vpop.f32.mrb[0].mxu0
    %v2865 = vadd.f32 %v2637, %v2864
    %2866 = vdwg.mxu0
    %2867 = vmatprep.subr.mxu0 %v2491
    %2868 = vmatpush1.msra.mxu0 %v2490
    %2869 = vmatprep.subr.mxu0 %v2499
    %2870 = vmatpush1.msra.mxu0 %v2498
    %2871 = vmatprep.subr.mxu0 %v2507
    %2872 = vmatpush1.msra.mxu0 %v2506
    %2873 = vmatprep.subr.mxu0 %v2515
    %2874 = vmatpush1.msra.mxu0 %v2514
    %2875 = vmatprep.subr.mxu0 %v2523
    %2876 = vmatpush1.msra.mxu0 %v2522
    %2877 = vmatprep.subr.mxu0 %v2531
    %2878 = vmatpush1.msra.mxu0 %v2530
    %2879 = vmatprep.subr.mxu0 %v2539
    %2880 = vmatpush1.msra.mxu0 %v2538
    %2881 = vmatprep.subr.mxu0 %v2547
    %2882 = vmatpush1.msra.mxu0 %v2546
    %2883 = vmatprep.subr.mxu0 %v2555
    %2884 = vmatpush1.msra.mxu0 %v2554
    %2885 = vmatprep.subr.mxu0 %v2563
    %2886 = vmatpush1.msra.mxu0 %v2562
    %2887 = vmatprep.subr.mxu0 %v2571
    %2888 = vmatpush1.msra.mxu0 %v2570
    %2889 = vmatprep.subr.mxu0 %v2579
    %2890 = vmatpush1.msra.mxu0 %v2578
    %2891 = vmatprep.subr.mxu0 %v2587
    %2892 = vmatpush1.msra.mxu0 %v2586
    %2893 = vmatprep.subr.mxu0 %v2595
    %2894 = vmatpush1.msra.mxu0 %v2594
    %2895 = vmatprep.subr.mxu0 %v2603
    %2896 = vmatpush1.msra.mxu0 %v2602
    %2897 = vmatprep.subr.mxu0 %v2611
    %2898 = vmatpush1.msra.mxu0 %v2610
    %2899 = vmatprep.subr.mxu0 0.0
    %2900 = vmatpush1.msra.mxu0 0.0
    %2901 = vmatprep.subr.mxu0 0.0
    %2902 = vmatpush1.msra.mxu0 0.0
    %2903 = vmatprep.subr.mxu0 0.0
    %2904 = vmatpush1.msra.mxu0 0.0
    %2905 = vmatprep.subr.mxu0 0.0
    %2906 = vmatpush1.msra.mxu0 0.0
    %2907 = vmatprep.subr.mxu0 0.0
    %2908 = vmatpush1.msra.mxu0 0.0
    %2909 = vmatprep.subr.mxu0 0.0
    %2910 = vmatpush1.msra.mxu0 0.0
    %2911 = vmatprep.subr.mxu0 0.0
    %2912 = vmatpush1.msra.mxu0 0.0
    %2913 = vmatprep.subr.mxu0 0.0
    %2914 = vmatpush1.msra.mxu0 0.0
    %2915 = vmatprep.subr.mxu0 0.0
    %2916 = vmatpush1.msra.mxu0 0.0
    %2917 = vmatprep.subr.mxu0 0.0
    %2918 = vmatpush1.msra.mxu0 0.0
    %2919 = vmatprep.subr.mxu0 0.0
    %2920 = vmatpush1.msra.mxu0 0.0
    %2921 = vmatprep.subr.mxu0 0.0
    %2922 = vmatpush1.msra.mxu0 0.0
    %2923 = vmatprep.subr.mxu0 0.0
    %2924 = vmatpush1.msra.mxu0 0.0
    %2925 = vmatprep.subr.mxu0 0.0
    %2926 = vmatpush1.msra.mxu0 0.0
    %2927 = vmatprep.subr.mxu0 0.0
    %2928 = vmatpush1.msra.mxu0 0.0
    %2929 = vmatprep.subr.mxu0 0.0
    %2930 = vmatpush1.msra.mxu0 0.0
    %2931 = vmatprep.mubr.f32.mxu0 0.0
    %2932 = vmatmul.mubr.f32.gmra.mrb[0].mxu0 %v2483
    %v2933 = vpop.f32.mrb[0].mxu0
    %v2934 = vadd.f32 %v2641, %v2933
    %v2935 = vpop.f32.mrb[0].mxu0
    %v2936 = vadd.f32 %v2645, %v2935
    %2937 = vdwg.mxu0
    %v2938 = vtanh.pop %v2721
    %v2939 = vtanh.pop %v2723
    %v2940 = vtanh.pop %v2792
    %v2941 = vtanh.pop %v2794
    %v2942 = vtanh.pop %v2863
    %v2943 = vtanh.pop %v2865
    %v2944 = vtanh.pop %v2934
    %v2945 = vtanh.pop %v2936
    %v2946 = vld [vmem:[%s14] sm:$0xff]
    %v2947 = vld [vmem:[%s14 + $0x8] sm:$0xff]
    %v2948 = vld [vmem:[%s14 + $0x10] sm:$0xff]
    %v2949 = vld [vmem:[%s14 + $0x18] sm:$0xff]
    %v2950 = vld [vmem:[%s14 + $0x20] sm:$0xff]
    %v2951 = vld [vmem:[%s14 + $0x28] sm:$0xff]
    %v2952 = vld [vmem:[%s14 + $0x30] sm:$0xff]
    %v2953 = vld [vmem:[%s14 + $0x38] sm:$0xff]
    %v2954 = vld [vmem:[%s14 + $0x40] sm:$0xff]
    %v2955 = vld [vmem:[%s14 + $0x48] sm:$0xff]
    %v2956 = vld [vmem:[%s14 + $0x50] sm:$0xff]
    %v2957 = vld [vmem:[%s14 + $0x58] sm:$0xff]
    %v2958 = vld [vmem:[%s14 + $0x60] sm:$0xff]
    %v2959 = vld [vmem:[%s14 + $0x68] sm:$0xff]
    %v2960 = vld [vmem:[%s14 + $0x70] sm:$0xff]
    %v2961 = vld [vmem:[%s14 + $0x78] sm:$0xff]
    %v2962 = vld [vmem:[%s14 + $0x80] sm:$0xff]
    %v2963 = vld [vmem:[%s14 + $0x88] sm:$0xff]
    %v2964 = vld [vmem:[%s14 + $0x90] sm:$0xff]
    %v2965 = vld [vmem:[%s14 + $0x98] sm:$0xff]
    %v2966 = vld [vmem:[%s14 + $0xa0] sm:$0xff]
    %v2967 = vld [vmem:[%s14 + $0xa8] sm:$0xff]
    %v2968 = vld [vmem:[%s14 + $0xb0] sm:$0xff]
    %v2969 = vld [vmem:[%s14 + $0xb8] sm:$0xff]
    %v2970 = vld [vmem:[%s14 + $0xc0] sm:$0xff]
    %v2971 = vld [vmem:[%s14 + $0xc8] sm:$0xff]
    %v2972 = vld [vmem:[%s14 + $0xd0] sm:$0xff]
    %v2973 = vld [vmem:[%s14 + $0xd8] sm:$0xff]
    %v2974 = vld [vmem:[%s14 + $0xe0] sm:$0xff]
    %v2975 = vld [vmem:[%s14 + $0xe8] sm:$0xff]
    %v2976 = vld [vmem:[%s14 + $0xf0] sm:$0xff]
    %v2977 = vld [vmem:[%s14 + $0xf8] sm:$0xff]
    %v2978 = vld [vmem:[%s14 + $0x100] sm:$0xff]
    %v2979 = vld [vmem:[%s14 + $0x108] sm:$0xff]
    %v2980 = vld [vmem:[%s14 + $0x110] sm:$0xff]
    %v2981 = vld [vmem:[%s14 + $0x118] sm:$0xff]
    %v2982 = vld [vmem:[%s14 + $0x120] sm:$0xff]
    %v2983 = vld [vmem:[%s14 + $0x128] sm:$0xff]
    %v2984 = vld [vmem:[%s14 + $0x130] sm:$0xff]
    %v2985 = vld [vmem:[%s14 + $0x138] sm:$0xff]
    %v2986 = vld [vmem:[%s14 + $0x140] sm:$0xff]
    %v2987 = vld [vmem:[%s14 + $0x148] sm:$0xff]
    %v2988 = vld [vmem:[%s14 + $0x150] sm:$0xff]
    %v2989 = vld [vmem:[%s14 + $0x158] sm:$0xff]
    %v2990 = vld [vmem:[%s14 + $0x160] sm:$0xff]
    %v2991 = vld [vmem:[%s14 + $0x168] sm:$0xff]
    %v2992 = vld [vmem:[%s14 + $0x170] sm:$0xff]
    %v2993 = vld [vmem:[%s14 + $0x178] sm:$0xff]
    %v2994 = vld [vmem:[%s14 + $0x180] sm:$0xff]
    %v2995 = vld [vmem:[%s14 + $0x188] sm:$0xff]
    %v2996 = vld [vmem:[%s14 + $0x190] sm:$0xff]
    %v2997 = vld [vmem:[%s14 + $0x198] sm:$0xff]
    %v2998 = vld [vmem:[%s14 + $0x1a0] sm:$0xff]
    %v2999 = vld [vmem:[%s14 + $0x1a8] sm:$0xff]
    %v3000 = vld [vmem:[%s14 + $0x1b0] sm:$0xff]
    %v3001 = vld [vmem:[%s14 + $0x1b8] sm:$0xff]
    %v3002 = vld [vmem:[%s14 + $0x1c0] sm:$0xff]
    %v3003 = vld [vmem:[%s14 + $0x1c8] sm:$0xff]
    %v3004 = vld [vmem:[%s14 + $0x1d0] sm:$0xff]
    %v3005 = vld [vmem:[%s14 + $0x1d8] sm:$0xff]
    %v3006 = vld [vmem:[%s14 + $0x1e0] sm:$0xff]
    %v3007 = vld [vmem:[%s14 + $0x1e8] sm:$0xff]
    %v3008 = vld [vmem:[%s14 + $0x1f0] sm:$0xff]
    %v3009 = vld [vmem:[%s14 + $0x1f8] sm:$0xff]
    %v3010 = vld [vmem:[%s14 + $0x200] sm:$0xff]
    %v3011 = vld [vmem:[%s14 + $0x208] sm:$0xff]
    %v3012 = vld [vmem:[%s14 + $0x210] sm:$0xff]
    %v3013 = vld [vmem:[%s14 + $0x218] sm:$0xff]
    %v3014 = vld [vmem:[%s14 + $0x220] sm:$0xff]
    %v3015 = vld [vmem:[%s14 + $0x228] sm:$0xff]
    %v3016 = vld [vmem:[%s14 + $0x230] sm:$0xff]
    %v3017 = vld [vmem:[%s14 + $0x238] sm:$0xff]
    %v3018 = vld [vmem:[%s14 + $0x240] sm:$0xff]
    %v3019 = vld [vmem:[%s14 + $0x248] sm:$0xff]
    %v3020 = vld [vmem:[%s14 + $0x250] sm:$0xff]
    %v3021 = vld [vmem:[%s14 + $0x258] sm:$0xff]
    %v3022 = vld [vmem:[%s14 + $0x260] sm:$0xff]
    %v3023 = vld [vmem:[%s14 + $0x268] sm:$0xff]
    %v3024 = vld [vmem:[%s14 + $0x270] sm:$0xff]
    %v3025 = vld [vmem:[%s14 + $0x278] sm:$0xff]
    %v3026 = vld [vmem:[%s14 + $0x280] sm:$0xff]
    %v3027 = vld [vmem:[%s14 + $0x288] sm:$0xff]
    %v3028 = vld [vmem:[%s14 + $0x290] sm:$0xff]
    %v3029 = vld [vmem:[%s14 + $0x298] sm:$0xff]
    %v3030 = vld [vmem:[%s14 + $0x2a0] sm:$0xff]
    %v3031 = vld [vmem:[%s14 + $0x2a8] sm:$0xff]
    %v3032 = vld [vmem:[%s14 + $0x2b0] sm:$0xff]
    %v3033 = vld [vmem:[%s14 + $0x2b8] sm:$0xff]
    %v3034 = vld [vmem:[%s14 + $0x2c0] sm:$0xff]
    %v3035 = vld [vmem:[%s14 + $0x2c8] sm:$0xff]
    %v3036 = vld [vmem:[%s14 + $0x2d0] sm:$0xff]
    %v3037 = vld [vmem:[%s14 + $0x2d8] sm:$0xff]
    %v3038 = vld [vmem:[%s14 + $0x2e0] sm:$0xff]
    %v3039 = vld [vmem:[%s14 + $0x2e8] sm:$0xff]
    %v3040 = vld [vmem:[%s14 + $0x2f0] sm:$0xff]
    %v3041 = vld [vmem:[%s14 + $0x2f8] sm:$0xff]
    %v3042 = vld [vmem:[%s14 + $0x300] sm:$0xff]
    %v3043 = vld [vmem:[%s14 + $0x308] sm:$0xff]
    %v3044 = vld [vmem:[%s14 + $0x310] sm:$0xff]
    %v3045 = vld [vmem:[%s14 + $0x318] sm:$0xff]
    %v3046 = vld [vmem:[%s14 + $0x320] sm:$0xff]
    %v3047 = vld [vmem:[%s14 + $0x328] sm:$0xff]
    %v3048 = vld [vmem:[%s14 + $0x330] sm:$0xff]
    %v3049 = vld [vmem:[%s14 + $0x338] sm:$0xff]
    %v3050 = vld [vmem:[%s14 + $0x340] sm:$0xff]
    %v3051 = vld [vmem:[%s14 + $0x348] sm:$0xff]
    %v3052 = vld [vmem:[%s14 + $0x350] sm:$0xff]
    %v3053 = vld [vmem:[%s14 + $0x358] sm:$0xff]
    %v3054 = vld [vmem:[%s14 + $0x360] sm:$0xff]
    %v3055 = vld [vmem:[%s14 + $0x368] sm:$0xff]
    %v3056 = vld [vmem:[%s14 + $0x370] sm:$0xff]
    %v3057 = vld [vmem:[%s14 + $0x378] sm:$0xff]
    %v3058 = vld [vmem:[%s14 + $0x380] sm:$0xff]
    %v3059 = vld [vmem:[%s14 + $0x388] sm:$0xff]
    %v3060 = vld [vmem:[%s14 + $0x390] sm:$0xff]
    %v3061 = vld [vmem:[%s14 + $0x398] sm:$0xff]
    %v3062 = vld [vmem:[%s14 + $0x3a0] sm:$0xff]
    %v3063 = vld [vmem:[%s14 + $0x3a8] sm:$0xff]
    %v3064 = vld [vmem:[%s14 + $0x3b0] sm:$0xff]
    %v3065 = vld [vmem:[%s14 + $0x3b8] sm:$0xff]
    %v3066 = vld [vmem:[%s14 + $0x3c0] sm:$0xff]
    %v3067 = vld [vmem:[%s14 + $0x3c8] sm:$0xff]
    %v3068 = vld [vmem:[%s14 + $0x3d0] sm:$0xff]
    %v3069 = vld [vmem:[%s14 + $0x3d8] sm:$0xff]
    %v3070 = vld [vmem:[%s14 + $0x3e0] sm:$0xff]
    %v3071 = vld [vmem:[%s15] sm:$0x1]
    %v3073 = vlaneseq
    %v3074 = vshrl.u32 %v3073, 7
    %v3075 = vsub.s32 0, %v3074
    %v3076 = vrot.slane %v3071, %v3075
    %vm3078 = vcmask 850944
    %v3080 = vsel %vm3078, %v2945, 0
    %3082 = vmatprep.subr.mxu0 0.0
    %3083 = vmatpush1.msra.mxu0 %v2946
    %3084 = vmatprep.subr.mxu0 0.0
    %3085 = vmatpush1.msra.mxu0 %v2947
    %3086 = vmatprep.subr.mxu0 0.0
    %3087 = vmatpush1.msra.mxu0 %v2948
    %3088 = vmatprep.subr.mxu0 0.0
    %3089 = vmatpush1.msra.mxu0 %v2949
    %3090 = vmatprep.subr.mxu0 0.0
    %3091 = vmatpush1.msra.mxu0 %v2950
    %3092 = vmatprep.subr.mxu0 0.0
    %3093 = vmatpush1.msra.mxu0 %v2951
    %3094 = vmatprep.subr.mxu0 0.0
    %3095 = vmatpush1.msra.mxu0 %v2952
    %3096 = vmatprep.subr.mxu0 0.0
    %3097 = vmatpush1.msra.mxu0 %v2953
    %3098 = vmatprep.subr.mxu0 0.0
    %3099 = vmatpush1.msra.mxu0 %v2954
    %3100 = vmatprep.subr.mxu0 0.0
    %3101 = vmatpush1.msra.mxu0 %v2955
    %3102 = vmatprep.subr.mxu0 0.0
    %3103 = vmatpush1.msra.mxu0 %v2956
    %3104 = vmatprep.subr.mxu0 0.0
    %3105 = vmatpush1.msra.mxu0 %v2957
    %3106 = vmatprep.subr.mxu0 0.0
    %3107 = vmatpush1.msra.mxu0 %v2958
    %3108 = vmatprep.subr.mxu0 0.0
    %3109 = vmatpush1.msra.mxu0 %v2959
    %3110 = vmatprep.subr.mxu0 0.0
    %3111 = vmatpush1.msra.mxu0 %v2960
    %3112 = vmatprep.subr.mxu0 0.0
    %3113 = vmatpush1.msra.mxu0 %v2961
    %3114 = vmatprep.subr.mxu0 0.0
    %3115 = vmatpush1.msra.mxu0 %v2962
    %3116 = vmatprep.subr.mxu0 0.0
    %3117 = vmatpush1.msra.mxu0 %v2963
    %3118 = vmatprep.subr.mxu0 0.0
    %3119 = vmatpush1.msra.mxu0 %v2964
    %3120 = vmatprep.subr.mxu0 0.0
    %3121 = vmatpush1.msra.mxu0 %v2965
    %3122 = vmatprep.subr.mxu0 0.0
    %3123 = vmatpush1.msra.mxu0 %v2966
    %3124 = vmatprep.subr.mxu0 0.0
    %3125 = vmatpush1.msra.mxu0 %v2967
    %3126 = vmatprep.subr.mxu0 0.0
    %3127 = vmatpush1.msra.mxu0 %v2968
    %3128 = vmatprep.subr.mxu0 0.0
    %3129 = vmatpush1.msra.mxu0 %v2969
    %3130 = vmatprep.subr.mxu0 0.0
    %3131 = vmatpush1.msra.mxu0 %v2970
    %3132 = vmatprep.subr.mxu0 0.0
    %3133 = vmatpush1.msra.mxu0 %v2971
    %3134 = vmatprep.subr.mxu0 0.0
    %3135 = vmatpush1.msra.mxu0 %v2972
    %3136 = vmatprep.subr.mxu0 0.0
    %3137 = vmatpush1.msra.mxu0 %v2973
    %3138 = vmatprep.subr.mxu0 0.0
    %3139 = vmatpush1.msra.mxu0 %v2974
    %3140 = vmatprep.subr.mxu0 0.0
    %3141 = vmatpush1.msra.mxu0 %v2975
    %3142 = vmatprep.subr.mxu0 0.0
    %3143 = vmatpush1.msra.mxu0 %v2976
    %3144 = vmatprep.subr.mxu0 0.0
    %3145 = vmatpush1.msra.mxu0 %v2977
    %3146 = vmatprep.mubr.f32.mxu0 %v2939
    %3147 = vmatmul.mubr.f32.gmra.mrb[0].mxu0 %v2938
    %v3148 = vpop.f32.mrb[0].mxu0
    %v3149 = vadd.f32 %v3076, %v3148
    %v3150 = vpop.f32.mrb[0].mxu0
    %3151 = vdwg.mxu0
    %3152 = vmatprep.subr.mxu0 0.0
    %3153 = vmatpush1.msra.mxu0 %v2978
    %3154 = vmatprep.subr.mxu0 0.0
    %3155 = vmatpush1.msra.mxu0 %v2979
    %3156 = vmatprep.subr.mxu0 0.0
    %3157 = vmatpush1.msra.mxu0 %v2980
    %3158 = vmatprep.subr.mxu0 0.0
    %3159 = vmatpush1.msra.mxu0 %v2981
    %3160 = vmatprep.subr.mxu0 0.0
    %3161 = vmatpush1.msra.mxu0 %v2982
    %3162 = vmatprep.subr.mxu0 0.0
    %3163 = vmatpush1.msra.mxu0 %v2983
    %3164 = vmatprep.subr.mxu0 0.0
    %3165 = vmatpush1.msra.mxu0 %v2984
    %3166 = vmatprep.subr.mxu0 0.0
    %3167 = vmatpush1.msra.mxu0 %v2985
    %3168 = vmatprep.subr.mxu0 0.0
    %3169 = vmatpush1.msra.mxu0 %v2986
    %3170 = vmatprep.subr.mxu0 0.0
    %3171 = vmatpush1.msra.mxu0 %v2987
    %3172 = vmatprep.subr.mxu0 0.0
    %3173 = vmatpush1.msra.mxu0 %v2988
    %3174 = vmatprep.subr.mxu0 0.0
    %3175 = vmatpush1.msra.mxu0 %v2989
    %3176 = vmatprep.subr.mxu0 0.0
    %3177 = vmatpush1.msra.mxu0 %v2990
    %3178 = vmatprep.subr.mxu0 0.0
    %3179 = vmatpush1.msra.mxu0 %v2991
    %3180 = vmatprep.subr.mxu0 0.0
    %3181 = vmatpush1.msra.mxu0 %v2992
    %3182 = vmatprep.subr.mxu0 0.0
    %3183 = vmatpush1.msra.mxu0 %v2993
    %3184 = vmatprep.subr.mxu0 0.0
    %3185 = vmatpush1.msra.mxu0 %v2994
    %3186 = vmatprep.subr.mxu0 0.0
    %3187 = vmatpush1.msra.mxu0 %v2995
    %3188 = vmatprep.subr.mxu0 0.0
    %3189 = vmatpush1.msra.mxu0 %v2996
    %3190 = vmatprep.subr.mxu0 0.0
    %3191 = vmatpush1.msra.mxu0 %v2997
    %3192 = vmatprep.subr.mxu0 0.0
    %3193 = vmatpush1.msra.mxu0 %v2998
    %3194 = vmatprep.subr.mxu0 0.0
    %3195 = vmatpush1.msra.mxu0 %v2999
    %3196 = vmatprep.subr.mxu0 0.0
    %3197 = vmatpush1.msra.mxu0 %v3000
    %3198 = vmatprep.subr.mxu0 0.0
    %3199 = vmatpush1.msra.mxu0 %v3001
    %3200 = vmatprep.subr.mxu0 0.0
    %3201 = vmatpush1.msra.mxu0 %v3002
    %3202 = vmatprep.subr.mxu0 0.0
    %3203 = vmatpush1.msra.mxu0 %v3003
    %3204 = vmatprep.subr.mxu0 0.0
    %3205 = vmatpush1.msra.mxu0 %v3004
    %3206 = vmatprep.subr.mxu0 0.0
    %3207 = vmatpush1.msra.mxu0 %v3005
    %3208 = vmatprep.subr.mxu0 0.0
    %3209 = vmatpush1.msra.mxu0 %v3006
    %3210 = vmatprep.subr.mxu0 0.0
    %3211 = vmatpush1.msra.mxu0 %v3007
    %3212 = vmatprep.subr.mxu0 0.0
    %3213 = vmatpush1.msra.mxu0 %v3008
    %3214 = vmatprep.subr.mxu0 0.0
    %3215 = vmatpush1.msra.mxu0 %v3009
    %3216 = vmatprep.mubr.f32.mxu0 %v2941
    %3217 = vmatmul.mubr.f32.gmra.mrb[0].mxu0 %v2940
    %v3218 = vpop.f32.mrb[0].mxu0
    %v3219 = vadd.f32 %v3149, %v3218
    %v3220 = vpop.f32.mrb[0].mxu0
    %3221 = vdwg.mxu0
    %3222 = vmatprep.subr.mxu0 0.0
    %3223 = vmatpush1.msra.mxu0 %v3010
    %3224 = vmatprep.subr.mxu0 0.0
    %3225 = vmatpush1.msra.mxu0 %v3011
    %3226 = vmatprep.subr.mxu0 0.0
    %3227 = vmatpush1.msra.mxu0 %v3012
    %3228 = vmatprep.subr.mxu0 0.0
    %3229 = vmatpush1.msra.mxu0 %v3013
    %3230 = vmatprep.subr.mxu0 0.0
    %3231 = vmatpush1.msra.mxu0 %v3014
    %3232 = vmatprep.subr.mxu0 0.0
    %3233 = vmatpush1.msra.mxu0 %v3015
    %3234 = vmatprep.subr.mxu0 0.0
    %3235 = vmatpush1.msra.mxu0 %v3016
    %3236 = vmatprep.subr.mxu0 0.0
    %3237 = vmatpush1.msra.mxu0 %v3017
    %3238 = vmatprep.subr.mxu0 0.0
    %3239 = vmatpush1.msra.mxu0 %v3018
    %3240 = vmatprep.subr.mxu0 0.0
    %3241 = vmatpush1.msra.mxu0 %v3019
    %3242 = vmatprep.subr.mxu0 0.0
    %3243 = vmatpush1.msra.mxu0 %v3020
    %3244 = vmatprep.subr.mxu0 0.0
    %3245 = vmatpush1.msra.mxu0 %v3021
    %3246 = vmatprep.subr.mxu0 0.0
    %3247 = vmatpush1.msra.mxu0 %v3022
    %3248 = vmatprep.subr.mxu0 0.0
    %3249 = vmatpush1.msra.mxu0 %v3023
    %3250 = vmatprep.subr.mxu0 0.0
    %3251 = vmatpush1.msra.mxu0 %v3024
    %3252 = vmatprep.subr.mxu0 0.0
    %3253 = vmatpush1.msra.mxu0 %v3025
    %3254 = vmatprep.subr.mxu0 0.0
    %3255 = vmatpush1.msra.mxu0 %v3026
    %3256 = vmatprep.subr.mxu0 0.0
    %3257 = vmatpush1.msra.mxu0 %v3027
    %3258 = vmatprep.subr.mxu0 0.0
    %3259 = vmatpush1.msra.mxu0 %v3028
    %3260 = vmatprep.subr.mxu0 0.0
    %3261 = vmatpush1.msra.mxu0 %v3029
    %3262 = vmatprep.subr.mxu0 0.0
    %3263 = vmatpush1.msra.mxu0 %v3030
    %3264 = vmatprep.subr.mxu0 0.0
    %3265 = vmatpush1.msra.mxu0 %v3031
    %3266 = vmatprep.subr.mxu0 0.0
    %3267 = vmatpush1.msra.mxu0 %v3032
    %3268 = vmatprep.subr.mxu0 0.0
    %3269 = vmatpush1.msra.mxu0 %v3033
    %3270 = vmatprep.subr.mxu0 0.0
    %3271 = vmatpush1.msra.mxu0 %v3034
    %3272 = vmatprep.subr.mxu0 0.0
    %3273 = vmatpush1.msra.mxu0 %v3035
    %3274 = vmatprep.subr.mxu0 0.0
    %3275 = vmatpush1.msra.mxu0 %v3036
    %3276 = vmatprep.subr.mxu0 0.0
    %3277 = vmatpush1.msra.mxu0 %v3037
    %3278 = vmatprep.subr.mxu0 0.0
    %3279 = vmatpush1.msra.mxu0 %v3038
    %3280 = vmatprep.subr.mxu0 0.0
    %3281 = vmatpush1.msra.mxu0 %v3039
    %3282 = vmatprep.subr.mxu0 0.0
    %3283 = vmatpush1.msra.mxu0 %v3040
    %3284 = vmatprep.subr.mxu0 0.0
    %3285 = vmatpush1.msra.mxu0 %v3041
    %3286 = vmatprep.mubr.f32.mxu0 %v2943
    %3287 = vmatmul.mubr.f32.gmra.mrb[0].mxu0 %v2942
    %v3288 = vpop.f32.mrb[0].mxu0
    %v3289 = vadd.f32 %v3219, %v3288
    %v3290 = vpop.f32.mrb[0].mxu0
    %3291 = vdwg.mxu0
    %3292 = vmatprep.subr.mxu0 0.0
    %3293 = vmatpush1.msra.mxu0 %v3042
    %3294 = vmatprep.subr.mxu0 0.0
    %3295 = vmatpush1.msra.mxu0 %v3043
    %3296 = vmatprep.subr.mxu0 0.0
    %3297 = vmatpush1.msra.mxu0 %v3044
    %3298 = vmatprep.subr.mxu0 0.0
    %3299 = vmatpush1.msra.mxu0 %v3045
    %3300 = vmatprep.subr.mxu0 0.0
    %3301 = vmatpush1.msra.mxu0 %v3046
    %3302 = vmatprep.subr.mxu0 0.0
    %3303 = vmatpush1.msra.mxu0 %v3047
    %3304 = vmatprep.subr.mxu0 0.0
    %3305 = vmatpush1.msra.mxu0 %v3048
    %3306 = vmatprep.subr.mxu0 0.0
    %3307 = vmatpush1.msra.mxu0 %v3049
    %3308 = vmatprep.subr.mxu0 0.0
    %3309 = vmatpush1.msra.mxu0 %v3050
    %3310 = vmatprep.subr.mxu0 0.0
    %3311 = vmatpush1.msra.mxu0 %v3051
    %3312 = vmatprep.subr.mxu0 0.0
    %3313 = vmatpush1.msra.mxu0 %v3052
    %3314 = vmatprep.subr.mxu0 0.0
    %3315 = vmatpush1.msra.mxu0 %v3053
    %3316 = vmatprep.subr.mxu0 0.0
    %3317 = vmatpush1.msra.mxu0 %v3054
    %3318 = vmatprep.subr.mxu0 0.0
    %3319 = vmatpush1.msra.mxu0 %v3055
    %3320 = vmatprep.subr.mxu0 0.0
    %3321 = vmatpush1.msra.mxu0 %v3056
    %3322 = vmatprep.subr.mxu0 0.0
    %3323 = vmatpush1.msra.mxu0 %v3057
    %3324 = vmatprep.subr.mxu0 0.0
    %3325 = vmatpush1.msra.mxu0 %v3058
    %3326 = vmatprep.subr.mxu0 0.0
    %3327 = vmatpush1.msra.mxu0 %v3059
    %3328 = vmatprep.subr.mxu0 0.0
    %3329 = vmatpush1.msra.mxu0 %v3060
    %3330 = vmatprep.subr.mxu0 0.0
    %3331 = vmatpush1.msra.mxu0 %v3061
    %3332 = vmatprep.subr.mxu0 0.0
    %3333 = vmatpush1.msra.mxu0 %v3062
    %3334 = vmatprep.subr.mxu0 0.0
    %3335 = vmatpush1.msra.mxu0 %v3063
    %3336 = vmatprep.subr.mxu0 0.0
    %3337 = vmatpush1.msra.mxu0 %v3064
    %3338 = vmatprep.subr.mxu0 0.0
    %3339 = vmatpush1.msra.mxu0 %v3065
    %3340 = vmatprep.subr.mxu0 0.0
    %3341 = vmatpush1.msra.mxu0 %v3066
    %3342 = vmatprep.subr.mxu0 0.0
    %3343 = vmatpush1.msra.mxu0 %v3067
    %3344 = vmatprep.subr.mxu0 0.0
    %3345 = vmatpush1.msra.mxu0 %v3068
    %3346 = vmatprep.subr.mxu0 0.0
    %3347 = vmatpush1.msra.mxu0 %v3069
    %3348 = vmatprep.subr.mxu0 0.0
    %3349 = vmatpush1.msra.mxu0 %v3070
    %3350 = vmatprep.subr.mxu0 0.0
    %3351 = vmatpush1.msra.mxu0 0.0
    %3352 = vmatprep.subr.mxu0 0.0
    %3353 = vmatpush1.msra.mxu0 0.0
    %3354 = vmatprep.subr.mxu0 0.0
    %3355 = vmatpush1.msra.mxu0 0.0
    %3356 = vmatprep.mubr.f32.mxu0 %v3080
    %3357 = vmatmul.mubr.f32.gmra.mrb[0].mxu0 %v2944
    %v3358 = vpop.f32.mrb[0].mxu0
    %v3359 = vadd.f32 %v3289, %v3358
    %v3360 = vpop.f32.mrb[0].mxu0
    %3361 = vdwg.mxu0
    %v3362 = vtanh.pop %v3359
    %v3363 = vld [vmem:[%s16] sm:$0xff]
    %v3364 = vld [vmem:[%s16 + $0x8] sm:$0xff]
    %v3365 = vld [vmem:[%s16 + $0x10] sm:$0xff]
    %v3366 = vld [vmem:[%s16 + $0x18] sm:$0xff]
    %v3367 = vld [vmem:[%s16 + $0x20] sm:$0xff]
    %v3368 = vld [vmem:[%s16 + $0x28] sm:$0xff]
    %v3369 = vld [vmem:[%s16 + $0x30] sm:$0xff]
    %v3370 = vld [vmem:[%s16 + $0x38] sm:$0xff]
    %v3371 = vld [vmem:[%s16 + $0x40] sm:$0xff]
    %v3372 = vld [vmem:[%s16 + $0x48] sm:$0xff]
    %v3373 = vld [vmem:[%s16 + $0x50] sm:$0xff]
    %v3374 = vld [vmem:[%s16 + $0x58] sm:$0xff]
    %v3375 = vld [vmem:[%s16 + $0x60] sm:$0xf]
    %v3376 = vld [vmem:[#allocation3] sm:$0x1]
    %v3378 = vlaneseq
    %v3379 = vshrl.u32 %v3378, 7
    %v3380 = vsub.s32 0, %v3379
    %v3381 = vrot.slane %v3376, %v3380
    %v3384 = vsel %vm1769, %v3362, 0
    %vm3386 = vcmask 1043456
    %v3388 = vsel %vm3386, %v3375, 0
    %3390 = vmatprep.subr.mxu0 0.0
    %3391 = vmatpush1.msra.mxu0 %v3363
    %3392 = vmatprep.subr.mxu0 0.0
    %3393 = vmatpush1.msra.mxu0 %v3364
    %3394 = vmatprep.subr.mxu0 0.0
    %3395 = vmatpush1.msra.mxu0 %v3365
    %3396 = vmatprep.subr.mxu0 0.0
    %3397 = vmatpush1.msra.mxu0 %v3366
    %3398 = vmatprep.subr.mxu0 0.0
    %3399 = vmatpush1.msra.mxu0 %v3367
    %3400 = vmatprep.subr.mxu0 0.0
    %3401 = vmatpush1.msra.mxu0 %v3368
    %3402 = vmatprep.subr.mxu0 0.0
    %3403 = vmatpush1.msra.mxu0 %v3369
    %3404 = vmatprep.subr.mxu0 0.0
    %3405 = vmatpush1.msra.mxu0 %v3370
    %3406 = vmatprep.subr.mxu0 0.0
    %3407 = vmatpush1.msra.mxu0 %v3371
    %3408 = vmatprep.subr.mxu0 0.0
    %3409 = vmatpush1.msra.mxu0 %v3372
    %3410 = vmatprep.subr.mxu0 0.0
    %3411 = vmatpush1.msra.mxu0 %v3373
    %3412 = vmatprep.subr.mxu0 0.0
    %3413 = vmatpush1.msra.mxu0 %v3374
    %3414 = vmatprep.subr.mxu0 0.0
    %3415 = vmatpush1.msra.mxu0 %v3388
    %3416 = vmatprep.subr.mxu0 0.0
    %3417 = vmatpush1.msra.mxu0 0.0
    %3418 = vmatprep.subr.mxu0 0.0
    %3419 = vmatpush1.msra.mxu0 0.0
    %3420 = vmatprep.subr.mxu0 0.0
    %3421 = vmatpush1.msra.mxu0 0.0
    %3422 = vmatprep.subr.mxu0 0.0
    %3423 = vmatpush1.msra.mxu0 0.0
    %3424 = vmatprep.subr.mxu0 0.0
    %3425 = vmatpush1.msra.mxu0 0.0
    %3426 = vmatprep.subr.mxu0 0.0
    %3427 = vmatpush1.msra.mxu0 0.0
    %3428 = vmatprep.subr.mxu0 0.0
    %3429 = vmatpush1.msra.mxu0 0.0
    %3430 = vmatprep.subr.mxu0 0.0
    %3431 = vmatpush1.msra.mxu0 0.0
    %3432 = vmatprep.subr.mxu0 0.0
    %3433 = vmatpush1.msra.mxu0 0.0
    %3434 = vmatprep.subr.mxu0 0.0
    %3435 = vmatpush1.msra.mxu0 0.0
    %3436 = vmatprep.subr.mxu0 0.0
    %3437 = vmatpush1.msra.mxu0 0.0
    %3438 = vmatprep.subr.mxu0 0.0
    %3439 = vmatpush1.msra.mxu0 0.0
    %3440 = vmatprep.subr.mxu0 0.0
    %3441 = vmatpush1.msra.mxu0 0.0
    %3442 = vmatprep.subr.mxu0 0.0
    %3443 = vmatpush1.msra.mxu0 0.0
    %3444 = vmatprep.subr.mxu0 0.0
    %3445 = vmatpush1.msra.mxu0 0.0
    %3446 = vmatprep.subr.mxu0 0.0
    %3447 = vmatpush1.msra.mxu0 0.0
    %3448 = vmatprep.subr.mxu0 0.0
    %3449 = vmatpush1.msra.mxu0 0.0
    %3450 = vmatprep.subr.mxu0 0.0
    %3451 = vmatpush1.msra.mxu0 0.0
    %3452 = vmatprep.subr.mxu0 0.0
    %3453 = vmatpush1.msra.mxu0 0.0
    %3454 = vmatprep.mubr.f32.mxu0 0.0
    %3455 = vmatmul.mubr.f32.gmra.mrb[0].mxu0 %v3384
    %v3456 = vpop.f32.mrb[0].mxu0
    %v3457 = vadd.f32 %v3381, %v3456
    %v3458 = vpop.f32.mrb[0].mxu0
    %3459 = vdwg.mxu0
    %vm3460 = vcmask 7168
    %3461 = vst.msk [vmem:[%s18] sm:$0xff] %vm3460, %v3457
  $region81: #{tpu_custom_call.1} parent=0 // pred_fallthru
    _
  // Predicated region
  $region82: #{tpu_custom_call.1} parent=0 // pred_check
    _
  $region83: #{tpu_custom_call.1} parent=0 // pred_check_branch
    %3463 = sbr.rel (0) target = $region85
  $region84: #{tpu_custom_call.1} parent=0 // pred_region
    _
  $region85: #{tpu_custom_call.1} parent=0 // pred_fallthru
    _
  // Predicated region
  $region86: #{tpu_custom_call.1} parent=0 // pred_check
    _
  $region87: #{tpu_custom_call.1} parent=0 // pred_check_branch
    %3465 = sbr.rel (0) target = $region89
  $region88: #{tpu_custom_call.1} parent=0 // pred_region
    _
  $region89: #{tpu_custom_call.1} parent=0 // pred_fallthru
    _

</llo_original>
